<compile_context>
chip_gen: v6e
topology: v6e:2x2x1
jax: 0.10.0
libtpu: 0.0.40
codegen_flags: <defaults>
</compile_context>

<pallas_src>
import functools
import math

import jax
import jax.numpy as jnp
import numpy as np
from jax.experimental import pallas as pl
from jax.experimental.pallas import tpu as pltpu


# ---------------------------------------------------------------------------
# helpers (JAX / numpy glue, outside the kernel)
# ---------------------------------------------------------------------------
def gelu_exact(x):
    # nn.GELU() default == exact (erf-based) GELU
    return 0.5 * x * (1.0 + jax.lax.erf(x * (1.0 / math.sqrt(2.0))))


def pad_to_divisible(x, r):
    # x: NCHW
    _, _, H, W = x.shape
    pad_h = (-H) % r
    pad_w = (-W) % r
    pt, pb = pad_h // 2, pad_h - pad_h // 2
    plft, prgt = pad_w // 2, pad_w - pad_w // 2
    return jnp.pad(x, ((0, 0), (0, 0), (pt, pb), (plft, prgt)))


def pixel_unshuffle(x, r=2):
    # x: NCHW -> (B, C*r*r, H//r, W//r), matching torch.nn.PixelUnshuffle ordering
    B, C, H, W = x.shape
    x = x.reshape(B, C, H // r, r, W // r, r)
    x = x.transpose(0, 1, 3, 5, 2, 4)
    return x.reshape(B, C * r * r, H // r, W // r)


def _pool_matrix_np(H, W, g):
    # AdaptiveAvgPool2d((g, g)) expressed as a (g*g, H*W) averaging matrix.
    m = np.zeros((g * g, H * W), dtype=np.float32)
    for oh in range(g):
        h0 = (oh * H) // g
        h1 = -((-(oh + 1) * H) // g)
        for ow in range(g):
            w0 = (ow * W) // g
            w1 = -((-(ow + 1) * W) // g)
            area = (h1 - h0) * (w1 - w0)
            for h in range(h0, h1):
                for w in range(w0, w1):
                    m[oh * g + ow, h * W + w] = 1.0 / area
    return m


def _layernorm(v, gamma, beta, eps=1e-5):
    mu = jnp.mean(v, axis=-1, keepdims=True)
    var = jnp.mean((v - mu) ** 2, axis=-1, keepdims=True)
    return (v - mu) * jax.lax.rsqrt(var + eps) * gamma + beta


# ---------------------------------------------------------------------------
# the single fused Pallas kernel (one grid step == one batch element)
# ---------------------------------------------------------------------------
def fused_kernel(xin_ref, wstk_ref, pool_ref, pe_ref,
                 wp1_ref, wp2_ref, wc1_ref, wc2_ref, we_ref, vecs_ref,
                 o_ref,
                 buf_a, buf_b, *, block_num, C):
    # xin_ref  : (1, H, W, CP)          channel-padded pixel-unshuffled input
    # wstk_ref : (2*bn+2, 9, CP, CP)    conv weights per tap, zero-padded to CPxCP
    # pool_ref : (P, H*W)               adaptive-avg-pool matrix (per batch element)
    # pe_ref   : (P, C)                 pos_embed
    # wp1/wp2  : (P, pm) / (pm, P)      patch mixer
    # wc1/wc2  : (C, cm) / (cm, C)      channel mixer
    # we_ref   : (C, 2C)                end linear
    # vecs_ref : (NV, VW)               packed biases / LayerNorm params (1 row each)
    # o_ref    : (1, P, 2C)             per-batch output
    # buf_a/b  : (H+2, W+2, CP)         zero-halo padded activation buffers
    _, H, W, CP = xin_ref.shape
    HW = H * W
    P = pool_ref.shape[0]
    pm = wp1_ref.shape[1]
    cm = wc1_ref.shape[1]
    C2 = we_ref.shape[1]

    # ---- zero ONLY the 1-pixel halo frames (interiors are fully overwritten
    #      every step; done every step so the batch-parallel grid is safe on
    #      multi-TensorCore chips where each core owns its own scratch) -------
    zrow = jnp.zeros((1, W + 2, CP), jnp.float32)
    zcol = jnp.zeros((H, 1, CP), jnp.float32)
    for buf in (buf_a, buf_b):
        buf[0:1, :, :] = zrow
        buf[H + 1:H + 2, :, :] = zrow
        buf[1:H + 1, 0:1, :] = zcol
        buf[1:H + 1, W + 1:W + 2, :] = zcol

    # full 128-lane interior store of the (channel-padded) input
    buf_a[1:H + 1, 1:W + 1, :] = xin_ref[0]

    def vec(idx, dim):
        # one packed bias / LN vector as a (1, dim) row (static slice)
        return vecs_ref[idx:idx + 1, 0:dim]

    def conv(src_ref, k):
        # 3x3 conv (padding=1) as 9 accumulating tap matmuls, K = N = CP = 128.
        # Padded output channels stay exactly zero (zero weight cols, zero bias).
        acc = None
        for dh in range(3):
            for dw in range(3):
                patch = src_ref[dh:dh + H, dw:dw + W, :].reshape(HW, CP)
                p = jnp.dot(patch, wstk_ref[k, dh * 3 + dw],
                            preferred_element_type=jnp.float32)
                acc = p if acc is None else acc + p
        return acc + vec(k, CP)

    # ---- conv1 + GELU ----------------------------------------------------
    y = gelu_exact(conv(buf_a, 0))
    buf_b[1:H + 1, 1:W + 1, :] = y.reshape(H, W, CP)

    # ---- residual blocks (conv+GELU, conv, +residual), buf_a reused as tmp -
    for bi in range(block_num):
        h1 = gelu_exact(conv(buf_b, 1 + 2 * bi))
        buf_a[1:H + 1, 1:W + 1, :] = h1.reshape(H, W, CP)
        h2 = conv(buf_a, 2 + 2 * bi)
        xres = buf_b[1:H + 1, 1:W + 1, :].reshape(HW, CP)
        buf_b[1:H + 1, 1:W + 1, :] = (h2 + xres).reshape(H, W, CP)

    # ---- conv2 (no activation) ---------------------------------------------
    xc = conv(buf_b, 2 * block_num + 1)                     # (HW, CP)

    # ---- adaptive avg-pool (small matmul) + pos_embed ------------------------
    t_full = jnp.dot(pool_ref[...], xc, preferred_element_type=jnp.float32)  # (P, CP)
    t = t_full[:, 0:C] + pe_ref[...]                                         # (P, C)

    # packed-vector indices for the head
    V0 = 2 * block_num + 2
    g1, b1 = vec(V0, C), vec(V0 + 1, C)
    g2, b2 = vec(V0 + 2, C), vec(V0 + 3, C)
    bp1, bp2 = vec(V0 + 4, pm), vec(V0 + 5, P)
    bc1, bc2 = vec(V0 + 6, cm), vec(V0 + 7, C)
    be = vec(V0 + 8, C2)

    # ---- patch mixer: x + patch_mixer(norm1(x).T).T --------------------------
    y1 = _layernorm(t, g1, b1)                              # (P, C)
    yt = y1.T                                               # (C, P)
    h = gelu_exact(jnp.dot(yt, wp1_ref[...],
                           preferred_element_type=jnp.float32) + bp1)
    h = jnp.dot(h, wp2_ref[...],
                preferred_element_type=jnp.float32) + bp2   # (C, P)
    t = t + h.T

    # ---- channel mixer: x + channel_mixer(norm2(x)) ---------------------------
    z = _layernorm(t, g2, b2)
    h2 = gelu_exact(jnp.dot(z, wc1_ref[...],
                            preferred_element_type=jnp.float32) + bc1)
    h2 = jnp.dot(h2, wc2_ref[...],
                 preferred_element_type=jnp.float32) + bc2
    t = t + h2

    # ---- end: Linear(C -> 2C) + GELU ------------------------------------------
    out = gelu_exact(jnp.dot(t, we_ref[...],
                             preferred_element_type=jnp.float32) + be)
    o_ref[...] = out.reshape(1, P, C2)


# ---------------------------------------------------------------------------
# wrapper: packs parameters and calls the single fused pallas_call
# ---------------------------------------------------------------------------
def latent_encoder_gelu_forward(params, inp_img, gt=None, group=4):
    # inp_img: (B, C, H, W) NCHW, float32
    if gt is not None:
        x = jnp.concatenate([gt, inp_img], axis=1)
    else:
        x = inp_img
    x = pad_to_divisible(x, 2)
    x = pixel_unshuffle(x, 2)
    x = jnp.transpose(x, (0, 2, 3, 1))                      # NCHW -> NHWC
    B, H, W, C0 = x.shape

    C = params["conv1_w"].shape[-1]
    block_num = len(params["blocks"])
    P = group * group
    C2 = params["we"].shape[1]
    CP = 128                                                # lane-padded channel width
    assert C0 <= CP and C <= CP

    # lane-dense input: pad channels up to CP (full-lane interior store in-kernel)
    x = jnp.pad(x, ((0, 0), (0, 0), (0, 0), (0, CP - C0)))

    # --- conv weights: per-tap (CP, CP), zero-padded rows (Cin) and cols (Cout)
    def pad_taps(w):                                        # w: (3, 3, Cin, Cout)
        cin, cout = w.shape[2], w.shape[3]
        w = jnp.pad(w, ((0, 0), (0, 0), (0, CP - cin), (0, CP - cout)))
        return w.reshape(9, CP, CP)

    conv_ws = [pad_taps(params["conv1_w"])]
    for blk in params["blocks"]:
        conv_ws.append(pad_taps(blk["w1"]))
        conv_ws.append(pad_taps(blk["w2"]))
    conv_ws.append(pad_taps(params["conv2_w"]))
    wstk = jnp.stack(conv_ws, axis=0)                       # (2*bn+2, 9, CP, CP)

    # --- pack all small bias / LayerNorm vectors into one 2D array
    vec_list = [params["conv1_b"]]
    for blk in params["blocks"]:
        vec_list += [blk["b1"], blk["b2"]]
    vec_list += [params["conv2_b"],
                 params["ln1_g"], params["ln1_b"], params["ln2_g"], params["ln2_b"],
                 params["bp1"], params["bp2"], params["bc1"], params["bc2"],
                 params["be"]]
    maxlen = max(int(v.size) for v in vec_list)
    VW = max(CP, ((maxlen + 127) // 128) * 128)
    vecs = jnp.stack([jnp.pad(v.reshape(-1), (0, VW - int(v.size)))
                      for v in vec_list], axis=0)           # (NV, VW)

    pool = jnp.asarray(_pool_matrix_np(H, W, group))        # (P, H*W) — per batch

    kernel = functools.partial(fused_kernel, block_num=block_num, C=C)

    def const_spec(shape):
        n = len(shape)
        return pl.BlockSpec(tuple(shape), lambda b, _n=n: (0,) * _n)

    out = pl.pallas_call(
        kernel,
        out_shape=jax.ShapeDtypeStruct((B, P, C2), jnp.float32),
        grid=(B,),
        in_specs=[
            pl.BlockSpec((1, H, W, CP), lambda b: (b, 0, 0, 0)),  # per-batch input
            const_spec(wstk.shape),                                # conv weights
            const_spec(pool.shape),                                # pool matrix
            const_spec(params["pos_embed"].shape),                 # pos_embed
            const_spec(params["wp1"].shape),
            const_spec(params["wp2"].shape),
            const_spec(params["wc1"].shape),
            const_spec(params["wc2"].shape),
            const_spec(params["we"].shape),
            const_spec(vecs.shape),                                # packed vectors
        ],
        out_specs=pl.BlockSpec((1, P, C2), lambda b: (b, 0, 0)),
        scratch_shapes=[
            pltpu.VMEM((H + 2, W + 2, CP), jnp.float32),   # padded input / block tmp
            pltpu.VMEM((H + 2, W + 2, CP), jnp.float32),   # padded main activation
        ],
        compiler_params=pltpu.CompilerParams(
            dimension_semantics=("parallel",),             # batch-parallel grid
            vmem_limit_bytes=32 * 1024 * 1024),
    )(x, wstk, pool, params["pos_embed"],
      params["wp1"], params["wp2"], params["wc1"], params["wc2"], params["we"],
      vecs)
    return out


# ---------------------------------------------------------------------------
# pure-JAX reference (for correctness check)
# ---------------------------------------------------------------------------
def reference_forward(params, inp_img, gt=None, group=4):
    if gt is not None:
        x = jnp.concatenate([gt, inp_img], axis=1)
    else:
        x = inp_img
    x = pad_to_divisible(x, 2)
    x = pixel_unshuffle(x, 2)                               # (B, C0, H, W)

    def conv3x3(x_nchw, w_hwio, b):
        w_oihw = jnp.transpose(w_hwio, (3, 2, 0, 1))
        y = jax.lax.conv_general_dilated(
            x_nchw, w_oihw, (1, 1), ((1, 1), (1, 1)),
            dimension_numbers=('NCHW', 'OIHW', 'NCHW'))
        return y + b.reshape(1, -1, 1, 1)

    x = gelu_exact(conv3x3(x, params["conv1_w"], params["conv1_b"]))
    for blk in params["blocks"]:
        h = gelu_exact(conv3x3(x, blk["w1"], blk["b1"]))
        h = conv3x3(h, blk["w2"], blk["b2"])
        x = x + h
    x = conv3x3(x, params["conv2_w"], params["conv2_b"])

    B, C, H, W = x.shape
    pool = jnp.asarray(_pool_matrix_np(H, W, group))        # (P, HW)
    t = jnp.einsum('pq,bcq->bpc', pool, x.reshape(B, C, H * W))
    t = t + params["pos_embed"]

    y1 = _layernorm(t, params["ln1_g"], params["ln1_b"])
    u = jnp.swapaxes(y1, 1, 2)                              # (B, C, P)
    h = gelu_exact(u @ params["wp1"] + params["bp1"])
    h = h @ params["wp2"] + params["bp2"]
    t = t + jnp.swapaxes(h, 1, 2)

    z = _layernorm(t, params["ln2_g"], params["ln2_b"])
    h2 = gelu_exact(z @ params["wc1"] + params["bc1"])
    h2 = h2 @ params["wc2"] + params["bc2"]
    t = t + h2

    return gelu_exact(t @ params["we"] + params["be"])


# ---------------------------------------------------------------------------
# parameter init (conv weights stored as (kh, kw, Cin, Cout); linears as (in, out))
# ---------------------------------------------------------------------------
def init_params(key, in_chans, embed_dim, block_num, group,
                patch_expansion, channel_expansion):
    P = group * group
    pm = int(patch_expansion * P)
    cm = int(channel_expansion * embed_dim)
    keys = jax.random.split(key, 8 + 4 * block_num + 16)
    kit = iter(keys)

    def w(shape, scale=0.1):
        return scale * jax.random.normal(next(kit), shape, jnp.float32)

    params = {
        "conv1_w": w((3, 3, in_chans * 4, embed_dim)),
        "conv1_b": w((embed_dim,)),
        "blocks": [
            {"w1": w((3, 3, embed_dim, embed_dim)), "b1": w((embed_dim,)),
             "w2": w((3, 3, embed_dim, embed_dim)), "b2": w((embed_dim,))}
            for _ in range(block_num)
        ],
        "conv2_w": w((3, 3, embed_dim, embed_dim)),
        "conv2_b": w((embed_dim,)),
        "pos_embed": jnp.ones((P, embed_dim), jnp.float32),  # torch.ones init
        "ln1_g": jnp.ones((1, embed_dim), jnp.float32),
        "ln1_b": jnp.zeros((1, embed_dim), jnp.float32),
        "ln2_g": jnp.ones((1, embed_dim), jnp.float32),
        "ln2_b": jnp.zeros((1, embed_dim), jnp.float32),
        "wp1": w((P, pm)), "bp1": w((1, pm)),
        "wp2": w((pm, P)), "bp2": w((1, P)),
        "wc1": w((embed_dim, cm)), "bc1": w((1, cm)),
        "wc2": w((cm, embed_dim)), "bc2": w((1, embed_dim)),
        "we": w((embed_dim, embed_dim * 2)), "be": w((1, embed_dim * 2)),
    }
    return params


# ---------------------------------------------------------------------------
# demo
# ---------------------------------------------------------------------------
if __name__ == "__main__":
    B, in_chans, H, W = 2, 4, 16, 16
    embed_dim, block_num, group = 32, 2, 4
    patch_expansion, channel_expansion = 0.5, 2

    key = jax.random.PRNGKey(0)
    k_param, k_inp = jax.random.split(key)
    params = init_params(k_param, in_chans, embed_dim, block_num, group,
                         patch_expansion, channel_expansion)
    inp_img = jax.random.normal(k_inp, (B, in_chans, H, W), jnp.float32)

    fwd = jax.jit(functools.partial(latent_encoder_gelu_forward, group=group))
    out = fwd(params, inp_img)
    out = jax.block_until_ready(out)

    expected = (B, group * group, embed_dim * 2)
    assert out.shape == expected, (out.shape, expected)
    assert bool(jnp.all(jnp.isfinite(out)))

    ref = jax.jit(functools.partial(reference_forward, group=group))(params, inp_img)
    ref = jax.block_until_ready(ref)
    assert bool(jnp.allclose(out, ref, atol=2e-3, rtol=2e-3)), float(
        jnp.max(jnp.abs(out - ref)))
    print("KERNEL_OK")
</pallas_src>

<mosaic_0001>
module attributes {stable_mosaic.version = 11 : i64} {
  func.func @fused_kernel(%arg0: i32, %arg1: memref<1x8x8x128xf32, #tpu.memory_space<vmem>>, %arg2: memref<6x9x128x128xf32, #tpu.memory_space<vmem>>, %arg3: memref<16x64xf32, #tpu.memory_space<vmem>>, %arg4: memref<16x32xf32, #tpu.memory_space<vmem>>, %arg5: memref<16x8xf32, #tpu.memory_space<vmem>>, %arg6: memref<8x16xf32, #tpu.memory_space<vmem>>, %arg7: memref<32x64xf32, #tpu.memory_space<vmem>>, %arg8: memref<64x32xf32, #tpu.memory_space<vmem>>, %arg9: memref<32x64xf32, #tpu.memory_space<vmem>>, %arg10: memref<15x128xf32, #tpu.memory_space<vmem>>, %arg11: memref<1x16x64xf32, #tpu.memory_space<vmem>>, %arg12: memref<10x10x128xf32, #tpu.memory_space<vmem>>, %arg13: memref<10x10x128xf32, #tpu.memory_space<vmem>>) attributes {dimension_semantics = [#tpu.dimension_semantics<parallel>], iteration_bounds = array<i64: 2>, scalar_prefetch = 0 : i64, scratch_operands = 2 : i64, tpu.core_type = #tpu.core_type<tc>, window_params = [{transform_indices = @transform_0, window_bounds = array<i64: 1, 8, 8, 128>}, {pipeline_mode = #tpu.pipeline_mode<synchronous>, transform_indices = @transform_1, window_bounds = array<i64: 6, 9, 128, 128>}, {pipeline_mode = #tpu.pipeline_mode<synchronous>, transform_indices = @transform_2, window_bounds = array<i64: 16, 64>}, {pipeline_mode = #tpu.pipeline_mode<synchronous>, transform_indices = @transform_3, window_bounds = array<i64: 16, 32>}, {pipeline_mode = #tpu.pipeline_mode<synchronous>, transform_indices = @transform_4, window_bounds = array<i64: 16, 8>}, {pipeline_mode = #tpu.pipeline_mode<synchronous>, transform_indices = @transform_5, window_bounds = array<i64: 8, 16>}, {pipeline_mode = #tpu.pipeline_mode<synchronous>, transform_indices = @transform_6, window_bounds = array<i64: 32, 64>}, {pipeline_mode = #tpu.pipeline_mode<synchronous>, transform_indices = @transform_7, window_bounds = array<i64: 64, 32>}, {pipeline_mode = #tpu.pipeline_mode<synchronous>, transform_indices = @transform_8, window_bounds = array<i64: 32, 64>}, {pipeline_mode = #tpu.pipeline_mode<synchronous>, transform_indices = @transform_9, window_bounds = array<i64: 15, 128>}, {transform_indices = @transform_10, window_bounds = array<i64: 1, 16, 64>}]} {
    %cst = arith.constant 0.000000e+00 : f32
    %0 = vector.broadcast %cst : f32 to vector<1x10x128xf32>
    %cst_0 = arith.constant 0.000000e+00 : f32
    %1 = vector.broadcast %cst_0 : f32 to vector<8x1x128xf32>
    %c0 = arith.constant 0 : index
    %c0_1 = arith.constant 0 : index
    %c0_2 = arith.constant 0 : index
    %2 = vector.load %arg12[%c0, %c0_1, %c0_2] : memref<10x10x128xf32, #tpu.memory_space<vmem>>, vector<1x10x128xf32>
    tpu.vector_store %arg12[%c0, %c0_1, %c0_2], %0 {strides = array<i32>} : memref<10x10x128xf32, #tpu.memory_space<vmem>>, vector<1x10x128xf32>,
    %c9 = arith.constant 9 : index
    %c0_3 = arith.constant 0 : index
    %c0_4 = arith.constant 0 : index
    %3 = vector.load %arg12[%c9, %c0_3, %c0_4] : memref<10x10x128xf32, #tpu.memory_space<vmem>>, vector<1x10x128xf32>
    tpu.vector_store %arg12[%c9, %c0_3, %c0_4], %0 {strides = array<i32>} : memref<10x10x128xf32, #tpu.memory_space<vmem>>, vector<1x10x128xf32>,
    %c1 = arith.constant 1 : index
    %c0_5 = arith.constant 0 : index
    %c0_6 = arith.constant 0 : index
    %4 = vector.load %arg12[%c1, %c0_5, %c0_6] : memref<10x10x128xf32, #tpu.memory_space<vmem>>, vector<8x1x128xf32>
    tpu.vector_store %arg12[%c1, %c0_5, %c0_6], %1 {strides = array<i32>} : memref<10x10x128xf32, #tpu.memory_space<vmem>>, vector<8x1x128xf32>,
    %c1_7 = arith.constant 1 : index
    %c9_8 = arith.constant 9 : index
    %c0_9 = arith.constant 0 : index
    %5 = vector.load %arg12[%c1_7, %c9_8, %c0_9] : memref<10x10x128xf32, #tpu.memory_space<vmem>>, vector<8x1x128xf32>
    tpu.vector_store %arg12[%c1_7, %c9_8, %c0_9], %1 {strides = array<i32>} : memref<10x10x128xf32, #tpu.memory_space<vmem>>, vector<8x1x128xf32>,
    %c0_10 = arith.constant 0 : index
    %c0_11 = arith.constant 0 : index
    %c0_12 = arith.constant 0 : index
    %6 = vector.load %arg13[%c0_10, %c0_11, %c0_12] : memref<10x10x128xf32, #tpu.memory_space<vmem>>, vector<1x10x128xf32>
    tpu.vector_store %arg13[%c0_10, %c0_11, %c0_12], %0 {strides = array<i32>} : memref<10x10x128xf32, #tpu.memory_space<vmem>>, vector<1x10x128xf32>,
    %c9_13 = arith.constant 9 : index
    %c0_14 = arith.constant 0 : index
    %c0_15 = arith.constant 0 : index
    %7 = vector.load %arg13[%c9_13, %c0_14, %c0_15] : memref<10x10x128xf32, #tpu.memory_space<vmem>>, vector<1x10x128xf32>
    tpu.vector_store %arg13[%c9_13, %c0_14, %c0_15], %0 {strides = array<i32>} : memref<10x10x128xf32, #tpu.memory_space<vmem>>, vector<1x10x128xf32>,
    %c1_16 = arith.constant 1 : index
    %c0_17 = arith.constant 0 : index
    %c0_18 = arith.constant 0 : index
    %8 = vector.load %arg13[%c1_16, %c0_17, %c0_18] : memref<10x10x128xf32, #tpu.memory_space<vmem>>, vector<8x1x128xf32>
    tpu.vector_store %arg13[%c1_16, %c0_17, %c0_18], %1 {strides = array<i32>} : memref<10x10x128xf32, #tpu.memory_space<vmem>>, vector<8x1x128xf32>,
    %c1_19 = arith.constant 1 : index
    %c9_20 = arith.constant 9 : index
    %c0_21 = arith.constant 0 : index
    %9 = vector.load %arg13[%c1_19, %c9_20, %c0_21] : memref<10x10x128xf32, #tpu.memory_space<vmem>>, vector<8x1x128xf32>
    tpu.vector_store %arg13[%c1_19, %c9_20, %c0_21], %1 {strides = array<i32>} : memref<10x10x128xf32, #tpu.memory_space<vmem>>, vector<8x1x128xf32>,
    %c0_22 = arith.constant 0 : index
    %c0_23 = arith.constant 0 : index
    %c0_24 = arith.constant 0 : index
    %c0_25 = arith.constant 0 : index
    %10 = vector.load %arg1[%c0_22, %c0_23, %c0_24, %c0_25] : memref<1x8x8x128xf32, #tpu.memory_space<vmem>>, vector<1x8x8x128xf32>
    %11 = vector.shape_cast %10 : vector<1x8x8x128xf32> to vector<8x8x128xf32>
    %c1_26 = arith.constant 1 : index
    %c1_27 = arith.constant 1 : index
    %c0_28 = arith.constant 0 : index
    %12 = vector.load %arg12[%c1_26, %c1_27, %c0_28] : memref<10x10x128xf32, #tpu.memory_space<vmem>>, vector<8x8x128xf32>
    tpu.vector_store %arg12[%c1_26, %c1_27, %c0_28], %11 {strides = array<i32>} : memref<10x10x128xf32, #tpu.memory_space<vmem>>, vector<8x8x128xf32>,
    %c0_29 = arith.constant 0 : index
    %c0_30 = arith.constant 0 : index
    %c0_31 = arith.constant 0 : index
    %13 = vector.load %arg12[%c0_29, %c0_30, %c0_31] : memref<10x10x128xf32, #tpu.memory_space<vmem>>, vector<8x8x128xf32>
    %14 = vector.shape_cast %13 : vector<8x8x128xf32> to vector<64x128xf32>
    %c0_32 = arith.constant 0 : index
    %c0_33 = arith.constant 0 : index
    %c0_34 = arith.constant 0 : index
    %c0_35 = arith.constant 0 : index
    %15 = vector.load %arg2[%c0_32, %c0_33, %c0_34, %c0_35] : memref<6x9x128x128xf32, #tpu.memory_space<vmem>>, vector<1x1x128x128xf32>
    %16 = vector.shape_cast %15 : vector<1x1x128x128xf32> to vector<128x128xf32>
    %cst_36 = arith.constant dense<0.000000e+00> : vector<64x128xf32>
    %17 = tpu.matmul %14, %16, %cst_36 {dimension_numbers = #tpu.dot_dimension_numbers<[1], [0], [0], [1], [0, 0, 1, 1], [], []>} : vector<64x128xf32>, vector<128x128xf32>, vector<64x128xf32> -> vector<64x128xf32>
    %c0_37 = arith.constant 0 : index
    %c1_38 = arith.constant 1 : index
    %c0_39 = arith.constant 0 : index
    %18 = vector.load %arg12[%c0_37, %c1_38, %c0_39] : memref<10x10x128xf32, #tpu.memory_space<vmem>>, vector<8x8x128xf32>
    %19 = vector.shape_cast %18 : vector<8x8x128xf32> to vector<64x128xf32>
    %c0_40 = arith.constant 0 : index
    %c1_41 = arith.constant 1 : index
    %c0_42 = arith.constant 0 : index
    %c0_43 = arith.constant 0 : index
    %20 = vector.load %arg2[%c0_40, %c1_41, %c0_42, %c0_43] : memref<6x9x128x128xf32, #tpu.memory_space<vmem>>, vector<1x1x128x128xf32>
    %21 = vector.shape_cast %20 : vector<1x1x128x128xf32> to vector<128x128xf32>
    %cst_44 = arith.constant dense<0.000000e+00> : vector<64x128xf32>
    %22 = tpu.matmul %19, %21, %cst_44 {dimension_numbers = #tpu.dot_dimension_numbers<[1], [0], [0], [1], [0, 0, 1, 1], [], []>} : vector<64x128xf32>, vector<128x128xf32>, vector<64x128xf32> -> vector<64x128xf32>
    %23 = arith.addf %17, %22 : vector<64x128xf32>
    %c0_45 = arith.constant 0 : index
    %c2 = arith.constant 2 : index
    %c0_46 = arith.constant 0 : index
    %24 = vector.load %arg12[%c0_45, %c2, %c0_46] : memref<10x10x128xf32, #tpu.memory_space<vmem>>, vector<8x8x128xf32>
    %25 = vector.shape_cast %24 : vector<8x8x128xf32> to vector<64x128xf32>
    %c0_47 = arith.constant 0 : index
    %c2_48 = arith.constant 2 : index
    %c0_49 = arith.constant 0 : index
    %c0_50 = arith.constant 0 : index
    %26 = vector.load %arg2[%c0_47, %c2_48, %c0_49, %c0_50] : memref<6x9x128x128xf32, #tpu.memory_space<vmem>>, vector<1x1x128x128xf32>
    %27 = vector.shape_cast %26 : vector<1x1x128x128xf32> to vector<128x128xf32>
    %cst_51 = arith.constant dense<0.000000e+00> : vector<64x128xf32>
    %28 = tpu.matmul %25, %27, %cst_51 {dimension_numbers = #tpu.dot_dimension_numbers<[1], [0], [0], [1], [0, 0, 1, 1], [], []>} : vector<64x128xf32>, vector<128x128xf32>, vector<64x128xf32> -> vector<64x128xf32>
    %29 = arith.addf %23, %28 : vector<64x128xf32>
    %c1_52 = arith.constant 1 : index
    %c0_53 = arith.constant 0 : index
    %c0_54 = arith.constant 0 : index
    %30 = vector.load %arg12[%c1_52, %c0_53, %c0_54] : memref<10x10x128xf32, #tpu.memory_space<vmem>>, vector<8x8x128xf32>
    %31 = vector.shape_cast %30 : vector<8x8x128xf32> to vector<64x128xf32>
    %c0_55 = arith.constant 0 : index
    %c3 = arith.constant 3 : index
    %c0_56 = arith.constant 0 : index
    %c0_57 = arith.constant 0 : index
    %32 = vector.load %arg2[%c0_55, %c3, %c0_56, %c0_57] : memref<6x9x128x128xf32, #tpu.memory_space<vmem>>, vector<1x1x128x128xf32>
    %33 = vector.shape_cast %32 : vector<1x1x128x128xf32> to vector<128x128xf32>
    %cst_58 = arith.constant dense<0.000000e+00> : vector<64x128xf32>
    %34 = tpu.matmul %31, %33, %cst_58 {dimension_numbers = #tpu.dot_dimension_numbers<[1], [0], [0], [1], [0, 0, 1, 1], [], []>} : vector<64x128xf32>, vector<128x128xf32>, vector<64x128xf32> -> vector<64x128xf32>
    %35 = arith.addf %29, %34 : vector<64x128xf32>
    %c1_59 = arith.constant 1 : index
    %c1_60 = arith.constant 1 : index
    %c0_61 = arith.constant 0 : index
    %36 = vector.load %arg12[%c1_59, %c1_60, %c0_61] : memref<10x10x128xf32, #tpu.memory_space<vmem>>, vector<8x8x128xf32>
    %37 = vector.shape_cast %36 : vector<8x8x128xf32> to vector<64x128xf32>
    %c0_62 = arith.constant 0 : index
    %c4 = arith.constant 4 : index
    %c0_63 = arith.constant 0 : index
    %c0_64 = arith.constant 0 : index
    %38 = vector.load %arg2[%c0_62, %c4, %c0_63, %c0_64] : memref<6x9x128x128xf32, #tpu.memory_space<vmem>>, vector<1x1x128x128xf32>
    %39 = vector.shape_cast %38 : vector<1x1x128x128xf32> to vector<128x128xf32>
    %cst_65 = arith.constant dense<0.000000e+00> : vector<64x128xf32>
    %40 = tpu.matmul %37, %39, %cst_65 {dimension_numbers = #tpu.dot_dimension_numbers<[1], [0], [0], [1], [0, 0, 1, 1], [], []>} : vector<64x128xf32>, vector<128x128xf32>, vector<64x128xf32> -> vector<64x128xf32>
    %41 = arith.addf %35, %40 : vector<64x128xf32>
    %c1_66 = arith.constant 1 : index
    %c2_67 = arith.constant 2 : index
    %c0_68 = arith.constant 0 : index
    %42 = vector.load %arg12[%c1_66, %c2_67, %c0_68] : memref<10x10x128xf32, #tpu.memory_space<vmem>>, vector<8x8x128xf32>
    %43 = vector.shape_cast %42 : vector<8x8x128xf32> to vector<64x128xf32>
    %c0_69 = arith.constant 0 : index
    %c5 = arith.constant 5 : index
    %c0_70 = arith.constant 0 : index
    %c0_71 = arith.constant 0 : index
    %44 = vector.load %arg2[%c0_69, %c5, %c0_70, %c0_71] : memref<6x9x128x128xf32, #tpu.memory_space<vmem>>, vector<1x1x128x128xf32>
    %45 = vector.shape_cast %44 : vector<1x1x128x128xf32> to vector<128x128xf32>
    %cst_72 = arith.constant dense<0.000000e+00> : vector<64x128xf32>
    %46 = tpu.matmul %43, %45, %cst_72 {dimension_numbers = #tpu.dot_dimension_numbers<[1], [0], [0], [1], [0, 0, 1, 1], [], []>} : vector<64x128xf32>, vector<128x128xf32>, vector<64x128xf32> -> vector<64x128xf32>
    %47 = arith.addf %41, %46 : vector<64x128xf32>
    %c2_73 = arith.constant 2 : index
    %c0_74 = arith.constant 0 : index
    %c0_75 = arith.constant 0 : index
    %48 = vector.load %arg12[%c2_73, %c0_74, %c0_75] : memref<10x10x128xf32, #tpu.memory_space<vmem>>, vector<8x8x128xf32>
    %49 = vector.shape_cast %48 : vector<8x8x128xf32> to vector<64x128xf32>
    %c0_76 = arith.constant 0 : index
    %c6 = arith.constant 6 : index
    %c0_77 = arith.constant 0 : index
    %c0_78 = arith.constant 0 : index
    %50 = vector.load %arg2[%c0_76, %c6, %c0_77, %c0_78] : memref<6x9x128x128xf32, #tpu.memory_space<vmem>>, vector<1x1x128x128xf32>
    %51 = vector.shape_cast %50 : vector<1x1x128x128xf32> to vector<128x128xf32>
    %cst_79 = arith.constant dense<0.000000e+00> : vector<64x128xf32>
    %52 = tpu.matmul %49, %51, %cst_79 {dimension_numbers = #tpu.dot_dimension_numbers<[1], [0], [0], [1], [0, 0, 1, 1], [], []>} : vector<64x128xf32>, vector<128x128xf32>, vector<64x128xf32> -> vector<64x128xf32>
    %53 = arith.addf %47, %52 : vector<64x128xf32>
    %c2_80 = arith.constant 2 : index
    %c1_81 = arith.constant 1 : index
    %c0_82 = arith.constant 0 : index
    %54 = vector.load %arg12[%c2_80, %c1_81, %c0_82] : memref<10x10x128xf32, #tpu.memory_space<vmem>>, vector<8x8x128xf32>
    %55 = vector.shape_cast %54 : vector<8x8x128xf32> to vector<64x128xf32>
    %c0_83 = arith.constant 0 : index
    %c7 = arith.constant 7 : index
    %c0_84 = arith.constant 0 : index
    %c0_85 = arith.constant 0 : index
    %56 = vector.load %arg2[%c0_83, %c7, %c0_84, %c0_85] : memref<6x9x128x128xf32, #tpu.memory_space<vmem>>, vector<1x1x128x128xf32>
    %57 = vector.shape_cast %56 : vector<1x1x128x128xf32> to vector<128x128xf32>
    %cst_86 = arith.constant dense<0.000000e+00> : vector<64x128xf32>
    %58 = tpu.matmul %55, %57, %cst_86 {dimension_numbers = #tpu.dot_dimension_numbers<[1], [0], [0], [1], [0, 0, 1, 1], [], []>} : vector<64x128xf32>, vector<128x128xf32>, vector<64x128xf32> -> vector<64x128xf32>
    %59 = arith.addf %53, %58 : vector<64x128xf32>
    %c2_87 = arith.constant 2 : index
    %c2_88 = arith.constant 2 : index
    %c0_89 = arith.constant 0 : index
    %60 = vector.load %arg12[%c2_87, %c2_88, %c0_89] : memref<10x10x128xf32, #tpu.memory_space<vmem>>, vector<8x8x128xf32>
    %61 = vector.shape_cast %60 : vector<8x8x128xf32> to vector<64x128xf32>
    %c0_90 = arith.constant 0 : index
    %c8 = arith.constant 8 : index
    %c0_91 = arith.constant 0 : index
    %c0_92 = arith.constant 0 : index
    %62 = vector.load %arg2[%c0_90, %c8, %c0_91, %c0_92] : memref<6x9x128x128xf32, #tpu.memory_space<vmem>>, vector<1x1x128x128xf32>
    %63 = vector.shape_cast %62 : vector<1x1x128x128xf32> to vector<128x128xf32>
    %cst_93 = arith.constant dense<0.000000e+00> : vector<64x128xf32>
    %64 = tpu.matmul %61, %63, %cst_93 {dimension_numbers = #tpu.dot_dimension_numbers<[1], [0], [0], [1], [0, 0, 1, 1], [], []>} : vector<64x128xf32>, vector<128x128xf32>, vector<64x128xf32> -> vector<64x128xf32>
    %65 = arith.addf %59, %64 : vector<64x128xf32>
    %c0_94 = arith.constant 0 : index
    %c0_95 = arith.constant 0 : index
    %66 = vector.load %arg10[%c0_94, %c0_95] : memref<15x128xf32, #tpu.memory_space<vmem>>, vector<1x128xf32>
    %67 = vector.broadcast %66 : vector<1x128xf32> to vector<64x128xf32>
    %68 = arith.addf %65, %67 : vector<64x128xf32>
    %cst_96 = arith.constant 5.000000e-01 : f32
    %69 = vector.broadcast %cst_96 : f32 to vector<64x128xf32>
    %70 = arith.mulf %69, %68 : vector<64x128xf32>
    %cst_97 = arith.constant 0.707106769 : f32
    %71 = vector.broadcast %cst_97 : f32 to vector<64x128xf32>
    %72 = arith.mulf %68, %71 : vector<64x128xf32>
    %73 = math.erf %72 : vector<64x128xf32>
    %cst_98 = arith.constant 1.000000e+00 : f32
    %74 = vector.broadcast %cst_98 : f32 to vector<64x128xf32>
    %75 = arith.addf %74, %73 : vector<64x128xf32>
    %76 = arith.mulf %70, %75 : vector<64x128xf32>
    %77 = vector.shape_cast %76 : vector<64x128xf32> to vector<8x8x128xf32>
    %c1_99 = arith.constant 1 : index
    %c1_100 = arith.constant 1 : index
    %c0_101 = arith.constant 0 : index
    %78 = vector.load %arg13[%c1_99, %c1_100, %c0_101] : memref<10x10x128xf32, #tpu.memory_space<vmem>>, vector<8x8x128xf32>
    tpu.vector_store %arg13[%c1_99, %c1_100, %c0_101], %77 {strides = array<i32>} : memref<10x10x128xf32, #tpu.memory_space<vmem>>, vector<8x8x128xf32>,
    %c0_102 = arith.constant 0 : index
    %c0_103 = arith.constant 0 : index
    %c0_104 = arith.constant 0 : index
    %79 = vector.load %arg13[%c0_102, %c0_103, %c0_104] : memref<10x10x128xf32, #tpu.memory_space<vmem>>, vector<8x8x128xf32>
    %80 = vector.shape_cast %79 : vector<8x8x128xf32> to vector<64x128xf32>
    %c1_105 = arith.constant 1 : index
    %c0_106 = arith.constant 0 : index
    %c0_107 = arith.constant 0 : index
    %c0_108 = arith.constant 0 : index
    %81 = vector.load %arg2[%c1_105, %c0_106, %c0_107, %c0_108] : memref<6x9x128x128xf32, #tpu.memory_space<vmem>>, vector<1x1x128x128xf32>
    %82 = vector.shape_cast %81 : vector<1x1x128x128xf32> to vector<128x128xf32>
    %cst_109 = arith.constant dense<0.000000e+00> : vector<64x128xf32>
    %83 = tpu.matmul %80, %82, %cst_109 {dimension_numbers = #tpu.dot_dimension_numbers<[1], [0], [0], [1], [0, 0, 1, 1], [], []>} : vector<64x128xf32>, vector<128x128xf32>, vector<64x128xf32> -> vector<64x128xf32>
    %c0_110 = arith.constant 0 : index
    %c1_111 = arith.constant 1 : index
    %c0_112 = arith.constant 0 : index
    %84 = vector.load %arg13[%c0_110, %c1_111, %c0_112] : memref<10x10x128xf32, #tpu.memory_space<vmem>>, vector<8x8x128xf32>
    %85 = vector.shape_cast %84 : vector<8x8x128xf32> to vector<64x128xf32>
    %c1_113 = arith.constant 1 : index
    %c1_114 = arith.constant 1 : index
    %c0_115 = arith.constant 0 : index
    %c0_116 = arith.constant 0 : index
    %86 = vector.load %arg2[%c1_113, %c1_114, %c0_115, %c0_116] : memref<6x9x128x128xf32, #tpu.memory_space<vmem>>, vector<1x1x128x128xf32>
    %87 = vector.shape_cast %86 : vector<1x1x128x128xf32> to vector<128x128xf32>
    %cst_117 = arith.constant dense<0.000000e+00> : vector<64x128xf32>
    %88 = tpu.matmul %85, %87, %cst_117 {dimension_numbers = #tpu.dot_dimension_numbers<[1], [0], [0], [1], [0, 0, 1, 1], [], []>} : vector<64x128xf32>, vector<128x128xf32>, vector<64x128xf32> -> vector<64x128xf32>
    %89 = arith.addf %83, %88 : vector<64x128xf32>
    %c0_118 = arith.constant 0 : index
    %c2_119 = arith.constant 2 : index
    %c0_120 = arith.constant 0 : index
    %90 = vector.load %arg13[%c0_118, %c2_119, %c0_120] : memref<10x10x128xf32, #tpu.memory_space<vmem>>, vector<8x8x128xf32>
    %91 = vector.shape_cast %90 : vector<8x8x128xf32> to vector<64x128xf32>
    %c1_121 = arith.constant 1 : index
    %c2_122 = arith.constant 2 : index
    %c0_123 = arith.constant 0 : index
    %c0_124 = arith.constant 0 : index
    %92 = vector.load %arg2[%c1_121, %c2_122, %c0_123, %c0_124] : memref<6x9x128x128xf32, #tpu.memory_space<vmem>>, vector<1x1x128x128xf32>
    %93 = vector.shape_cast %92 : vector<1x1x128x128xf32> to vector<128x128xf32>
    %cst_125 = arith.constant dense<0.000000e+00> : vector<64x128xf32>
    %94 = tpu.matmul %91, %93, %cst_125 {dimension_numbers = #tpu.dot_dimension_numbers<[1], [0], [0], [1], [0, 0, 1, 1], [], []>} : vector<64x128xf32>, vector<128x128xf32>, vector<64x128xf32> -> vector<64x128xf32>
    %95 = arith.addf %89, %94 : vector<64x128xf32>
    %c1_126 = arith.constant 1 : index
    %c0_127 = arith.constant 0 : index
    %c0_128 = arith.constant 0 : index
    %96 = vector.load %arg13[%c1_126, %c0_127, %c0_128] : memref<10x10x128xf32, #tpu.memory_space<vmem>>, vector<8x8x128xf32>
    %97 = vector.shape_cast %96 : vector<8x8x128xf32> to vector<64x128xf32>
    %c1_129 = arith.constant 1 : index
    %c3_130 = arith.constant 3 : index
    %c0_131 = arith.constant 0 : index
    %c0_132 = arith.constant 0 : index
    %98 = vector.load %arg2[%c1_129, %c3_130, %c0_131, %c0_132] : memref<6x9x128x128xf32, #tpu.memory_space<vmem>>, vector<1x1x128x128xf32>
    %99 = vector.shape_cast %98 : vector<1x1x128x128xf32> to vector<128x128xf32>
    %cst_133 = arith.constant dense<0.000000e+00> : vector<64x128xf32>
    %100 = tpu.matmul %97, %99, %cst_133 {dimension_numbers = #tpu.dot_dimension_numbers<[1], [0], [0], [1], [0, 0, 1, 1], [], []>} : vector<64x128xf32>, vector<128x128xf32>, vector<64x128xf32> -> vector<64x128xf32>
    %101 = arith.addf %95, %100 : vector<64x128xf32>
    %c1_134 = arith.constant 1 : index
    %c1_135 = arith.constant 1 : index
    %c0_136 = arith.constant 0 : index
    %102 = vector.load %arg13[%c1_134, %c1_135, %c0_136] : memref<10x10x128xf32, #tpu.memory_space<vmem>>, vector<8x8x128xf32>
    %103 = vector.shape_cast %102 : vector<8x8x128xf32> to vector<64x128xf32>
    %c1_137 = arith.constant 1 : index
    %c4_138 = arith.constant 4 : index
    %c0_139 = arith.constant 0 : index
    %c0_140 = arith.constant 0 : index
    %104 = vector.load %arg2[%c1_137, %c4_138, %c0_139, %c0_140] : memref<6x9x128x128xf32, #tpu.memory_space<vmem>>, vector<1x1x128x128xf32>
    %105 = vector.shape_cast %104 : vector<1x1x128x128xf32> to vector<128x128xf32>
    %cst_141 = arith.constant dense<0.000000e+00> : vector<64x128xf32>
    %106 = tpu.matmul %103, %105, %cst_141 {dimension_numbers = #tpu.dot_dimension_numbers<[1], [0], [0], [1], [0, 0, 1, 1], [], []>} : vector<64x128xf32>, vector<128x128xf32>, vector<64x128xf32> -> vector<64x128xf32>
    %107 = arith.addf %101, %106 : vector<64x128xf32>
    %c1_142 = arith.constant 1 : index
    %c2_143 = arith.constant 2 : index
    %c0_144 = arith.constant 0 : index
    %108 = vector.load %arg13[%c1_142, %c2_143, %c0_144] : memref<10x10x128xf32, #tpu.memory_space<vmem>>, vector<8x8x128xf32>
    %109 = vector.shape_cast %108 : vector<8x8x128xf32> to vector<64x128xf32>
    %c1_145 = arith.constant 1 : index
    %c5_146 = arith.constant 5 : index
    %c0_147 = arith.constant 0 : index
    %c0_148 = arith.constant 0 : index
    %110 = vector.load %arg2[%c1_145, %c5_146, %c0_147, %c0_148] : memref<6x9x128x128xf32, #tpu.memory_space<vmem>>, vector<1x1x128x128xf32>
    %111 = vector.shape_cast %110 : vector<1x1x128x128xf32> to vector<128x128xf32>
    %cst_149 = arith.constant dense<0.000000e+00> : vector<64x128xf32>
    %112 = tpu.matmul %109, %111, %cst_149 {dimension_numbers = #tpu.dot_dimension_numbers<[1], [0], [0], [1], [0, 0, 1, 1], [], []>} : vector<64x128xf32>, vector<128x128xf32>, vector<64x128xf32> -> vector<64x128xf32>
    %113 = arith.addf %107, %112 : vector<64x128xf32>
    %c2_150 = arith.constant 2 : index
    %c0_151 = arith.constant 0 : index
    %c0_152 = arith.constant 0 : index
    %114 = vector.load %arg13[%c2_150, %c0_151, %c0_152] : memref<10x10x128xf32, #tpu.memory_space<vmem>>, vector<8x8x128xf32>
    %115 = vector.shape_cast %114 : vector<8x8x128xf32> to vector<64x128xf32>
    %c1_153 = arith.constant 1 : index
    %c6_154 = arith.constant 6 : index
    %c0_155 = arith.constant 0 : index
    %c0_156 = arith.constant 0 : index
    %116 = vector.load %arg2[%c1_153, %c6_154, %c0_155, %c0_156] : memref<6x9x128x128xf32, #tpu.memory_space<vmem>>, vector<1x1x128x128xf32>
    %117 = vector.shape_cast %116 : vector<1x1x128x128xf32> to vector<128x128xf32>
    %cst_157 = arith.constant dense<0.000000e+00> : vector<64x128xf32>
    %118 = tpu.matmul %115, %117, %cst_157 {dimension_numbers = #tpu.dot_dimension_numbers<[1], [0], [0], [1], [0, 0, 1, 1], [], []>} : vector<64x128xf32>, vector<128x128xf32>, vector<64x128xf32> -> vector<64x128xf32>
    %119 = arith.addf %113, %118 : vector<64x128xf32>
    %c2_158 = arith.constant 2 : index
    %c1_159 = arith.constant 1 : index
    %c0_160 = arith.constant 0 : index
    %120 = vector.load %arg13[%c2_158, %c1_159, %c0_160] : memref<10x10x128xf32, #tpu.memory_space<vmem>>, vector<8x8x128xf32>
    %121 = vector.shape_cast %120 : vector<8x8x128xf32> to vector<64x128xf32>
    %c1_161 = arith.constant 1 : index
    %c7_162 = arith.constant 7 : index
    %c0_163 = arith.constant 0 : index
    %c0_164 = arith.constant 0 : index
    %122 = vector.load %arg2[%c1_161, %c7_162, %c0_163, %c0_164] : memref<6x9x128x128xf32, #tpu.memory_space<vmem>>, vector<1x1x128x128xf32>
    %123 = vector.shape_cast %122 : vector<1x1x128x128xf32> to vector<128x128xf32>
    %cst_165 = arith.constant dense<0.000000e+00> : vector<64x128xf32>
    %124 = tpu.matmul %121, %123, %cst_165 {dimension_numbers = #tpu.dot_dimension_numbers<[1], [0], [0], [1], [0, 0, 1, 1], [], []>} : vector<64x128xf32>, vector<128x128xf32>, vector<64x128xf32> -> vector<64x128xf32>
    %125 = arith.addf %119, %124 : vector<64x128xf32>
    %c2_166 = arith.constant 2 : index
    %c2_167 = arith.constant 2 : index
    %c0_168 = arith.constant 0 : index
    %126 = vector.load %arg13[%c2_166, %c2_167, %c0_168] : memref<10x10x128xf32, #tpu.memory_space<vmem>>, vector<8x8x128xf32>
    %127 = vector.shape_cast %126 : vector<8x8x128xf32> to vector<64x128xf32>
    %c1_169 = arith.constant 1 : index
    %c8_170 = arith.constant 8 : index
    %c0_171 = arith.constant 0 : index
    %c0_172 = arith.constant 0 : index
    %128 = vector.load %arg2[%c1_169, %c8_170, %c0_171, %c0_172] : memref<6x9x128x128xf32, #tpu.memory_space<vmem>>, vector<1x1x128x128xf32>
    %129 = vector.shape_cast %128 : vector<1x1x128x128xf32> to vector<128x128xf32>
    %cst_173 = arith.constant dense<0.000000e+00> : vector<64x128xf32>
    %130 = tpu.matmul %127, %129, %cst_173 {dimension_numbers = #tpu.dot_dimension_numbers<[1], [0], [0], [1], [0, 0, 1, 1], [], []>} : vector<64x128xf32>, vector<128x128xf32>, vector<64x128xf32> -> vector<64x128xf32>
    %131 = arith.addf %125, %130 : vector<64x128xf32>
    %c1_174 = arith.constant 1 : index
    %c0_175 = arith.constant 0 : index
    %132 = vector.load %arg10[%c1_174, %c0_175] : memref<15x128xf32, #tpu.memory_space<vmem>>, vector<1x128xf32>
    %133 = vector.broadcast %132 : vector<1x128xf32> to vector<64x128xf32>
    %134 = arith.addf %131, %133 : vector<64x128xf32>
    %cst_176 = arith.constant 5.000000e-01 : f32
    %135 = vector.broadcast %cst_176 : f32 to vector<64x128xf32>
    %136 = arith.mulf %135, %134 : vector<64x128xf32>
    %cst_177 = arith.constant 0.707106769 : f32
    %137 = vector.broadcast %cst_177 : f32 to vector<64x128xf32>
    %138 = arith.mulf %134, %137 : vector<64x128xf32>
    %139 = math.erf %138 : vector<64x128xf32>
    %cst_178 = arith.constant 1.000000e+00 : f32
    %140 = vector.broadcast %cst_178 : f32 to vector<64x128xf32>
    %141 = arith.addf %140, %139 : vector<64x128xf32>
    %142 = arith.mulf %136, %141 : vector<64x128xf32>
    %143 = vector.shape_cast %142 : vector<64x128xf32> to vector<8x8x128xf32>
    %c1_179 = arith.constant 1 : index
    %c1_180 = arith.constant 1 : index
    %c0_181 = arith.constant 0 : index
    %144 = vector.load %arg12[%c1_179, %c1_180, %c0_181] : memref<10x10x128xf32, #tpu.memory_space<vmem>>, vector<8x8x128xf32>
    tpu.vector_store %arg12[%c1_179, %c1_180, %c0_181], %143 {strides = array<i32>} : memref<10x10x128xf32, #tpu.memory_space<vmem>>, vector<8x8x128xf32>,
    %c0_182 = arith.constant 0 : index
    %c0_183 = arith.constant 0 : index
    %c0_184 = arith.constant 0 : index
    %145 = vector.load %arg12[%c0_182, %c0_183, %c0_184] : memref<10x10x128xf32, #tpu.memory_space<vmem>>, vector<8x8x128xf32>
    %146 = vector.shape_cast %145 : vector<8x8x128xf32> to vector<64x128xf32>
    %c2_185 = arith.constant 2 : index
    %c0_186 = arith.constant 0 : index
    %c0_187 = arith.constant 0 : index
    %c0_188 = arith.constant 0 : index
    %147 = vector.load %arg2[%c2_185, %c0_186, %c0_187, %c0_188] : memref<6x9x128x128xf32, #tpu.memory_space<vmem>>, vector<1x1x128x128xf32>
    %148 = vector.shape_cast %147 : vector<1x1x128x128xf32> to vector<128x128xf32>
    %cst_189 = arith.constant dense<0.000000e+00> : vector<64x128xf32>
    %149 = tpu.matmul %146, %148, %cst_189 {dimension_numbers = #tpu.dot_dimension_numbers<[1], [0], [0], [1], [0, 0, 1, 1], [], []>} : vector<64x128xf32>, vector<128x128xf32>, vector<64x128xf32> -> vector<64x128xf32>
    %c0_190 = arith.constant 0 : index
    %c1_191 = arith.constant 1 : index
    %c0_192 = arith.constant 0 : index
    %150 = vector.load %arg12[%c0_190, %c1_191, %c0_192] : memref<10x10x128xf32, #tpu.memory_space<vmem>>, vector<8x8x128xf32>
    %151 = vector.shape_cast %150 : vector<8x8x128xf32> to vector<64x128xf32>
    %c2_193 = arith.constant 2 : index
    %c1_194 = arith.constant 1 : index
    %c0_195 = arith.constant 0 : index
    %c0_196 = arith.constant 0 : index
    %152 = vector.load %arg2[%c2_193, %c1_194, %c0_195, %c0_196] : memref<6x9x128x128xf32, #tpu.memory_space<vmem>>, vector<1x1x128x128xf32>
    %153 = vector.shape_cast %152 : vector<1x1x128x128xf32> to vector<128x128xf32>
    %cst_197 = arith.constant dense<0.000000e+00> : vector<64x128xf32>
    %154 = tpu.matmul %151, %153, %cst_197 {dimension_numbers = #tpu.dot_dimension_numbers<[1], [0], [0], [1], [0, 0, 1, 1], [], []>} : vector<64x128xf32>, vector<128x128xf32>, vector<64x128xf32> -> vector<64x128xf32>
    %155 = arith.addf %149, %154 : vector<64x128xf32>
    %c0_198 = arith.constant 0 : index
    %c2_199 = arith.constant 2 : index
    %c0_200 = arith.constant 0 : index
    %156 = vector.load %arg12[%c0_198, %c2_199, %c0_200] : memref<10x10x128xf32, #tpu.memory_space<vmem>>, vector<8x8x128xf32>
    %157 = vector.shape_cast %156 : vector<8x8x128xf32> to vector<64x128xf32>
    %c2_201 = arith.constant 2 : index
    %c2_202 = arith.constant 2 : index
    %c0_203 = arith.constant 0 : index
    %c0_204 = arith.constant 0 : index
    %158 = vector.load %arg2[%c2_201, %c2_202, %c0_203, %c0_204] : memref<6x9x128x128xf32, #tpu.memory_space<vmem>>, vector<1x1x128x128xf32>
    %159 = vector.shape_cast %158 : vector<1x1x128x128xf32> to vector<128x128xf32>
    %cst_205 = arith.constant dense<0.000000e+00> : vector<64x128xf32>
    %160 = tpu.matmul %157, %159, %cst_205 {dimension_numbers = #tpu.dot_dimension_numbers<[1], [0], [0], [1], [0, 0, 1, 1], [], []>} : vector<64x128xf32>, vector<128x128xf32>, vector<64x128xf32> -> vector<64x128xf32>
    %161 = arith.addf %155, %160 : vector<64x128xf32>
    %c1_206 = arith.constant 1 : index
    %c0_207 = arith.constant 0 : index
    %c0_208 = arith.constant 0 : index
    %162 = vector.load %arg12[%c1_206, %c0_207, %c0_208] : memref<10x10x128xf32, #tpu.memory_space<vmem>>, vector<8x8x128xf32>
    %163 = vector.shape_cast %162 : vector<8x8x128xf32> to vector<64x128xf32>
    %c2_209 = arith.constant 2 : index
    %c3_210 = arith.constant 3 : index
    %c0_211 = arith.constant 0 : index
    %c0_212 = arith.constant 0 : index
    %164 = vector.load %arg2[%c2_209, %c3_210, %c0_211, %c0_212] : memref<6x9x128x128xf32, #tpu.memory_space<vmem>>, vector<1x1x128x128xf32>
    %165 = vector.shape_cast %164 : vector<1x1x128x128xf32> to vector<128x128xf32>
    %cst_213 = arith.constant dense<0.000000e+00> : vector<64x128xf32>
    %166 = tpu.matmul %163, %165, %cst_213 {dimension_numbers = #tpu.dot_dimension_numbers<[1], [0], [0], [1], [0, 0, 1, 1], [], []>} : vector<64x128xf32>, vector<128x128xf32>, vector<64x128xf32> -> vector<64x128xf32>
    %167 = arith.addf %161, %166 : vector<64x128xf32>
    %c1_214 = arith.constant 1 : index
    %c1_215 = arith.constant 1 : index
    %c0_216 = arith.constant 0 : index
    %168 = vector.load %arg12[%c1_214, %c1_215, %c0_216] : memref<10x10x128xf32, #tpu.memory_space<vmem>>, vector<8x8x128xf32>
    %169 = vector.shape_cast %168 : vector<8x8x128xf32> to vector<64x128xf32>
    %c2_217 = arith.constant 2 : index
    %c4_218 = arith.constant 4 : index
    %c0_219 = arith.constant 0 : index
    %c0_220 = arith.constant 0 : index
    %170 = vector.load %arg2[%c2_217, %c4_218, %c0_219, %c0_220] : memref<6x9x128x128xf32, #tpu.memory_space<vmem>>, vector<1x1x128x128xf32>
    %171 = vector.shape_cast %170 : vector<1x1x128x128xf32> to vector<128x128xf32>
    %cst_221 = arith.constant dense<0.000000e+00> : vector<64x128xf32>
    %172 = tpu.matmul %169, %171, %cst_221 {dimension_numbers = #tpu.dot_dimension_numbers<[1], [0], [0], [1], [0, 0, 1, 1], [], []>} : vector<64x128xf32>, vector<128x128xf32>, vector<64x128xf32> -> vector<64x128xf32>
    %173 = arith.addf %167, %172 : vector<64x128xf32>
    %c1_222 = arith.constant 1 : index
    %c2_223 = arith.constant 2 : index
    %c0_224 = arith.constant 0 : index
    %174 = vector.load %arg12[%c1_222, %c2_223, %c0_224] : memref<10x10x128xf32, #tpu.memory_space<vmem>>, vector<8x8x128xf32>
    %175 = vector.shape_cast %174 : vector<8x8x128xf32> to vector<64x128xf32>
    %c2_225 = arith.constant 2 : index
    %c5_226 = arith.constant 5 : index
    %c0_227 = arith.constant 0 : index
    %c0_228 = arith.constant 0 : index
    %176 = vector.load %arg2[%c2_225, %c5_226, %c0_227, %c0_228] : memref<6x9x128x128xf32, #tpu.memory_space<vmem>>, vector<1x1x128x128xf32>
    %177 = vector.shape_cast %176 : vector<1x1x128x128xf32> to vector<128x128xf32>
    %cst_229 = arith.constant dense<0.000000e+00> : vector<64x128xf32>
    %178 = tpu.matmul %175, %177, %cst_229 {dimension_numbers = #tpu.dot_dimension_numbers<[1], [0], [0], [1], [0, 0, 1, 1], [], []>} : vector<64x128xf32>, vector<128x128xf32>, vector<64x128xf32> -> vector<64x128xf32>
    %179 = arith.addf %173, %178 : vector<64x128xf32>
    %c2_230 = arith.constant 2 : index
    %c0_231 = arith.constant 0 : index
    %c0_232 = arith.constant 0 : index
    %180 = vector.load %arg12[%c2_230, %c0_231, %c0_232] : memref<10x10x128xf32, #tpu.memory_space<vmem>>, vector<8x8x128xf32>
    %181 = vector.shape_cast %180 : vector<8x8x128xf32> to vector<64x128xf32>
    %c2_233 = arith.constant 2 : index
    %c6_234 = arith.constant 6 : index
    %c0_235 = arith.constant 0 : index
    %c0_236 = arith.constant 0 : index
    %182 = vector.load %arg2[%c2_233, %c6_234, %c0_235, %c0_236] : memref<6x9x128x128xf32, #tpu.memory_space<vmem>>, vector<1x1x128x128xf32>
    %183 = vector.shape_cast %182 : vector<1x1x128x128xf32> to vector<128x128xf32>
    %cst_237 = arith.constant dense<0.000000e+00> : vector<64x128xf32>
    %184 = tpu.matmul %181, %183, %cst_237 {dimension_numbers = #tpu.dot_dimension_numbers<[1], [0], [0], [1], [0, 0, 1, 1], [], []>} : vector<64x128xf32>, vector<128x128xf32>, vector<64x128xf32> -> vector<64x128xf32>
    %185 = arith.addf %179, %184 : vector<64x128xf32>
    %c2_238 = arith.constant 2 : index
    %c1_239 = arith.constant 1 : index
    %c0_240 = arith.constant 0 : index
    %186 = vector.load %arg12[%c2_238, %c1_239, %c0_240] : memref<10x10x128xf32, #tpu.memory_space<vmem>>, vector<8x8x128xf32>
    %187 = vector.shape_cast %186 : vector<8x8x128xf32> to vector<64x128xf32>
    %c2_241 = arith.constant 2 : index
    %c7_242 = arith.constant 7 : index
    %c0_243 = arith.constant 0 : index
    %c0_244 = arith.constant 0 : index
    %188 = vector.load %arg2[%c2_241, %c7_242, %c0_243, %c0_244] : memref<6x9x128x128xf32, #tpu.memory_space<vmem>>, vector<1x1x128x128xf32>
    %189 = vector.shape_cast %188 : vector<1x1x128x128xf32> to vector<128x128xf32>
    %cst_245 = arith.constant dense<0.000000e+00> : vector<64x128xf32>
    %190 = tpu.matmul %187, %189, %cst_245 {dimension_numbers = #tpu.dot_dimension_numbers<[1], [0], [0], [1], [0, 0, 1, 1], [], []>} : vector<64x128xf32>, vector<128x128xf32>, vector<64x128xf32> -> vector<64x128xf32>
    %191 = arith.addf %185, %190 : vector<64x128xf32>
    %c2_246 = arith.constant 2 : index
    %c2_247 = arith.constant 2 : index
    %c0_248 = arith.constant 0 : index
    %192 = vector.load %arg12[%c2_246, %c2_247, %c0_248] : memref<10x10x128xf32, #tpu.memory_space<vmem>>, vector<8x8x128xf32>
    %193 = vector.shape_cast %192 : vector<8x8x128xf32> to vector<64x128xf32>
    %c2_249 = arith.constant 2 : index
    %c8_250 = arith.constant 8 : index
    %c0_251 = arith.constant 0 : index
    %c0_252 = arith.constant 0 : index
    %194 = vector.load %arg2[%c2_249, %c8_250, %c0_251, %c0_252] : memref<6x9x128x128xf32, #tpu.memory_space<vmem>>, vector<1x1x128x128xf32>
    %195 = vector.shape_cast %194 : vector<1x1x128x128xf32> to vector<128x128xf32>
    %cst_253 = arith.constant dense<0.000000e+00> : vector<64x128xf32>
    %196 = tpu.matmul %193, %195, %cst_253 {dimension_numbers = #tpu.dot_dimension_numbers<[1], [0], [0], [1], [0, 0, 1, 1], [], []>} : vector<64x128xf32>, vector<128x128xf32>, vector<64x128xf32> -> vector<64x128xf32>
    %197 = arith.addf %191, %196 : vector<64x128xf32>
    %c2_254 = arith.constant 2 : index
    %c0_255 = arith.constant 0 : index
    %198 = vector.load %arg10[%c2_254, %c0_255] : memref<15x128xf32, #tpu.memory_space<vmem>>, vector<1x128xf32>
    %199 = vector.broadcast %198 : vector<1x128xf32> to vector<64x128xf32>
    %200 = arith.addf %197, %199 : vector<64x128xf32>
    %c1_256 = arith.constant 1 : index
    %c1_257 = arith.constant 1 : index
    %c0_258 = arith.constant 0 : index
    %201 = vector.load %arg13[%c1_256, %c1_257, %c0_258] : memref<10x10x128xf32, #tpu.memory_space<vmem>>, vector<8x8x128xf32>
    %202 = vector.shape_cast %201 : vector<8x8x128xf32> to vector<64x128xf32>
    %203 = arith.addf %200, %202 : vector<64x128xf32>
    %204 = vector.shape_cast %203 : vector<64x128xf32> to vector<8x8x128xf32>
    %c1_259 = arith.constant 1 : index
    %c1_260 = arith.constant 1 : index
    %c0_261 = arith.constant 0 : index
    %205 = vector.load %arg13[%c1_259, %c1_260, %c0_261] : memref<10x10x128xf32, #tpu.memory_space<vmem>>, vector<8x8x128xf32>
    tpu.vector_store %arg13[%c1_259, %c1_260, %c0_261], %204 {strides = array<i32>} : memref<10x10x128xf32, #tpu.memory_space<vmem>>, vector<8x8x128xf32>,
    %c0_262 = arith.constant 0 : index
    %c0_263 = arith.constant 0 : index
    %c0_264 = arith.constant 0 : index
    %206 = vector.load %arg13[%c0_262, %c0_263, %c0_264] : memref<10x10x128xf32, #tpu.memory_space<vmem>>, vector<8x8x128xf32>
    %207 = vector.shape_cast %206 : vector<8x8x128xf32> to vector<64x128xf32>
    %c3_265 = arith.constant 3 : index
    %c0_266 = arith.constant 0 : index
    %c0_267 = arith.constant 0 : index
    %c0_268 = arith.constant 0 : index
    %208 = vector.load %arg2[%c3_265, %c0_266, %c0_267, %c0_268] : memref<6x9x128x128xf32, #tpu.memory_space<vmem>>, vector<1x1x128x128xf32>
    %209 = vector.shape_cast %208 : vector<1x1x128x128xf32> to vector<128x128xf32>
    %cst_269 = arith.constant dense<0.000000e+00> : vector<64x128xf32>
    %210 = tpu.matmul %207, %209, %cst_269 {dimension_numbers = #tpu.dot_dimension_numbers<[1], [0], [0], [1], [0, 0, 1, 1], [], []>} : vector<64x128xf32>, vector<128x128xf32>, vector<64x128xf32> -> vector<64x128xf32>
    %c0_270 = arith.constant 0 : index
    %c1_271 = arith.constant 1 : index
    %c0_272 = arith.constant 0 : index
    %211 = vector.load %arg13[%c0_270, %c1_271, %c0_272] : memref<10x10x128xf32, #tpu.memory_space<vmem>>, vector<8x8x128xf32>
    %212 = vector.shape_cast %211 : vector<8x8x128xf32> to vector<64x128xf32>
    %c3_273 = arith.constant 3 : index
    %c1_274 = arith.constant 1 : index
    %c0_275 = arith.constant 0 : index
    %c0_276 = arith.constant 0 : index
    %213 = vector.load %arg2[%c3_273, %c1_274, %c0_275, %c0_276] : memref<6x9x128x128xf32, #tpu.memory_space<vmem>>, vector<1x1x128x128xf32>
    %214 = vector.shape_cast %213 : vector<1x1x128x128xf32> to vector<128x128xf32>
    %cst_277 = arith.constant dense<0.000000e+00> : vector<64x128xf32>
    %215 = tpu.matmul %212, %214, %cst_277 {dimension_numbers = #tpu.dot_dimension_numbers<[1], [0], [0], [1], [0, 0, 1, 1], [], []>} : vector<64x128xf32>, vector<128x128xf32>, vector<64x128xf32> -> vector<64x128xf32>
    %216 = arith.addf %210, %215 : vector<64x128xf32>
    %c0_278 = arith.constant 0 : index
    %c2_279 = arith.constant 2 : index
    %c0_280 = arith.constant 0 : index
    %217 = vector.load %arg13[%c0_278, %c2_279, %c0_280] : memref<10x10x128xf32, #tpu.memory_space<vmem>>, vector<8x8x128xf32>
    %218 = vector.shape_cast %217 : vector<8x8x128xf32> to vector<64x128xf32>
    %c3_281 = arith.constant 3 : index
    %c2_282 = arith.constant 2 : index
    %c0_283 = arith.constant 0 : index
    %c0_284 = arith.constant 0 : index
    %219 = vector.load %arg2[%c3_281, %c2_282, %c0_283, %c0_284] : memref<6x9x128x128xf32, #tpu.memory_space<vmem>>, vector<1x1x128x128xf32>
    %220 = vector.shape_cast %219 : vector<1x1x128x128xf32> to vector<128x128xf32>
    %cst_285 = arith.constant dense<0.000000e+00> : vector<64x128xf32>
    %221 = tpu.matmul %218, %220, %cst_285 {dimension_numbers = #tpu.dot_dimension_numbers<[1], [0], [0], [1], [0, 0, 1, 1], [], []>} : vector<64x128xf32>, vector<128x128xf32>, vector<64x128xf32> -> vector<64x128xf32>
    %222 = arith.addf %216, %221 : vector<64x128xf32>
    %c1_286 = arith.constant 1 : index
    %c0_287 = arith.constant 0 : index
    %c0_288 = arith.constant 0 : index
    %223 = vector.load %arg13[%c1_286, %c0_287, %c0_288] : memref<10x10x128xf32, #tpu.memory_space<vmem>>, vector<8x8x128xf32>
    %224 = vector.shape_cast %223 : vector<8x8x128xf32> to vector<64x128xf32>
    %c3_289 = arith.constant 3 : index
    %c3_290 = arith.constant 3 : index
    %c0_291 = arith.constant 0 : index
    %c0_292 = arith.constant 0 : index
    %225 = vector.load %arg2[%c3_289, %c3_290, %c0_291, %c0_292] : memref<6x9x128x128xf32, #tpu.memory_space<vmem>>, vector<1x1x128x128xf32>
    %226 = vector.shape_cast %225 : vector<1x1x128x128xf32> to vector<128x128xf32>
    %cst_293 = arith.constant dense<0.000000e+00> : vector<64x128xf32>
    %227 = tpu.matmul %224, %226, %cst_293 {dimension_numbers = #tpu.dot_dimension_numbers<[1], [0], [0], [1], [0, 0, 1, 1], [], []>} : vector<64x128xf32>, vector<128x128xf32>, vector<64x128xf32> -> vector<64x128xf32>
    %228 = arith.addf %222, %227 : vector<64x128xf32>
    %c1_294 = arith.constant 1 : index
    %c1_295 = arith.constant 1 : index
    %c0_296 = arith.constant 0 : index
    %229 = vector.load %arg13[%c1_294, %c1_295, %c0_296] : memref<10x10x128xf32, #tpu.memory_space<vmem>>, vector<8x8x128xf32>
    %230 = vector.shape_cast %229 : vector<8x8x128xf32> to vector<64x128xf32>
    %c3_297 = arith.constant 3 : index
    %c4_298 = arith.constant 4 : index
    %c0_299 = arith.constant 0 : index
    %c0_300 = arith.constant 0 : index
    %231 = vector.load %arg2[%c3_297, %c4_298, %c0_299, %c0_300] : memref<6x9x128x128xf32, #tpu.memory_space<vmem>>, vector<1x1x128x128xf32>
    %232 = vector.shape_cast %231 : vector<1x1x128x128xf32> to vector<128x128xf32>
    %cst_301 = arith.constant dense<0.000000e+00> : vector<64x128xf32>
    %233 = tpu.matmul %230, %232, %cst_301 {dimension_numbers = #tpu.dot_dimension_numbers<[1], [0], [0], [1], [0, 0, 1, 1], [], []>} : vector<64x128xf32>, vector<128x128xf32>, vector<64x128xf32> -> vector<64x128xf32>
    %234 = arith.addf %228, %233 : vector<64x128xf32>
    %c1_302 = arith.constant 1 : index
    %c2_303 = arith.constant 2 : index
    %c0_304 = arith.constant 0 : index
    %235 = vector.load %arg13[%c1_302, %c2_303, %c0_304] : memref<10x10x128xf32, #tpu.memory_space<vmem>>, vector<8x8x128xf32>
    %236 = vector.shape_cast %235 : vector<8x8x128xf32> to vector<64x128xf32>
    %c3_305 = arith.constant 3 : index
    %c5_306 = arith.constant 5 : index
    %c0_307 = arith.constant 0 : index
    %c0_308 = arith.constant 0 : index
    %237 = vector.load %arg2[%c3_305, %c5_306, %c0_307, %c0_308] : memref<6x9x128x128xf32, #tpu.memory_space<vmem>>, vector<1x1x128x128xf32>
    %238 = vector.shape_cast %237 : vector<1x1x128x128xf32> to vector<128x128xf32>
    %cst_309 = arith.constant dense<0.000000e+00> : vector<64x128xf32>
    %239 = tpu.matmul %236, %238, %cst_309 {dimension_numbers = #tpu.dot_dimension_numbers<[1], [0], [0], [1], [0, 0, 1, 1], [], []>} : vector<64x128xf32>, vector<128x128xf32>, vector<64x128xf32> -> vector<64x128xf32>
    %240 = arith.addf %234, %239 : vector<64x128xf32>
    %c2_310 = arith.constant 2 : index
    %c0_311 = arith.constant 0 : index
    %c0_312 = arith.constant 0 : index
    %241 = vector.load %arg13[%c2_310, %c0_311, %c0_312] : memref<10x10x128xf32, #tpu.memory_space<vmem>>, vector<8x8x128xf32>
    %242 = vector.shape_cast %241 : vector<8x8x128xf32> to vector<64x128xf32>
    %c3_313 = arith.constant 3 : index
    %c6_314 = arith.constant 6 : index
    %c0_315 = arith.constant 0 : index
    %c0_316 = arith.constant 0 : index
    %243 = vector.load %arg2[%c3_313, %c6_314, %c0_315, %c0_316] : memref<6x9x128x128xf32, #tpu.memory_space<vmem>>, vector<1x1x128x128xf32>
    %244 = vector.shape_cast %243 : vector<1x1x128x128xf32> to vector<128x128xf32>
    %cst_317 = arith.constant dense<0.000000e+00> : vector<64x128xf32>
    %245 = tpu.matmul %242, %244, %cst_317 {dimension_numbers = #tpu.dot_dimension_numbers<[1], [0], [0], [1], [0, 0, 1, 1], [], []>} : vector<64x128xf32>, vector<128x128xf32>, vector<64x128xf32> -> vector<64x128xf32>
    %246 = arith.addf %240, %245 : vector<64x128xf32>
    %c2_318 = arith.constant 2 : index
    %c1_319 = arith.constant 1 : index
    %c0_320 = arith.constant 0 : index
    %247 = vector.load %arg13[%c2_318, %c1_319, %c0_320] : memref<10x10x128xf32, #tpu.memory_space<vmem>>, vector<8x8x128xf32>
    %248 = vector.shape_cast %247 : vector<8x8x128xf32> to vector<64x128xf32>
    %c3_321 = arith.constant 3 : index
    %c7_322 = arith.constant 7 : index
    %c0_323 = arith.constant 0 : index
    %c0_324 = arith.constant 0 : index
    %249 = vector.load %arg2[%c3_321, %c7_322, %c0_323, %c0_324] : memref<6x9x128x128xf32, #tpu.memory_space<vmem>>, vector<1x1x128x128xf32>
    %250 = vector.shape_cast %249 : vector<1x1x128x128xf32> to vector<128x128xf32>
    %cst_325 = arith.constant dense<0.000000e+00> : vector<64x128xf32>
    %251 = tpu.matmul %248, %250, %cst_325 {dimension_numbers = #tpu.dot_dimension_numbers<[1], [0], [0], [1], [0, 0, 1, 1], [], []>} : vector<64x128xf32>, vector<128x128xf32>, vector<64x128xf32> -> vector<64x128xf32>
    %252 = arith.addf %246, %251 : vector<64x128xf32>
    %c2_326 = arith.constant 2 : index
    %c2_327 = arith.constant 2 : index
    %c0_328 = arith.constant 0 : index
    %253 = vector.load %arg13[%c2_326, %c2_327, %c0_328] : memref<10x10x128xf32, #tpu.memory_space<vmem>>, vector<8x8x128xf32>
    %254 = vector.shape_cast %253 : vector<8x8x128xf32> to vector<64x128xf32>
    %c3_329 = arith.constant 3 : index
    %c8_330 = arith.constant 8 : index
    %c0_331 = arith.constant 0 : index
    %c0_332 = arith.constant 0 : index
    %255 = vector.load %arg2[%c3_329, %c8_330, %c0_331, %c0_332] : memref<6x9x128x128xf32, #tpu.memory_space<vmem>>, vector<1x1x128x128xf32>
    %256 = vector.shape_cast %255 : vector<1x1x128x128xf32> to vector<128x128xf32>
    %cst_333 = arith.constant dense<0.000000e+00> : vector<64x128xf32>
    %257 = tpu.matmul %254, %256, %cst_333 {dimension_numbers = #tpu.dot_dimension_numbers<[1], [0], [0], [1], [0, 0, 1, 1], [], []>} : vector<64x128xf32>, vector<128x128xf32>, vector<64x128xf32> -> vector<64x128xf32>
    %258 = arith.addf %252, %257 : vector<64x128xf32>
    %c3_334 = arith.constant 3 : index
    %c0_335 = arith.constant 0 : index
    %259 = vector.load %arg10[%c3_334, %c0_335] : memref<15x128xf32, #tpu.memory_space<vmem>>, vector<1x128xf32>
    %260 = vector.broadcast %259 : vector<1x128xf32> to vector<64x128xf32>
    %261 = arith.addf %258, %260 : vector<64x128xf32>
    %cst_336 = arith.constant 5.000000e-01 : f32
    %262 = vector.broadcast %cst_336 : f32 to vector<64x128xf32>
    %263 = arith.mulf %262, %261 : vector<64x128xf32>
    %cst_337 = arith.constant 0.707106769 : f32
    %264 = vector.broadcast %cst_337 : f32 to vector<64x128xf32>
    %265 = arith.mulf %261, %264 : vector<64x128xf32>
    %266 = math.erf %265 : vector<64x128xf32>
    %cst_338 = arith.constant 1.000000e+00 : f32
    %267 = vector.broadcast %cst_338 : f32 to vector<64x128xf32>
    %268 = arith.addf %267, %266 : vector<64x128xf32>
    %269 = arith.mulf %263, %268 : vector<64x128xf32>
    %270 = vector.shape_cast %269 : vector<64x128xf32> to vector<8x8x128xf32>
    %c1_339 = arith.constant 1 : index
    %c1_340 = arith.constant 1 : index
    %c0_341 = arith.constant 0 : index
    %271 = vector.load %arg12[%c1_339, %c1_340, %c0_341] : memref<10x10x128xf32, #tpu.memory_space<vmem>>, vector<8x8x128xf32>
    tpu.vector_store %arg12[%c1_339, %c1_340, %c0_341], %270 {strides = array<i32>} : memref<10x10x128xf32, #tpu.memory_space<vmem>>, vector<8x8x128xf32>,
    %c0_342 = arith.constant 0 : index
    %c0_343 = arith.constant 0 : index
    %c0_344 = arith.constant 0 : index
    %272 = vector.load %arg12[%c0_342, %c0_343, %c0_344] : memref<10x10x128xf32, #tpu.memory_space<vmem>>, vector<8x8x128xf32>
    %273 = vector.shape_cast %272 : vector<8x8x128xf32> to vector<64x128xf32>
    %c4_345 = arith.constant 4 : index
    %c0_346 = arith.constant 0 : index
    %c0_347 = arith.constant 0 : index
    %c0_348 = arith.constant 0 : index
    %274 = vector.load %arg2[%c4_345, %c0_346, %c0_347, %c0_348] : memref<6x9x128x128xf32, #tpu.memory_space<vmem>>, vector<1x1x128x128xf32>
    %275 = vector.shape_cast %274 : vector<1x1x128x128xf32> to vector<128x128xf32>
    %cst_349 = arith.constant dense<0.000000e+00> : vector<64x128xf32>
    %276 = tpu.matmul %273, %275, %cst_349 {dimension_numbers = #tpu.dot_dimension_numbers<[1], [0], [0], [1], [0, 0, 1, 1], [], []>} : vector<64x128xf32>, vector<128x128xf32>, vector<64x128xf32> -> vector<64x128xf32>
    %c0_350 = arith.constant 0 : index
    %c1_351 = arith.constant 1 : index
    %c0_352 = arith.constant 0 : index
    %277 = vector.load %arg12[%c0_350, %c1_351, %c0_352] : memref<10x10x128xf32, #tpu.memory_space<vmem>>, vector<8x8x128xf32>
    %278 = vector.shape_cast %277 : vector<8x8x128xf32> to vector<64x128xf32>
    %c4_353 = arith.constant 4 : index
    %c1_354 = arith.constant 1 : index
    %c0_355 = arith.constant 0 : index
    %c0_356 = arith.constant 0 : index
    %279 = vector.load %arg2[%c4_353, %c1_354, %c0_355, %c0_356] : memref<6x9x128x128xf32, #tpu.memory_space<vmem>>, vector<1x1x128x128xf32>
    %280 = vector.shape_cast %279 : vector<1x1x128x128xf32> to vector<128x128xf32>
    %cst_357 = arith.constant dense<0.000000e+00> : vector<64x128xf32>
    %281 = tpu.matmul %278, %280, %cst_357 {dimension_numbers = #tpu.dot_dimension_numbers<[1], [0], [0], [1], [0, 0, 1, 1], [], []>} : vector<64x128xf32>, vector<128x128xf32>, vector<64x128xf32> -> vector<64x128xf32>
    %282 = arith.addf %276, %281 : vector<64x128xf32>
    %c0_358 = arith.constant 0 : index
    %c2_359 = arith.constant 2 : index
    %c0_360 = arith.constant 0 : index
    %283 = vector.load %arg12[%c0_358, %c2_359, %c0_360] : memref<10x10x128xf32, #tpu.memory_space<vmem>>, vector<8x8x128xf32>
    %284 = vector.shape_cast %283 : vector<8x8x128xf32> to vector<64x128xf32>
    %c4_361 = arith.constant 4 : index
    %c2_362 = arith.constant 2 : index
    %c0_363 = arith.constant 0 : index
    %c0_364 = arith.constant 0 : index
    %285 = vector.load %arg2[%c4_361, %c2_362, %c0_363, %c0_364] : memref<6x9x128x128xf32, #tpu.memory_space<vmem>>, vector<1x1x128x128xf32>
    %286 = vector.shape_cast %285 : vector<1x1x128x128xf32> to vector<128x128xf32>
    %cst_365 = arith.constant dense<0.000000e+00> : vector<64x128xf32>
    %287 = tpu.matmul %284, %286, %cst_365 {dimension_numbers = #tpu.dot_dimension_numbers<[1], [0], [0], [1], [0, 0, 1, 1], [], []>} : vector<64x128xf32>, vector<128x128xf32>, vector<64x128xf32> -> vector<64x128xf32>
    %288 = arith.addf %282, %287 : vector<64x128xf32>
    %c1_366 = arith.constant 1 : index
    %c0_367 = arith.constant 0 : index
    %c0_368 = arith.constant 0 : index
    %289 = vector.load %arg12[%c1_366, %c0_367, %c0_368] : memref<10x10x128xf32, #tpu.memory_space<vmem>>, vector<8x8x128xf32>
    %290 = vector.shape_cast %289 : vector<8x8x128xf32> to vector<64x128xf32>
    %c4_369 = arith.constant 4 : index
    %c3_370 = arith.constant 3 : index
    %c0_371 = arith.constant 0 : index
    %c0_372 = arith.constant 0 : index
    %291 = vector.load %arg2[%c4_369, %c3_370, %c0_371, %c0_372] : memref<6x9x128x128xf32, #tpu.memory_space<vmem>>, vector<1x1x128x128xf32>
    %292 = vector.shape_cast %291 : vector<1x1x128x128xf32> to vector<128x128xf32>
    %cst_373 = arith.constant dense<0.000000e+00> : vector<64x128xf32>
    %293 = tpu.matmul %290, %292, %cst_373 {dimension_numbers = #tpu.dot_dimension_numbers<[1], [0], [0], [1], [0, 0, 1, 1], [], []>} : vector<64x128xf32>, vector<128x128xf32>, vector<64x128xf32> -> vector<64x128xf32>
    %294 = arith.addf %288, %293 : vector<64x128xf32>
    %c1_374 = arith.constant 1 : index
    %c1_375 = arith.constant 1 : index
    %c0_376 = arith.constant 0 : index
    %295 = vector.load %arg12[%c1_374, %c1_375, %c0_376] : memref<10x10x128xf32, #tpu.memory_space<vmem>>, vector<8x8x128xf32>
    %296 = vector.shape_cast %295 : vector<8x8x128xf32> to vector<64x128xf32>
    %c4_377 = arith.constant 4 : index
    %c4_378 = arith.constant 4 : index
    %c0_379 = arith.constant 0 : index
    %c0_380 = arith.constant 0 : index
    %297 = vector.load %arg2[%c4_377, %c4_378, %c0_379, %c0_380] : memref<6x9x128x128xf32, #tpu.memory_space<vmem>>, vector<1x1x128x128xf32>
    %298 = vector.shape_cast %297 : vector<1x1x128x128xf32> to vector<128x128xf32>
    %cst_381 = arith.constant dense<0.000000e+00> : vector<64x128xf32>
    %299 = tpu.matmul %296, %298, %cst_381 {dimension_numbers = #tpu.dot_dimension_numbers<[1], [0], [0], [1], [0, 0, 1, 1], [], []>} : vector<64x128xf32>, vector<128x128xf32>, vector<64x128xf32> -> vector<64x128xf32>
    %300 = arith.addf %294, %299 : vector<64x128xf32>
    %c1_382 = arith.constant 1 : index
    %c2_383 = arith.constant 2 : index
    %c0_384 = arith.constant 0 : index
    %301 = vector.load %arg12[%c1_382, %c2_383, %c0_384] : memref<10x10x128xf32, #tpu.memory_space<vmem>>, vector<8x8x128xf32>
    %302 = vector.shape_cast %301 : vector<8x8x128xf32> to vector<64x128xf32>
    %c4_385 = arith.constant 4 : index
    %c5_386 = arith.constant 5 : index
    %c0_387 = arith.constant 0 : index
    %c0_388 = arith.constant 0 : index
    %303 = vector.load %arg2[%c4_385, %c5_386, %c0_387, %c0_388] : memref<6x9x128x128xf32, #tpu.memory_space<vmem>>, vector<1x1x128x128xf32>
    %304 = vector.shape_cast %303 : vector<1x1x128x128xf32> to vector<128x128xf32>
    %cst_389 = arith.constant dense<0.000000e+00> : vector<64x128xf32>
    %305 = tpu.matmul %302, %304, %cst_389 {dimension_numbers = #tpu.dot_dimension_numbers<[1], [0], [0], [1], [0, 0, 1, 1], [], []>} : vector<64x128xf32>, vector<128x128xf32>, vector<64x128xf32> -> vector<64x128xf32>
    %306 = arith.addf %300, %305 : vector<64x128xf32>
    %c2_390 = arith.constant 2 : index
    %c0_391 = arith.constant 0 : index
    %c0_392 = arith.constant 0 : index
    %307 = vector.load %arg12[%c2_390, %c0_391, %c0_392] : memref<10x10x128xf32, #tpu.memory_space<vmem>>, vector<8x8x128xf32>
    %308 = vector.shape_cast %307 : vector<8x8x128xf32> to vector<64x128xf32>
    %c4_393 = arith.constant 4 : index
    %c6_394 = arith.constant 6 : index
    %c0_395 = arith.constant 0 : index
    %c0_396 = arith.constant 0 : index
    %309 = vector.load %arg2[%c4_393, %c6_394, %c0_395, %c0_396] : memref<6x9x128x128xf32, #tpu.memory_space<vmem>>, vector<1x1x128x128xf32>
    %310 = vector.shape_cast %309 : vector<1x1x128x128xf32> to vector<128x128xf32>
    %cst_397 = arith.constant dense<0.000000e+00> : vector<64x128xf32>
    %311 = tpu.matmul %308, %310, %cst_397 {dimension_numbers = #tpu.dot_dimension_numbers<[1], [0], [0], [1], [0, 0, 1, 1], [], []>} : vector<64x128xf32>, vector<128x128xf32>, vector<64x128xf32> -> vector<64x128xf32>
    %312 = arith.addf %306, %311 : vector<64x128xf32>
    %c2_398 = arith.constant 2 : index
    %c1_399 = arith.constant 1 : index
    %c0_400 = arith.constant 0 : index
    %313 = vector.load %arg12[%c2_398, %c1_399, %c0_400] : memref<10x10x128xf32, #tpu.memory_space<vmem>>, vector<8x8x128xf32>
    %314 = vector.shape_cast %313 : vector<8x8x128xf32> to vector<64x128xf32>
    %c4_401 = arith.constant 4 : index
    %c7_402 = arith.constant 7 : index
    %c0_403 = arith.constant 0 : index
    %c0_404 = arith.constant 0 : index
    %315 = vector.load %arg2[%c4_401, %c7_402, %c0_403, %c0_404] : memref<6x9x128x128xf32, #tpu.memory_space<vmem>>, vector<1x1x128x128xf32>
    %316 = vector.shape_cast %315 : vector<1x1x128x128xf32> to vector<128x128xf32>
    %cst_405 = arith.constant dense<0.000000e+00> : vector<64x128xf32>
    %317 = tpu.matmul %314, %316, %cst_405 {dimension_numbers = #tpu.dot_dimension_numbers<[1], [0], [0], [1], [0, 0, 1, 1], [], []>} : vector<64x128xf32>, vector<128x128xf32>, vector<64x128xf32> -> vector<64x128xf32>
    %318 = arith.addf %312, %317 : vector<64x128xf32>
    %c2_406 = arith.constant 2 : index
    %c2_407 = arith.constant 2 : index
    %c0_408 = arith.constant 0 : index
    %319 = vector.load %arg12[%c2_406, %c2_407, %c0_408] : memref<10x10x128xf32, #tpu.memory_space<vmem>>, vector<8x8x128xf32>
    %320 = vector.shape_cast %319 : vector<8x8x128xf32> to vector<64x128xf32>
    %c4_409 = arith.constant 4 : index
    %c8_410 = arith.constant 8 : index
    %c0_411 = arith.constant 0 : index
    %c0_412 = arith.constant 0 : index
    %321 = vector.load %arg2[%c4_409, %c8_410, %c0_411, %c0_412] : memref<6x9x128x128xf32, #tpu.memory_space<vmem>>, vector<1x1x128x128xf32>
    %322 = vector.shape_cast %321 : vector<1x1x128x128xf32> to vector<128x128xf32>
    %cst_413 = arith.constant dense<0.000000e+00> : vector<64x128xf32>
    %323 = tpu.matmul %320, %322, %cst_413 {dimension_numbers = #tpu.dot_dimension_numbers<[1], [0], [0], [1], [0, 0, 1, 1], [], []>} : vector<64x128xf32>, vector<128x128xf32>, vector<64x128xf32> -> vector<64x128xf32>
    %324 = arith.addf %318, %323 : vector<64x128xf32>
    %c4_414 = arith.constant 4 : index
    %c0_415 = arith.constant 0 : index
    %325 = vector.load %arg10[%c4_414, %c0_415] : memref<15x128xf32, #tpu.memory_space<vmem>>, vector<1x128xf32>
    %326 = vector.broadcast %325 : vector<1x128xf32> to vector<64x128xf32>
    %327 = arith.addf %324, %326 : vector<64x128xf32>
    %c1_416 = arith.constant 1 : index
    %c1_417 = arith.constant 1 : index
    %c0_418 = arith.constant 0 : index
    %328 = vector.load %arg13[%c1_416, %c1_417, %c0_418] : memref<10x10x128xf32, #tpu.memory_space<vmem>>, vector<8x8x128xf32>
    %329 = vector.shape_cast %328 : vector<8x8x128xf32> to vector<64x128xf32>
    %330 = arith.addf %327, %329 : vector<64x128xf32>
    %331 = vector.shape_cast %330 : vector<64x128xf32> to vector<8x8x128xf32>
    %c1_419 = arith.constant 1 : index
    %c1_420 = arith.constant 1 : index
    %c0_421 = arith.constant 0 : index
    %332 = vector.load %arg13[%c1_419, %c1_420, %c0_421] : memref<10x10x128xf32, #tpu.memory_space<vmem>>, vector<8x8x128xf32>
    tpu.vector_store %arg13[%c1_419, %c1_420, %c0_421], %331 {strides = array<i32>} : memref<10x10x128xf32, #tpu.memory_space<vmem>>, vector<8x8x128xf32>,
    %c0_422 = arith.constant 0 : index
    %c0_423 = arith.constant 0 : index
    %c0_424 = arith.constant 0 : index
    %333 = vector.load %arg13[%c0_422, %c0_423, %c0_424] : memref<10x10x128xf32, #tpu.memory_space<vmem>>, vector<8x8x128xf32>
    %334 = vector.shape_cast %333 : vector<8x8x128xf32> to vector<64x128xf32>
    %c5_425 = arith.constant 5 : index
    %c0_426 = arith.constant 0 : index
    %c0_427 = arith.constant 0 : index
    %c0_428 = arith.constant 0 : index
    %335 = vector.load %arg2[%c5_425, %c0_426, %c0_427, %c0_428] : memref<6x9x128x128xf32, #tpu.memory_space<vmem>>, vector<1x1x128x128xf32>
    %336 = vector.shape_cast %335 : vector<1x1x128x128xf32> to vector<128x128xf32>
    %cst_429 = arith.constant dense<0.000000e+00> : vector<64x128xf32>
    %337 = tpu.matmul %334, %336, %cst_429 {dimension_numbers = #tpu.dot_dimension_numbers<[1], [0], [0], [1], [0, 0, 1, 1], [], []>} : vector<64x128xf32>, vector<128x128xf32>, vector<64x128xf32> -> vector<64x128xf32>
    %c0_430 = arith.constant 0 : index
    %c1_431 = arith.constant 1 : index
    %c0_432 = arith.constant 0 : index
    %338 = vector.load %arg13[%c0_430, %c1_431, %c0_432] : memref<10x10x128xf32, #tpu.memory_space<vmem>>, vector<8x8x128xf32>
    %339 = vector.shape_cast %338 : vector<8x8x128xf32> to vector<64x128xf32>
    %c5_433 = arith.constant 5 : index
    %c1_434 = arith.constant 1 : index
    %c0_435 = arith.constant 0 : index
    %c0_436 = arith.constant 0 : index
    %340 = vector.load %arg2[%c5_433, %c1_434, %c0_435, %c0_436] : memref<6x9x128x128xf32, #tpu.memory_space<vmem>>, vector<1x1x128x128xf32>
    %341 = vector.shape_cast %340 : vector<1x1x128x128xf32> to vector<128x128xf32>
    %cst_437 = arith.constant dense<0.000000e+00> : vector<64x128xf32>
    %342 = tpu.matmul %339, %341, %cst_437 {dimension_numbers = #tpu.dot_dimension_numbers<[1], [0], [0], [1], [0, 0, 1, 1], [], []>} : vector<64x128xf32>, vector<128x128xf32>, vector<64x128xf32> -> vector<64x128xf32>
    %343 = arith.addf %337, %342 : vector<64x128xf32>
    %c0_438 = arith.constant 0 : index
    %c2_439 = arith.constant 2 : index
    %c0_440 = arith.constant 0 : index
    %344 = vector.load %arg13[%c0_438, %c2_439, %c0_440] : memref<10x10x128xf32, #tpu.memory_space<vmem>>, vector<8x8x128xf32>
    %345 = vector.shape_cast %344 : vector<8x8x128xf32> to vector<64x128xf32>
    %c5_441 = arith.constant 5 : index
    %c2_442 = arith.constant 2 : index
    %c0_443 = arith.constant 0 : index
    %c0_444 = arith.constant 0 : index
    %346 = vector.load %arg2[%c5_441, %c2_442, %c0_443, %c0_444] : memref<6x9x128x128xf32, #tpu.memory_space<vmem>>, vector<1x1x128x128xf32>
    %347 = vector.shape_cast %346 : vector<1x1x128x128xf32> to vector<128x128xf32>
    %cst_445 = arith.constant dense<0.000000e+00> : vector<64x128xf32>
    %348 = tpu.matmul %345, %347, %cst_445 {dimension_numbers = #tpu.dot_dimension_numbers<[1], [0], [0], [1], [0, 0, 1, 1], [], []>} : vector<64x128xf32>, vector<128x128xf32>, vector<64x128xf32> -> vector<64x128xf32>
    %349 = arith.addf %343, %348 : vector<64x128xf32>
    %c1_446 = arith.constant 1 : index
    %c0_447 = arith.constant 0 : index
    %c0_448 = arith.constant 0 : index
    %350 = vector.load %arg13[%c1_446, %c0_447, %c0_448] : memref<10x10x128xf32, #tpu.memory_space<vmem>>, vector<8x8x128xf32>
    %351 = vector.shape_cast %350 : vector<8x8x128xf32> to vector<64x128xf32>
    %c5_449 = arith.constant 5 : index
    %c3_450 = arith.constant 3 : index
    %c0_451 = arith.constant 0 : index
    %c0_452 = arith.constant 0 : index
    %352 = vector.load %arg2[%c5_449, %c3_450, %c0_451, %c0_452] : memref<6x9x128x128xf32, #tpu.memory_space<vmem>>, vector<1x1x128x128xf32>
    %353 = vector.shape_cast %352 : vector<1x1x128x128xf32> to vector<128x128xf32>
    %cst_453 = arith.constant dense<0.000000e+00> : vector<64x128xf32>
    %354 = tpu.matmul %351, %353, %cst_453 {dimension_numbers = #tpu.dot_dimension_numbers<[1], [0], [0], [1], [0, 0, 1, 1], [], []>} : vector<64x128xf32>, vector<128x128xf32>, vector<64x128xf32> -> vector<64x128xf32>
    %355 = arith.addf %349, %354 : vector<64x128xf32>
    %c1_454 = arith.constant 1 : index
    %c1_455 = arith.constant 1 : index
    %c0_456 = arith.constant 0 : index
    %356 = vector.load %arg13[%c1_454, %c1_455, %c0_456] : memref<10x10x128xf32, #tpu.memory_space<vmem>>, vector<8x8x128xf32>
    %357 = vector.shape_cast %356 : vector<8x8x128xf32> to vector<64x128xf32>
    %c5_457 = arith.constant 5 : index
    %c4_458 = arith.constant 4 : index
    %c0_459 = arith.constant 0 : index
    %c0_460 = arith.constant 0 : index
    %358 = vector.load %arg2[%c5_457, %c4_458, %c0_459, %c0_460] : memref<6x9x128x128xf32, #tpu.memory_space<vmem>>, vector<1x1x128x128xf32>
    %359 = vector.shape_cast %358 : vector<1x1x128x128xf32> to vector<128x128xf32>
    %cst_461 = arith.constant dense<0.000000e+00> : vector<64x128xf32>
    %360 = tpu.matmul %357, %359, %cst_461 {dimension_numbers = #tpu.dot_dimension_numbers<[1], [0], [0], [1], [0, 0, 1, 1], [], []>} : vector<64x128xf32>, vector<128x128xf32>, vector<64x128xf32> -> vector<64x128xf32>
    %361 = arith.addf %355, %360 : vector<64x128xf32>
    %c1_462 = arith.constant 1 : index
    %c2_463 = arith.constant 2 : index
    %c0_464 = arith.constant 0 : index
    %362 = vector.load %arg13[%c1_462, %c2_463, %c0_464] : memref<10x10x128xf32, #tpu.memory_space<vmem>>, vector<8x8x128xf32>
    %363 = vector.shape_cast %362 : vector<8x8x128xf32> to vector<64x128xf32>
    %c5_465 = arith.constant 5 : index
    %c5_466 = arith.constant 5 : index
    %c0_467 = arith.constant 0 : index
    %c0_468 = arith.constant 0 : index
    %364 = vector.load %arg2[%c5_465, %c5_466, %c0_467, %c0_468] : memref<6x9x128x128xf32, #tpu.memory_space<vmem>>, vector<1x1x128x128xf32>
    %365 = vector.shape_cast %364 : vector<1x1x128x128xf32> to vector<128x128xf32>
    %cst_469 = arith.constant dense<0.000000e+00> : vector<64x128xf32>
    %366 = tpu.matmul %363, %365, %cst_469 {dimension_numbers = #tpu.dot_dimension_numbers<[1], [0], [0], [1], [0, 0, 1, 1], [], []>} : vector<64x128xf32>, vector<128x128xf32>, vector<64x128xf32> -> vector<64x128xf32>
    %367 = arith.addf %361, %366 : vector<64x128xf32>
    %c2_470 = arith.constant 2 : index
    %c0_471 = arith.constant 0 : index
    %c0_472 = arith.constant 0 : index
    %368 = vector.load %arg13[%c2_470, %c0_471, %c0_472] : memref<10x10x128xf32, #tpu.memory_space<vmem>>, vector<8x8x128xf32>
    %369 = vector.shape_cast %368 : vector<8x8x128xf32> to vector<64x128xf32>
    %c5_473 = arith.constant 5 : index
    %c6_474 = arith.constant 6 : index
    %c0_475 = arith.constant 0 : index
    %c0_476 = arith.constant 0 : index
    %370 = vector.load %arg2[%c5_473, %c6_474, %c0_475, %c0_476] : memref<6x9x128x128xf32, #tpu.memory_space<vmem>>, vector<1x1x128x128xf32>
    %371 = vector.shape_cast %370 : vector<1x1x128x128xf32> to vector<128x128xf32>
    %cst_477 = arith.constant dense<0.000000e+00> : vector<64x128xf32>
    %372 = tpu.matmul %369, %371, %cst_477 {dimension_numbers = #tpu.dot_dimension_numbers<[1], [0], [0], [1], [0, 0, 1, 1], [], []>} : vector<64x128xf32>, vector<128x128xf32>, vector<64x128xf32> -> vector<64x128xf32>
    %373 = arith.addf %367, %372 : vector<64x128xf32>
    %c2_478 = arith.constant 2 : index
    %c1_479 = arith.constant 1 : index
    %c0_480 = arith.constant 0 : index
    %374 = vector.load %arg13[%c2_478, %c1_479, %c0_480] : memref<10x10x128xf32, #tpu.memory_space<vmem>>, vector<8x8x128xf32>
    %375 = vector.shape_cast %374 : vector<8x8x128xf32> to vector<64x128xf32>
    %c5_481 = arith.constant 5 : index
    %c7_482 = arith.constant 7 : index
    %c0_483 = arith.constant 0 : index
    %c0_484 = arith.constant 0 : index
    %376 = vector.load %arg2[%c5_481, %c7_482, %c0_483, %c0_484] : memref<6x9x128x128xf32, #tpu.memory_space<vmem>>, vector<1x1x128x128xf32>
    %377 = vector.shape_cast %376 : vector<1x1x128x128xf32> to vector<128x128xf32>
    %cst_485 = arith.constant dense<0.000000e+00> : vector<64x128xf32>
    %378 = tpu.matmul %375, %377, %cst_485 {dimension_numbers = #tpu.dot_dimension_numbers<[1], [0], [0], [1], [0, 0, 1, 1], [], []>} : vector<64x128xf32>, vector<128x128xf32>, vector<64x128xf32> -> vector<64x128xf32>
    %379 = arith.addf %373, %378 : vector<64x128xf32>
    %c2_486 = arith.constant 2 : index
    %c2_487 = arith.constant 2 : index
    %c0_488 = arith.constant 0 : index
    %380 = vector.load %arg13[%c2_486, %c2_487, %c0_488] : memref<10x10x128xf32, #tpu.memory_space<vmem>>, vector<8x8x128xf32>
    %381 = vector.shape_cast %380 : vector<8x8x128xf32> to vector<64x128xf32>
    %c5_489 = arith.constant 5 : index
    %c8_490 = arith.constant 8 : index
    %c0_491 = arith.constant 0 : index
    %c0_492 = arith.constant 0 : index
    %382 = vector.load %arg2[%c5_489, %c8_490, %c0_491, %c0_492] : memref<6x9x128x128xf32, #tpu.memory_space<vmem>>, vector<1x1x128x128xf32>
    %383 = vector.shape_cast %382 : vector<1x1x128x128xf32> to vector<128x128xf32>
    %cst_493 = arith.constant dense<0.000000e+00> : vector<64x128xf32>
    %384 = tpu.matmul %381, %383, %cst_493 {dimension_numbers = #tpu.dot_dimension_numbers<[1], [0], [0], [1], [0, 0, 1, 1], [], []>} : vector<64x128xf32>, vector<128x128xf32>, vector<64x128xf32> -> vector<64x128xf32>
    %385 = arith.addf %379, %384 : vector<64x128xf32>
    %c5_494 = arith.constant 5 : index
    %c0_495 = arith.constant 0 : index
    %386 = vector.load %arg10[%c5_494, %c0_495] : memref<15x128xf32, #tpu.memory_space<vmem>>, vector<1x128xf32>
    %387 = vector.broadcast %386 : vector<1x128xf32> to vector<64x128xf32>
    %388 = arith.addf %385, %387 : vector<64x128xf32>
    %c0_496 = arith.constant 0 : index
    %c0_497 = arith.constant 0 : index
    %389 = vector.load %arg3[%c0_496, %c0_497] : memref<16x64xf32, #tpu.memory_space<vmem>>, vector<16x64xf32>
    %cst_498 = arith.constant dense<0.000000e+00> : vector<16x128xf32>
    %390 = tpu.matmul %389, %388, %cst_498 {dimension_numbers = #tpu.dot_dimension_numbers<[1], [0], [0], [1], [0, 0, 1, 1], [], []>} : vector<16x64xf32>, vector<64x128xf32>, vector<16x128xf32> -> vector<16x128xf32>
    %391 = vector.extract_strided_slice %390 {offsets = [0, 0], sizes = [16, 32], strides = [1, 1]} : vector<16x128xf32> to vector<16x32xf32>
    %c0_499 = arith.constant 0 : index
    %c0_500 = arith.constant 0 : index
    %392 = vector.load %arg4[%c0_499, %c0_500] : memref<16x32xf32, #tpu.memory_space<vmem>>, vector<16x32xf32>
    %393 = arith.addf %391, %392 : vector<16x32xf32>
    %c6_501 = arith.constant 6 : index
    %c0_502 = arith.constant 0 : index
    %394 = vector.load %arg10[%c6_501, %c0_502] : memref<15x128xf32, #tpu.memory_space<vmem>>, vector<1x32xf32>
    %c7_503 = arith.constant 7 : index
    %c0_504 = arith.constant 0 : index
    %395 = vector.load %arg10[%c7_503, %c0_504] : memref<15x128xf32, #tpu.memory_space<vmem>>, vector<1x32xf32>
    %c8_505 = arith.constant 8 : index
    %c0_506 = arith.constant 0 : index
    %396 = vector.load %arg10[%c8_505, %c0_506] : memref<15x128xf32, #tpu.memory_space<vmem>>, vector<1x32xf32>
    %c9_507 = arith.constant 9 : index
    %c0_508 = arith.constant 0 : index
    %397 = vector.load %arg10[%c9_507, %c0_508] : memref<15x128xf32, #tpu.memory_space<vmem>>, vector<1x32xf32>
    %c10 = arith.constant 10 : index
    %c0_509 = arith.constant 0 : index
    %398 = vector.load %arg10[%c10, %c0_509] : memref<15x128xf32, #tpu.memory_space<vmem>>, vector<1x8xf32>
    %c11 = arith.constant 11 : index
    %c0_510 = arith.constant 0 : index
    %399 = vector.load %arg10[%c11, %c0_510] : memref<15x128xf32, #tpu.memory_space<vmem>>, vector<1x16xf32>
    %c12 = arith.constant 12 : index
    %c0_511 = arith.constant 0 : index
    %400 = vector.load %arg10[%c12, %c0_511] : memref<15x128xf32, #tpu.memory_space<vmem>>, vector<1x64xf32>
    %c13 = arith.constant 13 : index
    %c0_512 = arith.constant 0 : index
    %401 = vector.load %arg10[%c13, %c0_512] : memref<15x128xf32, #tpu.memory_space<vmem>>, vector<1x32xf32>
    %c14 = arith.constant 14 : index
    %c0_513 = arith.constant 0 : index
    %402 = vector.load %arg10[%c14, %c0_513] : memref<15x128xf32, #tpu.memory_space<vmem>>, vector<1x64xf32>
    %cst_514 = arith.constant dense<0.000000e+00> : vector<16xf32>
    %403 = vector.multi_reduction <add>, %393, %cst_514 [1] : vector<16x32xf32> to vector<16xf32>
    %404 = vector.shape_cast %403 : vector<16xf32> to vector<16x1xf32>
    %cst_515 = arith.constant 3.200000e+01 : f32
    %405 = vector.broadcast %cst_515 : f32 to vector<16x1xf32>
    %406 = arith.divf %404, %405 : vector<16x1xf32>
    %407 = vector.broadcast %406 : vector<16x1xf32> to vector<16x32xf32>
    %408 = arith.subf %393, %407 : vector<16x32xf32>
    %409 = arith.mulf %408, %408 : vector<16x32xf32>
    %cst_516 = arith.constant dense<0.000000e+00> : vector<16xf32>
    %410 = vector.multi_reduction <add>, %409, %cst_516 [1] : vector<16x32xf32> to vector<16xf32>
    %411 = vector.shape_cast %410 : vector<16xf32> to vector<16x1xf32>
    %cst_517 = arith.constant 3.200000e+01 : f32
    %412 = vector.broadcast %cst_517 : f32 to vector<16x1xf32>
    %413 = arith.divf %411, %412 : vector<16x1xf32>
    %414 = vector.broadcast %406 : vector<16x1xf32> to vector<16x32xf32>
    %415 = arith.subf %393, %414 : vector<16x32xf32>
    %cst_518 = arith.constant 9.99999974E-6 : f32
    %416 = vector.broadcast %cst_518 : f32 to vector<16x1xf32>
    %417 = arith.addf %413, %416 : vector<16x1xf32>
    %418 = math.rsqrt %417 : vector<16x1xf32>
    %419 = vector.broadcast %418 : vector<16x1xf32> to vector<16x32xf32>
    %420 = arith.mulf %415, %419 : vector<16x32xf32>
    %421 = vector.broadcast %394 : vector<1x32xf32> to vector<16x32xf32>
    %422 = arith.mulf %420, %421 : vector<16x32xf32>
    %423 = vector.broadcast %395 : vector<1x32xf32> to vector<16x32xf32>
    %424 = arith.addf %422, %423 : vector<16x32xf32>
    %425 = tpu.transpose %424, [1, 0] : vector<16x32xf32> -> vector<32x16xf32>
    %c0_519 = arith.constant 0 : index
    %c0_520 = arith.constant 0 : index
    %426 = vector.load %arg5[%c0_519, %c0_520] : memref<16x8xf32, #tpu.memory_space<vmem>>, vector<16x8xf32>
    %cst_521 = arith.constant dense<0.000000e+00> : vector<32x8xf32>
    %427 = tpu.matmul %425, %426, %cst_521 {dimension_numbers = #tpu.dot_dimension_numbers<[1], [0], [0], [1], [0, 0, 1, 1], [], []>} : vector<32x16xf32>, vector<16x8xf32>, vector<32x8xf32> -> vector<32x8xf32>
    %428 = vector.broadcast %398 : vector<1x8xf32> to vector<32x8xf32>
    %429 = arith.addf %427, %428 : vector<32x8xf32>
    %cst_522 = arith.constant 5.000000e-01 : f32
    %430 = vector.broadcast %cst_522 : f32 to vector<32x8xf32>
    %431 = arith.mulf %430, %429 : vector<32x8xf32>
    %cst_523 = arith.constant 0.707106769 : f32
    %432 = vector.broadcast %cst_523 : f32 to vector<32x8xf32>
    %433 = arith.mulf %429, %432 : vector<32x8xf32>
    %434 = math.erf %433 : vector<32x8xf32>
    %cst_524 = arith.constant 1.000000e+00 : f32
    %435 = vector.broadcast %cst_524 : f32 to vector<32x8xf32>
    %436 = arith.addf %435, %434 : vector<32x8xf32>
    %437 = arith.mulf %431, %436 : vector<32x8xf32>
    %c0_525 = arith.constant 0 : index
    %c0_526 = arith.constant 0 : index
    %438 = vector.load %arg6[%c0_525, %c0_526] : memref<8x16xf32, #tpu.memory_space<vmem>>, vector<8x16xf32>
    %cst_527 = arith.constant dense<0.000000e+00> : vector<32x16xf32>
    %439 = tpu.matmul %437, %438, %cst_527 {dimension_numbers = #tpu.dot_dimension_numbers<[1], [0], [0], [1], [0, 0, 1, 1], [], []>} : vector<32x8xf32>, vector<8x16xf32>, vector<32x16xf32> -> vector<32x16xf32>
    %440 = vector.broadcast %399 : vector<1x16xf32> to vector<32x16xf32>
    %441 = arith.addf %439, %440 : vector<32x16xf32>
    %442 = tpu.transpose %441, [1, 0] : vector<32x16xf32> -> vector<16x32xf32>
    %443 = arith.addf %393, %442 : vector<16x32xf32>
    %cst_528 = arith.constant dense<0.000000e+00> : vector<16xf32>
    %444 = vector.multi_reduction <add>, %443, %cst_528 [1] : vector<16x32xf32> to vector<16xf32>
    %445 = vector.shape_cast %444 : vector<16xf32> to vector<16x1xf32>
    %cst_529 = arith.constant 3.200000e+01 : f32
    %446 = vector.broadcast %cst_529 : f32 to vector<16x1xf32>
    %447 = arith.divf %445, %446 : vector<16x1xf32>
    %448 = vector.broadcast %447 : vector<16x1xf32> to vector<16x32xf32>
    %449 = arith.subf %443, %448 : vector<16x32xf32>
    %450 = arith.mulf %449, %449 : vector<16x32xf32>
    %cst_530 = arith.constant dense<0.000000e+00> : vector<16xf32>
    %451 = vector.multi_reduction <add>, %450, %cst_530 [1] : vector<16x32xf32> to vector<16xf32>
    %452 = vector.shape_cast %451 : vector<16xf32> to vector<16x1xf32>
    %cst_531 = arith.constant 3.200000e+01 : f32
    %453 = vector.broadcast %cst_531 : f32 to vector<16x1xf32>
    %454 = arith.divf %452, %453 : vector<16x1xf32>
    %455 = vector.broadcast %447 : vector<16x1xf32> to vector<16x32xf32>
    %456 = arith.subf %443, %455 : vector<16x32xf32>
    %cst_532 = arith.constant 9.99999974E-6 : f32
    %457 = vector.broadcast %cst_532 : f32 to vector<16x1xf32>
    %458 = arith.addf %454, %457 : vector<16x1xf32>
    %459 = math.rsqrt %458 : vector<16x1xf32>
    %460 = vector.broadcast %459 : vector<16x1xf32> to vector<16x32xf32>
    %461 = arith.mulf %456, %460 : vector<16x32xf32>
    %462 = vector.broadcast %396 : vector<1x32xf32> to vector<16x32xf32>
    %463 = arith.mulf %461, %462 : vector<16x32xf32>
    %464 = vector.broadcast %397 : vector<1x32xf32> to vector<16x32xf32>
    %465 = arith.addf %463, %464 : vector<16x32xf32>
    %c0_533 = arith.constant 0 : index
    %c0_534 = arith.constant 0 : index
    %466 = vector.load %arg7[%c0_533, %c0_534] : memref<32x64xf32, #tpu.memory_space<vmem>>, vector<32x64xf32>
    %cst_535 = arith.constant dense<0.000000e+00> : vector<16x64xf32>
    %467 = tpu.matmul %465, %466, %cst_535 {dimension_numbers = #tpu.dot_dimension_numbers<[1], [0], [0], [1], [0, 0, 1, 1], [], []>} : vector<16x32xf32>, vector<32x64xf32>, vector<16x64xf32> -> vector<16x64xf32>
    %468 = vector.broadcast %400 : vector<1x64xf32> to vector<16x64xf32>
    %469 = arith.addf %467, %468 : vector<16x64xf32>
    %cst_536 = arith.constant 5.000000e-01 : f32
    %470 = vector.broadcast %cst_536 : f32 to vector<16x64xf32>
    %471 = arith.mulf %470, %469 : vector<16x64xf32>
    %cst_537 = arith.constant 0.707106769 : f32
    %472 = vector.broadcast %cst_537 : f32 to vector<16x64xf32>
    %473 = arith.mulf %469, %472 : vector<16x64xf32>
    %474 = math.erf %473 : vector<16x64xf32>
    %cst_538 = arith.constant 1.000000e+00 : f32
    %475 = vector.broadcast %cst_538 : f32 to vector<16x64xf32>
    %476 = arith.addf %475, %474 : vector<16x64xf32>
    %477 = arith.mulf %471, %476 : vector<16x64xf32>
    %c0_539 = arith.constant 0 : index
    %c0_540 = arith.constant 0 : index
    %478 = vector.load %arg8[%c0_539, %c0_540] : memref<64x32xf32, #tpu.memory_space<vmem>>, vector<64x32xf32>
    %cst_541 = arith.constant dense<0.000000e+00> : vector<16x32xf32>
    %479 = tpu.matmul %477, %478, %cst_541 {dimension_numbers = #tpu.dot_dimension_numbers<[1], [0], [0], [1], [0, 0, 1, 1], [], []>} : vector<16x64xf32>, vector<64x32xf32>, vector<16x32xf32> -> vector<16x32xf32>
    %480 = vector.broadcast %401 : vector<1x32xf32> to vector<16x32xf32>
    %481 = arith.addf %479, %480 : vector<16x32xf32>
    %482 = arith.addf %443, %481 : vector<16x32xf32>
    %c0_542 = arith.constant 0 : index
    %c0_543 = arith.constant 0 : index
    %483 = vector.load %arg9[%c0_542, %c0_543] : memref<32x64xf32, #tpu.memory_space<vmem>>, vector<32x64xf32>
    %cst_544 = arith.constant dense<0.000000e+00> : vector<16x64xf32>
    %484 = tpu.matmul %482, %483, %cst_544 {dimension_numbers = #tpu.dot_dimension_numbers<[1], [0], [0], [1], [0, 0, 1, 1], [], []>} : vector<16x32xf32>, vector<32x64xf32>, vector<16x64xf32> -> vector<16x64xf32>
    %485 = vector.broadcast %402 : vector<1x64xf32> to vector<16x64xf32>
    %486 = arith.addf %484, %485 : vector<16x64xf32>
    %cst_545 = arith.constant 5.000000e-01 : f32
    %487 = vector.broadcast %cst_545 : f32 to vector<16x64xf32>
    %488 = arith.mulf %487, %486 : vector<16x64xf32>
    %cst_546 = arith.constant 0.707106769 : f32
    %489 = vector.broadcast %cst_546 : f32 to vector<16x64xf32>
    %490 = arith.mulf %486, %489 : vector<16x64xf32>
    %491 = math.erf %490 : vector<16x64xf32>
    %cst_547 = arith.constant 1.000000e+00 : f32
    %492 = vector.broadcast %cst_547 : f32 to vector<16x64xf32>
    %493 = arith.addf %492, %491 : vector<16x64xf32>
    %494 = arith.mulf %488, %493 : vector<16x64xf32>
    %495 = vector.shape_cast %494 : vector<16x64xf32> to vector<1x16x64xf32>
    %c0_548 = arith.constant 0 : index
    %c0_549 = arith.constant 0 : index
    %c0_550 = arith.constant 0 : index
    %496 = vector.load %arg11[%c0_548, %c0_549, %c0_550] : memref<1x16x64xf32, #tpu.memory_space<vmem>>, vector<1x16x64xf32>
    tpu.vector_store %arg11[%c0_548, %c0_549, %c0_550], %495 {strides = array<i32>} : memref<1x16x64xf32, #tpu.memory_space<vmem>>, vector<1x16x64xf32>,
    return
  }
  func.func @transform_0(%arg0: i32) -> (i32, i32, i32, i32) {
    %c0_i32 = arith.constant 0 : i32
    %c0_i32_0 = arith.constant 0 : i32
    %c0_i32_1 = arith.constant 0 : i32
    %c0_i32_2 = arith.constant 0 : i32
    return %arg0, %c0_i32, %c0_i32_0, %c0_i32_1 : i32, i32, i32, i32
  }
  func.func @transform_1(%arg0: i32) -> (i32, i32, i32, i32) {
    %c0_i32 = arith.constant 0 : i32
    %c0_i32_0 = arith.constant 0 : i32
    %c0_i32_1 = arith.constant 0 : i32
    %c0_i32_2 = arith.constant 0 : i32
    %c0_i32_3 = arith.constant 0 : i32
    return %c0_i32, %c0_i32_0, %c0_i32_1, %c0_i32_2 : i32, i32, i32, i32
  }
  func.func @transform_2(%arg0: i32) -> (i32, i32) {
    %c0_i32 = arith.constant 0 : i32
    %c0_i32_0 = arith.constant 0 : i32
    %c0_i32_1 = arith.constant 0 : i32
    return %c0_i32, %c0_i32_0 : i32, i32
  }
  func.func @transform_3(%arg0: i32) -> (i32, i32) {
    %c0_i32 = arith.constant 0 : i32
    %c0_i32_0 = arith.constant 0 : i32
    %c0_i32_1 = arith.constant 0 : i32
    return %c0_i32, %c0_i32_0 : i32, i32
  }
  func.func @transform_4(%arg0: i32) -> (i32, i32) {
    %c0_i32 = arith.constant 0 : i32
    %c0_i32_0 = arith.constant 0 : i32
    %c0_i32_1 = arith.constant 0 : i32
    return %c0_i32, %c0_i32_0 : i32, i32
  }
  func.func @transform_5(%arg0: i32) -> (i32, i32) {
    %c0_i32 = arith.constant 0 : i32
    %c0_i32_0 = arith.constant 0 : i32
    %c0_i32_1 = arith.constant 0 : i32
    return %c0_i32, %c0_i32_0 : i32, i32
  }
  func.func @transform_6(%arg0: i32) -> (i32, i32) {
    %c0_i32 = arith.constant 0 : i32
    %c0_i32_0 = arith.constant 0 : i32
    %c0_i32_1 = arith.constant 0 : i32
    return %c0_i32, %c0_i32_0 : i32, i32
  }
  func.func @transform_7(%arg0: i32) -> (i32, i32) {
    %c0_i32 = arith.constant 0 : i32
    %c0_i32_0 = arith.constant 0 : i32
    %c0_i32_1 = arith.constant 0 : i32
    return %c0_i32, %c0_i32_0 : i32, i32
  }
  func.func @transform_8(%arg0: i32) -> (i32, i32) {
    %c0_i32 = arith.constant 0 : i32
    %c0_i32_0 = arith.constant 0 : i32
    %c0_i32_1 = arith.constant 0 : i32
    return %c0_i32, %c0_i32_0 : i32, i32
  }
  func.func @transform_9(%arg0: i32) -> (i32, i32) {
    %c0_i32 = arith.constant 0 : i32
    %c0_i32_0 = arith.constant 0 : i32
    %c0_i32_1 = arith.constant 0 : i32
    return %c0_i32, %c0_i32_0 : i32, i32
  }
  func.func @transform_10(%arg0: i32) -> (i32, i32, i32) {
    %c0_i32 = arith.constant 0 : i32
    %c0_i32_0 = arith.constant 0 : i32
    %c0_i32_1 = arith.constant 0 : i32
    return %arg0, %c0_i32, %c0_i32_0 : i32, i32, i32
  }
}

</mosaic_0001>

<llo_original>
// kernel: latent_encoder_gelu_forward.1
$region0: #{latent_encoder_gelu_forward.1}
  #allocation0 [shape = 'u32[]', space=smem, size = 0x4, offset = 0x4, fixed_abs, tag = 'smem constant byte address 0x4 - core index']
  #allocation1 [shape = 'u32[144,128]{1,0:T(1,128)}', space=vmem, size = 0x12000, scoped, tag = 'internal scratch']
  #allocation2 [shape = 'f32[10,10,128]{2,1,0:T(8,128)}', space=vmem, size = 0x14000, scoped, tag = 'scratch operand']
  #allocation3 [shape = 'f32[10,10,128]{2,1,0:T(8,128)}', space=vmem, size = 0x14000, scoped, tag = 'scratch operand']
  %s0 = inlined_call_operand.vmem [shape: f32[2,8,8,128], index: 0, kind: input, shape index: {}]
  %s1 = inlined_call_operand.vmem [shape: f32[6,9,128,128], index: 1, kind: input, shape index: {}]
  %s2 = inlined_call_operand.vmem [shape: f32[16,64], index: 2, kind: input, shape index: {}]
  %s3 = inlined_call_operand.vmem [shape: f32[16,32], index: 3, kind: input, shape index: {}]
  %s4 = inlined_call_operand.vmem [shape: f32[16,8], index: 4, kind: input, shape index: {}]
  %s5 = inlined_call_operand.vmem [shape: f32[8,16], index: 5, kind: input, shape index: {}]
  %s6 = inlined_call_operand.vmem [shape: f32[32,64], index: 6, kind: input, shape index: {}]
  %s7 = inlined_call_operand.vmem [shape: f32[64,32], index: 7, kind: input, shape index: {}]
  %s8 = inlined_call_operand.vmem [shape: f32[32,64], index: 8, kind: input, shape index: {}]
  %s9 = inlined_call_operand.vmem [shape: f32[15,128], index: 9, kind: input, shape index: {}]
  %s10 = inlined_call_operand.hbm [shape: f32[2,16,64], index: 10, kind: output, shape index: {}]
  %s11 = sld [smem:[#allocation0]]
  $region73: #{latent_encoder_gelu_forward.1} parent=0
    _
  %s13 = ssub.s32 1, %s11
  %s14 = scalar_select 0, %s13, %s11
  $region1: #{latent_encoder_gelu_forward.1} parent=0
    #allocation4 [shape = 'u8[16384]{0}', space=vmem, size = 0x4000, scoped, tag = 'output window, operand 0']
    #allocation5 [shape = 's32[2]{0}', space=sflag, size = 0x8, scoped, tag = 'scoped memory for latent_encoder_gelu_forward.1']
    %15 = vsyncpa [#allocation5], 0
    %s16 = scalar_lea.sflag [#allocation5], 1
    %17 = vsyncpa %s16, 0
    loop: start=0, step=1, limit=4
    $region2: #{latent_encoder_gelu_forward.1} parent=1 // loop_pre_header
      _
    $region3: #{latent_encoder_gelu_forward.1} parent=1 // loop_header
      %s19 = sphi 0, %s23
      %p20 = scmp.ge.s32.totalorder %s19, 4
      %s29 = sphi 0, %s31
      %s32 = sphi 0, %s29
      %s33 = sphi 0, %s32
      %s49 = sphi 0, %s33
      %s53 = sphi 0, %s53
      %s55 = sphi 0, %s53
      %s56 = sphi 0, %s55
      %s70 = sphi 0, %s56
      %s74 = sphi 0, %s74
      %s76 = sphi 0, %s74
      %s77 = sphi 0, %s76
      %s91 = sphi 0, %s77
      %s95 = sphi 0, %s95
      %s97 = sphi 0, %s95
      %s98 = sphi 0, %s97
      %s112 = sphi 0, %s98
      %s116 = sphi 0, %s116
      %s118 = sphi 0, %s116
      %s119 = sphi 0, %s118
      %s133 = sphi 0, %s119
      %s137 = sphi 0, %s137
      %s139 = sphi 0, %s137
      %s140 = sphi 0, %s139
      %s154 = sphi 0, %s140
      %s158 = sphi 0, %s158
      %s160 = sphi 0, %s158
      %s161 = sphi 0, %s160
      %s175 = sphi 0, %s161
      %s179 = sphi 0, %s179
      %s181 = sphi 0, %s179
      %s182 = sphi 0, %s181
      %s196 = sphi 0, %s182
      %s200 = sphi 0, %s200
      %s202 = sphi 0, %s200
      %s203 = sphi 0, %s202
      %s217 = sphi 0, %s203
      %s221 = sphi 0, %s221
      %s223 = sphi 0, %s221
      %s224 = sphi 0, %s223
      %s238 = sphi 0, %s224
      %s244 = sphi 0, %s246
      %s247 = sphi 0, %s244
      %s248 = sphi 0, %s247
      %s264 = sphi 0, %s248
    $region4: #{latent_encoder_gelu_forward.1} parent=1 // loop_header_branch
      %22 = sbr.rel (%p20) target = $region8
    $region5: #{latent_encoder_gelu_forward.1} parent=1 // loop_body
      %s24 = ssub.s32 %s19, 1
      %s25 = ssub.s32 %s19, 2
      %s26 = sadd.s32 %s19, 1
      %s27 = ssub.s32 %s19, %s26
      %p28 = scmp.eq.s32.totalorder %s27, 0
      %s30 = sadd.s32 %s29, 1
      %s31 = scalar_select %p28, %s29, %s30
      %p34 = pneg %p28
      %p35 = scmp.eq.s32.totalorder %s19, 1
      %p36 = por %p34, %p35
      %p37 = scmp.ne.s32.totalorder %s29, %s32
      %p38 = scmp.eq.s32.totalorder %s19, 0
      %p39 = por %p37, %p38
      %p40 = scmp.ne.s32.totalorder %s29, %s32
      %p41 = scmp.eq.s32.totalorder %s24, 1
      %p42 = por %p40, %p41
      %p43 = scmp.ne.s32.totalorder %s32, %s33
      %p44 = scmp.eq.s32.totalorder %s24, 0
      %p45 = por %p43, %p44
      %p46 = scmp.ne.s32.totalorder %s32, %s33
      %p47 = scmp.eq.s32.totalorder %s25, 1
      %p48 = por %p46, %p47
      %p50 = scmp.ne.s32.totalorder %s33, %s49
      %p51 = scmp.eq.s32.totalorder %s25, 0
      %p52 = por %p50, %p51
      %s54 = sadd.s32 %s53, 1
      %p57 = scmp.eq.s32.totalorder %s19, 1
      %p58 = scmp.ne.s32.totalorder %s53, %s55
      %p59 = scmp.eq.s32.totalorder %s19, 0
      %p60 = por %p58, %p59
      %p61 = scmp.ne.s32.totalorder %s53, %s55
      %p62 = scmp.eq.s32.totalorder %s24, 1
      %p63 = por %p61, %p62
      %p64 = scmp.ne.s32.totalorder %s55, %s56
      %p65 = scmp.eq.s32.totalorder %s24, 0
      %p66 = por %p64, %p65
      %p67 = scmp.ne.s32.totalorder %s55, %s56
      %p68 = scmp.eq.s32.totalorder %s25, 1
      %p69 = por %p67, %p68
      %p71 = scmp.ne.s32.totalorder %s56, %s70
      %p72 = scmp.eq.s32.totalorder %s25, 0
      %p73 = por %p71, %p72
      %s75 = sadd.s32 %s74, 1
      %p78 = scmp.eq.s32.totalorder %s19, 1
      %p79 = scmp.ne.s32.totalorder %s74, %s76
      %p80 = scmp.eq.s32.totalorder %s19, 0
      %p81 = por %p79, %p80
      %p82 = scmp.ne.s32.totalorder %s74, %s76
      %p83 = scmp.eq.s32.totalorder %s24, 1
      %p84 = por %p82, %p83
      %p85 = scmp.ne.s32.totalorder %s76, %s77
      %p86 = scmp.eq.s32.totalorder %s24, 0
      %p87 = por %p85, %p86
      %p88 = scmp.ne.s32.totalorder %s76, %s77
      %p89 = scmp.eq.s32.totalorder %s25, 1
      %p90 = por %p88, %p89
      %p92 = scmp.ne.s32.totalorder %s77, %s91
      %p93 = scmp.eq.s32.totalorder %s25, 0
      %p94 = por %p92, %p93
      %s96 = sadd.s32 %s95, 1
      %p99 = scmp.eq.s32.totalorder %s19, 1
      %p100 = scmp.ne.s32.totalorder %s95, %s97
      %p101 = scmp.eq.s32.totalorder %s19, 0
      %p102 = por %p100, %p101
      %p103 = scmp.ne.s32.totalorder %s95, %s97
      %p104 = scmp.eq.s32.totalorder %s24, 1
      %p105 = por %p103, %p104
      %p106 = scmp.ne.s32.totalorder %s97, %s98
      %p107 = scmp.eq.s32.totalorder %s24, 0
      %p108 = por %p106, %p107
      %p109 = scmp.ne.s32.totalorder %s97, %s98
      %p110 = scmp.eq.s32.totalorder %s25, 1
      %p111 = por %p109, %p110
      %p113 = scmp.ne.s32.totalorder %s98, %s112
      %p114 = scmp.eq.s32.totalorder %s25, 0
      %p115 = por %p113, %p114
      %s117 = sadd.s32 %s116, 1
      %p120 = scmp.eq.s32.totalorder %s19, 1
      %p121 = scmp.ne.s32.totalorder %s116, %s118
      %p122 = scmp.eq.s32.totalorder %s19, 0
      %p123 = por %p121, %p122
      %p124 = scmp.ne.s32.totalorder %s116, %s118
      %p125 = scmp.eq.s32.totalorder %s24, 1
      %p126 = por %p124, %p125
      %p127 = scmp.ne.s32.totalorder %s118, %s119
      %p128 = scmp.eq.s32.totalorder %s24, 0
      %p129 = por %p127, %p128
      %p130 = scmp.ne.s32.totalorder %s118, %s119
      %p131 = scmp.eq.s32.totalorder %s25, 1
      %p132 = por %p130, %p131
      %p134 = scmp.ne.s32.totalorder %s119, %s133
      %p135 = scmp.eq.s32.totalorder %s25, 0
      %p136 = por %p134, %p135
      %s138 = sadd.s32 %s137, 1
      %p141 = scmp.eq.s32.totalorder %s19, 1
      %p142 = scmp.ne.s32.totalorder %s137, %s139
      %p143 = scmp.eq.s32.totalorder %s19, 0
      %p144 = por %p142, %p143
      %p145 = scmp.ne.s32.totalorder %s137, %s139
      %p146 = scmp.eq.s32.totalorder %s24, 1
      %p147 = por %p145, %p146
      %p148 = scmp.ne.s32.totalorder %s139, %s140
      %p149 = scmp.eq.s32.totalorder %s24, 0
      %p150 = por %p148, %p149
      %p151 = scmp.ne.s32.totalorder %s139, %s140
      %p152 = scmp.eq.s32.totalorder %s25, 1
      %p153 = por %p151, %p152
      %p155 = scmp.ne.s32.totalorder %s140, %s154
      %p156 = scmp.eq.s32.totalorder %s25, 0
      %p157 = por %p155, %p156
      %s159 = sadd.s32 %s158, 1
      %p162 = scmp.eq.s32.totalorder %s19, 1
      %p163 = scmp.ne.s32.totalorder %s158, %s160
      %p164 = scmp.eq.s32.totalorder %s19, 0
      %p165 = por %p163, %p164
      %p166 = scmp.ne.s32.totalorder %s158, %s160
      %p167 = scmp.eq.s32.totalorder %s24, 1
      %p168 = por %p166, %p167
      %p169 = scmp.ne.s32.totalorder %s160, %s161
      %p170 = scmp.eq.s32.totalorder %s24, 0
      %p171 = por %p169, %p170
      %p172 = scmp.ne.s32.totalorder %s160, %s161
      %p173 = scmp.eq.s32.totalorder %s25, 1
      %p174 = por %p172, %p173
      %p176 = scmp.ne.s32.totalorder %s161, %s175
      %p177 = scmp.eq.s32.totalorder %s25, 0
      %p178 = por %p176, %p177
      %s180 = sadd.s32 %s179, 1
      %p183 = scmp.eq.s32.totalorder %s19, 1
      %p184 = scmp.ne.s32.totalorder %s179, %s181
      %p185 = scmp.eq.s32.totalorder %s19, 0
      %p186 = por %p184, %p185
      %p187 = scmp.ne.s32.totalorder %s179, %s181
      %p188 = scmp.eq.s32.totalorder %s24, 1
      %p189 = por %p187, %p188
      %p190 = scmp.ne.s32.totalorder %s181, %s182
      %p191 = scmp.eq.s32.totalorder %s24, 0
      %p192 = por %p190, %p191
      %p193 = scmp.ne.s32.totalorder %s181, %s182
      %p194 = scmp.eq.s32.totalorder %s25, 1
      %p195 = por %p193, %p194
      %p197 = scmp.ne.s32.totalorder %s182, %s196
      %p198 = scmp.eq.s32.totalorder %s25, 0
      %p199 = por %p197, %p198
      %s201 = sadd.s32 %s200, 1
      %p204 = scmp.eq.s32.totalorder %s19, 1
      %p205 = scmp.ne.s32.totalorder %s200, %s202
      %p206 = scmp.eq.s32.totalorder %s19, 0
      %p207 = por %p205, %p206
      %p208 = scmp.ne.s32.totalorder %s200, %s202
      %p209 = scmp.eq.s32.totalorder %s24, 1
      %p210 = por %p208, %p209
      %p211 = scmp.ne.s32.totalorder %s202, %s203
      %p212 = scmp.eq.s32.totalorder %s24, 0
      %p213 = por %p211, %p212
      %p214 = scmp.ne.s32.totalorder %s202, %s203
      %p215 = scmp.eq.s32.totalorder %s25, 1
      %p216 = por %p214, %p215
      %p218 = scmp.ne.s32.totalorder %s203, %s217
      %p219 = scmp.eq.s32.totalorder %s25, 0
      %p220 = por %p218, %p219
      %s222 = sadd.s32 %s221, 1
      %p225 = scmp.eq.s32.totalorder %s19, 1
      %p226 = scmp.ne.s32.totalorder %s221, %s223
      %p227 = scmp.eq.s32.totalorder %s19, 0
      %p228 = por %p226, %p227
      %p229 = scmp.ne.s32.totalorder %s221, %s223
      %p230 = scmp.eq.s32.totalorder %s24, 1
      %p231 = por %p229, %p230
      %p232 = scmp.ne.s32.totalorder %s223, %s224
      %p233 = scmp.eq.s32.totalorder %s24, 0
      %p234 = por %p232, %p233
      %p235 = scmp.ne.s32.totalorder %s223, %s224
      %p236 = scmp.eq.s32.totalorder %s25, 1
      %p237 = por %p235, %p236
      %p239 = scmp.ne.s32.totalorder %s224, %s238
      %p240 = scmp.eq.s32.totalorder %s25, 0
      %p241 = por %p239, %p240
      %s242 = ssub.s32 %s19, %s26
      %p243 = scmp.eq.s32.totalorder %s242, 0
      %s245 = sadd.s32 %s244, 1
      %s246 = scalar_select %p243, %s244, %s245
      %p249 = pneg %p243
      %p250 = scmp.eq.s32.totalorder %s19, 1
      %p251 = por %p249, %p250
      %p252 = scmp.ne.s32.totalorder %s244, %s247
      %p253 = scmp.eq.s32.totalorder %s19, 0
      %p254 = por %p252, %p253
      %p255 = scmp.ne.s32.totalorder %s244, %s247
      %p256 = scmp.eq.s32.totalorder %s24, 1
      %p257 = por %p255, %p256
      %p258 = scmp.ne.s32.totalorder %s247, %s248
      %p259 = scmp.eq.s32.totalorder %s24, 0
      %p260 = por %p258, %p259
      %p261 = scmp.ne.s32.totalorder %s247, %s248
      %p262 = scmp.eq.s32.totalorder %s25, 1
      %p263 = por %p261, %p262
      %p265 = scmp.ne.s32.totalorder %s248, %s264
      %p266 = scmp.eq.s32.totalorder %s25, 0
      %p267 = por %p265, %p266
      %p268 = scmp.le.s32.totalorder 1, %s19
      %p269 = scmp.lt.s32.totalorder %s19, 3
      %p270 = pnand %p268, %p269
      %p271 = pneg %p270
      // Predicated region
      $region9: #{latent_encoder_gelu_forward.1} parent=5 // pred_check
        _
      $region10: #{latent_encoder_gelu_forward.1} parent=5 // pred_check_branch
        %273 = sbr.rel (%p270) target = $region12
      $region11: #{latent_encoder_gelu_forward.1} parent=5 // pred_region
        %s274 = ssub.s32 %s19, 1
        // Predicated region
        $region13: #{latent_encoder_gelu_forward.1} parent=11 // pred_check
          %p275 = pneg %p66
        $region14: #{latent_encoder_gelu_forward.1} parent=11 // pred_check_branch
          %277 = sbr.rel (%p275) target = $region16
        $region15: #{latent_encoder_gelu_forward.1} parent=11 // pred_region
          _
        $region16: #{latent_encoder_gelu_forward.1} parent=11 // pred_fallthru
          _
        // Predicated region
        $region17: #{latent_encoder_gelu_forward.1} parent=11 // pred_check
          %p278 = pneg %p87
        $region18: #{latent_encoder_gelu_forward.1} parent=11 // pred_check_branch
          %280 = sbr.rel (%p278) target = $region20
        $region19: #{latent_encoder_gelu_forward.1} parent=11 // pred_region
          _
        $region20: #{latent_encoder_gelu_forward.1} parent=11 // pred_fallthru
          _
        // Predicated region
        $region21: #{latent_encoder_gelu_forward.1} parent=11 // pred_check
          %p281 = pneg %p108
        $region22: #{latent_encoder_gelu_forward.1} parent=11 // pred_check_branch
          %283 = sbr.rel (%p281) target = $region24
        $region23: #{latent_encoder_gelu_forward.1} parent=11 // pred_region
          _
        $region24: #{latent_encoder_gelu_forward.1} parent=11 // pred_fallthru
          _
        // Predicated region
        $region25: #{latent_encoder_gelu_forward.1} parent=11 // pred_check
          %p284 = pneg %p129
        $region26: #{latent_encoder_gelu_forward.1} parent=11 // pred_check_branch
          %286 = sbr.rel (%p284) target = $region28
        $region27: #{latent_encoder_gelu_forward.1} parent=11 // pred_region
          _
        $region28: #{latent_encoder_gelu_forward.1} parent=11 // pred_fallthru
          _
        // Predicated region
        $region29: #{latent_encoder_gelu_forward.1} parent=11 // pred_check
          %p287 = pneg %p150
        $region30: #{latent_encoder_gelu_forward.1} parent=11 // pred_check_branch
          %289 = sbr.rel (%p287) target = $region32
        $region31: #{latent_encoder_gelu_forward.1} parent=11 // pred_region
          _
        $region32: #{latent_encoder_gelu_forward.1} parent=11 // pred_fallthru
          _
        // Predicated region
        $region33: #{latent_encoder_gelu_forward.1} parent=11 // pred_check
          %p290 = pneg %p171
        $region34: #{latent_encoder_gelu_forward.1} parent=11 // pred_check_branch
          %292 = sbr.rel (%p290) target = $region36
        $region35: #{latent_encoder_gelu_forward.1} parent=11 // pred_region
          _
        $region36: #{latent_encoder_gelu_forward.1} parent=11 // pred_fallthru
          _
        // Predicated region
        $region37: #{latent_encoder_gelu_forward.1} parent=11 // pred_check
          %p293 = pneg %p192
        $region38: #{latent_encoder_gelu_forward.1} parent=11 // pred_check_branch
          %295 = sbr.rel (%p293) target = $region40
        $region39: #{latent_encoder_gelu_forward.1} parent=11 // pred_region
          _
        $region40: #{latent_encoder_gelu_forward.1} parent=11 // pred_fallthru
          _
        // Predicated region
        $region41: #{latent_encoder_gelu_forward.1} parent=11 // pred_check
          %p296 = pneg %p213
        $region42: #{latent_encoder_gelu_forward.1} parent=11 // pred_check_branch
          %298 = sbr.rel (%p296) target = $region44
        $region43: #{latent_encoder_gelu_forward.1} parent=11 // pred_region
          _
        $region44: #{latent_encoder_gelu_forward.1} parent=11 // pred_fallthru
          _
        // Predicated region
        $region45: #{latent_encoder_gelu_forward.1} parent=11 // pred_check
          %p299 = pneg %p234
        $region46: #{latent_encoder_gelu_forward.1} parent=11 // pred_check_branch
          %301 = sbr.rel (%p299) target = $region48
        $region47: #{latent_encoder_gelu_forward.1} parent=11 // pred_region
          _
        $region48: #{latent_encoder_gelu_forward.1} parent=11 // pred_fallthru
          _
      $region12: #{latent_encoder_gelu_forward.1} parent=5 // pred_fallthru
        _
      %p302 = scmp.lt.s32.totalorder %s19, 2
      // Predicated region
      $region49: #{latent_encoder_gelu_forward.1} parent=5 // pred_check
        %p303 = pneg %p302
      $region50: #{latent_encoder_gelu_forward.1} parent=5 // pred_check_branch
        %305 = sbr.rel (%p303) target = $region52
      $region51: #{latent_encoder_gelu_forward.1} parent=5 // pred_region
        // Predicated region
        $region53: #{latent_encoder_gelu_forward.1} parent=51 // pred_check
          %p306 = pneg %p39
        $region54: #{latent_encoder_gelu_forward.1} parent=51 // pred_check_branch
          %308 = sbr.rel (%p306) target = $region56
        $region55: #{latent_encoder_gelu_forward.1} parent=51 // pred_region
          %p309 = scmp.lt.s32.totalorder %s19, 1
          %s310 = scalar_select %p309, %s19, 1
          %s311 = smul.addr %s310, 8
          %s312 = smul.addr %s311, 8
          %s313 = scalar_lea.vmem %s0, %s312
        $region56: #{latent_encoder_gelu_forward.1} parent=51 // pred_fallthru
          _
      $region52: #{latent_encoder_gelu_forward.1} parent=5 // pred_fallthru
        _
      %p314 = scmp.le.s32.totalorder 1, %s19
      %p315 = scmp.lt.s32.totalorder %s19, 3
      %p316 = pnand %p314, %p315
      %p317 = pneg %p316
      // Predicated region
      $region57: #{latent_encoder_gelu_forward.1} parent=5 // pred_check
        _
      $region58: #{latent_encoder_gelu_forward.1} parent=5 // pred_check_branch
        %319 = sbr.rel (%p316) target = $region60
      $region59: #{latent_encoder_gelu_forward.1} parent=5 // pred_region
        %s320 = ssub.s32 %s19, 1
        %p321 = scmp.lt.s32.totalorder %s24, 1
        %s322 = scalar_select %p321, %s24, 1
        %s323 = smul.addr %s322, 8
        %s324 = smul.addr %s323, 8
        %s325 = scalar_lea.vmem %s0, %s324
        %p326 = pneg %p45
        %p327 = pneg %p42
        %p328 = pneg %p66
        %p329 = pneg %p63
        %p330 = pneg %p87
        %p331 = pneg %p84
        %p332 = pneg %p108
        %p333 = pneg %p105
        %p334 = pneg %p129
        %p335 = pneg %p126
        %p336 = pneg %p150
        %p337 = pneg %p147
        %p338 = pneg %p171
        %p339 = pneg %p168
        %p340 = pneg %p192
        %p341 = pneg %p189
        %p342 = pneg %p213
        %p343 = pneg %p210
        %p344 = pneg %p234
        %p345 = pneg %p231
        %p346 = pneg %p260
        %p347 = pneg %p257
        %s348 = sand.u32 %s247, 1
        %s349 = scalar_lea.sflag [#allocation5], %s348
        %s350 = sand.u32 %s247, 1
        %s351 = smul.addr %s350, 16
        %s352 = scalar_lea.vmem [#allocation4], %s351
        %p353 = scmp.lt.s32.totalorder %s24, 1
        %s354 = scalar_select %p353, %s24, 1
        %s355 = smul.addr %s354, 8
        %s356 = smul.addr %s355, 8
        %s357 = scalar_lea.vmem %s0, %s356
        %358 = vst [vmem:[#allocation2] sm:$0xff] 0.0
        %359 = vst [vmem:[#allocation2 + $0x8] sm:$0x3] 0.0
        %s360 = scalar_lea.vmem [#allocation2], 144
        %361 = vst [vmem:[%s360] sm:$0xff] 0.0
        %362 = vst [vmem:[%s360 + $0x8] sm:$0x3] 0.0
        %s363 = scalar_lea.vmem [#allocation2], 16
        %364 = vst [vmem:[%s363] sm:$0x1] 0.0
        %365 = vst [vmem:[%s363 + $0x10] sm:$0x1] 0.0
        %366 = vst [vmem:[%s363 + $0x20] sm:$0x1] 0.0
        %367 = vst [vmem:[%s363 + $0x30] sm:$0x1] 0.0
        %368 = vst [vmem:[%s363 + $0x40] sm:$0x1] 0.0
        %369 = vst [vmem:[%s363 + $0x50] sm:$0x1] 0.0
        %370 = vst [vmem:[%s363 + $0x60] sm:$0x1] 0.0
        %371 = vst [vmem:[%s363 + $0x70] sm:$0x1] 0.0
        %372 = vst [vmem:[%s363 + $0x9] sm:$0x1] 0.0
        %373 = vst [vmem:[%s363 + $0x19] sm:$0x1] 0.0
        %374 = vst [vmem:[%s363 + $0x29] sm:$0x1] 0.0
        %375 = vst [vmem:[%s363 + $0x39] sm:$0x1] 0.0
        %376 = vst [vmem:[%s363 + $0x49] sm:$0x1] 0.0
        %377 = vst [vmem:[%s363 + $0x59] sm:$0x1] 0.0
        %378 = vst [vmem:[%s363 + $0x69] sm:$0x1] 0.0
        %379 = vst [vmem:[%s363 + $0x79] sm:$0x1] 0.0
        %380 = vst [vmem:[#allocation3] sm:$0xff] 0.0
        %381 = vst [vmem:[#allocation3 + $0x8] sm:$0x3] 0.0
        %s382 = scalar_lea.vmem [#allocation3], 144
        %383 = vst [vmem:[%s382] sm:$0xff] 0.0
        %384 = vst [vmem:[%s382 + $0x8] sm:$0x3] 0.0
        %s385 = scalar_lea.vmem [#allocation3], 16
        %386 = vst [vmem:[%s385] sm:$0x1] 0.0
        %387 = vst [vmem:[%s385 + $0x10] sm:$0x1] 0.0
        %388 = vst [vmem:[%s385 + $0x20] sm:$0x1] 0.0
        %389 = vst [vmem:[%s385 + $0x30] sm:$0x1] 0.0
        %390 = vst [vmem:[%s385 + $0x40] sm:$0x1] 0.0
        %391 = vst [vmem:[%s385 + $0x50] sm:$0x1] 0.0
        %392 = vst [vmem:[%s385 + $0x60] sm:$0x1] 0.0
        %393 = vst [vmem:[%s385 + $0x70] sm:$0x1] 0.0
        %394 = vst [vmem:[%s385 + $0x9] sm:$0x1] 0.0
        %395 = vst [vmem:[%s385 + $0x19] sm:$0x1] 0.0
        %396 = vst [vmem:[%s385 + $0x29] sm:$0x1] 0.0
        %397 = vst [vmem:[%s385 + $0x39] sm:$0x1] 0.0
        %398 = vst [vmem:[%s385 + $0x49] sm:$0x1] 0.0
        %399 = vst [vmem:[%s385 + $0x59] sm:$0x1] 0.0
        %400 = vst [vmem:[%s385 + $0x69] sm:$0x1] 0.0
        %401 = vst [vmem:[%s385 + $0x79] sm:$0x1] 0.0
        %v402 = vld [vmem:[%s357] sm:$0xff]
        %v403 = vld [vmem:[%s357 + $0x8] sm:$0xff]
        %v404 = vld [vmem:[%s357 + $0x10] sm:$0xff]
        %v405 = vld [vmem:[%s357 + $0x18] sm:$0xff]
        %v406 = vld [vmem:[%s357 + $0x20] sm:$0xff]
        %v407 = vld [vmem:[%s357 + $0x28] sm:$0xff]
        %v408 = vld [vmem:[%s357 + $0x30] sm:$0xff]
        %v409 = vld [vmem:[%s357 + $0x38] sm:$0xff]
        %410 = vst [vmem:[%s363 + $0x1] sm:$0xff] %v402
        %411 = vst [vmem:[%s363 + $0x11] sm:$0xff] %v403
        %412 = vst [vmem:[%s363 + $0x21] sm:$0xff] %v404
        %413 = vst [vmem:[%s363 + $0x31] sm:$0xff] %v405
        %414 = vst [vmem:[%s363 + $0x41] sm:$0xff] %v406
        %415 = vst [vmem:[%s363 + $0x51] sm:$0xff] %v407
        %416 = vst [vmem:[%s363 + $0x61] sm:$0xff] %v408
        %417 = vst [vmem:[%s363 + $0x71] sm:$0xff] %v409
        %v418 = vld [vmem:[#allocation2] sm:$0xff]
        %v419 = vld [vmem:[#allocation2 + $0x10] sm:$0xff]
        %v420 = vld [vmem:[#allocation2 + $0x20] sm:$0xff]
        %v421 = vld [vmem:[#allocation2 + $0x30] sm:$0xff]
        %v422 = vld [vmem:[#allocation2 + $0x40] sm:$0xff]
        %v423 = vld [vmem:[#allocation2 + $0x50] sm:$0xff]
        %v424 = vld [vmem:[#allocation2 + $0x60] sm:$0xff]
        %v425 = vld [vmem:[#allocation2 + $0x70] sm:$0xff]
        %v426 = vld [vmem:[%s1] sm:$0xff]
        %v427 = vld [vmem:[%s1 + $0x8] sm:$0xff]
        %v428 = vld [vmem:[%s1 + $0x10] sm:$0xff]
        %v429 = vld [vmem:[%s1 + $0x18] sm:$0xff]
        %v430 = vld [vmem:[%s1 + $0x20] sm:$0xff]
        %v431 = vld [vmem:[%s1 + $0x28] sm:$0xff]
        %v432 = vld [vmem:[%s1 + $0x30] sm:$0xff]
        %v433 = vld [vmem:[%s1 + $0x38] sm:$0xff]
        %v434 = vld [vmem:[%s1 + $0x40] sm:$0xff]
        %v435 = vld [vmem:[%s1 + $0x48] sm:$0xff]
        %v436 = vld [vmem:[%s1 + $0x50] sm:$0xff]
        %v437 = vld [vmem:[%s1 + $0x58] sm:$0xff]
        %v438 = vld [vmem:[%s1 + $0x60] sm:$0xff]
        %v439 = vld [vmem:[%s1 + $0x68] sm:$0xff]
        %v440 = vld [vmem:[%s1 + $0x70] sm:$0xff]
        %v441 = vld [vmem:[%s1 + $0x78] sm:$0xff]
        %v442 = vld [vmem:[#allocation2 + $0x1] sm:$0xff]
        %v443 = vld [vmem:[#allocation2 + $0x11] sm:$0xff]
        %v444 = vld [vmem:[#allocation2 + $0x21] sm:$0xff]
        %v445 = vld [vmem:[#allocation2 + $0x31] sm:$0xff]
        %v446 = vld [vmem:[#allocation2 + $0x41] sm:$0xff]
        %v447 = vld [vmem:[#allocation2 + $0x51] sm:$0xff]
        %v448 = vld [vmem:[#allocation2 + $0x61] sm:$0xff]
        %v449 = vld [vmem:[#allocation2 + $0x71] sm:$0xff]
        %s450 = scalar_lea.vmem %s1, 128
        %v451 = vld [vmem:[%s450] sm:$0xff]
        %v452 = vld [vmem:[%s450 + $0x8] sm:$0xff]
        %v453 = vld [vmem:[%s450 + $0x10] sm:$0xff]
        %v454 = vld [vmem:[%s450 + $0x18] sm:$0xff]
        %v455 = vld [vmem:[%s450 + $0x20] sm:$0xff]
        %v456 = vld [vmem:[%s450 + $0x28] sm:$0xff]
        %v457 = vld [vmem:[%s450 + $0x30] sm:$0xff]
        %v458 = vld [vmem:[%s450 + $0x38] sm:$0xff]
        %v459 = vld [vmem:[%s450 + $0x40] sm:$0xff]
        %v460 = vld [vmem:[%s450 + $0x48] sm:$0xff]
        %v461 = vld [vmem:[%s450 + $0x50] sm:$0xff]
        %v462 = vld [vmem:[%s450 + $0x58] sm:$0xff]
        %v463 = vld [vmem:[%s450 + $0x60] sm:$0xff]
        %v464 = vld [vmem:[%s450 + $0x68] sm:$0xff]
        %v465 = vld [vmem:[%s450 + $0x70] sm:$0xff]
        %v466 = vld [vmem:[%s450 + $0x78] sm:$0xff]
        %467 = vmatprep.subr.mxu0 0.0
        %468 = vmatpush1.msra.mxu0 %v466
        %469 = vmatprep.subr.mxu0 0.0
        %470 = vmatpush1.msra.mxu0 %v465
        %471 = vmatprep.subr.mxu0 0.0
        %472 = vmatpush1.msra.mxu0 %v464
        %473 = vmatprep.subr.mxu0 0.0
        %474 = vmatpush1.msra.mxu0 %v463
        %475 = vmatprep.subr.mxu0 0.0
        %476 = vmatpush1.msra.mxu0 %v462
        %477 = vmatprep.subr.mxu0 0.0
        %478 = vmatpush1.msra.mxu0 %v461
        %479 = vmatprep.subr.mxu0 0.0
        %480 = vmatpush1.msra.mxu0 %v460
        %481 = vmatprep.subr.mxu0 0.0
        %482 = vmatpush1.msra.mxu0 %v459
        %483 = vmatprep.subr.mxu0 0.0
        %484 = vmatpush1.msra.mxu0 %v458
        %485 = vmatprep.subr.mxu0 0.0
        %486 = vmatpush1.msra.mxu0 %v457
        %487 = vmatprep.subr.mxu0 0.0
        %488 = vmatpush1.msra.mxu0 %v456
        %489 = vmatprep.subr.mxu0 0.0
        %490 = vmatpush1.msra.mxu0 %v455
        %491 = vmatprep.subr.mxu0 0.0
        %492 = vmatpush1.msra.mxu0 %v454
        %493 = vmatprep.subr.mxu0 0.0
        %494 = vmatpush1.msra.mxu0 %v453
        %495 = vmatprep.subr.mxu0 0.0
        %496 = vmatpush1.msra.mxu0 %v452
        %497 = vmatprep.subr.mxu0 0.0
        %498 = vmatpush1.msra.mxu0 %v451
        %499 = vmatprep.subr.mxu0 0.0
        %500 = vmatpush2.msra.mxu0 0.0
        %501 = vmatprep.subr.mxu0 0.0
        %502 = vmatpush2.msra.mxu0 0.0
        %503 = vmatprep.subr.mxu0 0.0
        %504 = vmatpush2.msra.mxu0 0.0
        %505 = vmatprep.subr.mxu0 0.0
        %506 = vmatpush2.msra.mxu0 0.0
        %507 = vmatprep.subr.mxu0 0.0
        %508 = vmatpush2.msra.mxu0 0.0
        %509 = vmatprep.subr.mxu0 0.0
        %510 = vmatpush2.msra.mxu0 0.0
        %511 = vmatprep.subr.mxu0 0.0
        %512 = vmatpush2.msra.mxu0 0.0
        %513 = vmatprep.subr.mxu0 0.0
        %514 = vmatpush2.msra.mxu0 0.0
        %515 = vmatprep.subr.mxu0 0.0
        %516 = vmatpush2.msra.mxu0 0.0
        %517 = vmatprep.subr.mxu0 0.0
        %518 = vmatpush2.msra.mxu0 0.0
        %519 = vmatprep.subr.mxu0 0.0
        %520 = vmatpush2.msra.mxu0 0.0
        %521 = vmatprep.subr.mxu0 0.0
        %522 = vmatpush2.msra.mxu0 0.0
        %523 = vmatprep.subr.mxu0 0.0
        %524 = vmatpush2.msra.mxu0 0.0
        %525 = vmatprep.subr.mxu0 0.0
        %526 = vmatpush2.msra.mxu0 0.0
        %527 = vmatprep.subr.mxu0 0.0
        %528 = vmatpush2.msra.mxu0 0.0
        %529 = vmatprep.subr.mxu0 0.0
        %530 = vmatpush2.msra.mxu0 0.0
        %531 = vmatprep.mubr.f32.mxu0 0.0
        %532 = vmatmul.mubr.f32.gmra.mxu0 %v442
        %v533 = vpop.f32.mrf.mxu0
        %v534 = vadd.f32 0.0, %v533
        %v535 = vpop.f32.mrf.mxu0
        %536 = vmatprep.mubr.f32.mxu0 0.0
        %537 = vmatmul.mubr.f32.gmra.mxu0 %v443
        %v538 = vpop.f32.mrf.mxu0
        %v539 = vadd.f32 0.0, %v538
        %v540 = vpop.f32.mrf.mxu0
        %541 = vmatprep.mubr.f32.mxu0 0.0
        %542 = vmatmul.mubr.f32.gmra.mxu0 %v444
        %v543 = vpop.f32.mrf.mxu0
        %v544 = vadd.f32 0.0, %v543
        %v545 = vpop.f32.mrf.mxu0
        %546 = vmatprep.mubr.f32.mxu0 0.0
        %547 = vmatmul.mubr.f32.gmra.mxu0 %v445
        %v548 = vpop.f32.mrf.mxu0
        %v549 = vadd.f32 0.0, %v548
        %v550 = vpop.f32.mrf.mxu0
        %551 = vmatprep.mubr.f32.mxu0 0.0
        %552 = vmatmul.mubr.f32.gmra.mxu0 %v446
        %v553 = vpop.f32.mrf.mxu0
        %v554 = vadd.f32 0.0, %v553
        %v555 = vpop.f32.mrf.mxu0
        %556 = vmatprep.mubr.f32.mxu0 0.0
        %557 = vmatmul.mubr.f32.gmra.mxu0 %v447
        %v558 = vpop.f32.mrf.mxu0
        %v559 = vadd.f32 0.0, %v558
        %v560 = vpop.f32.mrf.mxu0
        %561 = vmatprep.mubr.f32.mxu0 0.0
        %562 = vmatmul.mubr.f32.gmra.mxu0 %v448
        %v563 = vpop.f32.mrf.mxu0
        %v564 = vadd.f32 0.0, %v563
        %v565 = vpop.f32.mrf.mxu0
        %566 = vmatprep.mubr.f32.mxu0 0.0
        %567 = vmatmul.mubr.f32.gmra.mxu0 %v449
        %v568 = vpop.f32.mrf.mxu0
        %v569 = vadd.f32 0.0, %v568
        %v570 = vpop.f32.mrf.mxu0
        %571 = vdwg.mxu0
        %572 = vmatprep.subr.mxu0 0.0
        %573 = vmatpush1.msra.mxu0 %v441
        %574 = vmatprep.subr.mxu0 0.0
        %575 = vmatpush1.msra.mxu0 %v440
        %576 = vmatprep.subr.mxu0 0.0
        %577 = vmatpush1.msra.mxu0 %v439
        %578 = vmatprep.subr.mxu0 0.0
        %579 = vmatpush1.msra.mxu0 %v438
        %580 = vmatprep.subr.mxu0 0.0
        %581 = vmatpush1.msra.mxu0 %v437
        %582 = vmatprep.subr.mxu0 0.0
        %583 = vmatpush1.msra.mxu0 %v436
        %584 = vmatprep.subr.mxu0 0.0
        %585 = vmatpush1.msra.mxu0 %v435
        %586 = vmatprep.subr.mxu0 0.0
        %587 = vmatpush1.msra.mxu0 %v434
        %588 = vmatprep.subr.mxu0 0.0
        %589 = vmatpush1.msra.mxu0 %v433
        %590 = vmatprep.subr.mxu0 0.0
        %591 = vmatpush1.msra.mxu0 %v432
        %592 = vmatprep.subr.mxu0 0.0
        %593 = vmatpush1.msra.mxu0 %v431
        %594 = vmatprep.subr.mxu0 0.0
        %595 = vmatpush1.msra.mxu0 %v430
        %596 = vmatprep.subr.mxu0 0.0
        %597 = vmatpush1.msra.mxu0 %v429
        %598 = vmatprep.subr.mxu0 0.0
        %599 = vmatpush1.msra.mxu0 %v428
        %600 = vmatprep.subr.mxu0 0.0
        %601 = vmatpush1.msra.mxu0 %v427
        %602 = vmatprep.subr.mxu0 0.0
        %603 = vmatpush1.msra.mxu0 %v426
        %604 = vmatprep.subr.mxu0 0.0
        %605 = vmatpush2.msra.mxu0 0.0
        %606 = vmatprep.subr.mxu0 0.0
        %607 = vmatpush2.msra.mxu0 0.0
        %608 = vmatprep.subr.mxu0 0.0
        %609 = vmatpush2.msra.mxu0 0.0
        %610 = vmatprep.subr.mxu0 0.0
        %611 = vmatpush2.msra.mxu0 0.0
        %612 = vmatprep.subr.mxu0 0.0
        %613 = vmatpush2.msra.mxu0 0.0
        %614 = vmatprep.subr.mxu0 0.0
        %615 = vmatpush2.msra.mxu0 0.0
        %616 = vmatprep.subr.mxu0 0.0
        %617 = vmatpush2.msra.mxu0 0.0
        %618 = vmatprep.subr.mxu0 0.0
        %619 = vmatpush2.msra.mxu0 0.0
        %620 = vmatprep.subr.mxu0 0.0
        %621 = vmatpush2.msra.mxu0 0.0
        %622 = vmatprep.subr.mxu0 0.0
        %623 = vmatpush2.msra.mxu0 0.0
        %624 = vmatprep.subr.mxu0 0.0
        %625 = vmatpush2.msra.mxu0 0.0
        %626 = vmatprep.subr.mxu0 0.0
        %627 = vmatpush2.msra.mxu0 0.0
        %628 = vmatprep.subr.mxu0 0.0
        %629 = vmatpush2.msra.mxu0 0.0
        %630 = vmatprep.subr.mxu0 0.0
        %631 = vmatpush2.msra.mxu0 0.0
        %632 = vmatprep.subr.mxu0 0.0
        %633 = vmatpush2.msra.mxu0 0.0
        %634 = vmatprep.subr.mxu0 0.0
        %635 = vmatpush2.msra.mxu0 0.0
        %636 = vmatprep.mubr.f32.mxu0 0.0
        %637 = vmatmul.mubr.f32.gmra.mxu0 %v418
        %v638 = vpop.f32.mrf.mxu0
        %v639 = vadd.f32 %v534, %v638
        %v640 = vpop.f32.mrf.mxu0
        %641 = vmatprep.mubr.f32.mxu0 0.0
        %642 = vmatmul.mubr.f32.gmra.mxu0 %v419
        %v643 = vpop.f32.mrf.mxu0
        %v644 = vadd.f32 %v539, %v643
        %v645 = vpop.f32.mrf.mxu0
        %646 = vmatprep.mubr.f32.mxu0 0.0
        %647 = vmatmul.mubr.f32.gmra.mxu0 %v420
        %v648 = vpop.f32.mrf.mxu0
        %v649 = vadd.f32 %v544, %v648
        %v650 = vpop.f32.mrf.mxu0
        %651 = vmatprep.mubr.f32.mxu0 0.0
        %652 = vmatmul.mubr.f32.gmra.mxu0 %v421
        %v653 = vpop.f32.mrf.mxu0
        %v654 = vadd.f32 %v549, %v653
        %v655 = vpop.f32.mrf.mxu0
        %656 = vmatprep.mubr.f32.mxu0 0.0
        %657 = vmatmul.mubr.f32.gmra.mxu0 %v422
        %v658 = vpop.f32.mrf.mxu0
        %v659 = vadd.f32 %v554, %v658
        %v660 = vpop.f32.mrf.mxu0
        %661 = vmatprep.mubr.f32.mxu0 0.0
        %662 = vmatmul.mubr.f32.gmra.mxu0 %v423
        %v663 = vpop.f32.mrf.mxu0
        %v664 = vadd.f32 %v559, %v663
        %v665 = vpop.f32.mrf.mxu0
        %666 = vmatprep.mubr.f32.mxu0 0.0
        %667 = vmatmul.mubr.f32.gmra.mxu0 %v424
        %v668 = vpop.f32.mrf.mxu0
        %v669 = vadd.f32 %v564, %v668
        %v670 = vpop.f32.mrf.mxu0
        %671 = vmatprep.mubr.f32.mxu0 0.0
        %672 = vmatmul.mubr.f32.gmra.mxu0 %v425
        %v673 = vpop.f32.mrf.mxu0
        %v674 = vadd.f32 %v569, %v673
        %v675 = vpop.f32.mrf.mxu0
        %676 = vdwg.mxu0
        %v677 = vld [vmem:[#allocation2 + $0x2] sm:$0xff]
        %v678 = vld [vmem:[#allocation2 + $0x12] sm:$0xff]
        %v679 = vld [vmem:[#allocation2 + $0x22] sm:$0xff]
        %v680 = vld [vmem:[#allocation2 + $0x32] sm:$0xff]
        %v681 = vld [vmem:[#allocation2 + $0x42] sm:$0xff]
        %v682 = vld [vmem:[#allocation2 + $0x52] sm:$0xff]
        %v683 = vld [vmem:[#allocation2 + $0x62] sm:$0xff]
        %v684 = vld [vmem:[#allocation2 + $0x72] sm:$0xff]
        %s685 = scalar_lea.vmem %s1, 256
        %v686 = vld [vmem:[%s685] sm:$0xff]
        %v687 = vld [vmem:[%s685 + $0x8] sm:$0xff]
        %v688 = vld [vmem:[%s685 + $0x10] sm:$0xff]
        %v689 = vld [vmem:[%s685 + $0x18] sm:$0xff]
        %v690 = vld [vmem:[%s685 + $0x20] sm:$0xff]
        %v691 = vld [vmem:[%s685 + $0x28] sm:$0xff]
        %v692 = vld [vmem:[%s685 + $0x30] sm:$0xff]
        %v693 = vld [vmem:[%s685 + $0x38] sm:$0xff]
        %v694 = vld [vmem:[%s685 + $0x40] sm:$0xff]
        %v695 = vld [vmem:[%s685 + $0x48] sm:$0xff]
        %v696 = vld [vmem:[%s685 + $0x50] sm:$0xff]
        %v697 = vld [vmem:[%s685 + $0x58] sm:$0xff]
        %v698 = vld [vmem:[%s685 + $0x60] sm:$0xff]
        %v699 = vld [vmem:[%s685 + $0x68] sm:$0xff]
        %v700 = vld [vmem:[%s685 + $0x70] sm:$0xff]
        %v701 = vld [vmem:[%s685 + $0x78] sm:$0xff]
        %702 = vmatprep.subr.mxu0 0.0
        %703 = vmatpush1.msra.mxu0 %v701
        %704 = vmatprep.subr.mxu0 0.0
        %705 = vmatpush1.msra.mxu0 %v700
        %706 = vmatprep.subr.mxu0 0.0
        %707 = vmatpush1.msra.mxu0 %v699
        %708 = vmatprep.subr.mxu0 0.0
        %709 = vmatpush1.msra.mxu0 %v698
        %710 = vmatprep.subr.mxu0 0.0
        %711 = vmatpush1.msra.mxu0 %v697
        %712 = vmatprep.subr.mxu0 0.0
        %713 = vmatpush1.msra.mxu0 %v696
        %714 = vmatprep.subr.mxu0 0.0
        %715 = vmatpush1.msra.mxu0 %v695
        %716 = vmatprep.subr.mxu0 0.0
        %717 = vmatpush1.msra.mxu0 %v694
        %718 = vmatprep.subr.mxu0 0.0
        %719 = vmatpush1.msra.mxu0 %v693
        %720 = vmatprep.subr.mxu0 0.0
        %721 = vmatpush1.msra.mxu0 %v692
        %722 = vmatprep.subr.mxu0 0.0
        %723 = vmatpush1.msra.mxu0 %v691
        %724 = vmatprep.subr.mxu0 0.0
        %725 = vmatpush1.msra.mxu0 %v690
        %726 = vmatprep.subr.mxu0 0.0
        %727 = vmatpush1.msra.mxu0 %v689
        %728 = vmatprep.subr.mxu0 0.0
        %729 = vmatpush1.msra.mxu0 %v688
        %730 = vmatprep.subr.mxu0 0.0
        %731 = vmatpush1.msra.mxu0 %v687
        %732 = vmatprep.subr.mxu0 0.0
        %733 = vmatpush1.msra.mxu0 %v686
        %734 = vmatprep.subr.mxu0 0.0
        %735 = vmatpush2.msra.mxu0 0.0
        %736 = vmatprep.subr.mxu0 0.0
        %737 = vmatpush2.msra.mxu0 0.0
        %738 = vmatprep.subr.mxu0 0.0
        %739 = vmatpush2.msra.mxu0 0.0
        %740 = vmatprep.subr.mxu0 0.0
        %741 = vmatpush2.msra.mxu0 0.0
        %742 = vmatprep.subr.mxu0 0.0
        %743 = vmatpush2.msra.mxu0 0.0
        %744 = vmatprep.subr.mxu0 0.0
        %745 = vmatpush2.msra.mxu0 0.0
        %746 = vmatprep.subr.mxu0 0.0
        %747 = vmatpush2.msra.mxu0 0.0
        %748 = vmatprep.subr.mxu0 0.0
        %749 = vmatpush2.msra.mxu0 0.0
        %750 = vmatprep.subr.mxu0 0.0
        %751 = vmatpush2.msra.mxu0 0.0
        %752 = vmatprep.subr.mxu0 0.0
        %753 = vmatpush2.msra.mxu0 0.0
        %754 = vmatprep.subr.mxu0 0.0
        %755 = vmatpush2.msra.mxu0 0.0
        %756 = vmatprep.subr.mxu0 0.0
        %757 = vmatpush2.msra.mxu0 0.0
        %758 = vmatprep.subr.mxu0 0.0
        %759 = vmatpush2.msra.mxu0 0.0
        %760 = vmatprep.subr.mxu0 0.0
        %761 = vmatpush2.msra.mxu0 0.0
        %762 = vmatprep.subr.mxu0 0.0
        %763 = vmatpush2.msra.mxu0 0.0
        %764 = vmatprep.subr.mxu0 0.0
        %765 = vmatpush2.msra.mxu0 0.0
        %766 = vmatprep.mubr.f32.mxu0 0.0
        %767 = vmatmul.mubr.f32.gmra.mxu0 %v677
        %v768 = vpop.f32.mrf.mxu0
        %v769 = vadd.f32 0.0, %v768
        %v770 = vpop.f32.mrf.mxu0
        %771 = vmatprep.mubr.f32.mxu0 0.0
        %772 = vmatmul.mubr.f32.gmra.mxu0 %v678
        %v773 = vpop.f32.mrf.mxu0
        %v774 = vadd.f32 0.0, %v773
        %v775 = vpop.f32.mrf.mxu0
        %776 = vmatprep.mubr.f32.mxu0 0.0
        %777 = vmatmul.mubr.f32.gmra.mxu0 %v679
        %v778 = vpop.f32.mrf.mxu0
        %v779 = vadd.f32 0.0, %v778
        %v780 = vpop.f32.mrf.mxu0
        %781 = vmatprep.mubr.f32.mxu0 0.0
        %782 = vmatmul.mubr.f32.gmra.mxu0 %v680
        %v783 = vpop.f32.mrf.mxu0
        %v784 = vadd.f32 0.0, %v783
        %v785 = vpop.f32.mrf.mxu0
        %786 = vmatprep.mubr.f32.mxu0 0.0
        %787 = vmatmul.mubr.f32.gmra.mxu0 %v681
        %v788 = vpop.f32.mrf.mxu0
        %v789 = vadd.f32 0.0, %v788
        %v790 = vpop.f32.mrf.mxu0
        %791 = vmatprep.mubr.f32.mxu0 0.0
        %792 = vmatmul.mubr.f32.gmra.mxu0 %v682
        %v793 = vpop.f32.mrf.mxu0
        %v794 = vadd.f32 0.0, %v793
        %v795 = vpop.f32.mrf.mxu0
        %796 = vmatprep.mubr.f32.mxu0 0.0
        %797 = vmatmul.mubr.f32.gmra.mxu0 %v683
        %v798 = vpop.f32.mrf.mxu0
        %v799 = vadd.f32 0.0, %v798
        %v800 = vpop.f32.mrf.mxu0
        %801 = vmatprep.mubr.f32.mxu0 0.0
        %802 = vmatmul.mubr.f32.gmra.mxu0 %v684
        %v803 = vpop.f32.mrf.mxu0
        %v804 = vadd.f32 0.0, %v803
        %v805 = vpop.f32.mrf.mxu0
        %806 = vdwg.mxu0
        %v807 = vadd.f32 %v639, %v769
        %v808 = vadd.f32 %v644, %v774
        %v809 = vadd.f32 %v649, %v779
        %v810 = vadd.f32 %v654, %v784
        %v811 = vadd.f32 %v659, %v789
        %v812 = vadd.f32 %v664, %v794
        %v813 = vadd.f32 %v669, %v799
        %v814 = vadd.f32 %v674, %v804
        %v815 = vld [vmem:[%s363] sm:$0xff]
        %v816 = vld [vmem:[%s363 + $0x10] sm:$0xff]
        %v817 = vld [vmem:[%s363 + $0x20] sm:$0xff]
        %v818 = vld [vmem:[%s363 + $0x30] sm:$0xff]
        %v819 = vld [vmem:[%s363 + $0x40] sm:$0xff]
        %v820 = vld [vmem:[%s363 + $0x50] sm:$0xff]
        %v821 = vld [vmem:[%s363 + $0x60] sm:$0xff]
        %v822 = vld [vmem:[%s363 + $0x70] sm:$0xff]
        %s823 = scalar_lea.vmem %s1, 384
        %v824 = vld [vmem:[%s823] sm:$0xff]
        %v825 = vld [vmem:[%s823 + $0x8] sm:$0xff]
        %v826 = vld [vmem:[%s823 + $0x10] sm:$0xff]
        %v827 = vld [vmem:[%s823 + $0x18] sm:$0xff]
        %v828 = vld [vmem:[%s823 + $0x20] sm:$0xff]
        %v829 = vld [vmem:[%s823 + $0x28] sm:$0xff]
        %v830 = vld [vmem:[%s823 + $0x30] sm:$0xff]
        %v831 = vld [vmem:[%s823 + $0x38] sm:$0xff]
        %v832 = vld [vmem:[%s823 + $0x40] sm:$0xff]
        %v833 = vld [vmem:[%s823 + $0x48] sm:$0xff]
        %v834 = vld [vmem:[%s823 + $0x50] sm:$0xff]
        %v835 = vld [vmem:[%s823 + $0x58] sm:$0xff]
        %v836 = vld [vmem:[%s823 + $0x60] sm:$0xff]
        %v837 = vld [vmem:[%s823 + $0x68] sm:$0xff]
        %v838 = vld [vmem:[%s823 + $0x70] sm:$0xff]
        %v839 = vld [vmem:[%s823 + $0x78] sm:$0xff]
        %840 = vmatprep.subr.mxu0 0.0
        %841 = vmatpush1.msra.mxu0 %v839
        %842 = vmatprep.subr.mxu0 0.0
        %843 = vmatpush1.msra.mxu0 %v838
        %844 = vmatprep.subr.mxu0 0.0
        %845 = vmatpush1.msra.mxu0 %v837
        %846 = vmatprep.subr.mxu0 0.0
        %847 = vmatpush1.msra.mxu0 %v836
        %848 = vmatprep.subr.mxu0 0.0
        %849 = vmatpush1.msra.mxu0 %v835
        %850 = vmatprep.subr.mxu0 0.0
        %851 = vmatpush1.msra.mxu0 %v834
        %852 = vmatprep.subr.mxu0 0.0
        %853 = vmatpush1.msra.mxu0 %v833
        %854 = vmatprep.subr.mxu0 0.0
        %855 = vmatpush1.msra.mxu0 %v832
        %856 = vmatprep.subr.mxu0 0.0
        %857 = vmatpush1.msra.mxu0 %v831
        %858 = vmatprep.subr.mxu0 0.0
        %859 = vmatpush1.msra.mxu0 %v830
        %860 = vmatprep.subr.mxu0 0.0
        %861 = vmatpush1.msra.mxu0 %v829
        %862 = vmatprep.subr.mxu0 0.0
        %863 = vmatpush1.msra.mxu0 %v828
        %864 = vmatprep.subr.mxu0 0.0
        %865 = vmatpush1.msra.mxu0 %v827
        %866 = vmatprep.subr.mxu0 0.0
        %867 = vmatpush1.msra.mxu0 %v826
        %868 = vmatprep.subr.mxu0 0.0
        %869 = vmatpush1.msra.mxu0 %v825
        %870 = vmatprep.subr.mxu0 0.0
        %871 = vmatpush1.msra.mxu0 %v824
        %872 = vmatprep.subr.mxu0 0.0
        %873 = vmatpush2.msra.mxu0 0.0
        %874 = vmatprep.subr.mxu0 0.0
        %875 = vmatpush2.msra.mxu0 0.0
        %876 = vmatprep.subr.mxu0 0.0
        %877 = vmatpush2.msra.mxu0 0.0
        %878 = vmatprep.subr.mxu0 0.0
        %879 = vmatpush2.msra.mxu0 0.0
        %880 = vmatprep.subr.mxu0 0.0
        %881 = vmatpush2.msra.mxu0 0.0
        %882 = vmatprep.subr.mxu0 0.0
        %883 = vmatpush2.msra.mxu0 0.0
        %884 = vmatprep.subr.mxu0 0.0
        %885 = vmatpush2.msra.mxu0 0.0
        %886 = vmatprep.subr.mxu0 0.0
        %887 = vmatpush2.msra.mxu0 0.0
        %888 = vmatprep.subr.mxu0 0.0
        %889 = vmatpush2.msra.mxu0 0.0
        %890 = vmatprep.subr.mxu0 0.0
        %891 = vmatpush2.msra.mxu0 0.0
        %892 = vmatprep.subr.mxu0 0.0
        %893 = vmatpush2.msra.mxu0 0.0
        %894 = vmatprep.subr.mxu0 0.0
        %895 = vmatpush2.msra.mxu0 0.0
        %896 = vmatprep.subr.mxu0 0.0
        %897 = vmatpush2.msra.mxu0 0.0
        %898 = vmatprep.subr.mxu0 0.0
        %899 = vmatpush2.msra.mxu0 0.0
        %900 = vmatprep.subr.mxu0 0.0
        %901 = vmatpush2.msra.mxu0 0.0
        %902 = vmatprep.subr.mxu0 0.0
        %903 = vmatpush2.msra.mxu0 0.0
        %904 = vmatprep.mubr.f32.mxu0 0.0
        %905 = vmatmul.mubr.f32.gmra.mxu0 %v815
        %v906 = vpop.f32.mrf.mxu0
        %v907 = vadd.f32 0.0, %v906
        %v908 = vpop.f32.mrf.mxu0
        %909 = vmatprep.mubr.f32.mxu0 0.0
        %910 = vmatmul.mubr.f32.gmra.mxu0 %v816
        %v911 = vpop.f32.mrf.mxu0
        %v912 = vadd.f32 0.0, %v911
        %v913 = vpop.f32.mrf.mxu0
        %914 = vmatprep.mubr.f32.mxu0 0.0
        %915 = vmatmul.mubr.f32.gmra.mxu0 %v817
        %v916 = vpop.f32.mrf.mxu0
        %v917 = vadd.f32 0.0, %v916
        %v918 = vpop.f32.mrf.mxu0
        %919 = vmatprep.mubr.f32.mxu0 0.0
        %920 = vmatmul.mubr.f32.gmra.mxu0 %v818
        %v921 = vpop.f32.mrf.mxu0
        %v922 = vadd.f32 0.0, %v921
        %v923 = vpop.f32.mrf.mxu0
        %924 = vmatprep.mubr.f32.mxu0 0.0
        %925 = vmatmul.mubr.f32.gmra.mxu0 %v819
        %v926 = vpop.f32.mrf.mxu0
        %v927 = vadd.f32 0.0, %v926
        %v928 = vpop.f32.mrf.mxu0
        %929 = vmatprep.mubr.f32.mxu0 0.0
        %930 = vmatmul.mubr.f32.gmra.mxu0 %v820
        %v931 = vpop.f32.mrf.mxu0
        %v932 = vadd.f32 0.0, %v931
        %v933 = vpop.f32.mrf.mxu0
        %934 = vmatprep.mubr.f32.mxu0 0.0
        %935 = vmatmul.mubr.f32.gmra.mxu0 %v821
        %v936 = vpop.f32.mrf.mxu0
        %v937 = vadd.f32 0.0, %v936
        %v938 = vpop.f32.mrf.mxu0
        %939 = vmatprep.mubr.f32.mxu0 0.0
        %940 = vmatmul.mubr.f32.gmra.mxu0 %v822
        %v941 = vpop.f32.mrf.mxu0
        %v942 = vadd.f32 0.0, %v941
        %v943 = vpop.f32.mrf.mxu0
        %944 = vdwg.mxu0
        %v945 = vadd.f32 %v807, %v907
        %v946 = vadd.f32 %v808, %v912
        %v947 = vadd.f32 %v809, %v917
        %v948 = vadd.f32 %v810, %v922
        %v949 = vadd.f32 %v811, %v927
        %v950 = vadd.f32 %v812, %v932
        %v951 = vadd.f32 %v813, %v937
        %v952 = vadd.f32 %v814, %v942
        %v953 = vld [vmem:[%s363 + $0x1] sm:$0xff]
        %v954 = vld [vmem:[%s363 + $0x11] sm:$0xff]
        %v955 = vld [vmem:[%s363 + $0x21] sm:$0xff]
        %v956 = vld [vmem:[%s363 + $0x31] sm:$0xff]
        %v957 = vld [vmem:[%s363 + $0x41] sm:$0xff]
        %v958 = vld [vmem:[%s363 + $0x51] sm:$0xff]
        %v959 = vld [vmem:[%s363 + $0x61] sm:$0xff]
        %v960 = vld [vmem:[%s363 + $0x71] sm:$0xff]
        %s961 = scalar_lea.vmem %s1, 512
        %v962 = vld [vmem:[%s961] sm:$0xff]
        %v963 = vld [vmem:[%s961 + $0x8] sm:$0xff]
        %v964 = vld [vmem:[%s961 + $0x10] sm:$0xff]
        %v965 = vld [vmem:[%s961 + $0x18] sm:$0xff]
        %v966 = vld [vmem:[%s961 + $0x20] sm:$0xff]
        %v967 = vld [vmem:[%s961 + $0x28] sm:$0xff]
        %v968 = vld [vmem:[%s961 + $0x30] sm:$0xff]
        %v969 = vld [vmem:[%s961 + $0x38] sm:$0xff]
        %v970 = vld [vmem:[%s961 + $0x40] sm:$0xff]
        %v971 = vld [vmem:[%s961 + $0x48] sm:$0xff]
        %v972 = vld [vmem:[%s961 + $0x50] sm:$0xff]
        %v973 = vld [vmem:[%s961 + $0x58] sm:$0xff]
        %v974 = vld [vmem:[%s961 + $0x60] sm:$0xff]
        %v975 = vld [vmem:[%s961 + $0x68] sm:$0xff]
        %v976 = vld [vmem:[%s961 + $0x70] sm:$0xff]
        %v977 = vld [vmem:[%s961 + $0x78] sm:$0xff]
        %978 = vmatprep.subr.mxu0 0.0
        %979 = vmatpush1.msra.mxu0 %v977
        %980 = vmatprep.subr.mxu0 0.0
        %981 = vmatpush1.msra.mxu0 %v976
        %982 = vmatprep.subr.mxu0 0.0
        %983 = vmatpush1.msra.mxu0 %v975
        %984 = vmatprep.subr.mxu0 0.0
        %985 = vmatpush1.msra.mxu0 %v974
        %986 = vmatprep.subr.mxu0 0.0
        %987 = vmatpush1.msra.mxu0 %v973
        %988 = vmatprep.subr.mxu0 0.0
        %989 = vmatpush1.msra.mxu0 %v972
        %990 = vmatprep.subr.mxu0 0.0
        %991 = vmatpush1.msra.mxu0 %v971
        %992 = vmatprep.subr.mxu0 0.0
        %993 = vmatpush1.msra.mxu0 %v970
        %994 = vmatprep.subr.mxu0 0.0
        %995 = vmatpush1.msra.mxu0 %v969
        %996 = vmatprep.subr.mxu0 0.0
        %997 = vmatpush1.msra.mxu0 %v968
        %998 = vmatprep.subr.mxu0 0.0
        %999 = vmatpush1.msra.mxu0 %v967
        %1000 = vmatprep.subr.mxu0 0.0
        %1001 = vmatpush1.msra.mxu0 %v966
        %1002 = vmatprep.subr.mxu0 0.0
        %1003 = vmatpush1.msra.mxu0 %v965
        %1004 = vmatprep.subr.mxu0 0.0
        %1005 = vmatpush1.msra.mxu0 %v964
        %1006 = vmatprep.subr.mxu0 0.0
        %1007 = vmatpush1.msra.mxu0 %v963
        %1008 = vmatprep.subr.mxu0 0.0
        %1009 = vmatpush1.msra.mxu0 %v962
        %1010 = vmatprep.subr.mxu0 0.0
        %1011 = vmatpush2.msra.mxu0 0.0
        %1012 = vmatprep.subr.mxu0 0.0
        %1013 = vmatpush2.msra.mxu0 0.0
        %1014 = vmatprep.subr.mxu0 0.0
        %1015 = vmatpush2.msra.mxu0 0.0
        %1016 = vmatprep.subr.mxu0 0.0
        %1017 = vmatpush2.msra.mxu0 0.0
        %1018 = vmatprep.subr.mxu0 0.0
        %1019 = vmatpush2.msra.mxu0 0.0
        %1020 = vmatprep.subr.mxu0 0.0
        %1021 = vmatpush2.msra.mxu0 0.0
        %1022 = vmatprep.subr.mxu0 0.0
        %1023 = vmatpush2.msra.mxu0 0.0
        %1024 = vmatprep.subr.mxu0 0.0
        %1025 = vmatpush2.msra.mxu0 0.0
        %1026 = vmatprep.subr.mxu0 0.0
        %1027 = vmatpush2.msra.mxu0 0.0
        %1028 = vmatprep.subr.mxu0 0.0
        %1029 = vmatpush2.msra.mxu0 0.0
        %1030 = vmatprep.subr.mxu0 0.0
        %1031 = vmatpush2.msra.mxu0 0.0
        %1032 = vmatprep.subr.mxu0 0.0
        %1033 = vmatpush2.msra.mxu0 0.0
        %1034 = vmatprep.subr.mxu0 0.0
        %1035 = vmatpush2.msra.mxu0 0.0
        %1036 = vmatprep.subr.mxu0 0.0
        %1037 = vmatpush2.msra.mxu0 0.0
        %1038 = vmatprep.subr.mxu0 0.0
        %1039 = vmatpush2.msra.mxu0 0.0
        %1040 = vmatprep.subr.mxu0 0.0
        %1041 = vmatpush2.msra.mxu0 0.0
        %1042 = vmatprep.mubr.f32.mxu0 0.0
        %1043 = vmatmul.mubr.f32.gmra.mxu0 %v953
        %v1044 = vpop.f32.mrf.mxu0
        %v1045 = vadd.f32 0.0, %v1044
        %v1046 = vpop.f32.mrf.mxu0
        %1047 = vmatprep.mubr.f32.mxu0 0.0
        %1048 = vmatmul.mubr.f32.gmra.mxu0 %v954
        %v1049 = vpop.f32.mrf.mxu0
        %v1050 = vadd.f32 0.0, %v1049
        %v1051 = vpop.f32.mrf.mxu0
        %1052 = vmatprep.mubr.f32.mxu0 0.0
        %1053 = vmatmul.mubr.f32.gmra.mxu0 %v955
        %v1054 = vpop.f32.mrf.mxu0
        %v1055 = vadd.f32 0.0, %v1054
        %v1056 = vpop.f32.mrf.mxu0
        %1057 = vmatprep.mubr.f32.mxu0 0.0
        %1058 = vmatmul.mubr.f32.gmra.mxu0 %v956
        %v1059 = vpop.f32.mrf.mxu0
        %v1060 = vadd.f32 0.0, %v1059
        %v1061 = vpop.f32.mrf.mxu0
        %1062 = vmatprep.mubr.f32.mxu0 0.0
        %1063 = vmatmul.mubr.f32.gmra.mxu0 %v957
        %v1064 = vpop.f32.mrf.mxu0
        %v1065 = vadd.f32 0.0, %v1064
        %v1066 = vpop.f32.mrf.mxu0
        %1067 = vmatprep.mubr.f32.mxu0 0.0
        %1068 = vmatmul.mubr.f32.gmra.mxu0 %v958
        %v1069 = vpop.f32.mrf.mxu0
        %v1070 = vadd.f32 0.0, %v1069
        %v1071 = vpop.f32.mrf.mxu0
        %1072 = vmatprep.mubr.f32.mxu0 0.0
        %1073 = vmatmul.mubr.f32.gmra.mxu0 %v959
        %v1074 = vpop.f32.mrf.mxu0
        %v1075 = vadd.f32 0.0, %v1074
        %v1076 = vpop.f32.mrf.mxu0
        %1077 = vmatprep.mubr.f32.mxu0 0.0
        %1078 = vmatmul.mubr.f32.gmra.mxu0 %v960
        %v1079 = vpop.f32.mrf.mxu0
        %v1080 = vadd.f32 0.0, %v1079
        %v1081 = vpop.f32.mrf.mxu0
        %1082 = vdwg.mxu0
        %v1083 = vadd.f32 %v945, %v1045
        %v1084 = vadd.f32 %v946, %v1050
        %v1085 = vadd.f32 %v947, %v1055
        %v1086 = vadd.f32 %v948, %v1060
        %v1087 = vadd.f32 %v949, %v1065
        %v1088 = vadd.f32 %v950, %v1070
        %v1089 = vadd.f32 %v951, %v1075
        %v1090 = vadd.f32 %v952, %v1080
        %v1091 = vld [vmem:[%s363 + $0x2] sm:$0xff]
        %v1092 = vld [vmem:[%s363 + $0x12] sm:$0xff]
        %v1093 = vld [vmem:[%s363 + $0x22] sm:$0xff]
        %v1094 = vld [vmem:[%s363 + $0x32] sm:$0xff]
        %v1095 = vld [vmem:[%s363 + $0x42] sm:$0xff]
        %v1096 = vld [vmem:[%s363 + $0x52] sm:$0xff]
        %v1097 = vld [vmem:[%s363 + $0x62] sm:$0xff]
        %v1098 = vld [vmem:[%s363 + $0x72] sm:$0xff]
        %s1099 = scalar_lea.vmem %s1, 640
        %v1100 = vld [vmem:[%s1099] sm:$0xff]
        %v1101 = vld [vmem:[%s1099 + $0x8] sm:$0xff]
        %v1102 = vld [vmem:[%s1099 + $0x10] sm:$0xff]
        %v1103 = vld [vmem:[%s1099 + $0x18] sm:$0xff]
        %v1104 = vld [vmem:[%s1099 + $0x20] sm:$0xff]
        %v1105 = vld [vmem:[%s1099 + $0x28] sm:$0xff]
        %v1106 = vld [vmem:[%s1099 + $0x30] sm:$0xff]
        %v1107 = vld [vmem:[%s1099 + $0x38] sm:$0xff]
        %v1108 = vld [vmem:[%s1099 + $0x40] sm:$0xff]
        %v1109 = vld [vmem:[%s1099 + $0x48] sm:$0xff]
        %v1110 = vld [vmem:[%s1099 + $0x50] sm:$0xff]
        %v1111 = vld [vmem:[%s1099 + $0x58] sm:$0xff]
        %v1112 = vld [vmem:[%s1099 + $0x60] sm:$0xff]
        %v1113 = vld [vmem:[%s1099 + $0x68] sm:$0xff]
        %v1114 = vld [vmem:[%s1099 + $0x70] sm:$0xff]
        %v1115 = vld [vmem:[%s1099 + $0x78] sm:$0xff]
        %1116 = vmatprep.subr.mxu0 0.0
        %1117 = vmatpush1.msra.mxu0 %v1115
        %1118 = vmatprep.subr.mxu0 0.0
        %1119 = vmatpush1.msra.mxu0 %v1114
        %1120 = vmatprep.subr.mxu0 0.0
        %1121 = vmatpush1.msra.mxu0 %v1113
        %1122 = vmatprep.subr.mxu0 0.0
        %1123 = vmatpush1.msra.mxu0 %v1112
        %1124 = vmatprep.subr.mxu0 0.0
        %1125 = vmatpush1.msra.mxu0 %v1111
        %1126 = vmatprep.subr.mxu0 0.0
        %1127 = vmatpush1.msra.mxu0 %v1110
        %1128 = vmatprep.subr.mxu0 0.0
        %1129 = vmatpush1.msra.mxu0 %v1109
        %1130 = vmatprep.subr.mxu0 0.0
        %1131 = vmatpush1.msra.mxu0 %v1108
        %1132 = vmatprep.subr.mxu0 0.0
        %1133 = vmatpush1.msra.mxu0 %v1107
        %1134 = vmatprep.subr.mxu0 0.0
        %1135 = vmatpush1.msra.mxu0 %v1106
        %1136 = vmatprep.subr.mxu0 0.0
        %1137 = vmatpush1.msra.mxu0 %v1105
        %1138 = vmatprep.subr.mxu0 0.0
        %1139 = vmatpush1.msra.mxu0 %v1104
        %1140 = vmatprep.subr.mxu0 0.0
        %1141 = vmatpush1.msra.mxu0 %v1103
        %1142 = vmatprep.subr.mxu0 0.0
        %1143 = vmatpush1.msra.mxu0 %v1102
        %1144 = vmatprep.subr.mxu0 0.0
        %1145 = vmatpush1.msra.mxu0 %v1101
        %1146 = vmatprep.subr.mxu0 0.0
        %1147 = vmatpush1.msra.mxu0 %v1100
        %1148 = vmatprep.subr.mxu0 0.0
        %1149 = vmatpush2.msra.mxu0 0.0
        %1150 = vmatprep.subr.mxu0 0.0
        %1151 = vmatpush2.msra.mxu0 0.0
        %1152 = vmatprep.subr.mxu0 0.0
        %1153 = vmatpush2.msra.mxu0 0.0
        %1154 = vmatprep.subr.mxu0 0.0
        %1155 = vmatpush2.msra.mxu0 0.0
        %1156 = vmatprep.subr.mxu0 0.0
        %1157 = vmatpush2.msra.mxu0 0.0
        %1158 = vmatprep.subr.mxu0 0.0
        %1159 = vmatpush2.msra.mxu0 0.0
        %1160 = vmatprep.subr.mxu0 0.0
        %1161 = vmatpush2.msra.mxu0 0.0
        %1162 = vmatprep.subr.mxu0 0.0
        %1163 = vmatpush2.msra.mxu0 0.0
        %1164 = vmatprep.subr.mxu0 0.0
        %1165 = vmatpush2.msra.mxu0 0.0
        %1166 = vmatprep.subr.mxu0 0.0
        %1167 = vmatpush2.msra.mxu0 0.0
        %1168 = vmatprep.subr.mxu0 0.0
        %1169 = vmatpush2.msra.mxu0 0.0
        %1170 = vmatprep.subr.mxu0 0.0
        %1171 = vmatpush2.msra.mxu0 0.0
        %1172 = vmatprep.subr.mxu0 0.0
        %1173 = vmatpush2.msra.mxu0 0.0
        %1174 = vmatprep.subr.mxu0 0.0
        %1175 = vmatpush2.msra.mxu0 0.0
        %1176 = vmatprep.subr.mxu0 0.0
        %1177 = vmatpush2.msra.mxu0 0.0
        %1178 = vmatprep.subr.mxu0 0.0
        %1179 = vmatpush2.msra.mxu0 0.0
        %1180 = vmatprep.mubr.f32.mxu0 0.0
        %1181 = vmatmul.mubr.f32.gmra.mxu0 %v1091
        %v1182 = vpop.f32.mrf.mxu0
        %v1183 = vadd.f32 0.0, %v1182
        %v1184 = vpop.f32.mrf.mxu0
        %1185 = vmatprep.mubr.f32.mxu0 0.0
        %1186 = vmatmul.mubr.f32.gmra.mxu0 %v1092
        %v1187 = vpop.f32.mrf.mxu0
        %v1188 = vadd.f32 0.0, %v1187
        %v1189 = vpop.f32.mrf.mxu0
        %1190 = vmatprep.mubr.f32.mxu0 0.0
        %1191 = vmatmul.mubr.f32.gmra.mxu0 %v1093
        %v1192 = vpop.f32.mrf.mxu0
        %v1193 = vadd.f32 0.0, %v1192
        %v1194 = vpop.f32.mrf.mxu0
        %1195 = vmatprep.mubr.f32.mxu0 0.0
        %1196 = vmatmul.mubr.f32.gmra.mxu0 %v1094
        %v1197 = vpop.f32.mrf.mxu0
        %v1198 = vadd.f32 0.0, %v1197
        %v1199 = vpop.f32.mrf.mxu0
        %1200 = vmatprep.mubr.f32.mxu0 0.0
        %1201 = vmatmul.mubr.f32.gmra.mxu0 %v1095
        %v1202 = vpop.f32.mrf.mxu0
        %v1203 = vadd.f32 0.0, %v1202
        %v1204 = vpop.f32.mrf.mxu0
        %1205 = vmatprep.mubr.f32.mxu0 0.0
        %1206 = vmatmul.mubr.f32.gmra.mxu0 %v1096
        %v1207 = vpop.f32.mrf.mxu0
        %v1208 = vadd.f32 0.0, %v1207
        %v1209 = vpop.f32.mrf.mxu0
        %1210 = vmatprep.mubr.f32.mxu0 0.0
        %1211 = vmatmul.mubr.f32.gmra.mxu0 %v1097
        %v1212 = vpop.f32.mrf.mxu0
        %v1213 = vadd.f32 0.0, %v1212
        %v1214 = vpop.f32.mrf.mxu0
        %1215 = vmatprep.mubr.f32.mxu0 0.0
        %1216 = vmatmul.mubr.f32.gmra.mxu0 %v1098
        %v1217 = vpop.f32.mrf.mxu0
        %v1218 = vadd.f32 0.0, %v1217
        %v1219 = vpop.f32.mrf.mxu0
        %1220 = vdwg.mxu0
        %v1221 = vadd.f32 %v1083, %v1183
        %v1222 = vadd.f32 %v1084, %v1188
        %v1223 = vadd.f32 %v1085, %v1193
        %v1224 = vadd.f32 %v1086, %v1198
        %v1225 = vadd.f32 %v1087, %v1203
        %v1226 = vadd.f32 %v1088, %v1208
        %v1227 = vadd.f32 %v1089, %v1213
        %v1228 = vadd.f32 %v1090, %v1218
        %s1229 = scalar_lea.vmem [#allocation2], 32
        %v1230 = vld [vmem:[%s1229] sm:$0xff]
        %v1231 = vld [vmem:[%s1229 + $0x10] sm:$0xff]
        %v1232 = vld [vmem:[%s1229 + $0x20] sm:$0xff]
        %v1233 = vld [vmem:[%s1229 + $0x30] sm:$0xff]
        %v1234 = vld [vmem:[%s1229 + $0x40] sm:$0xff]
        %v1235 = vld [vmem:[%s1229 + $0x50] sm:$0xff]
        %v1236 = vld [vmem:[%s1229 + $0x60] sm:$0xff]
        %v1237 = vld [vmem:[%s1229 + $0x70] sm:$0xff]
        %s1238 = scalar_lea.vmem %s1, 768
        %v1239 = vld [vmem:[%s1238] sm:$0xff]
        %v1240 = vld [vmem:[%s1238 + $0x8] sm:$0xff]
        %v1241 = vld [vmem:[%s1238 + $0x10] sm:$0xff]
        %v1242 = vld [vmem:[%s1238 + $0x18] sm:$0xff]
        %v1243 = vld [vmem:[%s1238 + $0x20] sm:$0xff]
        %v1244 = vld [vmem:[%s1238 + $0x28] sm:$0xff]
        %v1245 = vld [vmem:[%s1238 + $0x30] sm:$0xff]
        %v1246 = vld [vmem:[%s1238 + $0x38] sm:$0xff]
        %v1247 = vld [vmem:[%s1238 + $0x40] sm:$0xff]
        %v1248 = vld [vmem:[%s1238 + $0x48] sm:$0xff]
        %v1249 = vld [vmem:[%s1238 + $0x50] sm:$0xff]
        %v1250 = vld [vmem:[%s1238 + $0x58] sm:$0xff]
        %v1251 = vld [vmem:[%s1238 + $0x60] sm:$0xff]
        %v1252 = vld [vmem:[%s1238 + $0x68] sm:$0xff]
        %v1253 = vld [vmem:[%s1238 + $0x70] sm:$0xff]
        %v1254 = vld [vmem:[%s1238 + $0x78] sm:$0xff]
        %1255 = vmatprep.subr.mxu0 0.0
        %1256 = vmatpush1.msra.mxu0 %v1254
        %1257 = vmatprep.subr.mxu0 0.0
        %1258 = vmatpush1.msra.mxu0 %v1253
        %1259 = vmatprep.subr.mxu0 0.0
        %1260 = vmatpush1.msra.mxu0 %v1252
        %1261 = vmatprep.subr.mxu0 0.0
        %1262 = vmatpush1.msra.mxu0 %v1251
        %1263 = vmatprep.subr.mxu0 0.0
        %1264 = vmatpush1.msra.mxu0 %v1250
        %1265 = vmatprep.subr.mxu0 0.0
        %1266 = vmatpush1.msra.mxu0 %v1249
        %1267 = vmatprep.subr.mxu0 0.0
        %1268 = vmatpush1.msra.mxu0 %v1248
        %1269 = vmatprep.subr.mxu0 0.0
        %1270 = vmatpush1.msra.mxu0 %v1247
        %1271 = vmatprep.subr.mxu0 0.0
        %1272 = vmatpush1.msra.mxu0 %v1246
        %1273 = vmatprep.subr.mxu0 0.0
        %1274 = vmatpush1.msra.mxu0 %v1245
        %1275 = vmatprep.subr.mxu0 0.0
        %1276 = vmatpush1.msra.mxu0 %v1244
        %1277 = vmatprep.subr.mxu0 0.0
        %1278 = vmatpush1.msra.mxu0 %v1243
        %1279 = vmatprep.subr.mxu0 0.0
        %1280 = vmatpush1.msra.mxu0 %v1242
        %1281 = vmatprep.subr.mxu0 0.0
        %1282 = vmatpush1.msra.mxu0 %v1241
        %1283 = vmatprep.subr.mxu0 0.0
        %1284 = vmatpush1.msra.mxu0 %v1240
        %1285 = vmatprep.subr.mxu0 0.0
        %1286 = vmatpush1.msra.mxu0 %v1239
        %1287 = vmatprep.subr.mxu0 0.0
        %1288 = vmatpush2.msra.mxu0 0.0
        %1289 = vmatprep.subr.mxu0 0.0
        %1290 = vmatpush2.msra.mxu0 0.0
        %1291 = vmatprep.subr.mxu0 0.0
        %1292 = vmatpush2.msra.mxu0 0.0
        %1293 = vmatprep.subr.mxu0 0.0
        %1294 = vmatpush2.msra.mxu0 0.0
        %1295 = vmatprep.subr.mxu0 0.0
        %1296 = vmatpush2.msra.mxu0 0.0
        %1297 = vmatprep.subr.mxu0 0.0
        %1298 = vmatpush2.msra.mxu0 0.0
        %1299 = vmatprep.subr.mxu0 0.0
        %1300 = vmatpush2.msra.mxu0 0.0
        %1301 = vmatprep.subr.mxu0 0.0
        %1302 = vmatpush2.msra.mxu0 0.0
        %1303 = vmatprep.subr.mxu0 0.0
        %1304 = vmatpush2.msra.mxu0 0.0
        %1305 = vmatprep.subr.mxu0 0.0
        %1306 = vmatpush2.msra.mxu0 0.0
        %1307 = vmatprep.subr.mxu0 0.0
        %1308 = vmatpush2.msra.mxu0 0.0
        %1309 = vmatprep.subr.mxu0 0.0
        %1310 = vmatpush2.msra.mxu0 0.0
        %1311 = vmatprep.subr.mxu0 0.0
        %1312 = vmatpush2.msra.mxu0 0.0
        %1313 = vmatprep.subr.mxu0 0.0
        %1314 = vmatpush2.msra.mxu0 0.0
        %1315 = vmatprep.subr.mxu0 0.0
        %1316 = vmatpush2.msra.mxu0 0.0
        %1317 = vmatprep.subr.mxu0 0.0
        %1318 = vmatpush2.msra.mxu0 0.0
        %1319 = vmatprep.mubr.f32.mxu0 0.0
        %1320 = vmatmul.mubr.f32.gmra.mxu0 %v1230
        %v1321 = vpop.f32.mrf.mxu0
        %v1322 = vadd.f32 0.0, %v1321
        %v1323 = vpop.f32.mrf.mxu0
        %1324 = vmatprep.mubr.f32.mxu0 0.0
        %1325 = vmatmul.mubr.f32.gmra.mxu0 %v1231
        %v1326 = vpop.f32.mrf.mxu0
        %v1327 = vadd.f32 0.0, %v1326
        %v1328 = vpop.f32.mrf.mxu0
        %1329 = vmatprep.mubr.f32.mxu0 0.0
        %1330 = vmatmul.mubr.f32.gmra.mxu0 %v1232
        %v1331 = vpop.f32.mrf.mxu0
        %v1332 = vadd.f32 0.0, %v1331
        %v1333 = vpop.f32.mrf.mxu0
        %1334 = vmatprep.mubr.f32.mxu0 0.0
        %1335 = vmatmul.mubr.f32.gmra.mxu0 %v1233
        %v1336 = vpop.f32.mrf.mxu0
        %v1337 = vadd.f32 0.0, %v1336
        %v1338 = vpop.f32.mrf.mxu0
        %1339 = vmatprep.mubr.f32.mxu0 0.0
        %1340 = vmatmul.mubr.f32.gmra.mxu0 %v1234
        %v1341 = vpop.f32.mrf.mxu0
        %v1342 = vadd.f32 0.0, %v1341
        %v1343 = vpop.f32.mrf.mxu0
        %1344 = vmatprep.mubr.f32.mxu0 0.0
        %1345 = vmatmul.mubr.f32.gmra.mxu0 %v1235
        %v1346 = vpop.f32.mrf.mxu0
        %v1347 = vadd.f32 0.0, %v1346
        %v1348 = vpop.f32.mrf.mxu0
        %1349 = vmatprep.mubr.f32.mxu0 0.0
        %1350 = vmatmul.mubr.f32.gmra.mxu0 %v1236
        %v1351 = vpop.f32.mrf.mxu0
        %v1352 = vadd.f32 0.0, %v1351
        %v1353 = vpop.f32.mrf.mxu0
        %1354 = vmatprep.mubr.f32.mxu0 0.0
        %1355 = vmatmul.mubr.f32.gmra.mxu0 %v1237
        %v1356 = vpop.f32.mrf.mxu0
        %v1357 = vadd.f32 0.0, %v1356
        %v1358 = vpop.f32.mrf.mxu0
        %1359 = vdwg.mxu0
        %v1360 = vadd.f32 %v1221, %v1322
        %v1361 = vadd.f32 %v1222, %v1327
        %v1362 = vadd.f32 %v1223, %v1332
        %v1363 = vadd.f32 %v1224, %v1337
        %v1364 = vadd.f32 %v1225, %v1342
        %v1365 = vadd.f32 %v1226, %v1347
        %v1366 = vadd.f32 %v1227, %v1352
        %v1367 = vadd.f32 %v1228, %v1357
        %v1368 = vld [vmem:[%s1229 + $0x1] sm:$0xff]
        %v1369 = vld [vmem:[%s1229 + $0x11] sm:$0xff]
        %v1370 = vld [vmem:[%s1229 + $0x21] sm:$0xff]
        %v1371 = vld [vmem:[%s1229 + $0x31] sm:$0xff]
        %v1372 = vld [vmem:[%s1229 + $0x41] sm:$0xff]
        %v1373 = vld [vmem:[%s1229 + $0x51] sm:$0xff]
        %v1374 = vld [vmem:[%s1229 + $0x61] sm:$0xff]
        %v1375 = vld [vmem:[%s1229 + $0x71] sm:$0xff]
        %s1376 = scalar_lea.vmem %s1, 896
        %v1377 = vld [vmem:[%s1376] sm:$0xff]
        %v1378 = vld [vmem:[%s1376 + $0x8] sm:$0xff]
        %v1379 = vld [vmem:[%s1376 + $0x10] sm:$0xff]
        %v1380 = vld [vmem:[%s1376 + $0x18] sm:$0xff]
        %v1381 = vld [vmem:[%s1376 + $0x20] sm:$0xff]
        %v1382 = vld [vmem:[%s1376 + $0x28] sm:$0xff]
        %v1383 = vld [vmem:[%s1376 + $0x30] sm:$0xff]
        %v1384 = vld [vmem:[%s1376 + $0x38] sm:$0xff]
        %v1385 = vld [vmem:[%s1376 + $0x40] sm:$0xff]
        %v1386 = vld [vmem:[%s1376 + $0x48] sm:$0xff]
        %v1387 = vld [vmem:[%s1376 + $0x50] sm:$0xff]
        %v1388 = vld [vmem:[%s1376 + $0x58] sm:$0xff]
        %v1389 = vld [vmem:[%s1376 + $0x60] sm:$0xff]
        %v1390 = vld [vmem:[%s1376 + $0x68] sm:$0xff]
        %v1391 = vld [vmem:[%s1376 + $0x70] sm:$0xff]
        %v1392 = vld [vmem:[%s1376 + $0x78] sm:$0xff]
        %1393 = vmatprep.subr.mxu0 0.0
        %1394 = vmatpush1.msra.mxu0 %v1392
        %1395 = vmatprep.subr.mxu0 0.0
        %1396 = vmatpush1.msra.mxu0 %v1391
        %1397 = vmatprep.subr.mxu0 0.0
        %1398 = vmatpush1.msra.mxu0 %v1390
        %1399 = vmatprep.subr.mxu0 0.0
        %1400 = vmatpush1.msra.mxu0 %v1389
        %1401 = vmatprep.subr.mxu0 0.0
        %1402 = vmatpush1.msra.mxu0 %v1388
        %1403 = vmatprep.subr.mxu0 0.0
        %1404 = vmatpush1.msra.mxu0 %v1387
        %1405 = vmatprep.subr.mxu0 0.0
        %1406 = vmatpush1.msra.mxu0 %v1386
        %1407 = vmatprep.subr.mxu0 0.0
        %1408 = vmatpush1.msra.mxu0 %v1385
        %1409 = vmatprep.subr.mxu0 0.0
        %1410 = vmatpush1.msra.mxu0 %v1384
        %1411 = vmatprep.subr.mxu0 0.0
        %1412 = vmatpush1.msra.mxu0 %v1383
        %1413 = vmatprep.subr.mxu0 0.0
        %1414 = vmatpush1.msra.mxu0 %v1382
        %1415 = vmatprep.subr.mxu0 0.0
        %1416 = vmatpush1.msra.mxu0 %v1381
        %1417 = vmatprep.subr.mxu0 0.0
        %1418 = vmatpush1.msra.mxu0 %v1380
        %1419 = vmatprep.subr.mxu0 0.0
        %1420 = vmatpush1.msra.mxu0 %v1379
        %1421 = vmatprep.subr.mxu0 0.0
        %1422 = vmatpush1.msra.mxu0 %v1378
        %1423 = vmatprep.subr.mxu0 0.0
        %1424 = vmatpush1.msra.mxu0 %v1377
        %1425 = vmatprep.subr.mxu0 0.0
        %1426 = vmatpush2.msra.mxu0 0.0
        %1427 = vmatprep.subr.mxu0 0.0
        %1428 = vmatpush2.msra.mxu0 0.0
        %1429 = vmatprep.subr.mxu0 0.0
        %1430 = vmatpush2.msra.mxu0 0.0
        %1431 = vmatprep.subr.mxu0 0.0
        %1432 = vmatpush2.msra.mxu0 0.0
        %1433 = vmatprep.subr.mxu0 0.0
        %1434 = vmatpush2.msra.mxu0 0.0
        %1435 = vmatprep.subr.mxu0 0.0
        %1436 = vmatpush2.msra.mxu0 0.0
        %1437 = vmatprep.subr.mxu0 0.0
        %1438 = vmatpush2.msra.mxu0 0.0
        %1439 = vmatprep.subr.mxu0 0.0
        %1440 = vmatpush2.msra.mxu0 0.0
        %1441 = vmatprep.subr.mxu0 0.0
        %1442 = vmatpush2.msra.mxu0 0.0
        %1443 = vmatprep.subr.mxu0 0.0
        %1444 = vmatpush2.msra.mxu0 0.0
        %1445 = vmatprep.subr.mxu0 0.0
        %1446 = vmatpush2.msra.mxu0 0.0
        %1447 = vmatprep.subr.mxu0 0.0
        %1448 = vmatpush2.msra.mxu0 0.0
        %1449 = vmatprep.subr.mxu0 0.0
        %1450 = vmatpush2.msra.mxu0 0.0
        %1451 = vmatprep.subr.mxu0 0.0
        %1452 = vmatpush2.msra.mxu0 0.0
        %1453 = vmatprep.subr.mxu0 0.0
        %1454 = vmatpush2.msra.mxu0 0.0
        %1455 = vmatprep.subr.mxu0 0.0
        %1456 = vmatpush2.msra.mxu0 0.0
        %1457 = vmatprep.mubr.f32.mxu0 0.0
        %1458 = vmatmul.mubr.f32.gmra.mxu0 %v1368
        %v1459 = vpop.f32.mrf.mxu0
        %v1460 = vadd.f32 0.0, %v1459
        %v1461 = vpop.f32.mrf.mxu0
        %1462 = vmatprep.mubr.f32.mxu0 0.0
        %1463 = vmatmul.mubr.f32.gmra.mxu0 %v1369
        %v1464 = vpop.f32.mrf.mxu0
        %v1465 = vadd.f32 0.0, %v1464
        %v1466 = vpop.f32.mrf.mxu0
        %1467 = vmatprep.mubr.f32.mxu0 0.0
        %1468 = vmatmul.mubr.f32.gmra.mxu0 %v1370
        %v1469 = vpop.f32.mrf.mxu0
        %v1470 = vadd.f32 0.0, %v1469
        %v1471 = vpop.f32.mrf.mxu0
        %1472 = vmatprep.mubr.f32.mxu0 0.0
        %1473 = vmatmul.mubr.f32.gmra.mxu0 %v1371
        %v1474 = vpop.f32.mrf.mxu0
        %v1475 = vadd.f32 0.0, %v1474
        %v1476 = vpop.f32.mrf.mxu0
        %1477 = vmatprep.mubr.f32.mxu0 0.0
        %1478 = vmatmul.mubr.f32.gmra.mxu0 %v1372
        %v1479 = vpop.f32.mrf.mxu0
        %v1480 = vadd.f32 0.0, %v1479
        %v1481 = vpop.f32.mrf.mxu0
        %1482 = vmatprep.mubr.f32.mxu0 0.0
        %1483 = vmatmul.mubr.f32.gmra.mxu0 %v1373
        %v1484 = vpop.f32.mrf.mxu0
        %v1485 = vadd.f32 0.0, %v1484
        %v1486 = vpop.f32.mrf.mxu0
        %1487 = vmatprep.mubr.f32.mxu0 0.0
        %1488 = vmatmul.mubr.f32.gmra.mxu0 %v1374
        %v1489 = vpop.f32.mrf.mxu0
        %v1490 = vadd.f32 0.0, %v1489
        %v1491 = vpop.f32.mrf.mxu0
        %1492 = vmatprep.mubr.f32.mxu0 0.0
        %1493 = vmatmul.mubr.f32.gmra.mxu0 %v1375
        %v1494 = vpop.f32.mrf.mxu0
        %v1495 = vadd.f32 0.0, %v1494
        %v1496 = vpop.f32.mrf.mxu0
        %1497 = vdwg.mxu0
        %v1498 = vadd.f32 %v1360, %v1460
        %v1499 = vadd.f32 %v1361, %v1465
        %v1500 = vadd.f32 %v1362, %v1470
        %v1501 = vadd.f32 %v1363, %v1475
        %v1502 = vadd.f32 %v1364, %v1480
        %v1503 = vadd.f32 %v1365, %v1485
        %v1504 = vadd.f32 %v1366, %v1490
        %v1505 = vadd.f32 %v1367, %v1495
        %v1506 = vld [vmem:[%s1229 + $0x2] sm:$0xff]
        %v1507 = vld [vmem:[%s1229 + $0x12] sm:$0xff]
        %v1508 = vld [vmem:[%s1229 + $0x22] sm:$0xff]
        %v1509 = vld [vmem:[%s1229 + $0x32] sm:$0xff]
        %v1510 = vld [vmem:[%s1229 + $0x42] sm:$0xff]
        %v1511 = vld [vmem:[%s1229 + $0x52] sm:$0xff]
        %v1512 = vld [vmem:[%s1229 + $0x62] sm:$0xff]
        %v1513 = vld [vmem:[%s1229 + $0x72] sm:$0xff]
        %s1514 = scalar_lea.vmem %s1, 1024
        %v1515 = vld [vmem:[%s1514] sm:$0xff]
        %v1516 = vld [vmem:[%s1514 + $0x8] sm:$0xff]
        %v1517 = vld [vmem:[%s1514 + $0x10] sm:$0xff]
        %v1518 = vld [vmem:[%s1514 + $0x18] sm:$0xff]
        %v1519 = vld [vmem:[%s1514 + $0x20] sm:$0xff]
        %v1520 = vld [vmem:[%s1514 + $0x28] sm:$0xff]
        %v1521 = vld [vmem:[%s1514 + $0x30] sm:$0xff]
        %v1522 = vld [vmem:[%s1514 + $0x38] sm:$0xff]
        %v1523 = vld [vmem:[%s1514 + $0x40] sm:$0xff]
        %v1524 = vld [vmem:[%s1514 + $0x48] sm:$0xff]
        %v1525 = vld [vmem:[%s1514 + $0x50] sm:$0xff]
        %v1526 = vld [vmem:[%s1514 + $0x58] sm:$0xff]
        %v1527 = vld [vmem:[%s1514 + $0x60] sm:$0xff]
        %v1528 = vld [vmem:[%s1514 + $0x68] sm:$0xff]
        %v1529 = vld [vmem:[%s1514 + $0x70] sm:$0xff]
        %v1530 = vld [vmem:[%s1514 + $0x78] sm:$0xff]
        %1531 = vmatprep.subr.mxu0 0.0
        %1532 = vmatpush1.msra.mxu0 %v1530
        %1533 = vmatprep.subr.mxu0 0.0
        %1534 = vmatpush1.msra.mxu0 %v1529
        %1535 = vmatprep.subr.mxu0 0.0
        %1536 = vmatpush1.msra.mxu0 %v1528
        %1537 = vmatprep.subr.mxu0 0.0
        %1538 = vmatpush1.msra.mxu0 %v1527
        %1539 = vmatprep.subr.mxu0 0.0
        %1540 = vmatpush1.msra.mxu0 %v1526
        %1541 = vmatprep.subr.mxu0 0.0
        %1542 = vmatpush1.msra.mxu0 %v1525
        %1543 = vmatprep.subr.mxu0 0.0
        %1544 = vmatpush1.msra.mxu0 %v1524
        %1545 = vmatprep.subr.mxu0 0.0
        %1546 = vmatpush1.msra.mxu0 %v1523
        %1547 = vmatprep.subr.mxu0 0.0
        %1548 = vmatpush1.msra.mxu0 %v1522
        %1549 = vmatprep.subr.mxu0 0.0
        %1550 = vmatpush1.msra.mxu0 %v1521
        %1551 = vmatprep.subr.mxu0 0.0
        %1552 = vmatpush1.msra.mxu0 %v1520
        %1553 = vmatprep.subr.mxu0 0.0
        %1554 = vmatpush1.msra.mxu0 %v1519
        %1555 = vmatprep.subr.mxu0 0.0
        %1556 = vmatpush1.msra.mxu0 %v1518
        %1557 = vmatprep.subr.mxu0 0.0
        %1558 = vmatpush1.msra.mxu0 %v1517
        %1559 = vmatprep.subr.mxu0 0.0
        %1560 = vmatpush1.msra.mxu0 %v1516
        %1561 = vmatprep.subr.mxu0 0.0
        %1562 = vmatpush1.msra.mxu0 %v1515
        %1563 = vmatprep.subr.mxu0 0.0
        %1564 = vmatpush2.msra.mxu0 0.0
        %1565 = vmatprep.subr.mxu0 0.0
        %1566 = vmatpush2.msra.mxu0 0.0
        %1567 = vmatprep.subr.mxu0 0.0
        %1568 = vmatpush2.msra.mxu0 0.0
        %1569 = vmatprep.subr.mxu0 0.0
        %1570 = vmatpush2.msra.mxu0 0.0
        %1571 = vmatprep.subr.mxu0 0.0
        %1572 = vmatpush2.msra.mxu0 0.0
        %1573 = vmatprep.subr.mxu0 0.0
        %1574 = vmatpush2.msra.mxu0 0.0
        %1575 = vmatprep.subr.mxu0 0.0
        %1576 = vmatpush2.msra.mxu0 0.0
        %1577 = vmatprep.subr.mxu0 0.0
        %1578 = vmatpush2.msra.mxu0 0.0
        %1579 = vmatprep.subr.mxu0 0.0
        %1580 = vmatpush2.msra.mxu0 0.0
        %1581 = vmatprep.subr.mxu0 0.0
        %1582 = vmatpush2.msra.mxu0 0.0
        %1583 = vmatprep.subr.mxu0 0.0
        %1584 = vmatpush2.msra.mxu0 0.0
        %1585 = vmatprep.subr.mxu0 0.0
        %1586 = vmatpush2.msra.mxu0 0.0
        %1587 = vmatprep.subr.mxu0 0.0
        %1588 = vmatpush2.msra.mxu0 0.0
        %1589 = vmatprep.subr.mxu0 0.0
        %1590 = vmatpush2.msra.mxu0 0.0
        %1591 = vmatprep.subr.mxu0 0.0
        %1592 = vmatpush2.msra.mxu0 0.0
        %1593 = vmatprep.subr.mxu0 0.0
        %1594 = vmatpush2.msra.mxu0 0.0
        %1595 = vmatprep.mubr.f32.mxu0 0.0
        %1596 = vmatmul.mubr.f32.gmra.mxu0 %v1506
        %v1597 = vpop.f32.mrf.mxu0
        %v1598 = vadd.f32 0.0, %v1597
        %v1599 = vpop.f32.mrf.mxu0
        %1600 = vmatprep.mubr.f32.mxu0 0.0
        %1601 = vmatmul.mubr.f32.gmra.mxu0 %v1507
        %v1602 = vpop.f32.mrf.mxu0
        %v1603 = vadd.f32 0.0, %v1602
        %v1604 = vpop.f32.mrf.mxu0
        %1605 = vmatprep.mubr.f32.mxu0 0.0
        %1606 = vmatmul.mubr.f32.gmra.mxu0 %v1508
        %v1607 = vpop.f32.mrf.mxu0
        %v1608 = vadd.f32 0.0, %v1607
        %v1609 = vpop.f32.mrf.mxu0
        %1610 = vmatprep.mubr.f32.mxu0 0.0
        %1611 = vmatmul.mubr.f32.gmra.mxu0 %v1509
        %v1612 = vpop.f32.mrf.mxu0
        %v1613 = vadd.f32 0.0, %v1612
        %v1614 = vpop.f32.mrf.mxu0
        %1615 = vmatprep.mubr.f32.mxu0 0.0
        %1616 = vmatmul.mubr.f32.gmra.mxu0 %v1510
        %v1617 = vpop.f32.mrf.mxu0
        %v1618 = vadd.f32 0.0, %v1617
        %v1619 = vpop.f32.mrf.mxu0
        %1620 = vmatprep.mubr.f32.mxu0 0.0
        %1621 = vmatmul.mubr.f32.gmra.mxu0 %v1511
        %v1622 = vpop.f32.mrf.mxu0
        %v1623 = vadd.f32 0.0, %v1622
        %v1624 = vpop.f32.mrf.mxu0
        %1625 = vmatprep.mubr.f32.mxu0 0.0
        %1626 = vmatmul.mubr.f32.gmra.mxu0 %v1512
        %v1627 = vpop.f32.mrf.mxu0
        %v1628 = vadd.f32 0.0, %v1627
        %v1629 = vpop.f32.mrf.mxu0
        %1630 = vmatprep.mubr.f32.mxu0 0.0
        %1631 = vmatmul.mubr.f32.gmra.mxu0 %v1513
        %v1632 = vpop.f32.mrf.mxu0
        %v1633 = vadd.f32 0.0, %v1632
        %v1634 = vpop.f32.mrf.mxu0
        %1635 = vdwg.mxu0
        %v1636 = vadd.f32 %v1498, %v1598
        %v1637 = vadd.f32 %v1499, %v1603
        %v1638 = vadd.f32 %v1500, %v1608
        %v1639 = vadd.f32 %v1501, %v1613
        %v1640 = vadd.f32 %v1502, %v1618
        %v1641 = vadd.f32 %v1503, %v1623
        %v1642 = vadd.f32 %v1504, %v1628
        %v1643 = vadd.f32 %v1505, %v1633
        %v1644 = vld [vmem:[%s9] sm:$0x1]
        %v1645 = vlaneseq
        %v1646 = vshrl.u32 %v1645, 7
        %v1647 = vsub.s32 0, %v1646
        %v1648 = vrot.slane %v1644, %v1647
        %v1649 = vadd.f32 %v1636, %v1648
        %v1650 = vadd.f32 %v1637, %v1648
        %v1651 = vadd.f32 %v1638, %v1648
        %v1652 = vadd.f32 %v1639, %v1648
        %v1653 = vadd.f32 %v1640, %v1648
        %v1654 = vadd.f32 %v1641, %v1648
        %v1655 = vadd.f32 %v1642, %v1648
        %v1656 = vadd.f32 %v1643, %v1648
        %v1657 = vmul.f32 %v1649, 0.5
        %v1658 = vmul.f32 %v1650, 0.5
        %v1659 = vmul.f32 %v1651, 0.5
        %v1660 = vmul.f32 %v1652, 0.5
        %v1661 = vmul.f32 %v1653, 0.5
        %v1662 = vmul.f32 %v1654, 0.5
        %v1663 = vmul.f32 %v1655, 0.5
        %v1664 = vmul.f32 %v1656, 0.5
        %v1665 = vmul.f32 %v1649, 0.70710677
        %v1666 = vmul.f32 %v1650, 0.70710677
        %v1667 = vmul.f32 %v1651, 0.70710677
        %v1668 = vmul.f32 %v1652, 0.70710677
        %v1669 = vmul.f32 %v1653, 0.70710677
        %v1670 = vmul.f32 %v1654, 0.70710677
        %v1671 = vmul.f32 %v1655, 0.70710677
        %v1672 = vmul.f32 %v1656, 0.70710677
        %v1673 = verf.f32.pop %v1665
        %v1674 = verf.f32.pop %v1666
        %v1675 = verf.f32.pop %v1667
        %v1676 = verf.f32.pop %v1668
        %v1677 = verf.f32.pop %v1669
        %v1678 = verf.f32.pop %v1670
        %v1679 = verf.f32.pop %v1671
        %v1680 = verf.f32.pop %v1672
        %v1681 = vadd.f32 %v1673, 1.0
        %v1682 = vadd.f32 %v1674, 1.0
        %v1683 = vadd.f32 %v1675, 1.0
        %v1684 = vadd.f32 %v1676, 1.0
        %v1685 = vadd.f32 %v1677, 1.0
        %v1686 = vadd.f32 %v1678, 1.0
        %v1687 = vadd.f32 %v1679, 1.0
        %v1688 = vadd.f32 %v1680, 1.0
        %v1689 = vmul.f32 %v1657, %v1681
        %v1690 = vmul.f32 %v1658, %v1682
        %v1691 = vmul.f32 %v1659, %v1683
        %v1692 = vmul.f32 %v1660, %v1684
        %v1693 = vmul.f32 %v1661, %v1685
        %v1694 = vmul.f32 %v1662, %v1686
        %v1695 = vmul.f32 %v1663, %v1687
        %v1696 = vmul.f32 %v1664, %v1688
        %1697 = vst [vmem:[%s385 + $0x1] sm:$0xff] %v1689
        %1698 = vst [vmem:[%s385 + $0x11] sm:$0xff] %v1690
        %1699 = vst [vmem:[%s385 + $0x21] sm:$0xff] %v1691
        %1700 = vst [vmem:[%s385 + $0x31] sm:$0xff] %v1692
        %1701 = vst [vmem:[%s385 + $0x41] sm:$0xff] %v1693
        %1702 = vst [vmem:[%s385 + $0x51] sm:$0xff] %v1694
        %1703 = vst [vmem:[%s385 + $0x61] sm:$0xff] %v1695
        %1704 = vst [vmem:[%s385 + $0x71] sm:$0xff] %v1696
        %v1705 = vld [vmem:[#allocation3] sm:$0xff]
        %v1706 = vld [vmem:[#allocation3 + $0x10] sm:$0xff]
        %v1707 = vld [vmem:[#allocation3 + $0x20] sm:$0xff]
        %v1708 = vld [vmem:[#allocation3 + $0x30] sm:$0xff]
        %v1709 = vld [vmem:[#allocation3 + $0x40] sm:$0xff]
        %v1710 = vld [vmem:[#allocation3 + $0x50] sm:$0xff]
        %v1711 = vld [vmem:[#allocation3 + $0x60] sm:$0xff]
        %v1712 = vld [vmem:[#allocation3 + $0x70] sm:$0xff]
        %s1713 = scalar_lea.vmem %s1, 1152
        %v1714 = vld [vmem:[%s1713] sm:$0xff]
        %v1715 = vld [vmem:[%s1713 + $0x8] sm:$0xff]
        %v1716 = vld [vmem:[%s1713 + $0x10] sm:$0xff]
        %v1717 = vld [vmem:[%s1713 + $0x18] sm:$0xff]
        %v1718 = vld [vmem:[%s1713 + $0x20] sm:$0xff]
        %v1719 = vld [vmem:[%s1713 + $0x28] sm:$0xff]
        %v1720 = vld [vmem:[%s1713 + $0x30] sm:$0xff]
        %v1721 = vld [vmem:[%s1713 + $0x38] sm:$0xff]
        %v1722 = vld [vmem:[%s1713 + $0x40] sm:$0xff]
        %v1723 = vld [vmem:[%s1713 + $0x48] sm:$0xff]
        %v1724 = vld [vmem:[%s1713 + $0x50] sm:$0xff]
        %v1725 = vld [vmem:[%s1713 + $0x58] sm:$0xff]
        %v1726 = vld [vmem:[%s1713 + $0x60] sm:$0xff]
        %v1727 = vld [vmem:[%s1713 + $0x68] sm:$0xff]
        %v1728 = vld [vmem:[%s1713 + $0x70] sm:$0xff]
        %v1729 = vld [vmem:[%s1713 + $0x78] sm:$0xff]
        %v1730 = vld [vmem:[#allocation3 + $0x1] sm:$0xff]
        %v1731 = vld [vmem:[#allocation3 + $0x11] sm:$0xff]
        %v1732 = vld [vmem:[#allocation3 + $0x21] sm:$0xff]
        %v1733 = vld [vmem:[#allocation3 + $0x31] sm:$0xff]
        %v1734 = vld [vmem:[#allocation3 + $0x41] sm:$0xff]
        %v1735 = vld [vmem:[#allocation3 + $0x51] sm:$0xff]
        %v1736 = vld [vmem:[#allocation3 + $0x61] sm:$0xff]
        %v1737 = vld [vmem:[#allocation3 + $0x71] sm:$0xff]
        %s1738 = scalar_lea.vmem %s1, 1280
        %v1739 = vld [vmem:[%s1738] sm:$0xff]
        %v1740 = vld [vmem:[%s1738 + $0x8] sm:$0xff]
        %v1741 = vld [vmem:[%s1738 + $0x10] sm:$0xff]
        %v1742 = vld [vmem:[%s1738 + $0x18] sm:$0xff]
        %v1743 = vld [vmem:[%s1738 + $0x20] sm:$0xff]
        %v1744 = vld [vmem:[%s1738 + $0x28] sm:$0xff]
        %v1745 = vld [vmem:[%s1738 + $0x30] sm:$0xff]
        %v1746 = vld [vmem:[%s1738 + $0x38] sm:$0xff]
        %v1747 = vld [vmem:[%s1738 + $0x40] sm:$0xff]
        %v1748 = vld [vmem:[%s1738 + $0x48] sm:$0xff]
        %v1749 = vld [vmem:[%s1738 + $0x50] sm:$0xff]
        %v1750 = vld [vmem:[%s1738 + $0x58] sm:$0xff]
        %v1751 = vld [vmem:[%s1738 + $0x60] sm:$0xff]
        %v1752 = vld [vmem:[%s1738 + $0x68] sm:$0xff]
        %v1753 = vld [vmem:[%s1738 + $0x70] sm:$0xff]
        %v1754 = vld [vmem:[%s1738 + $0x78] sm:$0xff]
        %1755 = vmatprep.subr.mxu0 0.0
        %1756 = vmatpush1.msra.mxu0 %v1754
        %1757 = vmatprep.subr.mxu0 0.0
        %1758 = vmatpush1.msra.mxu0 %v1753
        %1759 = vmatprep.subr.mxu0 0.0
        %1760 = vmatpush1.msra.mxu0 %v1752
        %1761 = vmatprep.subr.mxu0 0.0
        %1762 = vmatpush1.msra.mxu0 %v1751
        %1763 = vmatprep.subr.mxu0 0.0
        %1764 = vmatpush1.msra.mxu0 %v1750
        %1765 = vmatprep.subr.mxu0 0.0
        %1766 = vmatpush1.msra.mxu0 %v1749
        %1767 = vmatprep.subr.mxu0 0.0
        %1768 = vmatpush1.msra.mxu0 %v1748
        %1769 = vmatprep.subr.mxu0 0.0
        %1770 = vmatpush1.msra.mxu0 %v1747
        %1771 = vmatprep.subr.mxu0 0.0
        %1772 = vmatpush1.msra.mxu0 %v1746
        %1773 = vmatprep.subr.mxu0 0.0
        %1774 = vmatpush1.msra.mxu0 %v1745
        %1775 = vmatprep.subr.mxu0 0.0
        %1776 = vmatpush1.msra.mxu0 %v1744
        %1777 = vmatprep.subr.mxu0 0.0
        %1778 = vmatpush1.msra.mxu0 %v1743
        %1779 = vmatprep.subr.mxu0 0.0
        %1780 = vmatpush1.msra.mxu0 %v1742
        %1781 = vmatprep.subr.mxu0 0.0
        %1782 = vmatpush1.msra.mxu0 %v1741
        %1783 = vmatprep.subr.mxu0 0.0
        %1784 = vmatpush1.msra.mxu0 %v1740
        %1785 = vmatprep.subr.mxu0 0.0
        %1786 = vmatpush1.msra.mxu0 %v1739
        %1787 = vmatprep.subr.mxu0 0.0
        %1788 = vmatpush2.msra.mxu0 0.0
        %1789 = vmatprep.subr.mxu0 0.0
        %1790 = vmatpush2.msra.mxu0 0.0
        %1791 = vmatprep.subr.mxu0 0.0
        %1792 = vmatpush2.msra.mxu0 0.0
        %1793 = vmatprep.subr.mxu0 0.0
        %1794 = vmatpush2.msra.mxu0 0.0
        %1795 = vmatprep.subr.mxu0 0.0
        %1796 = vmatpush2.msra.mxu0 0.0
        %1797 = vmatprep.subr.mxu0 0.0
        %1798 = vmatpush2.msra.mxu0 0.0
        %1799 = vmatprep.subr.mxu0 0.0
        %1800 = vmatpush2.msra.mxu0 0.0
        %1801 = vmatprep.subr.mxu0 0.0
        %1802 = vmatpush2.msra.mxu0 0.0
        %1803 = vmatprep.subr.mxu0 0.0
        %1804 = vmatpush2.msra.mxu0 0.0
        %1805 = vmatprep.subr.mxu0 0.0
        %1806 = vmatpush2.msra.mxu0 0.0
        %1807 = vmatprep.subr.mxu0 0.0
        %1808 = vmatpush2.msra.mxu0 0.0
        %1809 = vmatprep.subr.mxu0 0.0
        %1810 = vmatpush2.msra.mxu0 0.0
        %1811 = vmatprep.subr.mxu0 0.0
        %1812 = vmatpush2.msra.mxu0 0.0
        %1813 = vmatprep.subr.mxu0 0.0
        %1814 = vmatpush2.msra.mxu0 0.0
        %1815 = vmatprep.subr.mxu0 0.0
        %1816 = vmatpush2.msra.mxu0 0.0
        %1817 = vmatprep.subr.mxu0 0.0
        %1818 = vmatpush2.msra.mxu0 0.0
        %1819 = vmatprep.mubr.f32.mxu0 0.0
        %1820 = vmatmul.mubr.f32.gmra.mxu0 %v1730
        %v1821 = vpop.f32.mrf.mxu0
        %v1822 = vadd.f32 0.0, %v1821
        %v1823 = vpop.f32.mrf.mxu0
        %1824 = vmatprep.mubr.f32.mxu0 0.0
        %1825 = vmatmul.mubr.f32.gmra.mxu0 %v1731
        %v1826 = vpop.f32.mrf.mxu0
        %v1827 = vadd.f32 0.0, %v1826
        %v1828 = vpop.f32.mrf.mxu0
        %1829 = vmatprep.mubr.f32.mxu0 0.0
        %1830 = vmatmul.mubr.f32.gmra.mxu0 %v1732
        %v1831 = vpop.f32.mrf.mxu0
        %v1832 = vadd.f32 0.0, %v1831
        %v1833 = vpop.f32.mrf.mxu0
        %1834 = vmatprep.mubr.f32.mxu0 0.0
        %1835 = vmatmul.mubr.f32.gmra.mxu0 %v1733
        %v1836 = vpop.f32.mrf.mxu0
        %v1837 = vadd.f32 0.0, %v1836
        %v1838 = vpop.f32.mrf.mxu0
        %1839 = vmatprep.mubr.f32.mxu0 0.0
        %1840 = vmatmul.mubr.f32.gmra.mxu0 %v1734
        %v1841 = vpop.f32.mrf.mxu0
        %v1842 = vadd.f32 0.0, %v1841
        %v1843 = vpop.f32.mrf.mxu0
        %1844 = vmatprep.mubr.f32.mxu0 0.0
        %1845 = vmatmul.mubr.f32.gmra.mxu0 %v1735
        %v1846 = vpop.f32.mrf.mxu0
        %v1847 = vadd.f32 0.0, %v1846
        %v1848 = vpop.f32.mrf.mxu0
        %1849 = vmatprep.mubr.f32.mxu0 0.0
        %1850 = vmatmul.mubr.f32.gmra.mxu0 %v1736
        %v1851 = vpop.f32.mrf.mxu0
        %v1852 = vadd.f32 0.0, %v1851
        %v1853 = vpop.f32.mrf.mxu0
        %1854 = vmatprep.mubr.f32.mxu0 0.0
        %1855 = vmatmul.mubr.f32.gmra.mxu0 %v1737
        %v1856 = vpop.f32.mrf.mxu0
        %v1857 = vadd.f32 0.0, %v1856
        %v1858 = vpop.f32.mrf.mxu0
        %1859 = vdwg.mxu0
        %1860 = vmatprep.subr.mxu0 0.0
        %1861 = vmatpush1.msra.mxu0 %v1729
        %1862 = vmatprep.subr.mxu0 0.0
        %1863 = vmatpush1.msra.mxu0 %v1728
        %1864 = vmatprep.subr.mxu0 0.0
        %1865 = vmatpush1.msra.mxu0 %v1727
        %1866 = vmatprep.subr.mxu0 0.0
        %1867 = vmatpush1.msra.mxu0 %v1726
        %1868 = vmatprep.subr.mxu0 0.0
        %1869 = vmatpush1.msra.mxu0 %v1725
        %1870 = vmatprep.subr.mxu0 0.0
        %1871 = vmatpush1.msra.mxu0 %v1724
        %1872 = vmatprep.subr.mxu0 0.0
        %1873 = vmatpush1.msra.mxu0 %v1723
        %1874 = vmatprep.subr.mxu0 0.0
        %1875 = vmatpush1.msra.mxu0 %v1722
        %1876 = vmatprep.subr.mxu0 0.0
        %1877 = vmatpush1.msra.mxu0 %v1721
        %1878 = vmatprep.subr.mxu0 0.0
        %1879 = vmatpush1.msra.mxu0 %v1720
        %1880 = vmatprep.subr.mxu0 0.0
        %1881 = vmatpush1.msra.mxu0 %v1719
        %1882 = vmatprep.subr.mxu0 0.0
        %1883 = vmatpush1.msra.mxu0 %v1718
        %1884 = vmatprep.subr.mxu0 0.0
        %1885 = vmatpush1.msra.mxu0 %v1717
        %1886 = vmatprep.subr.mxu0 0.0
        %1887 = vmatpush1.msra.mxu0 %v1716
        %1888 = vmatprep.subr.mxu0 0.0
        %1889 = vmatpush1.msra.mxu0 %v1715
        %1890 = vmatprep.subr.mxu0 0.0
        %1891 = vmatpush1.msra.mxu0 %v1714
        %1892 = vmatprep.subr.mxu0 0.0
        %1893 = vmatpush2.msra.mxu0 0.0
        %1894 = vmatprep.subr.mxu0 0.0
        %1895 = vmatpush2.msra.mxu0 0.0
        %1896 = vmatprep.subr.mxu0 0.0
        %1897 = vmatpush2.msra.mxu0 0.0
        %1898 = vmatprep.subr.mxu0 0.0
        %1899 = vmatpush2.msra.mxu0 0.0
        %1900 = vmatprep.subr.mxu0 0.0
        %1901 = vmatpush2.msra.mxu0 0.0
        %1902 = vmatprep.subr.mxu0 0.0
        %1903 = vmatpush2.msra.mxu0 0.0
        %1904 = vmatprep.subr.mxu0 0.0
        %1905 = vmatpush2.msra.mxu0 0.0
        %1906 = vmatprep.subr.mxu0 0.0
        %1907 = vmatpush2.msra.mxu0 0.0
        %1908 = vmatprep.subr.mxu0 0.0
        %1909 = vmatpush2.msra.mxu0 0.0
        %1910 = vmatprep.subr.mxu0 0.0
        %1911 = vmatpush2.msra.mxu0 0.0
        %1912 = vmatprep.subr.mxu0 0.0
        %1913 = vmatpush2.msra.mxu0 0.0
        %1914 = vmatprep.subr.mxu0 0.0
        %1915 = vmatpush2.msra.mxu0 0.0
        %1916 = vmatprep.subr.mxu0 0.0
        %1917 = vmatpush2.msra.mxu0 0.0
        %1918 = vmatprep.subr.mxu0 0.0
        %1919 = vmatpush2.msra.mxu0 0.0
        %1920 = vmatprep.subr.mxu0 0.0
        %1921 = vmatpush2.msra.mxu0 0.0
        %1922 = vmatprep.subr.mxu0 0.0
        %1923 = vmatpush2.msra.mxu0 0.0
        %1924 = vmatprep.mubr.f32.mxu0 0.0
        %1925 = vmatmul.mubr.f32.gmra.mxu0 %v1705
        %v1926 = vpop.f32.mrf.mxu0
        %v1927 = vadd.f32 %v1822, %v1926
        %v1928 = vpop.f32.mrf.mxu0
        %1929 = vmatprep.mubr.f32.mxu0 0.0
        %1930 = vmatmul.mubr.f32.gmra.mxu0 %v1706
        %v1931 = vpop.f32.mrf.mxu0
        %v1932 = vadd.f32 %v1827, %v1931
        %v1933 = vpop.f32.mrf.mxu0
        %1934 = vmatprep.mubr.f32.mxu0 0.0
        %1935 = vmatmul.mubr.f32.gmra.mxu0 %v1707
        %v1936 = vpop.f32.mrf.mxu0
        %v1937 = vadd.f32 %v1832, %v1936
        %v1938 = vpop.f32.mrf.mxu0
        %1939 = vmatprep.mubr.f32.mxu0 0.0
        %1940 = vmatmul.mubr.f32.gmra.mxu0 %v1708
        %v1941 = vpop.f32.mrf.mxu0
        %v1942 = vadd.f32 %v1837, %v1941
        %v1943 = vpop.f32.mrf.mxu0
        %1944 = vmatprep.mubr.f32.mxu0 0.0
        %1945 = vmatmul.mubr.f32.gmra.mxu0 %v1709
        %v1946 = vpop.f32.mrf.mxu0
        %v1947 = vadd.f32 %v1842, %v1946
        %v1948 = vpop.f32.mrf.mxu0
        %1949 = vmatprep.mubr.f32.mxu0 0.0
        %1950 = vmatmul.mubr.f32.gmra.mxu0 %v1710
        %v1951 = vpop.f32.mrf.mxu0
        %v1952 = vadd.f32 %v1847, %v1951
        %v1953 = vpop.f32.mrf.mxu0
        %1954 = vmatprep.mubr.f32.mxu0 0.0
        %1955 = vmatmul.mubr.f32.gmra.mxu0 %v1711
        %v1956 = vpop.f32.mrf.mxu0
        %v1957 = vadd.f32 %v1852, %v1956
        %v1958 = vpop.f32.mrf.mxu0
        %1959 = vmatprep.mubr.f32.mxu0 0.0
        %1960 = vmatmul.mubr.f32.gmra.mxu0 %v1712
        %v1961 = vpop.f32.mrf.mxu0
        %v1962 = vadd.f32 %v1857, %v1961
        %v1963 = vpop.f32.mrf.mxu0
        %1964 = vdwg.mxu0
        %v1965 = vld [vmem:[#allocation3 + $0x2] sm:$0xff]
        %v1966 = vld [vmem:[#allocation3 + $0x12] sm:$0xff]
        %v1967 = vld [vmem:[#allocation3 + $0x22] sm:$0xff]
        %v1968 = vld [vmem:[#allocation3 + $0x32] sm:$0xff]
        %v1969 = vld [vmem:[#allocation3 + $0x42] sm:$0xff]
        %v1970 = vld [vmem:[#allocation3 + $0x52] sm:$0xff]
        %v1971 = vld [vmem:[#allocation3 + $0x62] sm:$0xff]
        %v1972 = vld [vmem:[#allocation3 + $0x72] sm:$0xff]
        %s1973 = scalar_lea.vmem %s1, 1408
        %v1974 = vld [vmem:[%s1973] sm:$0xff]
        %v1975 = vld [vmem:[%s1973 + $0x8] sm:$0xff]
        %v1976 = vld [vmem:[%s1973 + $0x10] sm:$0xff]
        %v1977 = vld [vmem:[%s1973 + $0x18] sm:$0xff]
        %v1978 = vld [vmem:[%s1973 + $0x20] sm:$0xff]
        %v1979 = vld [vmem:[%s1973 + $0x28] sm:$0xff]
        %v1980 = vld [vmem:[%s1973 + $0x30] sm:$0xff]
        %v1981 = vld [vmem:[%s1973 + $0x38] sm:$0xff]
        %v1982 = vld [vmem:[%s1973 + $0x40] sm:$0xff]
        %v1983 = vld [vmem:[%s1973 + $0x48] sm:$0xff]
        %v1984 = vld [vmem:[%s1973 + $0x50] sm:$0xff]
        %v1985 = vld [vmem:[%s1973 + $0x58] sm:$0xff]
        %v1986 = vld [vmem:[%s1973 + $0x60] sm:$0xff]
        %v1987 = vld [vmem:[%s1973 + $0x68] sm:$0xff]
        %v1988 = vld [vmem:[%s1973 + $0x70] sm:$0xff]
        %v1989 = vld [vmem:[%s1973 + $0x78] sm:$0xff]
        %1990 = vmatprep.subr.mxu0 0.0
        %1991 = vmatpush1.msra.mxu0 %v1989
        %1992 = vmatprep.subr.mxu0 0.0
        %1993 = vmatpush1.msra.mxu0 %v1988
        %1994 = vmatprep.subr.mxu0 0.0
        %1995 = vmatpush1.msra.mxu0 %v1987
        %1996 = vmatprep.subr.mxu0 0.0
        %1997 = vmatpush1.msra.mxu0 %v1986
        %1998 = vmatprep.subr.mxu0 0.0
        %1999 = vmatpush1.msra.mxu0 %v1985
        %2000 = vmatprep.subr.mxu0 0.0
        %2001 = vmatpush1.msra.mxu0 %v1984
        %2002 = vmatprep.subr.mxu0 0.0
        %2003 = vmatpush1.msra.mxu0 %v1983
        %2004 = vmatprep.subr.mxu0 0.0
        %2005 = vmatpush1.msra.mxu0 %v1982
        %2006 = vmatprep.subr.mxu0 0.0
        %2007 = vmatpush1.msra.mxu0 %v1981
        %2008 = vmatprep.subr.mxu0 0.0
        %2009 = vmatpush1.msra.mxu0 %v1980
        %2010 = vmatprep.subr.mxu0 0.0
        %2011 = vmatpush1.msra.mxu0 %v1979
        %2012 = vmatprep.subr.mxu0 0.0
        %2013 = vmatpush1.msra.mxu0 %v1978
        %2014 = vmatprep.subr.mxu0 0.0
        %2015 = vmatpush1.msra.mxu0 %v1977
        %2016 = vmatprep.subr.mxu0 0.0
        %2017 = vmatpush1.msra.mxu0 %v1976
        %2018 = vmatprep.subr.mxu0 0.0
        %2019 = vmatpush1.msra.mxu0 %v1975
        %2020 = vmatprep.subr.mxu0 0.0
        %2021 = vmatpush1.msra.mxu0 %v1974
        %2022 = vmatprep.subr.mxu0 0.0
        %2023 = vmatpush2.msra.mxu0 0.0
        %2024 = vmatprep.subr.mxu0 0.0
        %2025 = vmatpush2.msra.mxu0 0.0
        %2026 = vmatprep.subr.mxu0 0.0
        %2027 = vmatpush2.msra.mxu0 0.0
        %2028 = vmatprep.subr.mxu0 0.0
        %2029 = vmatpush2.msra.mxu0 0.0
        %2030 = vmatprep.subr.mxu0 0.0
        %2031 = vmatpush2.msra.mxu0 0.0
        %2032 = vmatprep.subr.mxu0 0.0
        %2033 = vmatpush2.msra.mxu0 0.0
        %2034 = vmatprep.subr.mxu0 0.0
        %2035 = vmatpush2.msra.mxu0 0.0
        %2036 = vmatprep.subr.mxu0 0.0
        %2037 = vmatpush2.msra.mxu0 0.0
        %2038 = vmatprep.subr.mxu0 0.0
        %2039 = vmatpush2.msra.mxu0 0.0
        %2040 = vmatprep.subr.mxu0 0.0
        %2041 = vmatpush2.msra.mxu0 0.0
        %2042 = vmatprep.subr.mxu0 0.0
        %2043 = vmatpush2.msra.mxu0 0.0
        %2044 = vmatprep.subr.mxu0 0.0
        %2045 = vmatpush2.msra.mxu0 0.0
        %2046 = vmatprep.subr.mxu0 0.0
        %2047 = vmatpush2.msra.mxu0 0.0
        %2048 = vmatprep.subr.mxu0 0.0
        %2049 = vmatpush2.msra.mxu0 0.0
        %2050 = vmatprep.subr.mxu0 0.0
        %2051 = vmatpush2.msra.mxu0 0.0
        %2052 = vmatprep.subr.mxu0 0.0
        %2053 = vmatpush2.msra.mxu0 0.0
        %2054 = vmatprep.mubr.f32.mxu0 0.0
        %2055 = vmatmul.mubr.f32.gmra.mxu0 %v1965
        %v2056 = vpop.f32.mrf.mxu0
        %v2057 = vadd.f32 0.0, %v2056
        %v2058 = vpop.f32.mrf.mxu0
        %2059 = vmatprep.mubr.f32.mxu0 0.0
        %2060 = vmatmul.mubr.f32.gmra.mxu0 %v1966
        %v2061 = vpop.f32.mrf.mxu0
        %v2062 = vadd.f32 0.0, %v2061
        %v2063 = vpop.f32.mrf.mxu0
        %2064 = vmatprep.mubr.f32.mxu0 0.0
        %2065 = vmatmul.mubr.f32.gmra.mxu0 %v1967
        %v2066 = vpop.f32.mrf.mxu0
        %v2067 = vadd.f32 0.0, %v2066
        %v2068 = vpop.f32.mrf.mxu0
        %2069 = vmatprep.mubr.f32.mxu0 0.0
        %2070 = vmatmul.mubr.f32.gmra.mxu0 %v1968
        %v2071 = vpop.f32.mrf.mxu0
        %v2072 = vadd.f32 0.0, %v2071
        %v2073 = vpop.f32.mrf.mxu0
        %2074 = vmatprep.mubr.f32.mxu0 0.0
        %2075 = vmatmul.mubr.f32.gmra.mxu0 %v1969
        %v2076 = vpop.f32.mrf.mxu0
        %v2077 = vadd.f32 0.0, %v2076
        %v2078 = vpop.f32.mrf.mxu0
        %2079 = vmatprep.mubr.f32.mxu0 0.0
        %2080 = vmatmul.mubr.f32.gmra.mxu0 %v1970
        %v2081 = vpop.f32.mrf.mxu0
        %v2082 = vadd.f32 0.0, %v2081
        %v2083 = vpop.f32.mrf.mxu0
        %2084 = vmatprep.mubr.f32.mxu0 0.0
        %2085 = vmatmul.mubr.f32.gmra.mxu0 %v1971
        %v2086 = vpop.f32.mrf.mxu0
        %v2087 = vadd.f32 0.0, %v2086
        %v2088 = vpop.f32.mrf.mxu0
        %2089 = vmatprep.mubr.f32.mxu0 0.0
        %2090 = vmatmul.mubr.f32.gmra.mxu0 %v1972
        %v2091 = vpop.f32.mrf.mxu0
        %v2092 = vadd.f32 0.0, %v2091
        %v2093 = vpop.f32.mrf.mxu0
        %2094 = vdwg.mxu0
        %v2095 = vadd.f32 %v1927, %v2057
        %v2096 = vadd.f32 %v1932, %v2062
        %v2097 = vadd.f32 %v1937, %v2067
        %v2098 = vadd.f32 %v1942, %v2072
        %v2099 = vadd.f32 %v1947, %v2077
        %v2100 = vadd.f32 %v1952, %v2082
        %v2101 = vadd.f32 %v1957, %v2087
        %v2102 = vadd.f32 %v1962, %v2092
        %v2103 = vld [vmem:[%s385] sm:$0xff]
        %v2104 = vld [vmem:[%s385 + $0x10] sm:$0xff]
        %v2105 = vld [vmem:[%s385 + $0x20] sm:$0xff]
        %v2106 = vld [vmem:[%s385 + $0x30] sm:$0xff]
        %v2107 = vld [vmem:[%s385 + $0x40] sm:$0xff]
        %v2108 = vld [vmem:[%s385 + $0x50] sm:$0xff]
        %v2109 = vld [vmem:[%s385 + $0x60] sm:$0xff]
        %v2110 = vld [vmem:[%s385 + $0x70] sm:$0xff]
        %s2111 = scalar_lea.vmem %s1, 1536
        %v2112 = vld [vmem:[%s2111] sm:$0xff]
        %v2113 = vld [vmem:[%s2111 + $0x8] sm:$0xff]
        %v2114 = vld [vmem:[%s2111 + $0x10] sm:$0xff]
        %v2115 = vld [vmem:[%s2111 + $0x18] sm:$0xff]
        %v2116 = vld [vmem:[%s2111 + $0x20] sm:$0xff]
        %v2117 = vld [vmem:[%s2111 + $0x28] sm:$0xff]
        %v2118 = vld [vmem:[%s2111 + $0x30] sm:$0xff]
        %v2119 = vld [vmem:[%s2111 + $0x38] sm:$0xff]
        %v2120 = vld [vmem:[%s2111 + $0x40] sm:$0xff]
        %v2121 = vld [vmem:[%s2111 + $0x48] sm:$0xff]
        %v2122 = vld [vmem:[%s2111 + $0x50] sm:$0xff]
        %v2123 = vld [vmem:[%s2111 + $0x58] sm:$0xff]
        %v2124 = vld [vmem:[%s2111 + $0x60] sm:$0xff]
        %v2125 = vld [vmem:[%s2111 + $0x68] sm:$0xff]
        %v2126 = vld [vmem:[%s2111 + $0x70] sm:$0xff]
        %v2127 = vld [vmem:[%s2111 + $0x78] sm:$0xff]
        %2128 = vmatprep.subr.mxu0 0.0
        %2129 = vmatpush1.msra.mxu0 %v2127
        %2130 = vmatprep.subr.mxu0 0.0
        %2131 = vmatpush1.msra.mxu0 %v2126
        %2132 = vmatprep.subr.mxu0 0.0
        %2133 = vmatpush1.msra.mxu0 %v2125
        %2134 = vmatprep.subr.mxu0 0.0
        %2135 = vmatpush1.msra.mxu0 %v2124
        %2136 = vmatprep.subr.mxu0 0.0
        %2137 = vmatpush1.msra.mxu0 %v2123
        %2138 = vmatprep.subr.mxu0 0.0
        %2139 = vmatpush1.msra.mxu0 %v2122
        %2140 = vmatprep.subr.mxu0 0.0
        %2141 = vmatpush1.msra.mxu0 %v2121
        %2142 = vmatprep.subr.mxu0 0.0
        %2143 = vmatpush1.msra.mxu0 %v2120
        %2144 = vmatprep.subr.mxu0 0.0
        %2145 = vmatpush1.msra.mxu0 %v2119
        %2146 = vmatprep.subr.mxu0 0.0
        %2147 = vmatpush1.msra.mxu0 %v2118
        %2148 = vmatprep.subr.mxu0 0.0
        %2149 = vmatpush1.msra.mxu0 %v2117
        %2150 = vmatprep.subr.mxu0 0.0
        %2151 = vmatpush1.msra.mxu0 %v2116
        %2152 = vmatprep.subr.mxu0 0.0
        %2153 = vmatpush1.msra.mxu0 %v2115
        %2154 = vmatprep.subr.mxu0 0.0
        %2155 = vmatpush1.msra.mxu0 %v2114
        %2156 = vmatprep.subr.mxu0 0.0
        %2157 = vmatpush1.msra.mxu0 %v2113
        %2158 = vmatprep.subr.mxu0 0.0
        %2159 = vmatpush1.msra.mxu0 %v2112
        %2160 = vmatprep.subr.mxu0 0.0
        %2161 = vmatpush2.msra.mxu0 0.0
        %2162 = vmatprep.subr.mxu0 0.0
        %2163 = vmatpush2.msra.mxu0 0.0
        %2164 = vmatprep.subr.mxu0 0.0
        %2165 = vmatpush2.msra.mxu0 0.0
        %2166 = vmatprep.subr.mxu0 0.0
        %2167 = vmatpush2.msra.mxu0 0.0
        %2168 = vmatprep.subr.mxu0 0.0
        %2169 = vmatpush2.msra.mxu0 0.0
        %2170 = vmatprep.subr.mxu0 0.0
        %2171 = vmatpush2.msra.mxu0 0.0
        %2172 = vmatprep.subr.mxu0 0.0
        %2173 = vmatpush2.msra.mxu0 0.0
        %2174 = vmatprep.subr.mxu0 0.0
        %2175 = vmatpush2.msra.mxu0 0.0
        %2176 = vmatprep.subr.mxu0 0.0
        %2177 = vmatpush2.msra.mxu0 0.0
        %2178 = vmatprep.subr.mxu0 0.0
        %2179 = vmatpush2.msra.mxu0 0.0
        %2180 = vmatprep.subr.mxu0 0.0
        %2181 = vmatpush2.msra.mxu0 0.0
        %2182 = vmatprep.subr.mxu0 0.0
        %2183 = vmatpush2.msra.mxu0 0.0
        %2184 = vmatprep.subr.mxu0 0.0
        %2185 = vmatpush2.msra.mxu0 0.0
        %2186 = vmatprep.subr.mxu0 0.0
        %2187 = vmatpush2.msra.mxu0 0.0
        %2188 = vmatprep.subr.mxu0 0.0
        %2189 = vmatpush2.msra.mxu0 0.0
        %2190 = vmatprep.subr.mxu0 0.0
        %2191 = vmatpush2.msra.mxu0 0.0
        %2192 = vmatprep.mubr.f32.mxu0 0.0
        %2193 = vmatmul.mubr.f32.gmra.mxu0 %v2103
        %v2194 = vpop.f32.mrf.mxu0
        %v2195 = vadd.f32 0.0, %v2194
        %v2196 = vpop.f32.mrf.mxu0
        %2197 = vmatprep.mubr.f32.mxu0 0.0
        %2198 = vmatmul.mubr.f32.gmra.mxu0 %v2104
        %v2199 = vpop.f32.mrf.mxu0
        %v2200 = vadd.f32 0.0, %v2199
        %v2201 = vpop.f32.mrf.mxu0
        %2202 = vmatprep.mubr.f32.mxu0 0.0
        %2203 = vmatmul.mubr.f32.gmra.mxu0 %v2105
        %v2204 = vpop.f32.mrf.mxu0
        %v2205 = vadd.f32 0.0, %v2204
        %v2206 = vpop.f32.mrf.mxu0
        %2207 = vmatprep.mubr.f32.mxu0 0.0
        %2208 = vmatmul.mubr.f32.gmra.mxu0 %v2106
        %v2209 = vpop.f32.mrf.mxu0
        %v2210 = vadd.f32 0.0, %v2209
        %v2211 = vpop.f32.mrf.mxu0
        %2212 = vmatprep.mubr.f32.mxu0 0.0
        %2213 = vmatmul.mubr.f32.gmra.mxu0 %v2107
        %v2214 = vpop.f32.mrf.mxu0
        %v2215 = vadd.f32 0.0, %v2214
        %v2216 = vpop.f32.mrf.mxu0
        %2217 = vmatprep.mubr.f32.mxu0 0.0
        %2218 = vmatmul.mubr.f32.gmra.mxu0 %v2108
        %v2219 = vpop.f32.mrf.mxu0
        %v2220 = vadd.f32 0.0, %v2219
        %v2221 = vpop.f32.mrf.mxu0
        %2222 = vmatprep.mubr.f32.mxu0 0.0
        %2223 = vmatmul.mubr.f32.gmra.mxu0 %v2109
        %v2224 = vpop.f32.mrf.mxu0
        %v2225 = vadd.f32 0.0, %v2224
        %v2226 = vpop.f32.mrf.mxu0
        %2227 = vmatprep.mubr.f32.mxu0 0.0
        %2228 = vmatmul.mubr.f32.gmra.mxu0 %v2110
        %v2229 = vpop.f32.mrf.mxu0
        %v2230 = vadd.f32 0.0, %v2229
        %v2231 = vpop.f32.mrf.mxu0
        %2232 = vdwg.mxu0
        %v2233 = vadd.f32 %v2095, %v2195
        %v2234 = vadd.f32 %v2096, %v2200
        %v2235 = vadd.f32 %v2097, %v2205
        %v2236 = vadd.f32 %v2098, %v2210
        %v2237 = vadd.f32 %v2099, %v2215
        %v2238 = vadd.f32 %v2100, %v2220
        %v2239 = vadd.f32 %v2101, %v2225
        %v2240 = vadd.f32 %v2102, %v2230
        %v2241 = vld [vmem:[%s385 + $0x1] sm:$0xff]
        %v2242 = vld [vmem:[%s385 + $0x11] sm:$0xff]
        %v2243 = vld [vmem:[%s385 + $0x21] sm:$0xff]
        %v2244 = vld [vmem:[%s385 + $0x31] sm:$0xff]
        %v2245 = vld [vmem:[%s385 + $0x41] sm:$0xff]
        %v2246 = vld [vmem:[%s385 + $0x51] sm:$0xff]
        %v2247 = vld [vmem:[%s385 + $0x61] sm:$0xff]
        %v2248 = vld [vmem:[%s385 + $0x71] sm:$0xff]
        %s2249 = scalar_lea.vmem %s1, 1664
        %v2250 = vld [vmem:[%s2249] sm:$0xff]
        %v2251 = vld [vmem:[%s2249 + $0x8] sm:$0xff]
        %v2252 = vld [vmem:[%s2249 + $0x10] sm:$0xff]
        %v2253 = vld [vmem:[%s2249 + $0x18] sm:$0xff]
        %v2254 = vld [vmem:[%s2249 + $0x20] sm:$0xff]
        %v2255 = vld [vmem:[%s2249 + $0x28] sm:$0xff]
        %v2256 = vld [vmem:[%s2249 + $0x30] sm:$0xff]
        %v2257 = vld [vmem:[%s2249 + $0x38] sm:$0xff]
        %v2258 = vld [vmem:[%s2249 + $0x40] sm:$0xff]
        %v2259 = vld [vmem:[%s2249 + $0x48] sm:$0xff]
        %v2260 = vld [vmem:[%s2249 + $0x50] sm:$0xff]
        %v2261 = vld [vmem:[%s2249 + $0x58] sm:$0xff]
        %v2262 = vld [vmem:[%s2249 + $0x60] sm:$0xff]
        %v2263 = vld [vmem:[%s2249 + $0x68] sm:$0xff]
        %v2264 = vld [vmem:[%s2249 + $0x70] sm:$0xff]
        %v2265 = vld [vmem:[%s2249 + $0x78] sm:$0xff]
        %2266 = vmatprep.subr.mxu0 0.0
        %2267 = vmatpush1.msra.mxu0 %v2265
        %2268 = vmatprep.subr.mxu0 0.0
        %2269 = vmatpush1.msra.mxu0 %v2264
        %2270 = vmatprep.subr.mxu0 0.0
        %2271 = vmatpush1.msra.mxu0 %v2263
        %2272 = vmatprep.subr.mxu0 0.0
        %2273 = vmatpush1.msra.mxu0 %v2262
        %2274 = vmatprep.subr.mxu0 0.0
        %2275 = vmatpush1.msra.mxu0 %v2261
        %2276 = vmatprep.subr.mxu0 0.0
        %2277 = vmatpush1.msra.mxu0 %v2260
        %2278 = vmatprep.subr.mxu0 0.0
        %2279 = vmatpush1.msra.mxu0 %v2259
        %2280 = vmatprep.subr.mxu0 0.0
        %2281 = vmatpush1.msra.mxu0 %v2258
        %2282 = vmatprep.subr.mxu0 0.0
        %2283 = vmatpush1.msra.mxu0 %v2257
        %2284 = vmatprep.subr.mxu0 0.0
        %2285 = vmatpush1.msra.mxu0 %v2256
        %2286 = vmatprep.subr.mxu0 0.0
        %2287 = vmatpush1.msra.mxu0 %v2255
        %2288 = vmatprep.subr.mxu0 0.0
        %2289 = vmatpush1.msra.mxu0 %v2254
        %2290 = vmatprep.subr.mxu0 0.0
        %2291 = vmatpush1.msra.mxu0 %v2253
        %2292 = vmatprep.subr.mxu0 0.0
        %2293 = vmatpush1.msra.mxu0 %v2252
        %2294 = vmatprep.subr.mxu0 0.0
        %2295 = vmatpush1.msra.mxu0 %v2251
        %2296 = vmatprep.subr.mxu0 0.0
        %2297 = vmatpush1.msra.mxu0 %v2250
        %2298 = vmatprep.subr.mxu0 0.0
        %2299 = vmatpush2.msra.mxu0 0.0
        %2300 = vmatprep.subr.mxu0 0.0
        %2301 = vmatpush2.msra.mxu0 0.0
        %2302 = vmatprep.subr.mxu0 0.0
        %2303 = vmatpush2.msra.mxu0 0.0
        %2304 = vmatprep.subr.mxu0 0.0
        %2305 = vmatpush2.msra.mxu0 0.0
        %2306 = vmatprep.subr.mxu0 0.0
        %2307 = vmatpush2.msra.mxu0 0.0
        %2308 = vmatprep.subr.mxu0 0.0
        %2309 = vmatpush2.msra.mxu0 0.0
        %2310 = vmatprep.subr.mxu0 0.0
        %2311 = vmatpush2.msra.mxu0 0.0
        %2312 = vmatprep.subr.mxu0 0.0
        %2313 = vmatpush2.msra.mxu0 0.0
        %2314 = vmatprep.subr.mxu0 0.0
        %2315 = vmatpush2.msra.mxu0 0.0
        %2316 = vmatprep.subr.mxu0 0.0
        %2317 = vmatpush2.msra.mxu0 0.0
        %2318 = vmatprep.subr.mxu0 0.0
        %2319 = vmatpush2.msra.mxu0 0.0
        %2320 = vmatprep.subr.mxu0 0.0
        %2321 = vmatpush2.msra.mxu0 0.0
        %2322 = vmatprep.subr.mxu0 0.0
        %2323 = vmatpush2.msra.mxu0 0.0
        %2324 = vmatprep.subr.mxu0 0.0
        %2325 = vmatpush2.msra.mxu0 0.0
        %2326 = vmatprep.subr.mxu0 0.0
        %2327 = vmatpush2.msra.mxu0 0.0
        %2328 = vmatprep.subr.mxu0 0.0
        %2329 = vmatpush2.msra.mxu0 0.0
        %2330 = vmatprep.mubr.f32.mxu0 0.0
        %2331 = vmatmul.mubr.f32.gmra.mxu0 %v2241
        %v2332 = vpop.f32.mrf.mxu0
        %v2333 = vadd.f32 0.0, %v2332
        %v2334 = vpop.f32.mrf.mxu0
        %2335 = vmatprep.mubr.f32.mxu0 0.0
        %2336 = vmatmul.mubr.f32.gmra.mxu0 %v2242
        %v2337 = vpop.f32.mrf.mxu0
        %v2338 = vadd.f32 0.0, %v2337
        %v2339 = vpop.f32.mrf.mxu0
        %2340 = vmatprep.mubr.f32.mxu0 0.0
        %2341 = vmatmul.mubr.f32.gmra.mxu0 %v2243
        %v2342 = vpop.f32.mrf.mxu0
        %v2343 = vadd.f32 0.0, %v2342
        %v2344 = vpop.f32.mrf.mxu0
        %2345 = vmatprep.mubr.f32.mxu0 0.0
        %2346 = vmatmul.mubr.f32.gmra.mxu0 %v2244
        %v2347 = vpop.f32.mrf.mxu0
        %v2348 = vadd.f32 0.0, %v2347
        %v2349 = vpop.f32.mrf.mxu0
        %2350 = vmatprep.mubr.f32.mxu0 0.0
        %2351 = vmatmul.mubr.f32.gmra.mxu0 %v2245
        %v2352 = vpop.f32.mrf.mxu0
        %v2353 = vadd.f32 0.0, %v2352
        %v2354 = vpop.f32.mrf.mxu0
        %2355 = vmatprep.mubr.f32.mxu0 0.0
        %2356 = vmatmul.mubr.f32.gmra.mxu0 %v2246
        %v2357 = vpop.f32.mrf.mxu0
        %v2358 = vadd.f32 0.0, %v2357
        %v2359 = vpop.f32.mrf.mxu0
        %2360 = vmatprep.mubr.f32.mxu0 0.0
        %2361 = vmatmul.mubr.f32.gmra.mxu0 %v2247
        %v2362 = vpop.f32.mrf.mxu0
        %v2363 = vadd.f32 0.0, %v2362
        %v2364 = vpop.f32.mrf.mxu0
        %2365 = vmatprep.mubr.f32.mxu0 0.0
        %2366 = vmatmul.mubr.f32.gmra.mxu0 %v2248
        %v2367 = vpop.f32.mrf.mxu0
        %v2368 = vadd.f32 0.0, %v2367
        %v2369 = vpop.f32.mrf.mxu0
        %2370 = vdwg.mxu0
        %v2371 = vadd.f32 %v2233, %v2333
        %v2372 = vadd.f32 %v2234, %v2338
        %v2373 = vadd.f32 %v2235, %v2343
        %v2374 = vadd.f32 %v2236, %v2348
        %v2375 = vadd.f32 %v2237, %v2353
        %v2376 = vadd.f32 %v2238, %v2358
        %v2377 = vadd.f32 %v2239, %v2363
        %v2378 = vadd.f32 %v2240, %v2368
        %v2379 = vld [vmem:[%s385 + $0x2] sm:$0xff]
        %v2380 = vld [vmem:[%s385 + $0x12] sm:$0xff]
        %v2381 = vld [vmem:[%s385 + $0x22] sm:$0xff]
        %v2382 = vld [vmem:[%s385 + $0x32] sm:$0xff]
        %v2383 = vld [vmem:[%s385 + $0x42] sm:$0xff]
        %v2384 = vld [vmem:[%s385 + $0x52] sm:$0xff]
        %v2385 = vld [vmem:[%s385 + $0x62] sm:$0xff]
        %v2386 = vld [vmem:[%s385 + $0x72] sm:$0xff]
        %s2387 = scalar_lea.vmem %s1, 1792
        %v2388 = vld [vmem:[%s2387] sm:$0xff]
        %v2389 = vld [vmem:[%s2387 + $0x8] sm:$0xff]
        %v2390 = vld [vmem:[%s2387 + $0x10] sm:$0xff]
        %v2391 = vld [vmem:[%s2387 + $0x18] sm:$0xff]
        %v2392 = vld [vmem:[%s2387 + $0x20] sm:$0xff]
        %v2393 = vld [vmem:[%s2387 + $0x28] sm:$0xff]
        %v2394 = vld [vmem:[%s2387 + $0x30] sm:$0xff]
        %v2395 = vld [vmem:[%s2387 + $0x38] sm:$0xff]
        %v2396 = vld [vmem:[%s2387 + $0x40] sm:$0xff]
        %v2397 = vld [vmem:[%s2387 + $0x48] sm:$0xff]
        %v2398 = vld [vmem:[%s2387 + $0x50] sm:$0xff]
        %v2399 = vld [vmem:[%s2387 + $0x58] sm:$0xff]
        %v2400 = vld [vmem:[%s2387 + $0x60] sm:$0xff]
        %v2401 = vld [vmem:[%s2387 + $0x68] sm:$0xff]
        %v2402 = vld [vmem:[%s2387 + $0x70] sm:$0xff]
        %v2403 = vld [vmem:[%s2387 + $0x78] sm:$0xff]
        %2404 = vmatprep.subr.mxu0 0.0
        %2405 = vmatpush1.msra.mxu0 %v2403
        %2406 = vmatprep.subr.mxu0 0.0
        %2407 = vmatpush1.msra.mxu0 %v2402
        %2408 = vmatprep.subr.mxu0 0.0
        %2409 = vmatpush1.msra.mxu0 %v2401
        %2410 = vmatprep.subr.mxu0 0.0
        %2411 = vmatpush1.msra.mxu0 %v2400
        %2412 = vmatprep.subr.mxu0 0.0
        %2413 = vmatpush1.msra.mxu0 %v2399
        %2414 = vmatprep.subr.mxu0 0.0
        %2415 = vmatpush1.msra.mxu0 %v2398
        %2416 = vmatprep.subr.mxu0 0.0
        %2417 = vmatpush1.msra.mxu0 %v2397
        %2418 = vmatprep.subr.mxu0 0.0
        %2419 = vmatpush1.msra.mxu0 %v2396
        %2420 = vmatprep.subr.mxu0 0.0
        %2421 = vmatpush1.msra.mxu0 %v2395
        %2422 = vmatprep.subr.mxu0 0.0
        %2423 = vmatpush1.msra.mxu0 %v2394
        %2424 = vmatprep.subr.mxu0 0.0
        %2425 = vmatpush1.msra.mxu0 %v2393
        %2426 = vmatprep.subr.mxu0 0.0
        %2427 = vmatpush1.msra.mxu0 %v2392
        %2428 = vmatprep.subr.mxu0 0.0
        %2429 = vmatpush1.msra.mxu0 %v2391
        %2430 = vmatprep.subr.mxu0 0.0
        %2431 = vmatpush1.msra.mxu0 %v2390
        %2432 = vmatprep.subr.mxu0 0.0
        %2433 = vmatpush1.msra.mxu0 %v2389
        %2434 = vmatprep.subr.mxu0 0.0
        %2435 = vmatpush1.msra.mxu0 %v2388
        %2436 = vmatprep.subr.mxu0 0.0
        %2437 = vmatpush2.msra.mxu0 0.0
        %2438 = vmatprep.subr.mxu0 0.0
        %2439 = vmatpush2.msra.mxu0 0.0
        %2440 = vmatprep.subr.mxu0 0.0
        %2441 = vmatpush2.msra.mxu0 0.0
        %2442 = vmatprep.subr.mxu0 0.0
        %2443 = vmatpush2.msra.mxu0 0.0
        %2444 = vmatprep.subr.mxu0 0.0
        %2445 = vmatpush2.msra.mxu0 0.0
        %2446 = vmatprep.subr.mxu0 0.0
        %2447 = vmatpush2.msra.mxu0 0.0
        %2448 = vmatprep.subr.mxu0 0.0
        %2449 = vmatpush2.msra.mxu0 0.0
        %2450 = vmatprep.subr.mxu0 0.0
        %2451 = vmatpush2.msra.mxu0 0.0
        %2452 = vmatprep.subr.mxu0 0.0
        %2453 = vmatpush2.msra.mxu0 0.0
        %2454 = vmatprep.subr.mxu0 0.0
        %2455 = vmatpush2.msra.mxu0 0.0
        %2456 = vmatprep.subr.mxu0 0.0
        %2457 = vmatpush2.msra.mxu0 0.0
        %2458 = vmatprep.subr.mxu0 0.0
        %2459 = vmatpush2.msra.mxu0 0.0
        %2460 = vmatprep.subr.mxu0 0.0
        %2461 = vmatpush2.msra.mxu0 0.0
        %2462 = vmatprep.subr.mxu0 0.0
        %2463 = vmatpush2.msra.mxu0 0.0
        %2464 = vmatprep.subr.mxu0 0.0
        %2465 = vmatpush2.msra.mxu0 0.0
        %2466 = vmatprep.subr.mxu0 0.0
        %2467 = vmatpush2.msra.mxu0 0.0
        %2468 = vmatprep.mubr.f32.mxu0 0.0
        %2469 = vmatmul.mubr.f32.gmra.mxu0 %v2379
        %v2470 = vpop.f32.mrf.mxu0
        %v2471 = vadd.f32 0.0, %v2470
        %v2472 = vpop.f32.mrf.mxu0
        %2473 = vmatprep.mubr.f32.mxu0 0.0
        %2474 = vmatmul.mubr.f32.gmra.mxu0 %v2380
        %v2475 = vpop.f32.mrf.mxu0
        %v2476 = vadd.f32 0.0, %v2475
        %v2477 = vpop.f32.mrf.mxu0
        %2478 = vmatprep.mubr.f32.mxu0 0.0
        %2479 = vmatmul.mubr.f32.gmra.mxu0 %v2381
        %v2480 = vpop.f32.mrf.mxu0
        %v2481 = vadd.f32 0.0, %v2480
        %v2482 = vpop.f32.mrf.mxu0
        %2483 = vmatprep.mubr.f32.mxu0 0.0
        %2484 = vmatmul.mubr.f32.gmra.mxu0 %v2382
        %v2485 = vpop.f32.mrf.mxu0
        %v2486 = vadd.f32 0.0, %v2485
        %v2487 = vpop.f32.mrf.mxu0
        %2488 = vmatprep.mubr.f32.mxu0 0.0
        %2489 = vmatmul.mubr.f32.gmra.mxu0 %v2383
        %v2490 = vpop.f32.mrf.mxu0
        %v2491 = vadd.f32 0.0, %v2490
        %v2492 = vpop.f32.mrf.mxu0
        %2493 = vmatprep.mubr.f32.mxu0 0.0
        %2494 = vmatmul.mubr.f32.gmra.mxu0 %v2384
        %v2495 = vpop.f32.mrf.mxu0
        %v2496 = vadd.f32 0.0, %v2495
        %v2497 = vpop.f32.mrf.mxu0
        %2498 = vmatprep.mubr.f32.mxu0 0.0
        %2499 = vmatmul.mubr.f32.gmra.mxu0 %v2385
        %v2500 = vpop.f32.mrf.mxu0
        %v2501 = vadd.f32 0.0, %v2500
        %v2502 = vpop.f32.mrf.mxu0
        %2503 = vmatprep.mubr.f32.mxu0 0.0
        %2504 = vmatmul.mubr.f32.gmra.mxu0 %v2386
        %v2505 = vpop.f32.mrf.mxu0
        %v2506 = vadd.f32 0.0, %v2505
        %v2507 = vpop.f32.mrf.mxu0
        %2508 = vdwg.mxu0
        %v2509 = vadd.f32 %v2371, %v2471
        %v2510 = vadd.f32 %v2372, %v2476
        %v2511 = vadd.f32 %v2373, %v2481
        %v2512 = vadd.f32 %v2374, %v2486
        %v2513 = vadd.f32 %v2375, %v2491
        %v2514 = vadd.f32 %v2376, %v2496
        %v2515 = vadd.f32 %v2377, %v2501
        %v2516 = vadd.f32 %v2378, %v2506
        %s2517 = scalar_lea.vmem [#allocation3], 32
        %v2518 = vld [vmem:[%s2517] sm:$0xff]
        %v2519 = vld [vmem:[%s2517 + $0x10] sm:$0xff]
        %v2520 = vld [vmem:[%s2517 + $0x20] sm:$0xff]
        %v2521 = vld [vmem:[%s2517 + $0x30] sm:$0xff]
        %v2522 = vld [vmem:[%s2517 + $0x40] sm:$0xff]
        %v2523 = vld [vmem:[%s2517 + $0x50] sm:$0xff]
        %v2524 = vld [vmem:[%s2517 + $0x60] sm:$0xff]
        %v2525 = vld [vmem:[%s2517 + $0x70] sm:$0xff]
        %s2526 = scalar_lea.vmem %s1, 1920
        %v2527 = vld [vmem:[%s2526] sm:$0xff]
        %v2528 = vld [vmem:[%s2526 + $0x8] sm:$0xff]
        %v2529 = vld [vmem:[%s2526 + $0x10] sm:$0xff]
        %v2530 = vld [vmem:[%s2526 + $0x18] sm:$0xff]
        %v2531 = vld [vmem:[%s2526 + $0x20] sm:$0xff]
        %v2532 = vld [vmem:[%s2526 + $0x28] sm:$0xff]
        %v2533 = vld [vmem:[%s2526 + $0x30] sm:$0xff]
        %v2534 = vld [vmem:[%s2526 + $0x38] sm:$0xff]
        %v2535 = vld [vmem:[%s2526 + $0x40] sm:$0xff]
        %v2536 = vld [vmem:[%s2526 + $0x48] sm:$0xff]
        %v2537 = vld [vmem:[%s2526 + $0x50] sm:$0xff]
        %v2538 = vld [vmem:[%s2526 + $0x58] sm:$0xff]
        %v2539 = vld [vmem:[%s2526 + $0x60] sm:$0xff]
        %v2540 = vld [vmem:[%s2526 + $0x68] sm:$0xff]
        %v2541 = vld [vmem:[%s2526 + $0x70] sm:$0xff]
        %v2542 = vld [vmem:[%s2526 + $0x78] sm:$0xff]
        %2543 = vmatprep.subr.mxu0 0.0
        %2544 = vmatpush1.msra.mxu0 %v2542
        %2545 = vmatprep.subr.mxu0 0.0
        %2546 = vmatpush1.msra.mxu0 %v2541
        %2547 = vmatprep.subr.mxu0 0.0
        %2548 = vmatpush1.msra.mxu0 %v2540
        %2549 = vmatprep.subr.mxu0 0.0
        %2550 = vmatpush1.msra.mxu0 %v2539
        %2551 = vmatprep.subr.mxu0 0.0
        %2552 = vmatpush1.msra.mxu0 %v2538
        %2553 = vmatprep.subr.mxu0 0.0
        %2554 = vmatpush1.msra.mxu0 %v2537
        %2555 = vmatprep.subr.mxu0 0.0
        %2556 = vmatpush1.msra.mxu0 %v2536
        %2557 = vmatprep.subr.mxu0 0.0
        %2558 = vmatpush1.msra.mxu0 %v2535
        %2559 = vmatprep.subr.mxu0 0.0
        %2560 = vmatpush1.msra.mxu0 %v2534
        %2561 = vmatprep.subr.mxu0 0.0
        %2562 = vmatpush1.msra.mxu0 %v2533
        %2563 = vmatprep.subr.mxu0 0.0
        %2564 = vmatpush1.msra.mxu0 %v2532
        %2565 = vmatprep.subr.mxu0 0.0
        %2566 = vmatpush1.msra.mxu0 %v2531
        %2567 = vmatprep.subr.mxu0 0.0
        %2568 = vmatpush1.msra.mxu0 %v2530
        %2569 = vmatprep.subr.mxu0 0.0
        %2570 = vmatpush1.msra.mxu0 %v2529
        %2571 = vmatprep.subr.mxu0 0.0
        %2572 = vmatpush1.msra.mxu0 %v2528
        %2573 = vmatprep.subr.mxu0 0.0
        %2574 = vmatpush1.msra.mxu0 %v2527
        %2575 = vmatprep.subr.mxu0 0.0
        %2576 = vmatpush2.msra.mxu0 0.0
        %2577 = vmatprep.subr.mxu0 0.0
        %2578 = vmatpush2.msra.mxu0 0.0
        %2579 = vmatprep.subr.mxu0 0.0
        %2580 = vmatpush2.msra.mxu0 0.0
        %2581 = vmatprep.subr.mxu0 0.0
        %2582 = vmatpush2.msra.mxu0 0.0
        %2583 = vmatprep.subr.mxu0 0.0
        %2584 = vmatpush2.msra.mxu0 0.0
        %2585 = vmatprep.subr.mxu0 0.0
        %2586 = vmatpush2.msra.mxu0 0.0
        %2587 = vmatprep.subr.mxu0 0.0
        %2588 = vmatpush2.msra.mxu0 0.0
        %2589 = vmatprep.subr.mxu0 0.0
        %2590 = vmatpush2.msra.mxu0 0.0
        %2591 = vmatprep.subr.mxu0 0.0
        %2592 = vmatpush2.msra.mxu0 0.0
        %2593 = vmatprep.subr.mxu0 0.0
        %2594 = vmatpush2.msra.mxu0 0.0
        %2595 = vmatprep.subr.mxu0 0.0
        %2596 = vmatpush2.msra.mxu0 0.0
        %2597 = vmatprep.subr.mxu0 0.0
        %2598 = vmatpush2.msra.mxu0 0.0
        %2599 = vmatprep.subr.mxu0 0.0
        %2600 = vmatpush2.msra.mxu0 0.0
        %2601 = vmatprep.subr.mxu0 0.0
        %2602 = vmatpush2.msra.mxu0 0.0
        %2603 = vmatprep.subr.mxu0 0.0
        %2604 = vmatpush2.msra.mxu0 0.0
        %2605 = vmatprep.subr.mxu0 0.0
        %2606 = vmatpush2.msra.mxu0 0.0
        %2607 = vmatprep.mubr.f32.mxu0 0.0
        %2608 = vmatmul.mubr.f32.gmra.mxu0 %v2518
        %v2609 = vpop.f32.mrf.mxu0
        %v2610 = vadd.f32 0.0, %v2609
        %v2611 = vpop.f32.mrf.mxu0
        %2612 = vmatprep.mubr.f32.mxu0 0.0
        %2613 = vmatmul.mubr.f32.gmra.mxu0 %v2519
        %v2614 = vpop.f32.mrf.mxu0
        %v2615 = vadd.f32 0.0, %v2614
        %v2616 = vpop.f32.mrf.mxu0
        %2617 = vmatprep.mubr.f32.mxu0 0.0
        %2618 = vmatmul.mubr.f32.gmra.mxu0 %v2520
        %v2619 = vpop.f32.mrf.mxu0
        %v2620 = vadd.f32 0.0, %v2619
        %v2621 = vpop.f32.mrf.mxu0
        %2622 = vmatprep.mubr.f32.mxu0 0.0
        %2623 = vmatmul.mubr.f32.gmra.mxu0 %v2521
        %v2624 = vpop.f32.mrf.mxu0
        %v2625 = vadd.f32 0.0, %v2624
        %v2626 = vpop.f32.mrf.mxu0
        %2627 = vmatprep.mubr.f32.mxu0 0.0
        %2628 = vmatmul.mubr.f32.gmra.mxu0 %v2522
        %v2629 = vpop.f32.mrf.mxu0
        %v2630 = vadd.f32 0.0, %v2629
        %v2631 = vpop.f32.mrf.mxu0
        %2632 = vmatprep.mubr.f32.mxu0 0.0
        %2633 = vmatmul.mubr.f32.gmra.mxu0 %v2523
        %v2634 = vpop.f32.mrf.mxu0
        %v2635 = vadd.f32 0.0, %v2634
        %v2636 = vpop.f32.mrf.mxu0
        %2637 = vmatprep.mubr.f32.mxu0 0.0
        %2638 = vmatmul.mubr.f32.gmra.mxu0 %v2524
        %v2639 = vpop.f32.mrf.mxu0
        %v2640 = vadd.f32 0.0, %v2639
        %v2641 = vpop.f32.mrf.mxu0
        %2642 = vmatprep.mubr.f32.mxu0 0.0
        %2643 = vmatmul.mubr.f32.gmra.mxu0 %v2525
        %v2644 = vpop.f32.mrf.mxu0
        %v2645 = vadd.f32 0.0, %v2644
        %v2646 = vpop.f32.mrf.mxu0
        %2647 = vdwg.mxu0
        %v2648 = vadd.f32 %v2509, %v2610
        %v2649 = vadd.f32 %v2510, %v2615
        %v2650 = vadd.f32 %v2511, %v2620
        %v2651 = vadd.f32 %v2512, %v2625
        %v2652 = vadd.f32 %v2513, %v2630
        %v2653 = vadd.f32 %v2514, %v2635
        %v2654 = vadd.f32 %v2515, %v2640
        %v2655 = vadd.f32 %v2516, %v2645
        %v2656 = vld [vmem:[%s2517 + $0x1] sm:$0xff]
        %v2657 = vld [vmem:[%s2517 + $0x11] sm:$0xff]
        %v2658 = vld [vmem:[%s2517 + $0x21] sm:$0xff]
        %v2659 = vld [vmem:[%s2517 + $0x31] sm:$0xff]
        %v2660 = vld [vmem:[%s2517 + $0x41] sm:$0xff]
        %v2661 = vld [vmem:[%s2517 + $0x51] sm:$0xff]
        %v2662 = vld [vmem:[%s2517 + $0x61] sm:$0xff]
        %v2663 = vld [vmem:[%s2517 + $0x71] sm:$0xff]
        %s2664 = scalar_lea.vmem %s1, 2048
        %v2665 = vld [vmem:[%s2664] sm:$0xff]
        %v2666 = vld [vmem:[%s2664 + $0x8] sm:$0xff]
        %v2667 = vld [vmem:[%s2664 + $0x10] sm:$0xff]
        %v2668 = vld [vmem:[%s2664 + $0x18] sm:$0xff]
        %v2669 = vld [vmem:[%s2664 + $0x20] sm:$0xff]
        %v2670 = vld [vmem:[%s2664 + $0x28] sm:$0xff]
        %v2671 = vld [vmem:[%s2664 + $0x30] sm:$0xff]
        %v2672 = vld [vmem:[%s2664 + $0x38] sm:$0xff]
        %v2673 = vld [vmem:[%s2664 + $0x40] sm:$0xff]
        %v2674 = vld [vmem:[%s2664 + $0x48] sm:$0xff]
        %v2675 = vld [vmem:[%s2664 + $0x50] sm:$0xff]
        %v2676 = vld [vmem:[%s2664 + $0x58] sm:$0xff]
        %v2677 = vld [vmem:[%s2664 + $0x60] sm:$0xff]
        %v2678 = vld [vmem:[%s2664 + $0x68] sm:$0xff]
        %v2679 = vld [vmem:[%s2664 + $0x70] sm:$0xff]
        %v2680 = vld [vmem:[%s2664 + $0x78] sm:$0xff]
        %2681 = vmatprep.subr.mxu0 0.0
        %2682 = vmatpush1.msra.mxu0 %v2680
        %2683 = vmatprep.subr.mxu0 0.0
        %2684 = vmatpush1.msra.mxu0 %v2679
        %2685 = vmatprep.subr.mxu0 0.0
        %2686 = vmatpush1.msra.mxu0 %v2678
        %2687 = vmatprep.subr.mxu0 0.0
        %2688 = vmatpush1.msra.mxu0 %v2677
        %2689 = vmatprep.subr.mxu0 0.0
        %2690 = vmatpush1.msra.mxu0 %v2676
        %2691 = vmatprep.subr.mxu0 0.0
        %2692 = vmatpush1.msra.mxu0 %v2675
        %2693 = vmatprep.subr.mxu0 0.0
        %2694 = vmatpush1.msra.mxu0 %v2674
        %2695 = vmatprep.subr.mxu0 0.0
        %2696 = vmatpush1.msra.mxu0 %v2673
        %2697 = vmatprep.subr.mxu0 0.0
        %2698 = vmatpush1.msra.mxu0 %v2672
        %2699 = vmatprep.subr.mxu0 0.0
        %2700 = vmatpush1.msra.mxu0 %v2671
        %2701 = vmatprep.subr.mxu0 0.0
        %2702 = vmatpush1.msra.mxu0 %v2670
        %2703 = vmatprep.subr.mxu0 0.0
        %2704 = vmatpush1.msra.mxu0 %v2669
        %2705 = vmatprep.subr.mxu0 0.0
        %2706 = vmatpush1.msra.mxu0 %v2668
        %2707 = vmatprep.subr.mxu0 0.0
        %2708 = vmatpush1.msra.mxu0 %v2667
        %2709 = vmatprep.subr.mxu0 0.0
        %2710 = vmatpush1.msra.mxu0 %v2666
        %2711 = vmatprep.subr.mxu0 0.0
        %2712 = vmatpush1.msra.mxu0 %v2665
        %2713 = vmatprep.subr.mxu0 0.0
        %2714 = vmatpush2.msra.mxu0 0.0
        %2715 = vmatprep.subr.mxu0 0.0
        %2716 = vmatpush2.msra.mxu0 0.0
        %2717 = vmatprep.subr.mxu0 0.0
        %2718 = vmatpush2.msra.mxu0 0.0
        %2719 = vmatprep.subr.mxu0 0.0
        %2720 = vmatpush2.msra.mxu0 0.0
        %2721 = vmatprep.subr.mxu0 0.0
        %2722 = vmatpush2.msra.mxu0 0.0
        %2723 = vmatprep.subr.mxu0 0.0
        %2724 = vmatpush2.msra.mxu0 0.0
        %2725 = vmatprep.subr.mxu0 0.0
        %2726 = vmatpush2.msra.mxu0 0.0
        %2727 = vmatprep.subr.mxu0 0.0
        %2728 = vmatpush2.msra.mxu0 0.0
        %2729 = vmatprep.subr.mxu0 0.0
        %2730 = vmatpush2.msra.mxu0 0.0
        %2731 = vmatprep.subr.mxu0 0.0
        %2732 = vmatpush2.msra.mxu0 0.0
        %2733 = vmatprep.subr.mxu0 0.0
        %2734 = vmatpush2.msra.mxu0 0.0
        %2735 = vmatprep.subr.mxu0 0.0
        %2736 = vmatpush2.msra.mxu0 0.0
        %2737 = vmatprep.subr.mxu0 0.0
        %2738 = vmatpush2.msra.mxu0 0.0
        %2739 = vmatprep.subr.mxu0 0.0
        %2740 = vmatpush2.msra.mxu0 0.0
        %2741 = vmatprep.subr.mxu0 0.0
        %2742 = vmatpush2.msra.mxu0 0.0
        %2743 = vmatprep.subr.mxu0 0.0
        %2744 = vmatpush2.msra.mxu0 0.0
        %2745 = vmatprep.mubr.f32.mxu0 0.0
        %2746 = vmatmul.mubr.f32.gmra.mxu0 %v2656
        %v2747 = vpop.f32.mrf.mxu0
        %v2748 = vadd.f32 0.0, %v2747
        %v2749 = vpop.f32.mrf.mxu0
        %2750 = vmatprep.mubr.f32.mxu0 0.0
        %2751 = vmatmul.mubr.f32.gmra.mxu0 %v2657
        %v2752 = vpop.f32.mrf.mxu0
        %v2753 = vadd.f32 0.0, %v2752
        %v2754 = vpop.f32.mrf.mxu0
        %2755 = vmatprep.mubr.f32.mxu0 0.0
        %2756 = vmatmul.mubr.f32.gmra.mxu0 %v2658
        %v2757 = vpop.f32.mrf.mxu0
        %v2758 = vadd.f32 0.0, %v2757
        %v2759 = vpop.f32.mrf.mxu0
        %2760 = vmatprep.mubr.f32.mxu0 0.0
        %2761 = vmatmul.mubr.f32.gmra.mxu0 %v2659
        %v2762 = vpop.f32.mrf.mxu0
        %v2763 = vadd.f32 0.0, %v2762
        %v2764 = vpop.f32.mrf.mxu0
        %2765 = vmatprep.mubr.f32.mxu0 0.0
        %2766 = vmatmul.mubr.f32.gmra.mxu0 %v2660
        %v2767 = vpop.f32.mrf.mxu0
        %v2768 = vadd.f32 0.0, %v2767
        %v2769 = vpop.f32.mrf.mxu0
        %2770 = vmatprep.mubr.f32.mxu0 0.0
        %2771 = vmatmul.mubr.f32.gmra.mxu0 %v2661
        %v2772 = vpop.f32.mrf.mxu0
        %v2773 = vadd.f32 0.0, %v2772
        %v2774 = vpop.f32.mrf.mxu0
        %2775 = vmatprep.mubr.f32.mxu0 0.0
        %2776 = vmatmul.mubr.f32.gmra.mxu0 %v2662
        %v2777 = vpop.f32.mrf.mxu0
        %v2778 = vadd.f32 0.0, %v2777
        %v2779 = vpop.f32.mrf.mxu0
        %2780 = vmatprep.mubr.f32.mxu0 0.0
        %2781 = vmatmul.mubr.f32.gmra.mxu0 %v2663
        %v2782 = vpop.f32.mrf.mxu0
        %v2783 = vadd.f32 0.0, %v2782
        %v2784 = vpop.f32.mrf.mxu0
        %2785 = vdwg.mxu0
        %v2786 = vadd.f32 %v2648, %v2748
        %v2787 = vadd.f32 %v2649, %v2753
        %v2788 = vadd.f32 %v2650, %v2758
        %v2789 = vadd.f32 %v2651, %v2763
        %v2790 = vadd.f32 %v2652, %v2768
        %v2791 = vadd.f32 %v2653, %v2773
        %v2792 = vadd.f32 %v2654, %v2778
        %v2793 = vadd.f32 %v2655, %v2783
        %v2794 = vld [vmem:[%s2517 + $0x2] sm:$0xff]
        %v2795 = vld [vmem:[%s2517 + $0x12] sm:$0xff]
        %v2796 = vld [vmem:[%s2517 + $0x22] sm:$0xff]
        %v2797 = vld [vmem:[%s2517 + $0x32] sm:$0xff]
        %v2798 = vld [vmem:[%s2517 + $0x42] sm:$0xff]
        %v2799 = vld [vmem:[%s2517 + $0x52] sm:$0xff]
        %v2800 = vld [vmem:[%s2517 + $0x62] sm:$0xff]
        %v2801 = vld [vmem:[%s2517 + $0x72] sm:$0xff]
        %s2802 = scalar_lea.vmem %s1, 2176
        %v2803 = vld [vmem:[%s2802] sm:$0xff]
        %v2804 = vld [vmem:[%s2802 + $0x8] sm:$0xff]
        %v2805 = vld [vmem:[%s2802 + $0x10] sm:$0xff]
        %v2806 = vld [vmem:[%s2802 + $0x18] sm:$0xff]
        %v2807 = vld [vmem:[%s2802 + $0x20] sm:$0xff]
        %v2808 = vld [vmem:[%s2802 + $0x28] sm:$0xff]
        %v2809 = vld [vmem:[%s2802 + $0x30] sm:$0xff]
        %v2810 = vld [vmem:[%s2802 + $0x38] sm:$0xff]
        %v2811 = vld [vmem:[%s2802 + $0x40] sm:$0xff]
        %v2812 = vld [vmem:[%s2802 + $0x48] sm:$0xff]
        %v2813 = vld [vmem:[%s2802 + $0x50] sm:$0xff]
        %v2814 = vld [vmem:[%s2802 + $0x58] sm:$0xff]
        %v2815 = vld [vmem:[%s2802 + $0x60] sm:$0xff]
        %v2816 = vld [vmem:[%s2802 + $0x68] sm:$0xff]
        %v2817 = vld [vmem:[%s2802 + $0x70] sm:$0xff]
        %v2818 = vld [vmem:[%s2802 + $0x78] sm:$0xff]
        %2819 = vmatprep.subr.mxu0 0.0
        %2820 = vmatpush1.msra.mxu0 %v2818
        %2821 = vmatprep.subr.mxu0 0.0
        %2822 = vmatpush1.msra.mxu0 %v2817
        %2823 = vmatprep.subr.mxu0 0.0
        %2824 = vmatpush1.msra.mxu0 %v2816
        %2825 = vmatprep.subr.mxu0 0.0
        %2826 = vmatpush1.msra.mxu0 %v2815
        %2827 = vmatprep.subr.mxu0 0.0
        %2828 = vmatpush1.msra.mxu0 %v2814
        %2829 = vmatprep.subr.mxu0 0.0
        %2830 = vmatpush1.msra.mxu0 %v2813
        %2831 = vmatprep.subr.mxu0 0.0
        %2832 = vmatpush1.msra.mxu0 %v2812
        %2833 = vmatprep.subr.mxu0 0.0
        %2834 = vmatpush1.msra.mxu0 %v2811
        %2835 = vmatprep.subr.mxu0 0.0
        %2836 = vmatpush1.msra.mxu0 %v2810
        %2837 = vmatprep.subr.mxu0 0.0
        %2838 = vmatpush1.msra.mxu0 %v2809
        %2839 = vmatprep.subr.mxu0 0.0
        %2840 = vmatpush1.msra.mxu0 %v2808
        %2841 = vmatprep.subr.mxu0 0.0
        %2842 = vmatpush1.msra.mxu0 %v2807
        %2843 = vmatprep.subr.mxu0 0.0
        %2844 = vmatpush1.msra.mxu0 %v2806
        %2845 = vmatprep.subr.mxu0 0.0
        %2846 = vmatpush1.msra.mxu0 %v2805
        %2847 = vmatprep.subr.mxu0 0.0
        %2848 = vmatpush1.msra.mxu0 %v2804
        %2849 = vmatprep.subr.mxu0 0.0
        %2850 = vmatpush1.msra.mxu0 %v2803
        %2851 = vmatprep.subr.mxu0 0.0
        %2852 = vmatpush2.msra.mxu0 0.0
        %2853 = vmatprep.subr.mxu0 0.0
        %2854 = vmatpush2.msra.mxu0 0.0
        %2855 = vmatprep.subr.mxu0 0.0
        %2856 = vmatpush2.msra.mxu0 0.0
        %2857 = vmatprep.subr.mxu0 0.0
        %2858 = vmatpush2.msra.mxu0 0.0
        %2859 = vmatprep.subr.mxu0 0.0
        %2860 = vmatpush2.msra.mxu0 0.0
        %2861 = vmatprep.subr.mxu0 0.0
        %2862 = vmatpush2.msra.mxu0 0.0
        %2863 = vmatprep.subr.mxu0 0.0
        %2864 = vmatpush2.msra.mxu0 0.0
        %2865 = vmatprep.subr.mxu0 0.0
        %2866 = vmatpush2.msra.mxu0 0.0
        %2867 = vmatprep.subr.mxu0 0.0
        %2868 = vmatpush2.msra.mxu0 0.0
        %2869 = vmatprep.subr.mxu0 0.0
        %2870 = vmatpush2.msra.mxu0 0.0
        %2871 = vmatprep.subr.mxu0 0.0
        %2872 = vmatpush2.msra.mxu0 0.0
        %2873 = vmatprep.subr.mxu0 0.0
        %2874 = vmatpush2.msra.mxu0 0.0
        %2875 = vmatprep.subr.mxu0 0.0
        %2876 = vmatpush2.msra.mxu0 0.0
        %2877 = vmatprep.subr.mxu0 0.0
        %2878 = vmatpush2.msra.mxu0 0.0
        %2879 = vmatprep.subr.mxu0 0.0
        %2880 = vmatpush2.msra.mxu0 0.0
        %2881 = vmatprep.subr.mxu0 0.0
        %2882 = vmatpush2.msra.mxu0 0.0
        %2883 = vmatprep.mubr.f32.mxu0 0.0
        %2884 = vmatmul.mubr.f32.gmra.mxu0 %v2794
        %v2885 = vpop.f32.mrf.mxu0
        %v2886 = vadd.f32 0.0, %v2885
        %v2887 = vpop.f32.mrf.mxu0
        %2888 = vmatprep.mubr.f32.mxu0 0.0
        %2889 = vmatmul.mubr.f32.gmra.mxu0 %v2795
        %v2890 = vpop.f32.mrf.mxu0
        %v2891 = vadd.f32 0.0, %v2890
        %v2892 = vpop.f32.mrf.mxu0
        %2893 = vmatprep.mubr.f32.mxu0 0.0
        %2894 = vmatmul.mubr.f32.gmra.mxu0 %v2796
        %v2895 = vpop.f32.mrf.mxu0
        %v2896 = vadd.f32 0.0, %v2895
        %v2897 = vpop.f32.mrf.mxu0
        %2898 = vmatprep.mubr.f32.mxu0 0.0
        %2899 = vmatmul.mubr.f32.gmra.mxu0 %v2797
        %v2900 = vpop.f32.mrf.mxu0
        %v2901 = vadd.f32 0.0, %v2900
        %v2902 = vpop.f32.mrf.mxu0
        %2903 = vmatprep.mubr.f32.mxu0 0.0
        %2904 = vmatmul.mubr.f32.gmra.mxu0 %v2798
        %v2905 = vpop.f32.mrf.mxu0
        %v2906 = vadd.f32 0.0, %v2905
        %v2907 = vpop.f32.mrf.mxu0
        %2908 = vmatprep.mubr.f32.mxu0 0.0
        %2909 = vmatmul.mubr.f32.gmra.mxu0 %v2799
        %v2910 = vpop.f32.mrf.mxu0
        %v2911 = vadd.f32 0.0, %v2910
        %v2912 = vpop.f32.mrf.mxu0
        %2913 = vmatprep.mubr.f32.mxu0 0.0
        %2914 = vmatmul.mubr.f32.gmra.mxu0 %v2800
        %v2915 = vpop.f32.mrf.mxu0
        %v2916 = vadd.f32 0.0, %v2915
        %v2917 = vpop.f32.mrf.mxu0
        %2918 = vmatprep.mubr.f32.mxu0 0.0
        %2919 = vmatmul.mubr.f32.gmra.mxu0 %v2801
        %v2920 = vpop.f32.mrf.mxu0
        %v2921 = vadd.f32 0.0, %v2920
        %v2922 = vpop.f32.mrf.mxu0
        %2923 = vdwg.mxu0
        %v2924 = vadd.f32 %v2786, %v2886
        %v2925 = vadd.f32 %v2787, %v2891
        %v2926 = vadd.f32 %v2788, %v2896
        %v2927 = vadd.f32 %v2789, %v2901
        %v2928 = vadd.f32 %v2790, %v2906
        %v2929 = vadd.f32 %v2791, %v2911
        %v2930 = vadd.f32 %v2792, %v2916
        %v2931 = vadd.f32 %v2793, %v2921
        %v2932 = vld [vmem:[%s9 + $0x1] sm:$0x1]
        %v2933 = vlaneseq
        %v2934 = vshrl.u32 %v2933, 7
        %v2935 = vsub.s32 0, %v2934
        %v2936 = vrot.slane %v2932, %v2935
        %v2937 = vadd.f32 %v2924, %v2936
        %v2938 = vadd.f32 %v2925, %v2936
        %v2939 = vadd.f32 %v2926, %v2936
        %v2940 = vadd.f32 %v2927, %v2936
        %v2941 = vadd.f32 %v2928, %v2936
        %v2942 = vadd.f32 %v2929, %v2936
        %v2943 = vadd.f32 %v2930, %v2936
        %v2944 = vadd.f32 %v2931, %v2936
        %v2945 = vmul.f32 %v2937, 0.5
        %v2946 = vmul.f32 %v2938, 0.5
        %v2947 = vmul.f32 %v2939, 0.5
        %v2948 = vmul.f32 %v2940, 0.5
        %v2949 = vmul.f32 %v2941, 0.5
        %v2950 = vmul.f32 %v2942, 0.5
        %v2951 = vmul.f32 %v2943, 0.5
        %v2952 = vmul.f32 %v2944, 0.5
        %v2953 = vmul.f32 %v2937, 0.70710677
        %v2954 = vmul.f32 %v2938, 0.70710677
        %v2955 = vmul.f32 %v2939, 0.70710677
        %v2956 = vmul.f32 %v2940, 0.70710677
        %v2957 = vmul.f32 %v2941, 0.70710677
        %v2958 = vmul.f32 %v2942, 0.70710677
        %v2959 = vmul.f32 %v2943, 0.70710677
        %v2960 = vmul.f32 %v2944, 0.70710677
        %v2961 = verf.f32.pop %v2953
        %v2962 = verf.f32.pop %v2954
        %v2963 = verf.f32.pop %v2955
        %v2964 = verf.f32.pop %v2956
        %v2965 = verf.f32.pop %v2957
        %v2966 = verf.f32.pop %v2958
        %v2967 = verf.f32.pop %v2959
        %v2968 = verf.f32.pop %v2960
        %v2969 = vadd.f32 %v2961, 1.0
        %v2970 = vadd.f32 %v2962, 1.0
        %v2971 = vadd.f32 %v2963, 1.0
        %v2972 = vadd.f32 %v2964, 1.0
        %v2973 = vadd.f32 %v2965, 1.0
        %v2974 = vadd.f32 %v2966, 1.0
        %v2975 = vadd.f32 %v2967, 1.0
        %v2976 = vadd.f32 %v2968, 1.0
        %v2977 = vmul.f32 %v2945, %v2969
        %v2978 = vmul.f32 %v2946, %v2970
        %v2979 = vmul.f32 %v2947, %v2971
        %v2980 = vmul.f32 %v2948, %v2972
        %v2981 = vmul.f32 %v2949, %v2973
        %v2982 = vmul.f32 %v2950, %v2974
        %v2983 = vmul.f32 %v2951, %v2975
        %v2984 = vmul.f32 %v2952, %v2976
        %2985 = vst [vmem:[%s363 + $0x1] sm:$0xff] %v2977
        %2986 = vst [vmem:[%s363 + $0x11] sm:$0xff] %v2978
        %2987 = vst [vmem:[%s363 + $0x21] sm:$0xff] %v2979
        %2988 = vst [vmem:[%s363 + $0x31] sm:$0xff] %v2980
        %2989 = vst [vmem:[%s363 + $0x41] sm:$0xff] %v2981
        %2990 = vst [vmem:[%s363 + $0x51] sm:$0xff] %v2982
        %2991 = vst [vmem:[%s363 + $0x61] sm:$0xff] %v2983
        %2992 = vst [vmem:[%s363 + $0x71] sm:$0xff] %v2984
        %v2993 = vld [vmem:[#allocation2] sm:$0xff]
        %v2994 = vld [vmem:[#allocation2 + $0x10] sm:$0xff]
        %v2995 = vld [vmem:[#allocation2 + $0x20] sm:$0xff]
        %v2996 = vld [vmem:[#allocation2 + $0x30] sm:$0xff]
        %v2997 = vld [vmem:[#allocation2 + $0x40] sm:$0xff]
        %v2998 = vld [vmem:[#allocation2 + $0x50] sm:$0xff]
        %v2999 = vld [vmem:[#allocation2 + $0x60] sm:$0xff]
        %v3000 = vld [vmem:[#allocation2 + $0x70] sm:$0xff]
        %s3001 = scalar_lea.vmem %s1, 2304
        %v3002 = vld [vmem:[%s3001] sm:$0xff]
        %v3003 = vld [vmem:[%s3001 + $0x8] sm:$0xff]
        %v3004 = vld [vmem:[%s3001 + $0x10] sm:$0xff]
        %v3005 = vld [vmem:[%s3001 + $0x18] sm:$0xff]
        %v3006 = vld [vmem:[%s3001 + $0x20] sm:$0xff]
        %v3007 = vld [vmem:[%s3001 + $0x28] sm:$0xff]
        %v3008 = vld [vmem:[%s3001 + $0x30] sm:$0xff]
        %v3009 = vld [vmem:[%s3001 + $0x38] sm:$0xff]
        %v3010 = vld [vmem:[%s3001 + $0x40] sm:$0xff]
        %v3011 = vld [vmem:[%s3001 + $0x48] sm:$0xff]
        %v3012 = vld [vmem:[%s3001 + $0x50] sm:$0xff]
        %v3013 = vld [vmem:[%s3001 + $0x58] sm:$0xff]
        %v3014 = vld [vmem:[%s3001 + $0x60] sm:$0xff]
        %v3015 = vld [vmem:[%s3001 + $0x68] sm:$0xff]
        %v3016 = vld [vmem:[%s3001 + $0x70] sm:$0xff]
        %v3017 = vld [vmem:[%s3001 + $0x78] sm:$0xff]
        %v3018 = vld [vmem:[#allocation2 + $0x1] sm:$0xff]
        %v3019 = vld [vmem:[#allocation2 + $0x11] sm:$0xff]
        %v3020 = vld [vmem:[#allocation2 + $0x21] sm:$0xff]
        %v3021 = vld [vmem:[#allocation2 + $0x31] sm:$0xff]
        %v3022 = vld [vmem:[#allocation2 + $0x41] sm:$0xff]
        %v3023 = vld [vmem:[#allocation2 + $0x51] sm:$0xff]
        %v3024 = vld [vmem:[#allocation2 + $0x61] sm:$0xff]
        %v3025 = vld [vmem:[#allocation2 + $0x71] sm:$0xff]
        %s3026 = scalar_lea.vmem %s1, 2432
        %v3027 = vld [vmem:[%s3026] sm:$0xff]
        %v3028 = vld [vmem:[%s3026 + $0x8] sm:$0xff]
        %v3029 = vld [vmem:[%s3026 + $0x10] sm:$0xff]
        %v3030 = vld [vmem:[%s3026 + $0x18] sm:$0xff]
        %v3031 = vld [vmem:[%s3026 + $0x20] sm:$0xff]
        %v3032 = vld [vmem:[%s3026 + $0x28] sm:$0xff]
        %v3033 = vld [vmem:[%s3026 + $0x30] sm:$0xff]
        %v3034 = vld [vmem:[%s3026 + $0x38] sm:$0xff]
        %v3035 = vld [vmem:[%s3026 + $0x40] sm:$0xff]
        %v3036 = vld [vmem:[%s3026 + $0x48] sm:$0xff]
        %v3037 = vld [vmem:[%s3026 + $0x50] sm:$0xff]
        %v3038 = vld [vmem:[%s3026 + $0x58] sm:$0xff]
        %v3039 = vld [vmem:[%s3026 + $0x60] sm:$0xff]
        %v3040 = vld [vmem:[%s3026 + $0x68] sm:$0xff]
        %v3041 = vld [vmem:[%s3026 + $0x70] sm:$0xff]
        %v3042 = vld [vmem:[%s3026 + $0x78] sm:$0xff]
        %3043 = vmatprep.subr.mxu0 0.0
        %3044 = vmatpush1.msra.mxu0 %v3042
        %3045 = vmatprep.subr.mxu0 0.0
        %3046 = vmatpush1.msra.mxu0 %v3041
        %3047 = vmatprep.subr.mxu0 0.0
        %3048 = vmatpush1.msra.mxu0 %v3040
        %3049 = vmatprep.subr.mxu0 0.0
        %3050 = vmatpush1.msra.mxu0 %v3039
        %3051 = vmatprep.subr.mxu0 0.0
        %3052 = vmatpush1.msra.mxu0 %v3038
        %3053 = vmatprep.subr.mxu0 0.0
        %3054 = vmatpush1.msra.mxu0 %v3037
        %3055 = vmatprep.subr.mxu0 0.0
        %3056 = vmatpush1.msra.mxu0 %v3036
        %3057 = vmatprep.subr.mxu0 0.0
        %3058 = vmatpush1.msra.mxu0 %v3035
        %3059 = vmatprep.subr.mxu0 0.0
        %3060 = vmatpush1.msra.mxu0 %v3034
        %3061 = vmatprep.subr.mxu0 0.0
        %3062 = vmatpush1.msra.mxu0 %v3033
        %3063 = vmatprep.subr.mxu0 0.0
        %3064 = vmatpush1.msra.mxu0 %v3032
        %3065 = vmatprep.subr.mxu0 0.0
        %3066 = vmatpush1.msra.mxu0 %v3031
        %3067 = vmatprep.subr.mxu0 0.0
        %3068 = vmatpush1.msra.mxu0 %v3030
        %3069 = vmatprep.subr.mxu0 0.0
        %3070 = vmatpush1.msra.mxu0 %v3029
        %3071 = vmatprep.subr.mxu0 0.0
        %3072 = vmatpush1.msra.mxu0 %v3028
        %3073 = vmatprep.subr.mxu0 0.0
        %3074 = vmatpush1.msra.mxu0 %v3027
        %3075 = vmatprep.subr.mxu0 0.0
        %3076 = vmatpush2.msra.mxu0 0.0
        %3077 = vmatprep.subr.mxu0 0.0
        %3078 = vmatpush2.msra.mxu0 0.0
        %3079 = vmatprep.subr.mxu0 0.0
        %3080 = vmatpush2.msra.mxu0 0.0
        %3081 = vmatprep.subr.mxu0 0.0
        %3082 = vmatpush2.msra.mxu0 0.0
        %3083 = vmatprep.subr.mxu0 0.0
        %3084 = vmatpush2.msra.mxu0 0.0
        %3085 = vmatprep.subr.mxu0 0.0
        %3086 = vmatpush2.msra.mxu0 0.0
        %3087 = vmatprep.subr.mxu0 0.0
        %3088 = vmatpush2.msra.mxu0 0.0
        %3089 = vmatprep.subr.mxu0 0.0
        %3090 = vmatpush2.msra.mxu0 0.0
        %3091 = vmatprep.subr.mxu0 0.0
        %3092 = vmatpush2.msra.mxu0 0.0
        %3093 = vmatprep.subr.mxu0 0.0
        %3094 = vmatpush2.msra.mxu0 0.0
        %3095 = vmatprep.subr.mxu0 0.0
        %3096 = vmatpush2.msra.mxu0 0.0
        %3097 = vmatprep.subr.mxu0 0.0
        %3098 = vmatpush2.msra.mxu0 0.0
        %3099 = vmatprep.subr.mxu0 0.0
        %3100 = vmatpush2.msra.mxu0 0.0
        %3101 = vmatprep.subr.mxu0 0.0
        %3102 = vmatpush2.msra.mxu0 0.0
        %3103 = vmatprep.subr.mxu0 0.0
        %3104 = vmatpush2.msra.mxu0 0.0
        %3105 = vmatprep.subr.mxu0 0.0
        %3106 = vmatpush2.msra.mxu0 0.0
        %3107 = vmatprep.mubr.f32.mxu0 0.0
        %3108 = vmatmul.mubr.f32.gmra.mxu0 %v3018
        %v3109 = vpop.f32.mrf.mxu0
        %v3110 = vadd.f32 0.0, %v3109
        %v3111 = vpop.f32.mrf.mxu0
        %3112 = vmatprep.mubr.f32.mxu0 0.0
        %3113 = vmatmul.mubr.f32.gmra.mxu0 %v3019
        %v3114 = vpop.f32.mrf.mxu0
        %v3115 = vadd.f32 0.0, %v3114
        %v3116 = vpop.f32.mrf.mxu0
        %3117 = vmatprep.mubr.f32.mxu0 0.0
        %3118 = vmatmul.mubr.f32.gmra.mxu0 %v3020
        %v3119 = vpop.f32.mrf.mxu0
        %v3120 = vadd.f32 0.0, %v3119
        %v3121 = vpop.f32.mrf.mxu0
        %3122 = vmatprep.mubr.f32.mxu0 0.0
        %3123 = vmatmul.mubr.f32.gmra.mxu0 %v3021
        %v3124 = vpop.f32.mrf.mxu0
        %v3125 = vadd.f32 0.0, %v3124
        %v3126 = vpop.f32.mrf.mxu0
        %3127 = vmatprep.mubr.f32.mxu0 0.0
        %3128 = vmatmul.mubr.f32.gmra.mxu0 %v3022
        %v3129 = vpop.f32.mrf.mxu0
        %v3130 = vadd.f32 0.0, %v3129
        %v3131 = vpop.f32.mrf.mxu0
        %3132 = vmatprep.mubr.f32.mxu0 0.0
        %3133 = vmatmul.mubr.f32.gmra.mxu0 %v3023
        %v3134 = vpop.f32.mrf.mxu0
        %v3135 = vadd.f32 0.0, %v3134
        %v3136 = vpop.f32.mrf.mxu0
        %3137 = vmatprep.mubr.f32.mxu0 0.0
        %3138 = vmatmul.mubr.f32.gmra.mxu0 %v3024
        %v3139 = vpop.f32.mrf.mxu0
        %v3140 = vadd.f32 0.0, %v3139
        %v3141 = vpop.f32.mrf.mxu0
        %3142 = vmatprep.mubr.f32.mxu0 0.0
        %3143 = vmatmul.mubr.f32.gmra.mxu0 %v3025
        %v3144 = vpop.f32.mrf.mxu0
        %v3145 = vadd.f32 0.0, %v3144
        %v3146 = vpop.f32.mrf.mxu0
        %3147 = vdwg.mxu0
        %3148 = vmatprep.subr.mxu0 0.0
        %3149 = vmatpush1.msra.mxu0 %v3017
        %3150 = vmatprep.subr.mxu0 0.0
        %3151 = vmatpush1.msra.mxu0 %v3016
        %3152 = vmatprep.subr.mxu0 0.0
        %3153 = vmatpush1.msra.mxu0 %v3015
        %3154 = vmatprep.subr.mxu0 0.0
        %3155 = vmatpush1.msra.mxu0 %v3014
        %3156 = vmatprep.subr.mxu0 0.0
        %3157 = vmatpush1.msra.mxu0 %v3013
        %3158 = vmatprep.subr.mxu0 0.0
        %3159 = vmatpush1.msra.mxu0 %v3012
        %3160 = vmatprep.subr.mxu0 0.0
        %3161 = vmatpush1.msra.mxu0 %v3011
        %3162 = vmatprep.subr.mxu0 0.0
        %3163 = vmatpush1.msra.mxu0 %v3010
        %3164 = vmatprep.subr.mxu0 0.0
        %3165 = vmatpush1.msra.mxu0 %v3009
        %3166 = vmatprep.subr.mxu0 0.0
        %3167 = vmatpush1.msra.mxu0 %v3008
        %3168 = vmatprep.subr.mxu0 0.0
        %3169 = vmatpush1.msra.mxu0 %v3007
        %3170 = vmatprep.subr.mxu0 0.0
        %3171 = vmatpush1.msra.mxu0 %v3006
        %3172 = vmatprep.subr.mxu0 0.0
        %3173 = vmatpush1.msra.mxu0 %v3005
        %3174 = vmatprep.subr.mxu0 0.0
        %3175 = vmatpush1.msra.mxu0 %v3004
        %3176 = vmatprep.subr.mxu0 0.0
        %3177 = vmatpush1.msra.mxu0 %v3003
        %3178 = vmatprep.subr.mxu0 0.0
        %3179 = vmatpush1.msra.mxu0 %v3002
        %3180 = vmatprep.subr.mxu0 0.0
        %3181 = vmatpush2.msra.mxu0 0.0
        %3182 = vmatprep.subr.mxu0 0.0
        %3183 = vmatpush2.msra.mxu0 0.0
        %3184 = vmatprep.subr.mxu0 0.0
        %3185 = vmatpush2.msra.mxu0 0.0
        %3186 = vmatprep.subr.mxu0 0.0
        %3187 = vmatpush2.msra.mxu0 0.0
        %3188 = vmatprep.subr.mxu0 0.0
        %3189 = vmatpush2.msra.mxu0 0.0
        %3190 = vmatprep.subr.mxu0 0.0
        %3191 = vmatpush2.msra.mxu0 0.0
        %3192 = vmatprep.subr.mxu0 0.0
        %3193 = vmatpush2.msra.mxu0 0.0
        %3194 = vmatprep.subr.mxu0 0.0
        %3195 = vmatpush2.msra.mxu0 0.0
        %3196 = vmatprep.subr.mxu0 0.0
        %3197 = vmatpush2.msra.mxu0 0.0
        %3198 = vmatprep.subr.mxu0 0.0
        %3199 = vmatpush2.msra.mxu0 0.0
        %3200 = vmatprep.subr.mxu0 0.0
        %3201 = vmatpush2.msra.mxu0 0.0
        %3202 = vmatprep.subr.mxu0 0.0
        %3203 = vmatpush2.msra.mxu0 0.0
        %3204 = vmatprep.subr.mxu0 0.0
        %3205 = vmatpush2.msra.mxu0 0.0
        %3206 = vmatprep.subr.mxu0 0.0
        %3207 = vmatpush2.msra.mxu0 0.0
        %3208 = vmatprep.subr.mxu0 0.0
        %3209 = vmatpush2.msra.mxu0 0.0
        %3210 = vmatprep.subr.mxu0 0.0
        %3211 = vmatpush2.msra.mxu0 0.0
        %3212 = vmatprep.mubr.f32.mxu0 0.0
        %3213 = vmatmul.mubr.f32.gmra.mxu0 %v2993
        %v3214 = vpop.f32.mrf.mxu0
        %v3215 = vadd.f32 %v3110, %v3214
        %v3216 = vpop.f32.mrf.mxu0
        %3217 = vmatprep.mubr.f32.mxu0 0.0
        %3218 = vmatmul.mubr.f32.gmra.mxu0 %v2994
        %v3219 = vpop.f32.mrf.mxu0
        %v3220 = vadd.f32 %v3115, %v3219
        %v3221 = vpop.f32.mrf.mxu0
        %3222 = vmatprep.mubr.f32.mxu0 0.0
        %3223 = vmatmul.mubr.f32.gmra.mxu0 %v2995
        %v3224 = vpop.f32.mrf.mxu0
        %v3225 = vadd.f32 %v3120, %v3224
        %v3226 = vpop.f32.mrf.mxu0
        %3227 = vmatprep.mubr.f32.mxu0 0.0
        %3228 = vmatmul.mubr.f32.gmra.mxu0 %v2996
        %v3229 = vpop.f32.mrf.mxu0
        %v3230 = vadd.f32 %v3125, %v3229
        %v3231 = vpop.f32.mrf.mxu0
        %3232 = vmatprep.mubr.f32.mxu0 0.0
        %3233 = vmatmul.mubr.f32.gmra.mxu0 %v2997
        %v3234 = vpop.f32.mrf.mxu0
        %v3235 = vadd.f32 %v3130, %v3234
        %v3236 = vpop.f32.mrf.mxu0
        %3237 = vmatprep.mubr.f32.mxu0 0.0
        %3238 = vmatmul.mubr.f32.gmra.mxu0 %v2998
        %v3239 = vpop.f32.mrf.mxu0
        %v3240 = vadd.f32 %v3135, %v3239
        %v3241 = vpop.f32.mrf.mxu0
        %3242 = vmatprep.mubr.f32.mxu0 0.0
        %3243 = vmatmul.mubr.f32.gmra.mxu0 %v2999
        %v3244 = vpop.f32.mrf.mxu0
        %v3245 = vadd.f32 %v3140, %v3244
        %v3246 = vpop.f32.mrf.mxu0
        %3247 = vmatprep.mubr.f32.mxu0 0.0
        %3248 = vmatmul.mubr.f32.gmra.mxu0 %v3000
        %v3249 = vpop.f32.mrf.mxu0
        %v3250 = vadd.f32 %v3145, %v3249
        %v3251 = vpop.f32.mrf.mxu0
        %3252 = vdwg.mxu0
        %v3253 = vld [vmem:[#allocation2 + $0x2] sm:$0xff]
        %v3254 = vld [vmem:[#allocation2 + $0x12] sm:$0xff]
        %v3255 = vld [vmem:[#allocation2 + $0x22] sm:$0xff]
        %v3256 = vld [vmem:[#allocation2 + $0x32] sm:$0xff]
        %v3257 = vld [vmem:[#allocation2 + $0x42] sm:$0xff]
        %v3258 = vld [vmem:[#allocation2 + $0x52] sm:$0xff]
        %v3259 = vld [vmem:[#allocation2 + $0x62] sm:$0xff]
        %v3260 = vld [vmem:[#allocation2 + $0x72] sm:$0xff]
        %s3261 = scalar_lea.vmem %s1, 2560
        %v3262 = vld [vmem:[%s3261] sm:$0xff]
        %v3263 = vld [vmem:[%s3261 + $0x8] sm:$0xff]
        %v3264 = vld [vmem:[%s3261 + $0x10] sm:$0xff]
        %v3265 = vld [vmem:[%s3261 + $0x18] sm:$0xff]
        %v3266 = vld [vmem:[%s3261 + $0x20] sm:$0xff]
        %v3267 = vld [vmem:[%s3261 + $0x28] sm:$0xff]
        %v3268 = vld [vmem:[%s3261 + $0x30] sm:$0xff]
        %v3269 = vld [vmem:[%s3261 + $0x38] sm:$0xff]
        %v3270 = vld [vmem:[%s3261 + $0x40] sm:$0xff]
        %v3271 = vld [vmem:[%s3261 + $0x48] sm:$0xff]
        %v3272 = vld [vmem:[%s3261 + $0x50] sm:$0xff]
        %v3273 = vld [vmem:[%s3261 + $0x58] sm:$0xff]
        %v3274 = vld [vmem:[%s3261 + $0x60] sm:$0xff]
        %v3275 = vld [vmem:[%s3261 + $0x68] sm:$0xff]
        %v3276 = vld [vmem:[%s3261 + $0x70] sm:$0xff]
        %v3277 = vld [vmem:[%s3261 + $0x78] sm:$0xff]
        %3278 = vmatprep.subr.mxu0 0.0
        %3279 = vmatpush1.msra.mxu0 %v3277
        %3280 = vmatprep.subr.mxu0 0.0
        %3281 = vmatpush1.msra.mxu0 %v3276
        %3282 = vmatprep.subr.mxu0 0.0
        %3283 = vmatpush1.msra.mxu0 %v3275
        %3284 = vmatprep.subr.mxu0 0.0
        %3285 = vmatpush1.msra.mxu0 %v3274
        %3286 = vmatprep.subr.mxu0 0.0
        %3287 = vmatpush1.msra.mxu0 %v3273
        %3288 = vmatprep.subr.mxu0 0.0
        %3289 = vmatpush1.msra.mxu0 %v3272
        %3290 = vmatprep.subr.mxu0 0.0
        %3291 = vmatpush1.msra.mxu0 %v3271
        %3292 = vmatprep.subr.mxu0 0.0
        %3293 = vmatpush1.msra.mxu0 %v3270
        %3294 = vmatprep.subr.mxu0 0.0
        %3295 = vmatpush1.msra.mxu0 %v3269
        %3296 = vmatprep.subr.mxu0 0.0
        %3297 = vmatpush1.msra.mxu0 %v3268
        %3298 = vmatprep.subr.mxu0 0.0
        %3299 = vmatpush1.msra.mxu0 %v3267
        %3300 = vmatprep.subr.mxu0 0.0
        %3301 = vmatpush1.msra.mxu0 %v3266
        %3302 = vmatprep.subr.mxu0 0.0
        %3303 = vmatpush1.msra.mxu0 %v3265
        %3304 = vmatprep.subr.mxu0 0.0
        %3305 = vmatpush1.msra.mxu0 %v3264
        %3306 = vmatprep.subr.mxu0 0.0
        %3307 = vmatpush1.msra.mxu0 %v3263
        %3308 = vmatprep.subr.mxu0 0.0
        %3309 = vmatpush1.msra.mxu0 %v3262
        %3310 = vmatprep.subr.mxu0 0.0
        %3311 = vmatpush2.msra.mxu0 0.0
        %3312 = vmatprep.subr.mxu0 0.0
        %3313 = vmatpush2.msra.mxu0 0.0
        %3314 = vmatprep.subr.mxu0 0.0
        %3315 = vmatpush2.msra.mxu0 0.0
        %3316 = vmatprep.subr.mxu0 0.0
        %3317 = vmatpush2.msra.mxu0 0.0
        %3318 = vmatprep.subr.mxu0 0.0
        %3319 = vmatpush2.msra.mxu0 0.0
        %3320 = vmatprep.subr.mxu0 0.0
        %3321 = vmatpush2.msra.mxu0 0.0
        %3322 = vmatprep.subr.mxu0 0.0
        %3323 = vmatpush2.msra.mxu0 0.0
        %3324 = vmatprep.subr.mxu0 0.0
        %3325 = vmatpush2.msra.mxu0 0.0
        %3326 = vmatprep.subr.mxu0 0.0
        %3327 = vmatpush2.msra.mxu0 0.0
        %3328 = vmatprep.subr.mxu0 0.0
        %3329 = vmatpush2.msra.mxu0 0.0
        %3330 = vmatprep.subr.mxu0 0.0
        %3331 = vmatpush2.msra.mxu0 0.0
        %3332 = vmatprep.subr.mxu0 0.0
        %3333 = vmatpush2.msra.mxu0 0.0
        %3334 = vmatprep.subr.mxu0 0.0
        %3335 = vmatpush2.msra.mxu0 0.0
        %3336 = vmatprep.subr.mxu0 0.0
        %3337 = vmatpush2.msra.mxu0 0.0
        %3338 = vmatprep.subr.mxu0 0.0
        %3339 = vmatpush2.msra.mxu0 0.0
        %3340 = vmatprep.subr.mxu0 0.0
        %3341 = vmatpush2.msra.mxu0 0.0
        %3342 = vmatprep.mubr.f32.mxu0 0.0
        %3343 = vmatmul.mubr.f32.gmra.mxu0 %v3253
        %v3344 = vpop.f32.mrf.mxu0
        %v3345 = vadd.f32 0.0, %v3344
        %v3346 = vpop.f32.mrf.mxu0
        %3347 = vmatprep.mubr.f32.mxu0 0.0
        %3348 = vmatmul.mubr.f32.gmra.mxu0 %v3254
        %v3349 = vpop.f32.mrf.mxu0
        %v3350 = vadd.f32 0.0, %v3349
        %v3351 = vpop.f32.mrf.mxu0
        %3352 = vmatprep.mubr.f32.mxu0 0.0
        %3353 = vmatmul.mubr.f32.gmra.mxu0 %v3255
        %v3354 = vpop.f32.mrf.mxu0
        %v3355 = vadd.f32 0.0, %v3354
        %v3356 = vpop.f32.mrf.mxu0
        %3357 = vmatprep.mubr.f32.mxu0 0.0
        %3358 = vmatmul.mubr.f32.gmra.mxu0 %v3256
        %v3359 = vpop.f32.mrf.mxu0
        %v3360 = vadd.f32 0.0, %v3359
        %v3361 = vpop.f32.mrf.mxu0
        %3362 = vmatprep.mubr.f32.mxu0 0.0
        %3363 = vmatmul.mubr.f32.gmra.mxu0 %v3257
        %v3364 = vpop.f32.mrf.mxu0
        %v3365 = vadd.f32 0.0, %v3364
        %v3366 = vpop.f32.mrf.mxu0
        %3367 = vmatprep.mubr.f32.mxu0 0.0
        %3368 = vmatmul.mubr.f32.gmra.mxu0 %v3258
        %v3369 = vpop.f32.mrf.mxu0
        %v3370 = vadd.f32 0.0, %v3369
        %v3371 = vpop.f32.mrf.mxu0
        %3372 = vmatprep.mubr.f32.mxu0 0.0
        %3373 = vmatmul.mubr.f32.gmra.mxu0 %v3259
        %v3374 = vpop.f32.mrf.mxu0
        %v3375 = vadd.f32 0.0, %v3374
        %v3376 = vpop.f32.mrf.mxu0
        %3377 = vmatprep.mubr.f32.mxu0 0.0
        %3378 = vmatmul.mubr.f32.gmra.mxu0 %v3260
        %v3379 = vpop.f32.mrf.mxu0
        %v3380 = vadd.f32 0.0, %v3379
        %v3381 = vpop.f32.mrf.mxu0
        %3382 = vdwg.mxu0
        %v3383 = vadd.f32 %v3215, %v3345
        %v3384 = vadd.f32 %v3220, %v3350
        %v3385 = vadd.f32 %v3225, %v3355
        %v3386 = vadd.f32 %v3230, %v3360
        %v3387 = vadd.f32 %v3235, %v3365
        %v3388 = vadd.f32 %v3240, %v3370
        %v3389 = vadd.f32 %v3245, %v3375
        %v3390 = vadd.f32 %v3250, %v3380
        %v3391 = vld [vmem:[%s363] sm:$0xff]
        %v3392 = vld [vmem:[%s363 + $0x10] sm:$0xff]
        %v3393 = vld [vmem:[%s363 + $0x20] sm:$0xff]
        %v3394 = vld [vmem:[%s363 + $0x30] sm:$0xff]
        %v3395 = vld [vmem:[%s363 + $0x40] sm:$0xff]
        %v3396 = vld [vmem:[%s363 + $0x50] sm:$0xff]
        %v3397 = vld [vmem:[%s363 + $0x60] sm:$0xff]
        %v3398 = vld [vmem:[%s363 + $0x70] sm:$0xff]
        %s3399 = scalar_lea.vmem %s1, 2688
        %v3400 = vld [vmem:[%s3399] sm:$0xff]
        %v3401 = vld [vmem:[%s3399 + $0x8] sm:$0xff]
        %v3402 = vld [vmem:[%s3399 + $0x10] sm:$0xff]
        %v3403 = vld [vmem:[%s3399 + $0x18] sm:$0xff]
        %v3404 = vld [vmem:[%s3399 + $0x20] sm:$0xff]
        %v3405 = vld [vmem:[%s3399 + $0x28] sm:$0xff]
        %v3406 = vld [vmem:[%s3399 + $0x30] sm:$0xff]
        %v3407 = vld [vmem:[%s3399 + $0x38] sm:$0xff]
        %v3408 = vld [vmem:[%s3399 + $0x40] sm:$0xff]
        %v3409 = vld [vmem:[%s3399 + $0x48] sm:$0xff]
        %v3410 = vld [vmem:[%s3399 + $0x50] sm:$0xff]
        %v3411 = vld [vmem:[%s3399 + $0x58] sm:$0xff]
        %v3412 = vld [vmem:[%s3399 + $0x60] sm:$0xff]
        %v3413 = vld [vmem:[%s3399 + $0x68] sm:$0xff]
        %v3414 = vld [vmem:[%s3399 + $0x70] sm:$0xff]
        %v3415 = vld [vmem:[%s3399 + $0x78] sm:$0xff]
        %3416 = vmatprep.subr.mxu0 0.0
        %3417 = vmatpush1.msra.mxu0 %v3415
        %3418 = vmatprep.subr.mxu0 0.0
        %3419 = vmatpush1.msra.mxu0 %v3414
        %3420 = vmatprep.subr.mxu0 0.0
        %3421 = vmatpush1.msra.mxu0 %v3413
        %3422 = vmatprep.subr.mxu0 0.0
        %3423 = vmatpush1.msra.mxu0 %v3412
        %3424 = vmatprep.subr.mxu0 0.0
        %3425 = vmatpush1.msra.mxu0 %v3411
        %3426 = vmatprep.subr.mxu0 0.0
        %3427 = vmatpush1.msra.mxu0 %v3410
        %3428 = vmatprep.subr.mxu0 0.0
        %3429 = vmatpush1.msra.mxu0 %v3409
        %3430 = vmatprep.subr.mxu0 0.0
        %3431 = vmatpush1.msra.mxu0 %v3408
        %3432 = vmatprep.subr.mxu0 0.0
        %3433 = vmatpush1.msra.mxu0 %v3407
        %3434 = vmatprep.subr.mxu0 0.0
        %3435 = vmatpush1.msra.mxu0 %v3406
        %3436 = vmatprep.subr.mxu0 0.0
        %3437 = vmatpush1.msra.mxu0 %v3405
        %3438 = vmatprep.subr.mxu0 0.0
        %3439 = vmatpush1.msra.mxu0 %v3404
        %3440 = vmatprep.subr.mxu0 0.0
        %3441 = vmatpush1.msra.mxu0 %v3403
        %3442 = vmatprep.subr.mxu0 0.0
        %3443 = vmatpush1.msra.mxu0 %v3402
        %3444 = vmatprep.subr.mxu0 0.0
        %3445 = vmatpush1.msra.mxu0 %v3401
        %3446 = vmatprep.subr.mxu0 0.0
        %3447 = vmatpush1.msra.mxu0 %v3400
        %3448 = vmatprep.subr.mxu0 0.0
        %3449 = vmatpush2.msra.mxu0 0.0
        %3450 = vmatprep.subr.mxu0 0.0
        %3451 = vmatpush2.msra.mxu0 0.0
        %3452 = vmatprep.subr.mxu0 0.0
        %3453 = vmatpush2.msra.mxu0 0.0
        %3454 = vmatprep.subr.mxu0 0.0
        %3455 = vmatpush2.msra.mxu0 0.0
        %3456 = vmatprep.subr.mxu0 0.0
        %3457 = vmatpush2.msra.mxu0 0.0
        %3458 = vmatprep.subr.mxu0 0.0
        %3459 = vmatpush2.msra.mxu0 0.0
        %3460 = vmatprep.subr.mxu0 0.0
        %3461 = vmatpush2.msra.mxu0 0.0
        %3462 = vmatprep.subr.mxu0 0.0
        %3463 = vmatpush2.msra.mxu0 0.0
        %3464 = vmatprep.subr.mxu0 0.0
        %3465 = vmatpush2.msra.mxu0 0.0
        %3466 = vmatprep.subr.mxu0 0.0
        %3467 = vmatpush2.msra.mxu0 0.0
        %3468 = vmatprep.subr.mxu0 0.0
        %3469 = vmatpush2.msra.mxu0 0.0
        %3470 = vmatprep.subr.mxu0 0.0
        %3471 = vmatpush2.msra.mxu0 0.0
        %3472 = vmatprep.subr.mxu0 0.0
        %3473 = vmatpush2.msra.mxu0 0.0
        %3474 = vmatprep.subr.mxu0 0.0
        %3475 = vmatpush2.msra.mxu0 0.0
        %3476 = vmatprep.subr.mxu0 0.0
        %3477 = vmatpush2.msra.mxu0 0.0
        %3478 = vmatprep.subr.mxu0 0.0
        %3479 = vmatpush2.msra.mxu0 0.0
        %3480 = vmatprep.mubr.f32.mxu0 0.0
        %3481 = vmatmul.mubr.f32.gmra.mxu0 %v3391
        %v3482 = vpop.f32.mrf.mxu0
        %v3483 = vadd.f32 0.0, %v3482
        %v3484 = vpop.f32.mrf.mxu0
        %3485 = vmatprep.mubr.f32.mxu0 0.0
        %3486 = vmatmul.mubr.f32.gmra.mxu0 %v3392
        %v3487 = vpop.f32.mrf.mxu0
        %v3488 = vadd.f32 0.0, %v3487
        %v3489 = vpop.f32.mrf.mxu0
        %3490 = vmatprep.mubr.f32.mxu0 0.0
        %3491 = vmatmul.mubr.f32.gmra.mxu0 %v3393
        %v3492 = vpop.f32.mrf.mxu0
        %v3493 = vadd.f32 0.0, %v3492
        %v3494 = vpop.f32.mrf.mxu0
        %3495 = vmatprep.mubr.f32.mxu0 0.0
        %3496 = vmatmul.mubr.f32.gmra.mxu0 %v3394
        %v3497 = vpop.f32.mrf.mxu0
        %v3498 = vadd.f32 0.0, %v3497
        %v3499 = vpop.f32.mrf.mxu0
        %3500 = vmatprep.mubr.f32.mxu0 0.0
        %3501 = vmatmul.mubr.f32.gmra.mxu0 %v3395
        %v3502 = vpop.f32.mrf.mxu0
        %v3503 = vadd.f32 0.0, %v3502
        %v3504 = vpop.f32.mrf.mxu0
        %3505 = vmatprep.mubr.f32.mxu0 0.0
        %3506 = vmatmul.mubr.f32.gmra.mxu0 %v3396
        %v3507 = vpop.f32.mrf.mxu0
        %v3508 = vadd.f32 0.0, %v3507
        %v3509 = vpop.f32.mrf.mxu0
        %3510 = vmatprep.mubr.f32.mxu0 0.0
        %3511 = vmatmul.mubr.f32.gmra.mxu0 %v3397
        %v3512 = vpop.f32.mrf.mxu0
        %v3513 = vadd.f32 0.0, %v3512
        %v3514 = vpop.f32.mrf.mxu0
        %3515 = vmatprep.mubr.f32.mxu0 0.0
        %3516 = vmatmul.mubr.f32.gmra.mxu0 %v3398
        %v3517 = vpop.f32.mrf.mxu0
        %v3518 = vadd.f32 0.0, %v3517
        %v3519 = vpop.f32.mrf.mxu0
        %3520 = vdwg.mxu0
        %v3521 = vadd.f32 %v3383, %v3483
        %v3522 = vadd.f32 %v3384, %v3488
        %v3523 = vadd.f32 %v3385, %v3493
        %v3524 = vadd.f32 %v3386, %v3498
        %v3525 = vadd.f32 %v3387, %v3503
        %v3526 = vadd.f32 %v3388, %v3508
        %v3527 = vadd.f32 %v3389, %v3513
        %v3528 = vadd.f32 %v3390, %v3518
        %v3529 = vld [vmem:[%s363 + $0x1] sm:$0xff]
        %v3530 = vld [vmem:[%s363 + $0x11] sm:$0xff]
        %v3531 = vld [vmem:[%s363 + $0x21] sm:$0xff]
        %v3532 = vld [vmem:[%s363 + $0x31] sm:$0xff]
        %v3533 = vld [vmem:[%s363 + $0x41] sm:$0xff]
        %v3534 = vld [vmem:[%s363 + $0x51] sm:$0xff]
        %v3535 = vld [vmem:[%s363 + $0x61] sm:$0xff]
        %v3536 = vld [vmem:[%s363 + $0x71] sm:$0xff]
        %s3537 = scalar_lea.vmem %s1, 2816
        %v3538 = vld [vmem:[%s3537] sm:$0xff]
        %v3539 = vld [vmem:[%s3537 + $0x8] sm:$0xff]
        %v3540 = vld [vmem:[%s3537 + $0x10] sm:$0xff]
        %v3541 = vld [vmem:[%s3537 + $0x18] sm:$0xff]
        %v3542 = vld [vmem:[%s3537 + $0x20] sm:$0xff]
        %v3543 = vld [vmem:[%s3537 + $0x28] sm:$0xff]
        %v3544 = vld [vmem:[%s3537 + $0x30] sm:$0xff]
        %v3545 = vld [vmem:[%s3537 + $0x38] sm:$0xff]
        %v3546 = vld [vmem:[%s3537 + $0x40] sm:$0xff]
        %v3547 = vld [vmem:[%s3537 + $0x48] sm:$0xff]
        %v3548 = vld [vmem:[%s3537 + $0x50] sm:$0xff]
        %v3549 = vld [vmem:[%s3537 + $0x58] sm:$0xff]
        %v3550 = vld [vmem:[%s3537 + $0x60] sm:$0xff]
        %v3551 = vld [vmem:[%s3537 + $0x68] sm:$0xff]
        %v3552 = vld [vmem:[%s3537 + $0x70] sm:$0xff]
        %v3553 = vld [vmem:[%s3537 + $0x78] sm:$0xff]
        %3554 = vmatprep.subr.mxu0 0.0
        %3555 = vmatpush1.msra.mxu0 %v3553
        %3556 = vmatprep.subr.mxu0 0.0
        %3557 = vmatpush1.msra.mxu0 %v3552
        %3558 = vmatprep.subr.mxu0 0.0
        %3559 = vmatpush1.msra.mxu0 %v3551
        %3560 = vmatprep.subr.mxu0 0.0
        %3561 = vmatpush1.msra.mxu0 %v3550
        %3562 = vmatprep.subr.mxu0 0.0
        %3563 = vmatpush1.msra.mxu0 %v3549
        %3564 = vmatprep.subr.mxu0 0.0
        %3565 = vmatpush1.msra.mxu0 %v3548
        %3566 = vmatprep.subr.mxu0 0.0
        %3567 = vmatpush1.msra.mxu0 %v3547
        %3568 = vmatprep.subr.mxu0 0.0
        %3569 = vmatpush1.msra.mxu0 %v3546
        %3570 = vmatprep.subr.mxu0 0.0
        %3571 = vmatpush1.msra.mxu0 %v3545
        %3572 = vmatprep.subr.mxu0 0.0
        %3573 = vmatpush1.msra.mxu0 %v3544
        %3574 = vmatprep.subr.mxu0 0.0
        %3575 = vmatpush1.msra.mxu0 %v3543
        %3576 = vmatprep.subr.mxu0 0.0
        %3577 = vmatpush1.msra.mxu0 %v3542
        %3578 = vmatprep.subr.mxu0 0.0
        %3579 = vmatpush1.msra.mxu0 %v3541
        %3580 = vmatprep.subr.mxu0 0.0
        %3581 = vmatpush1.msra.mxu0 %v3540
        %3582 = vmatprep.subr.mxu0 0.0
        %3583 = vmatpush1.msra.mxu0 %v3539
        %3584 = vmatprep.subr.mxu0 0.0
        %3585 = vmatpush1.msra.mxu0 %v3538
        %3586 = vmatprep.subr.mxu0 0.0
        %3587 = vmatpush2.msra.mxu0 0.0
        %3588 = vmatprep.subr.mxu0 0.0
        %3589 = vmatpush2.msra.mxu0 0.0
        %3590 = vmatprep.subr.mxu0 0.0
        %3591 = vmatpush2.msra.mxu0 0.0
        %3592 = vmatprep.subr.mxu0 0.0
        %3593 = vmatpush2.msra.mxu0 0.0
        %3594 = vmatprep.subr.mxu0 0.0
        %3595 = vmatpush2.msra.mxu0 0.0
        %3596 = vmatprep.subr.mxu0 0.0
        %3597 = vmatpush2.msra.mxu0 0.0
        %3598 = vmatprep.subr.mxu0 0.0
        %3599 = vmatpush2.msra.mxu0 0.0
        %3600 = vmatprep.subr.mxu0 0.0
        %3601 = vmatpush2.msra.mxu0 0.0
        %3602 = vmatprep.subr.mxu0 0.0
        %3603 = vmatpush2.msra.mxu0 0.0
        %3604 = vmatprep.subr.mxu0 0.0
        %3605 = vmatpush2.msra.mxu0 0.0
        %3606 = vmatprep.subr.mxu0 0.0
        %3607 = vmatpush2.msra.mxu0 0.0
        %3608 = vmatprep.subr.mxu0 0.0
        %3609 = vmatpush2.msra.mxu0 0.0
        %3610 = vmatprep.subr.mxu0 0.0
        %3611 = vmatpush2.msra.mxu0 0.0
        %3612 = vmatprep.subr.mxu0 0.0
        %3613 = vmatpush2.msra.mxu0 0.0
        %3614 = vmatprep.subr.mxu0 0.0
        %3615 = vmatpush2.msra.mxu0 0.0
        %3616 = vmatprep.subr.mxu0 0.0
        %3617 = vmatpush2.msra.mxu0 0.0
        %3618 = vmatprep.mubr.f32.mxu0 0.0
        %3619 = vmatmul.mubr.f32.gmra.mxu0 %v3529
        %v3620 = vpop.f32.mrf.mxu0
        %v3621 = vadd.f32 0.0, %v3620
        %v3622 = vpop.f32.mrf.mxu0
        %3623 = vmatprep.mubr.f32.mxu0 0.0
        %3624 = vmatmul.mubr.f32.gmra.mxu0 %v3530
        %v3625 = vpop.f32.mrf.mxu0
        %v3626 = vadd.f32 0.0, %v3625
        %v3627 = vpop.f32.mrf.mxu0
        %3628 = vmatprep.mubr.f32.mxu0 0.0
        %3629 = vmatmul.mubr.f32.gmra.mxu0 %v3531
        %v3630 = vpop.f32.mrf.mxu0
        %v3631 = vadd.f32 0.0, %v3630
        %v3632 = vpop.f32.mrf.mxu0
        %3633 = vmatprep.mubr.f32.mxu0 0.0
        %3634 = vmatmul.mubr.f32.gmra.mxu0 %v3532
        %v3635 = vpop.f32.mrf.mxu0
        %v3636 = vadd.f32 0.0, %v3635
        %v3637 = vpop.f32.mrf.mxu0
        %3638 = vmatprep.mubr.f32.mxu0 0.0
        %3639 = vmatmul.mubr.f32.gmra.mxu0 %v3533
        %v3640 = vpop.f32.mrf.mxu0
        %v3641 = vadd.f32 0.0, %v3640
        %v3642 = vpop.f32.mrf.mxu0
        %3643 = vmatprep.mubr.f32.mxu0 0.0
        %3644 = vmatmul.mubr.f32.gmra.mxu0 %v3534
        %v3645 = vpop.f32.mrf.mxu0
        %v3646 = vadd.f32 0.0, %v3645
        %v3647 = vpop.f32.mrf.mxu0
        %3648 = vmatprep.mubr.f32.mxu0 0.0
        %3649 = vmatmul.mubr.f32.gmra.mxu0 %v3535
        %v3650 = vpop.f32.mrf.mxu0
        %v3651 = vadd.f32 0.0, %v3650
        %v3652 = vpop.f32.mrf.mxu0
        %3653 = vmatprep.mubr.f32.mxu0 0.0
        %3654 = vmatmul.mubr.f32.gmra.mxu0 %v3536
        %v3655 = vpop.f32.mrf.mxu0
        %v3656 = vadd.f32 0.0, %v3655
        %v3657 = vpop.f32.mrf.mxu0
        %3658 = vdwg.mxu0
        %v3659 = vadd.f32 %v3521, %v3621
        %v3660 = vadd.f32 %v3522, %v3626
        %v3661 = vadd.f32 %v3523, %v3631
        %v3662 = vadd.f32 %v3524, %v3636
        %v3663 = vadd.f32 %v3525, %v3641
        %v3664 = vadd.f32 %v3526, %v3646
        %v3665 = vadd.f32 %v3527, %v3651
        %v3666 = vadd.f32 %v3528, %v3656
        %v3667 = vld [vmem:[%s363 + $0x2] sm:$0xff]
        %v3668 = vld [vmem:[%s363 + $0x12] sm:$0xff]
        %v3669 = vld [vmem:[%s363 + $0x22] sm:$0xff]
        %v3670 = vld [vmem:[%s363 + $0x32] sm:$0xff]
        %v3671 = vld [vmem:[%s363 + $0x42] sm:$0xff]
        %v3672 = vld [vmem:[%s363 + $0x52] sm:$0xff]
        %v3673 = vld [vmem:[%s363 + $0x62] sm:$0xff]
        %v3674 = vld [vmem:[%s363 + $0x72] sm:$0xff]
        %s3675 = scalar_lea.vmem %s1, 2944
        %v3676 = vld [vmem:[%s3675] sm:$0xff]
        %v3677 = vld [vmem:[%s3675 + $0x8] sm:$0xff]
        %v3678 = vld [vmem:[%s3675 + $0x10] sm:$0xff]
        %v3679 = vld [vmem:[%s3675 + $0x18] sm:$0xff]
        %v3680 = vld [vmem:[%s3675 + $0x20] sm:$0xff]
        %v3681 = vld [vmem:[%s3675 + $0x28] sm:$0xff]
        %v3682 = vld [vmem:[%s3675 + $0x30] sm:$0xff]
        %v3683 = vld [vmem:[%s3675 + $0x38] sm:$0xff]
        %v3684 = vld [vmem:[%s3675 + $0x40] sm:$0xff]
        %v3685 = vld [vmem:[%s3675 + $0x48] sm:$0xff]
        %v3686 = vld [vmem:[%s3675 + $0x50] sm:$0xff]
        %v3687 = vld [vmem:[%s3675 + $0x58] sm:$0xff]
        %v3688 = vld [vmem:[%s3675 + $0x60] sm:$0xff]
        %v3689 = vld [vmem:[%s3675 + $0x68] sm:$0xff]
        %v3690 = vld [vmem:[%s3675 + $0x70] sm:$0xff]
        %v3691 = vld [vmem:[%s3675 + $0x78] sm:$0xff]
        %3692 = vmatprep.subr.mxu0 0.0
        %3693 = vmatpush1.msra.mxu0 %v3691
        %3694 = vmatprep.subr.mxu0 0.0
        %3695 = vmatpush1.msra.mxu0 %v3690
        %3696 = vmatprep.subr.mxu0 0.0
        %3697 = vmatpush1.msra.mxu0 %v3689
        %3698 = vmatprep.subr.mxu0 0.0
        %3699 = vmatpush1.msra.mxu0 %v3688
        %3700 = vmatprep.subr.mxu0 0.0
        %3701 = vmatpush1.msra.mxu0 %v3687
        %3702 = vmatprep.subr.mxu0 0.0
        %3703 = vmatpush1.msra.mxu0 %v3686
        %3704 = vmatprep.subr.mxu0 0.0
        %3705 = vmatpush1.msra.mxu0 %v3685
        %3706 = vmatprep.subr.mxu0 0.0
        %3707 = vmatpush1.msra.mxu0 %v3684
        %3708 = vmatprep.subr.mxu0 0.0
        %3709 = vmatpush1.msra.mxu0 %v3683
        %3710 = vmatprep.subr.mxu0 0.0
        %3711 = vmatpush1.msra.mxu0 %v3682
        %3712 = vmatprep.subr.mxu0 0.0
        %3713 = vmatpush1.msra.mxu0 %v3681
        %3714 = vmatprep.subr.mxu0 0.0
        %3715 = vmatpush1.msra.mxu0 %v3680
        %3716 = vmatprep.subr.mxu0 0.0
        %3717 = vmatpush1.msra.mxu0 %v3679
        %3718 = vmatprep.subr.mxu0 0.0
        %3719 = vmatpush1.msra.mxu0 %v3678
        %3720 = vmatprep.subr.mxu0 0.0
        %3721 = vmatpush1.msra.mxu0 %v3677
        %3722 = vmatprep.subr.mxu0 0.0
        %3723 = vmatpush1.msra.mxu0 %v3676
        %3724 = vmatprep.subr.mxu0 0.0
        %3725 = vmatpush2.msra.mxu0 0.0
        %3726 = vmatprep.subr.mxu0 0.0
        %3727 = vmatpush2.msra.mxu0 0.0
        %3728 = vmatprep.subr.mxu0 0.0
        %3729 = vmatpush2.msra.mxu0 0.0
        %3730 = vmatprep.subr.mxu0 0.0
        %3731 = vmatpush2.msra.mxu0 0.0
        %3732 = vmatprep.subr.mxu0 0.0
        %3733 = vmatpush2.msra.mxu0 0.0
        %3734 = vmatprep.subr.mxu0 0.0
        %3735 = vmatpush2.msra.mxu0 0.0
        %3736 = vmatprep.subr.mxu0 0.0
        %3737 = vmatpush2.msra.mxu0 0.0
        %3738 = vmatprep.subr.mxu0 0.0
        %3739 = vmatpush2.msra.mxu0 0.0
        %3740 = vmatprep.subr.mxu0 0.0
        %3741 = vmatpush2.msra.mxu0 0.0
        %3742 = vmatprep.subr.mxu0 0.0
        %3743 = vmatpush2.msra.mxu0 0.0
        %3744 = vmatprep.subr.mxu0 0.0
        %3745 = vmatpush2.msra.mxu0 0.0
        %3746 = vmatprep.subr.mxu0 0.0
        %3747 = vmatpush2.msra.mxu0 0.0
        %3748 = vmatprep.subr.mxu0 0.0
        %3749 = vmatpush2.msra.mxu0 0.0
        %3750 = vmatprep.subr.mxu0 0.0
        %3751 = vmatpush2.msra.mxu0 0.0
        %3752 = vmatprep.subr.mxu0 0.0
        %3753 = vmatpush2.msra.mxu0 0.0
        %3754 = vmatprep.subr.mxu0 0.0
        %3755 = vmatpush2.msra.mxu0 0.0
        %3756 = vmatprep.mubr.f32.mxu0 0.0
        %3757 = vmatmul.mubr.f32.gmra.mxu0 %v3667
        %v3758 = vpop.f32.mrf.mxu0
        %v3759 = vadd.f32 0.0, %v3758
        %v3760 = vpop.f32.mrf.mxu0
        %3761 = vmatprep.mubr.f32.mxu0 0.0
        %3762 = vmatmul.mubr.f32.gmra.mxu0 %v3668
        %v3763 = vpop.f32.mrf.mxu0
        %v3764 = vadd.f32 0.0, %v3763
        %v3765 = vpop.f32.mrf.mxu0
        %3766 = vmatprep.mubr.f32.mxu0 0.0
        %3767 = vmatmul.mubr.f32.gmra.mxu0 %v3669
        %v3768 = vpop.f32.mrf.mxu0
        %v3769 = vadd.f32 0.0, %v3768
        %v3770 = vpop.f32.mrf.mxu0
        %3771 = vmatprep.mubr.f32.mxu0 0.0
        %3772 = vmatmul.mubr.f32.gmra.mxu0 %v3670
        %v3773 = vpop.f32.mrf.mxu0
        %v3774 = vadd.f32 0.0, %v3773
        %v3775 = vpop.f32.mrf.mxu0
        %3776 = vmatprep.mubr.f32.mxu0 0.0
        %3777 = vmatmul.mubr.f32.gmra.mxu0 %v3671
        %v3778 = vpop.f32.mrf.mxu0
        %v3779 = vadd.f32 0.0, %v3778
        %v3780 = vpop.f32.mrf.mxu0
        %3781 = vmatprep.mubr.f32.mxu0 0.0
        %3782 = vmatmul.mubr.f32.gmra.mxu0 %v3672
        %v3783 = vpop.f32.mrf.mxu0
        %v3784 = vadd.f32 0.0, %v3783
        %v3785 = vpop.f32.mrf.mxu0
        %3786 = vmatprep.mubr.f32.mxu0 0.0
        %3787 = vmatmul.mubr.f32.gmra.mxu0 %v3673
        %v3788 = vpop.f32.mrf.mxu0
        %v3789 = vadd.f32 0.0, %v3788
        %v3790 = vpop.f32.mrf.mxu0
        %3791 = vmatprep.mubr.f32.mxu0 0.0
        %3792 = vmatmul.mubr.f32.gmra.mxu0 %v3674
        %v3793 = vpop.f32.mrf.mxu0
        %v3794 = vadd.f32 0.0, %v3793
        %v3795 = vpop.f32.mrf.mxu0
        %3796 = vdwg.mxu0
        %v3797 = vadd.f32 %v3659, %v3759
        %v3798 = vadd.f32 %v3660, %v3764
        %v3799 = vadd.f32 %v3661, %v3769
        %v3800 = vadd.f32 %v3662, %v3774
        %v3801 = vadd.f32 %v3663, %v3779
        %v3802 = vadd.f32 %v3664, %v3784
        %v3803 = vadd.f32 %v3665, %v3789
        %v3804 = vadd.f32 %v3666, %v3794
        %v3805 = vld [vmem:[%s1229] sm:$0xff]
        %v3806 = vld [vmem:[%s1229 + $0x10] sm:$0xff]
        %v3807 = vld [vmem:[%s1229 + $0x20] sm:$0xff]
        %v3808 = vld [vmem:[%s1229 + $0x30] sm:$0xff]
        %v3809 = vld [vmem:[%s1229 + $0x40] sm:$0xff]
        %v3810 = vld [vmem:[%s1229 + $0x50] sm:$0xff]
        %v3811 = vld [vmem:[%s1229 + $0x60] sm:$0xff]
        %v3812 = vld [vmem:[%s1229 + $0x70] sm:$0xff]
        %s3813 = scalar_lea.vmem %s1, 3072
        %v3814 = vld [vmem:[%s3813] sm:$0xff]
        %v3815 = vld [vmem:[%s3813 + $0x8] sm:$0xff]
        %v3816 = vld [vmem:[%s3813 + $0x10] sm:$0xff]
        %v3817 = vld [vmem:[%s3813 + $0x18] sm:$0xff]
        %v3818 = vld [vmem:[%s3813 + $0x20] sm:$0xff]
        %v3819 = vld [vmem:[%s3813 + $0x28] sm:$0xff]
        %v3820 = vld [vmem:[%s3813 + $0x30] sm:$0xff]
        %v3821 = vld [vmem:[%s3813 + $0x38] sm:$0xff]
        %v3822 = vld [vmem:[%s3813 + $0x40] sm:$0xff]
        %v3823 = vld [vmem:[%s3813 + $0x48] sm:$0xff]
        %v3824 = vld [vmem:[%s3813 + $0x50] sm:$0xff]
        %v3825 = vld [vmem:[%s3813 + $0x58] sm:$0xff]
        %v3826 = vld [vmem:[%s3813 + $0x60] sm:$0xff]
        %v3827 = vld [vmem:[%s3813 + $0x68] sm:$0xff]
        %v3828 = vld [vmem:[%s3813 + $0x70] sm:$0xff]
        %v3829 = vld [vmem:[%s3813 + $0x78] sm:$0xff]
        %3830 = vmatprep.subr.mxu0 0.0
        %3831 = vmatpush1.msra.mxu0 %v3829
        %3832 = vmatprep.subr.mxu0 0.0
        %3833 = vmatpush1.msra.mxu0 %v3828
        %3834 = vmatprep.subr.mxu0 0.0
        %3835 = vmatpush1.msra.mxu0 %v3827
        %3836 = vmatprep.subr.mxu0 0.0
        %3837 = vmatpush1.msra.mxu0 %v3826
        %3838 = vmatprep.subr.mxu0 0.0
        %3839 = vmatpush1.msra.mxu0 %v3825
        %3840 = vmatprep.subr.mxu0 0.0
        %3841 = vmatpush1.msra.mxu0 %v3824
        %3842 = vmatprep.subr.mxu0 0.0
        %3843 = vmatpush1.msra.mxu0 %v3823
        %3844 = vmatprep.subr.mxu0 0.0
        %3845 = vmatpush1.msra.mxu0 %v3822
        %3846 = vmatprep.subr.mxu0 0.0
        %3847 = vmatpush1.msra.mxu0 %v3821
        %3848 = vmatprep.subr.mxu0 0.0
        %3849 = vmatpush1.msra.mxu0 %v3820
        %3850 = vmatprep.subr.mxu0 0.0
        %3851 = vmatpush1.msra.mxu0 %v3819
        %3852 = vmatprep.subr.mxu0 0.0
        %3853 = vmatpush1.msra.mxu0 %v3818
        %3854 = vmatprep.subr.mxu0 0.0
        %3855 = vmatpush1.msra.mxu0 %v3817
        %3856 = vmatprep.subr.mxu0 0.0
        %3857 = vmatpush1.msra.mxu0 %v3816
        %3858 = vmatprep.subr.mxu0 0.0
        %3859 = vmatpush1.msra.mxu0 %v3815
        %3860 = vmatprep.subr.mxu0 0.0
        %3861 = vmatpush1.msra.mxu0 %v3814
        %3862 = vmatprep.subr.mxu0 0.0
        %3863 = vmatpush2.msra.mxu0 0.0
        %3864 = vmatprep.subr.mxu0 0.0
        %3865 = vmatpush2.msra.mxu0 0.0
        %3866 = vmatprep.subr.mxu0 0.0
        %3867 = vmatpush2.msra.mxu0 0.0
        %3868 = vmatprep.subr.mxu0 0.0
        %3869 = vmatpush2.msra.mxu0 0.0
        %3870 = vmatprep.subr.mxu0 0.0
        %3871 = vmatpush2.msra.mxu0 0.0
        %3872 = vmatprep.subr.mxu0 0.0
        %3873 = vmatpush2.msra.mxu0 0.0
        %3874 = vmatprep.subr.mxu0 0.0
        %3875 = vmatpush2.msra.mxu0 0.0
        %3876 = vmatprep.subr.mxu0 0.0
        %3877 = vmatpush2.msra.mxu0 0.0
        %3878 = vmatprep.subr.mxu0 0.0
        %3879 = vmatpush2.msra.mxu0 0.0
        %3880 = vmatprep.subr.mxu0 0.0
        %3881 = vmatpush2.msra.mxu0 0.0
        %3882 = vmatprep.subr.mxu0 0.0
        %3883 = vmatpush2.msra.mxu0 0.0
        %3884 = vmatprep.subr.mxu0 0.0
        %3885 = vmatpush2.msra.mxu0 0.0
        %3886 = vmatprep.subr.mxu0 0.0
        %3887 = vmatpush2.msra.mxu0 0.0
        %3888 = vmatprep.subr.mxu0 0.0
        %3889 = vmatpush2.msra.mxu0 0.0
        %3890 = vmatprep.subr.mxu0 0.0
        %3891 = vmatpush2.msra.mxu0 0.0
        %3892 = vmatprep.subr.mxu0 0.0
        %3893 = vmatpush2.msra.mxu0 0.0
        %3894 = vmatprep.mubr.f32.mxu0 0.0
        %3895 = vmatmul.mubr.f32.gmra.mxu0 %v3805
        %v3896 = vpop.f32.mrf.mxu0
        %v3897 = vadd.f32 0.0, %v3896
        %v3898 = vpop.f32.mrf.mxu0
        %3899 = vmatprep.mubr.f32.mxu0 0.0
        %3900 = vmatmul.mubr.f32.gmra.mxu0 %v3806
        %v3901 = vpop.f32.mrf.mxu0
        %v3902 = vadd.f32 0.0, %v3901
        %v3903 = vpop.f32.mrf.mxu0
        %3904 = vmatprep.mubr.f32.mxu0 0.0
        %3905 = vmatmul.mubr.f32.gmra.mxu0 %v3807
        %v3906 = vpop.f32.mrf.mxu0
        %v3907 = vadd.f32 0.0, %v3906
        %v3908 = vpop.f32.mrf.mxu0
        %3909 = vmatprep.mubr.f32.mxu0 0.0
        %3910 = vmatmul.mubr.f32.gmra.mxu0 %v3808
        %v3911 = vpop.f32.mrf.mxu0
        %v3912 = vadd.f32 0.0, %v3911
        %v3913 = vpop.f32.mrf.mxu0
        %3914 = vmatprep.mubr.f32.mxu0 0.0
        %3915 = vmatmul.mubr.f32.gmra.mxu0 %v3809
        %v3916 = vpop.f32.mrf.mxu0
        %v3917 = vadd.f32 0.0, %v3916
        %v3918 = vpop.f32.mrf.mxu0
        %3919 = vmatprep.mubr.f32.mxu0 0.0
        %3920 = vmatmul.mubr.f32.gmra.mxu0 %v3810
        %v3921 = vpop.f32.mrf.mxu0
        %v3922 = vadd.f32 0.0, %v3921
        %v3923 = vpop.f32.mrf.mxu0
        %3924 = vmatprep.mubr.f32.mxu0 0.0
        %3925 = vmatmul.mubr.f32.gmra.mxu0 %v3811
        %v3926 = vpop.f32.mrf.mxu0
        %v3927 = vadd.f32 0.0, %v3926
        %v3928 = vpop.f32.mrf.mxu0
        %3929 = vmatprep.mubr.f32.mxu0 0.0
        %3930 = vmatmul.mubr.f32.gmra.mxu0 %v3812
        %v3931 = vpop.f32.mrf.mxu0
        %v3932 = vadd.f32 0.0, %v3931
        %v3933 = vpop.f32.mrf.mxu0
        %3934 = vdwg.mxu0
        %v3935 = vadd.f32 %v3797, %v3897
        %v3936 = vadd.f32 %v3798, %v3902
        %v3937 = vadd.f32 %v3799, %v3907
        %v3938 = vadd.f32 %v3800, %v3912
        %v3939 = vadd.f32 %v3801, %v3917
        %v3940 = vadd.f32 %v3802, %v3922
        %v3941 = vadd.f32 %v3803, %v3927
        %v3942 = vadd.f32 %v3804, %v3932
        %v3943 = vld [vmem:[%s1229 + $0x1] sm:$0xff]
        %v3944 = vld [vmem:[%s1229 + $0x11] sm:$0xff]
        %v3945 = vld [vmem:[%s1229 + $0x21] sm:$0xff]
        %v3946 = vld [vmem:[%s1229 + $0x31] sm:$0xff]
        %v3947 = vld [vmem:[%s1229 + $0x41] sm:$0xff]
        %v3948 = vld [vmem:[%s1229 + $0x51] sm:$0xff]
        %v3949 = vld [vmem:[%s1229 + $0x61] sm:$0xff]
        %v3950 = vld [vmem:[%s1229 + $0x71] sm:$0xff]
        %s3951 = scalar_lea.vmem %s1, 3200
        %v3952 = vld [vmem:[%s3951] sm:$0xff]
        %v3953 = vld [vmem:[%s3951 + $0x8] sm:$0xff]
        %v3954 = vld [vmem:[%s3951 + $0x10] sm:$0xff]
        %v3955 = vld [vmem:[%s3951 + $0x18] sm:$0xff]
        %v3956 = vld [vmem:[%s3951 + $0x20] sm:$0xff]
        %v3957 = vld [vmem:[%s3951 + $0x28] sm:$0xff]
        %v3958 = vld [vmem:[%s3951 + $0x30] sm:$0xff]
        %v3959 = vld [vmem:[%s3951 + $0x38] sm:$0xff]
        %v3960 = vld [vmem:[%s3951 + $0x40] sm:$0xff]
        %v3961 = vld [vmem:[%s3951 + $0x48] sm:$0xff]
        %v3962 = vld [vmem:[%s3951 + $0x50] sm:$0xff]
        %v3963 = vld [vmem:[%s3951 + $0x58] sm:$0xff]
        %v3964 = vld [vmem:[%s3951 + $0x60] sm:$0xff]
        %v3965 = vld [vmem:[%s3951 + $0x68] sm:$0xff]
        %v3966 = vld [vmem:[%s3951 + $0x70] sm:$0xff]
        %v3967 = vld [vmem:[%s3951 + $0x78] sm:$0xff]
        %3968 = vmatprep.subr.mxu0 0.0
        %3969 = vmatpush1.msra.mxu0 %v3967
        %3970 = vmatprep.subr.mxu0 0.0
        %3971 = vmatpush1.msra.mxu0 %v3966
        %3972 = vmatprep.subr.mxu0 0.0
        %3973 = vmatpush1.msra.mxu0 %v3965
        %3974 = vmatprep.subr.mxu0 0.0
        %3975 = vmatpush1.msra.mxu0 %v3964
        %3976 = vmatprep.subr.mxu0 0.0
        %3977 = vmatpush1.msra.mxu0 %v3963
        %3978 = vmatprep.subr.mxu0 0.0
        %3979 = vmatpush1.msra.mxu0 %v3962
        %3980 = vmatprep.subr.mxu0 0.0
        %3981 = vmatpush1.msra.mxu0 %v3961
        %3982 = vmatprep.subr.mxu0 0.0
        %3983 = vmatpush1.msra.mxu0 %v3960
        %3984 = vmatprep.subr.mxu0 0.0
        %3985 = vmatpush1.msra.mxu0 %v3959
        %3986 = vmatprep.subr.mxu0 0.0
        %3987 = vmatpush1.msra.mxu0 %v3958
        %3988 = vmatprep.subr.mxu0 0.0
        %3989 = vmatpush1.msra.mxu0 %v3957
        %3990 = vmatprep.subr.mxu0 0.0
        %3991 = vmatpush1.msra.mxu0 %v3956
        %3992 = vmatprep.subr.mxu0 0.0
        %3993 = vmatpush1.msra.mxu0 %v3955
        %3994 = vmatprep.subr.mxu0 0.0
        %3995 = vmatpush1.msra.mxu0 %v3954
        %3996 = vmatprep.subr.mxu0 0.0
        %3997 = vmatpush1.msra.mxu0 %v3953
        %3998 = vmatprep.subr.mxu0 0.0
        %3999 = vmatpush1.msra.mxu0 %v3952
        %4000 = vmatprep.subr.mxu0 0.0
        %4001 = vmatpush2.msra.mxu0 0.0
        %4002 = vmatprep.subr.mxu0 0.0
        %4003 = vmatpush2.msra.mxu0 0.0
        %4004 = vmatprep.subr.mxu0 0.0
        %4005 = vmatpush2.msra.mxu0 0.0
        %4006 = vmatprep.subr.mxu0 0.0
        %4007 = vmatpush2.msra.mxu0 0.0
        %4008 = vmatprep.subr.mxu0 0.0
        %4009 = vmatpush2.msra.mxu0 0.0
        %4010 = vmatprep.subr.mxu0 0.0
        %4011 = vmatpush2.msra.mxu0 0.0
        %4012 = vmatprep.subr.mxu0 0.0
        %4013 = vmatpush2.msra.mxu0 0.0
        %4014 = vmatprep.subr.mxu0 0.0
        %4015 = vmatpush2.msra.mxu0 0.0
        %4016 = vmatprep.subr.mxu0 0.0
        %4017 = vmatpush2.msra.mxu0 0.0
        %4018 = vmatprep.subr.mxu0 0.0
        %4019 = vmatpush2.msra.mxu0 0.0
        %4020 = vmatprep.subr.mxu0 0.0
        %4021 = vmatpush2.msra.mxu0 0.0
        %4022 = vmatprep.subr.mxu0 0.0
        %4023 = vmatpush2.msra.mxu0 0.0
        %4024 = vmatprep.subr.mxu0 0.0
        %4025 = vmatpush2.msra.mxu0 0.0
        %4026 = vmatprep.subr.mxu0 0.0
        %4027 = vmatpush2.msra.mxu0 0.0
        %4028 = vmatprep.subr.mxu0 0.0
        %4029 = vmatpush2.msra.mxu0 0.0
        %4030 = vmatprep.subr.mxu0 0.0
        %4031 = vmatpush2.msra.mxu0 0.0
        %4032 = vmatprep.mubr.f32.mxu0 0.0
        %4033 = vmatmul.mubr.f32.gmra.mxu0 %v3943
        %v4034 = vpop.f32.mrf.mxu0
        %v4035 = vadd.f32 0.0, %v4034
        %v4036 = vpop.f32.mrf.mxu0
        %4037 = vmatprep.mubr.f32.mxu0 0.0
        %4038 = vmatmul.mubr.f32.gmra.mxu0 %v3944
        %v4039 = vpop.f32.mrf.mxu0
        %v4040 = vadd.f32 0.0, %v4039
        %v4041 = vpop.f32.mrf.mxu0
        %4042 = vmatprep.mubr.f32.mxu0 0.0
        %4043 = vmatmul.mubr.f32.gmra.mxu0 %v3945
        %v4044 = vpop.f32.mrf.mxu0
        %v4045 = vadd.f32 0.0, %v4044
        %v4046 = vpop.f32.mrf.mxu0
        %4047 = vmatprep.mubr.f32.mxu0 0.0
        %4048 = vmatmul.mubr.f32.gmra.mxu0 %v3946
        %v4049 = vpop.f32.mrf.mxu0
        %v4050 = vadd.f32 0.0, %v4049
        %v4051 = vpop.f32.mrf.mxu0
        %4052 = vmatprep.mubr.f32.mxu0 0.0
        %4053 = vmatmul.mubr.f32.gmra.mxu0 %v3947
        %v4054 = vpop.f32.mrf.mxu0
        %v4055 = vadd.f32 0.0, %v4054
        %v4056 = vpop.f32.mrf.mxu0
        %4057 = vmatprep.mubr.f32.mxu0 0.0
        %4058 = vmatmul.mubr.f32.gmra.mxu0 %v3948
        %v4059 = vpop.f32.mrf.mxu0
        %v4060 = vadd.f32 0.0, %v4059
        %v4061 = vpop.f32.mrf.mxu0
        %4062 = vmatprep.mubr.f32.mxu0 0.0
        %4063 = vmatmul.mubr.f32.gmra.mxu0 %v3949
        %v4064 = vpop.f32.mrf.mxu0
        %v4065 = vadd.f32 0.0, %v4064
        %v4066 = vpop.f32.mrf.mxu0
        %4067 = vmatprep.mubr.f32.mxu0 0.0
        %4068 = vmatmul.mubr.f32.gmra.mxu0 %v3950
        %v4069 = vpop.f32.mrf.mxu0
        %v4070 = vadd.f32 0.0, %v4069
        %v4071 = vpop.f32.mrf.mxu0
        %4072 = vdwg.mxu0
        %v4073 = vadd.f32 %v3935, %v4035
        %v4074 = vadd.f32 %v3936, %v4040
        %v4075 = vadd.f32 %v3937, %v4045
        %v4076 = vadd.f32 %v3938, %v4050
        %v4077 = vadd.f32 %v3939, %v4055
        %v4078 = vadd.f32 %v3940, %v4060
        %v4079 = vadd.f32 %v3941, %v4065
        %v4080 = vadd.f32 %v3942, %v4070
        %v4081 = vld [vmem:[%s1229 + $0x2] sm:$0xff]
        %v4082 = vld [vmem:[%s1229 + $0x12] sm:$0xff]
        %v4083 = vld [vmem:[%s1229 + $0x22] sm:$0xff]
        %v4084 = vld [vmem:[%s1229 + $0x32] sm:$0xff]
        %v4085 = vld [vmem:[%s1229 + $0x42] sm:$0xff]
        %v4086 = vld [vmem:[%s1229 + $0x52] sm:$0xff]
        %v4087 = vld [vmem:[%s1229 + $0x62] sm:$0xff]
        %v4088 = vld [vmem:[%s1229 + $0x72] sm:$0xff]
        %s4089 = scalar_lea.vmem %s1, 3328
        %v4090 = vld [vmem:[%s4089] sm:$0xff]
        %v4091 = vld [vmem:[%s4089 + $0x8] sm:$0xff]
        %v4092 = vld [vmem:[%s4089 + $0x10] sm:$0xff]
        %v4093 = vld [vmem:[%s4089 + $0x18] sm:$0xff]
        %v4094 = vld [vmem:[%s4089 + $0x20] sm:$0xff]
        %v4095 = vld [vmem:[%s4089 + $0x28] sm:$0xff]
        %v4096 = vld [vmem:[%s4089 + $0x30] sm:$0xff]
        %v4097 = vld [vmem:[%s4089 + $0x38] sm:$0xff]
        %v4098 = vld [vmem:[%s4089 + $0x40] sm:$0xff]
        %v4099 = vld [vmem:[%s4089 + $0x48] sm:$0xff]
        %v4100 = vld [vmem:[%s4089 + $0x50] sm:$0xff]
        %v4101 = vld [vmem:[%s4089 + $0x58] sm:$0xff]
        %v4102 = vld [vmem:[%s4089 + $0x60] sm:$0xff]
        %v4103 = vld [vmem:[%s4089 + $0x68] sm:$0xff]
        %v4104 = vld [vmem:[%s4089 + $0x70] sm:$0xff]
        %v4105 = vld [vmem:[%s4089 + $0x78] sm:$0xff]
        %4106 = vmatprep.subr.mxu0 0.0
        %4107 = vmatpush1.msra.mxu0 %v4105
        %4108 = vmatprep.subr.mxu0 0.0
        %4109 = vmatpush1.msra.mxu0 %v4104
        %4110 = vmatprep.subr.mxu0 0.0
        %4111 = vmatpush1.msra.mxu0 %v4103
        %4112 = vmatprep.subr.mxu0 0.0
        %4113 = vmatpush1.msra.mxu0 %v4102
        %4114 = vmatprep.subr.mxu0 0.0
        %4115 = vmatpush1.msra.mxu0 %v4101
        %4116 = vmatprep.subr.mxu0 0.0
        %4117 = vmatpush1.msra.mxu0 %v4100
        %4118 = vmatprep.subr.mxu0 0.0
        %4119 = vmatpush1.msra.mxu0 %v4099
        %4120 = vmatprep.subr.mxu0 0.0
        %4121 = vmatpush1.msra.mxu0 %v4098
        %4122 = vmatprep.subr.mxu0 0.0
        %4123 = vmatpush1.msra.mxu0 %v4097
        %4124 = vmatprep.subr.mxu0 0.0
        %4125 = vmatpush1.msra.mxu0 %v4096
        %4126 = vmatprep.subr.mxu0 0.0
        %4127 = vmatpush1.msra.mxu0 %v4095
        %4128 = vmatprep.subr.mxu0 0.0
        %4129 = vmatpush1.msra.mxu0 %v4094
        %4130 = vmatprep.subr.mxu0 0.0
        %4131 = vmatpush1.msra.mxu0 %v4093
        %4132 = vmatprep.subr.mxu0 0.0
        %4133 = vmatpush1.msra.mxu0 %v4092
        %4134 = vmatprep.subr.mxu0 0.0
        %4135 = vmatpush1.msra.mxu0 %v4091
        %4136 = vmatprep.subr.mxu0 0.0
        %4137 = vmatpush1.msra.mxu0 %v4090
        %4138 = vmatprep.subr.mxu0 0.0
        %4139 = vmatpush2.msra.mxu0 0.0
        %4140 = vmatprep.subr.mxu0 0.0
        %4141 = vmatpush2.msra.mxu0 0.0
        %4142 = vmatprep.subr.mxu0 0.0
        %4143 = vmatpush2.msra.mxu0 0.0
        %4144 = vmatprep.subr.mxu0 0.0
        %4145 = vmatpush2.msra.mxu0 0.0
        %4146 = vmatprep.subr.mxu0 0.0
        %4147 = vmatpush2.msra.mxu0 0.0
        %4148 = vmatprep.subr.mxu0 0.0
        %4149 = vmatpush2.msra.mxu0 0.0
        %4150 = vmatprep.subr.mxu0 0.0
        %4151 = vmatpush2.msra.mxu0 0.0
        %4152 = vmatprep.subr.mxu0 0.0
        %4153 = vmatpush2.msra.mxu0 0.0
        %4154 = vmatprep.subr.mxu0 0.0
        %4155 = vmatpush2.msra.mxu0 0.0
        %4156 = vmatprep.subr.mxu0 0.0
        %4157 = vmatpush2.msra.mxu0 0.0
        %4158 = vmatprep.subr.mxu0 0.0
        %4159 = vmatpush2.msra.mxu0 0.0
        %4160 = vmatprep.subr.mxu0 0.0
        %4161 = vmatpush2.msra.mxu0 0.0
        %4162 = vmatprep.subr.mxu0 0.0
        %4163 = vmatpush2.msra.mxu0 0.0
        %4164 = vmatprep.subr.mxu0 0.0
        %4165 = vmatpush2.msra.mxu0 0.0
        %4166 = vmatprep.subr.mxu0 0.0
        %4167 = vmatpush2.msra.mxu0 0.0
        %4168 = vmatprep.subr.mxu0 0.0
        %4169 = vmatpush2.msra.mxu0 0.0
        %4170 = vmatprep.mubr.f32.mxu0 0.0
        %4171 = vmatmul.mubr.f32.gmra.mxu0 %v4081
        %v4172 = vpop.f32.mrf.mxu0
        %v4173 = vadd.f32 0.0, %v4172
        %v4174 = vpop.f32.mrf.mxu0
        %4175 = vmatprep.mubr.f32.mxu0 0.0
        %4176 = vmatmul.mubr.f32.gmra.mxu0 %v4082
        %v4177 = vpop.f32.mrf.mxu0
        %v4178 = vadd.f32 0.0, %v4177
        %v4179 = vpop.f32.mrf.mxu0
        %4180 = vmatprep.mubr.f32.mxu0 0.0
        %4181 = vmatmul.mubr.f32.gmra.mxu0 %v4083
        %v4182 = vpop.f32.mrf.mxu0
        %v4183 = vadd.f32 0.0, %v4182
        %v4184 = vpop.f32.mrf.mxu0
        %4185 = vmatprep.mubr.f32.mxu0 0.0
        %4186 = vmatmul.mubr.f32.gmra.mxu0 %v4084
        %v4187 = vpop.f32.mrf.mxu0
        %v4188 = vadd.f32 0.0, %v4187
        %v4189 = vpop.f32.mrf.mxu0
        %4190 = vmatprep.mubr.f32.mxu0 0.0
        %4191 = vmatmul.mubr.f32.gmra.mxu0 %v4085
        %v4192 = vpop.f32.mrf.mxu0
        %v4193 = vadd.f32 0.0, %v4192
        %v4194 = vpop.f32.mrf.mxu0
        %4195 = vmatprep.mubr.f32.mxu0 0.0
        %4196 = vmatmul.mubr.f32.gmra.mxu0 %v4086
        %v4197 = vpop.f32.mrf.mxu0
        %v4198 = vadd.f32 0.0, %v4197
        %v4199 = vpop.f32.mrf.mxu0
        %4200 = vmatprep.mubr.f32.mxu0 0.0
        %4201 = vmatmul.mubr.f32.gmra.mxu0 %v4087
        %v4202 = vpop.f32.mrf.mxu0
        %v4203 = vadd.f32 0.0, %v4202
        %v4204 = vpop.f32.mrf.mxu0
        %4205 = vmatprep.mubr.f32.mxu0 0.0
        %4206 = vmatmul.mubr.f32.gmra.mxu0 %v4088
        %v4207 = vpop.f32.mrf.mxu0
        %v4208 = vadd.f32 0.0, %v4207
        %v4209 = vpop.f32.mrf.mxu0
        %4210 = vdwg.mxu0
        %v4211 = vadd.f32 %v4073, %v4173
        %v4212 = vadd.f32 %v4074, %v4178
        %v4213 = vadd.f32 %v4075, %v4183
        %v4214 = vadd.f32 %v4076, %v4188
        %v4215 = vadd.f32 %v4077, %v4193
        %v4216 = vadd.f32 %v4078, %v4198
        %v4217 = vadd.f32 %v4079, %v4203
        %v4218 = vadd.f32 %v4080, %v4208
        %v4219 = vld [vmem:[%s9 + $0x2] sm:$0x1]
        %v4220 = vlaneseq
        %v4221 = vshrl.u32 %v4220, 7
        %v4222 = vsub.s32 0, %v4221
        %v4223 = vrot.slane %v4219, %v4222
        %v4224 = vadd.f32 %v4211, %v4223
        %v4225 = vadd.f32 %v4212, %v4223
        %v4226 = vadd.f32 %v4213, %v4223
        %v4227 = vadd.f32 %v4214, %v4223
        %v4228 = vadd.f32 %v4215, %v4223
        %v4229 = vadd.f32 %v4216, %v4223
        %v4230 = vadd.f32 %v4217, %v4223
        %v4231 = vadd.f32 %v4218, %v4223
        %v4232 = vld [vmem:[%s385 + $0x1] sm:$0xff]
        %v4233 = vld [vmem:[%s385 + $0x11] sm:$0xff]
        %v4234 = vld [vmem:[%s385 + $0x21] sm:$0xff]
        %v4235 = vld [vmem:[%s385 + $0x31] sm:$0xff]
        %v4236 = vld [vmem:[%s385 + $0x41] sm:$0xff]
        %v4237 = vld [vmem:[%s385 + $0x51] sm:$0xff]
        %v4238 = vld [vmem:[%s385 + $0x61] sm:$0xff]
        %v4239 = vld [vmem:[%s385 + $0x71] sm:$0xff]
        %v4240 = vadd.f32 %v4224, %v4232
        %v4241 = vadd.f32 %v4225, %v4233
        %v4242 = vadd.f32 %v4226, %v4234
        %v4243 = vadd.f32 %v4227, %v4235
        %v4244 = vadd.f32 %v4228, %v4236
        %v4245 = vadd.f32 %v4229, %v4237
        %v4246 = vadd.f32 %v4230, %v4238
        %v4247 = vadd.f32 %v4231, %v4239
        %4248 = vst [vmem:[%s385 + $0x1] sm:$0xff] %v4240
        %4249 = vst [vmem:[%s385 + $0x11] sm:$0xff] %v4241
        %4250 = vst [vmem:[%s385 + $0x21] sm:$0xff] %v4242
        %4251 = vst [vmem:[%s385 + $0x31] sm:$0xff] %v4243
        %4252 = vst [vmem:[%s385 + $0x41] sm:$0xff] %v4244
        %4253 = vst [vmem:[%s385 + $0x51] sm:$0xff] %v4245
        %4254 = vst [vmem:[%s385 + $0x61] sm:$0xff] %v4246
        %4255 = vst [vmem:[%s385 + $0x71] sm:$0xff] %v4247
        %v4256 = vld [vmem:[#allocation3] sm:$0xff]
        %v4257 = vld [vmem:[#allocation3 + $0x10] sm:$0xff]
        %v4258 = vld [vmem:[#allocation3 + $0x20] sm:$0xff]
        %v4259 = vld [vmem:[#allocation3 + $0x30] sm:$0xff]
        %v4260 = vld [vmem:[#allocation3 + $0x40] sm:$0xff]
        %v4261 = vld [vmem:[#allocation3 + $0x50] sm:$0xff]
        %v4262 = vld [vmem:[#allocation3 + $0x60] sm:$0xff]
        %v4263 = vld [vmem:[#allocation3 + $0x70] sm:$0xff]
        %s4264 = scalar_lea.vmem %s1, 3456
        %v4265 = vld [vmem:[%s4264] sm:$0xff]
        %v4266 = vld [vmem:[%s4264 + $0x8] sm:$0xff]
        %v4267 = vld [vmem:[%s4264 + $0x10] sm:$0xff]
        %v4268 = vld [vmem:[%s4264 + $0x18] sm:$0xff]
        %v4269 = vld [vmem:[%s4264 + $0x20] sm:$0xff]
        %v4270 = vld [vmem:[%s4264 + $0x28] sm:$0xff]
        %v4271 = vld [vmem:[%s4264 + $0x30] sm:$0xff]
        %v4272 = vld [vmem:[%s4264 + $0x38] sm:$0xff]
        %v4273 = vld [vmem:[%s4264 + $0x40] sm:$0xff]
        %v4274 = vld [vmem:[%s4264 + $0x48] sm:$0xff]
        %v4275 = vld [vmem:[%s4264 + $0x50] sm:$0xff]
        %v4276 = vld [vmem:[%s4264 + $0x58] sm:$0xff]
        %v4277 = vld [vmem:[%s4264 + $0x60] sm:$0xff]
        %v4278 = vld [vmem:[%s4264 + $0x68] sm:$0xff]
        %v4279 = vld [vmem:[%s4264 + $0x70] sm:$0xff]
        %v4280 = vld [vmem:[%s4264 + $0x78] sm:$0xff]
        %v4281 = vld [vmem:[#allocation3 + $0x1] sm:$0xff]
        %v4282 = vld [vmem:[#allocation3 + $0x11] sm:$0xff]
        %v4283 = vld [vmem:[#allocation3 + $0x21] sm:$0xff]
        %v4284 = vld [vmem:[#allocation3 + $0x31] sm:$0xff]
        %v4285 = vld [vmem:[#allocation3 + $0x41] sm:$0xff]
        %v4286 = vld [vmem:[#allocation3 + $0x51] sm:$0xff]
        %v4287 = vld [vmem:[#allocation3 + $0x61] sm:$0xff]
        %v4288 = vld [vmem:[#allocation3 + $0x71] sm:$0xff]
        %s4289 = scalar_lea.vmem %s1, 3584
        %v4290 = vld [vmem:[%s4289] sm:$0xff]
        %v4291 = vld [vmem:[%s4289 + $0x8] sm:$0xff]
        %v4292 = vld [vmem:[%s4289 + $0x10] sm:$0xff]
        %v4293 = vld [vmem:[%s4289 + $0x18] sm:$0xff]
        %v4294 = vld [vmem:[%s4289 + $0x20] sm:$0xff]
        %v4295 = vld [vmem:[%s4289 + $0x28] sm:$0xff]
        %v4296 = vld [vmem:[%s4289 + $0x30] sm:$0xff]
        %v4297 = vld [vmem:[%s4289 + $0x38] sm:$0xff]
        %v4298 = vld [vmem:[%s4289 + $0x40] sm:$0xff]
        %v4299 = vld [vmem:[%s4289 + $0x48] sm:$0xff]
        %v4300 = vld [vmem:[%s4289 + $0x50] sm:$0xff]
        %v4301 = vld [vmem:[%s4289 + $0x58] sm:$0xff]
        %v4302 = vld [vmem:[%s4289 + $0x60] sm:$0xff]
        %v4303 = vld [vmem:[%s4289 + $0x68] sm:$0xff]
        %v4304 = vld [vmem:[%s4289 + $0x70] sm:$0xff]
        %v4305 = vld [vmem:[%s4289 + $0x78] sm:$0xff]
        %4306 = vmatprep.subr.mxu0 0.0
        %4307 = vmatpush1.msra.mxu0 %v4305
        %4308 = vmatprep.subr.mxu0 0.0
        %4309 = vmatpush1.msra.mxu0 %v4304
        %4310 = vmatprep.subr.mxu0 0.0
        %4311 = vmatpush1.msra.mxu0 %v4303
        %4312 = vmatprep.subr.mxu0 0.0
        %4313 = vmatpush1.msra.mxu0 %v4302
        %4314 = vmatprep.subr.mxu0 0.0
        %4315 = vmatpush1.msra.mxu0 %v4301
        %4316 = vmatprep.subr.mxu0 0.0
        %4317 = vmatpush1.msra.mxu0 %v4300
        %4318 = vmatprep.subr.mxu0 0.0
        %4319 = vmatpush1.msra.mxu0 %v4299
        %4320 = vmatprep.subr.mxu0 0.0
        %4321 = vmatpush1.msra.mxu0 %v4298
        %4322 = vmatprep.subr.mxu0 0.0
        %4323 = vmatpush1.msra.mxu0 %v4297
        %4324 = vmatprep.subr.mxu0 0.0
        %4325 = vmatpush1.msra.mxu0 %v4296
        %4326 = vmatprep.subr.mxu0 0.0
        %4327 = vmatpush1.msra.mxu0 %v4295
        %4328 = vmatprep.subr.mxu0 0.0
        %4329 = vmatpush1.msra.mxu0 %v4294
        %4330 = vmatprep.subr.mxu0 0.0
        %4331 = vmatpush1.msra.mxu0 %v4293
        %4332 = vmatprep.subr.mxu0 0.0
        %4333 = vmatpush1.msra.mxu0 %v4292
        %4334 = vmatprep.subr.mxu0 0.0
        %4335 = vmatpush1.msra.mxu0 %v4291
        %4336 = vmatprep.subr.mxu0 0.0
        %4337 = vmatpush1.msra.mxu0 %v4290
        %4338 = vmatprep.subr.mxu0 0.0
        %4339 = vmatpush2.msra.mxu0 0.0
        %4340 = vmatprep.subr.mxu0 0.0
        %4341 = vmatpush2.msra.mxu0 0.0
        %4342 = vmatprep.subr.mxu0 0.0
        %4343 = vmatpush2.msra.mxu0 0.0
        %4344 = vmatprep.subr.mxu0 0.0
        %4345 = vmatpush2.msra.mxu0 0.0
        %4346 = vmatprep.subr.mxu0 0.0
        %4347 = vmatpush2.msra.mxu0 0.0
        %4348 = vmatprep.subr.mxu0 0.0
        %4349 = vmatpush2.msra.mxu0 0.0
        %4350 = vmatprep.subr.mxu0 0.0
        %4351 = vmatpush2.msra.mxu0 0.0
        %4352 = vmatprep.subr.mxu0 0.0
        %4353 = vmatpush2.msra.mxu0 0.0
        %4354 = vmatprep.subr.mxu0 0.0
        %4355 = vmatpush2.msra.mxu0 0.0
        %4356 = vmatprep.subr.mxu0 0.0
        %4357 = vmatpush2.msra.mxu0 0.0
        %4358 = vmatprep.subr.mxu0 0.0
        %4359 = vmatpush2.msra.mxu0 0.0
        %4360 = vmatprep.subr.mxu0 0.0
        %4361 = vmatpush2.msra.mxu0 0.0
        %4362 = vmatprep.subr.mxu0 0.0
        %4363 = vmatpush2.msra.mxu0 0.0
        %4364 = vmatprep.subr.mxu0 0.0
        %4365 = vmatpush2.msra.mxu0 0.0
        %4366 = vmatprep.subr.mxu0 0.0
        %4367 = vmatpush2.msra.mxu0 0.0
        %4368 = vmatprep.subr.mxu0 0.0
        %4369 = vmatpush2.msra.mxu0 0.0
        %4370 = vmatprep.mubr.f32.mxu0 0.0
        %4371 = vmatmul.mubr.f32.gmra.mxu0 %v4281
        %v4372 = vpop.f32.mrf.mxu0
        %v4373 = vadd.f32 0.0, %v4372
        %v4374 = vpop.f32.mrf.mxu0
        %4375 = vmatprep.mubr.f32.mxu0 0.0
        %4376 = vmatmul.mubr.f32.gmra.mxu0 %v4282
        %v4377 = vpop.f32.mrf.mxu0
        %v4378 = vadd.f32 0.0, %v4377
        %v4379 = vpop.f32.mrf.mxu0
        %4380 = vmatprep.mubr.f32.mxu0 0.0
        %4381 = vmatmul.mubr.f32.gmra.mxu0 %v4283
        %v4382 = vpop.f32.mrf.mxu0
        %v4383 = vadd.f32 0.0, %v4382
        %v4384 = vpop.f32.mrf.mxu0
        %4385 = vmatprep.mubr.f32.mxu0 0.0
        %4386 = vmatmul.mubr.f32.gmra.mxu0 %v4284
        %v4387 = vpop.f32.mrf.mxu0
        %v4388 = vadd.f32 0.0, %v4387
        %v4389 = vpop.f32.mrf.mxu0
        %4390 = vmatprep.mubr.f32.mxu0 0.0
        %4391 = vmatmul.mubr.f32.gmra.mxu0 %v4285
        %v4392 = vpop.f32.mrf.mxu0
        %v4393 = vadd.f32 0.0, %v4392
        %v4394 = vpop.f32.mrf.mxu0
        %4395 = vmatprep.mubr.f32.mxu0 0.0
        %4396 = vmatmul.mubr.f32.gmra.mxu0 %v4286
        %v4397 = vpop.f32.mrf.mxu0
        %v4398 = vadd.f32 0.0, %v4397
        %v4399 = vpop.f32.mrf.mxu0
        %4400 = vmatprep.mubr.f32.mxu0 0.0
        %4401 = vmatmul.mubr.f32.gmra.mxu0 %v4287
        %v4402 = vpop.f32.mrf.mxu0
        %v4403 = vadd.f32 0.0, %v4402
        %v4404 = vpop.f32.mrf.mxu0
        %4405 = vmatprep.mubr.f32.mxu0 0.0
        %4406 = vmatmul.mubr.f32.gmra.mxu0 %v4288
        %v4407 = vpop.f32.mrf.mxu0
        %v4408 = vadd.f32 0.0, %v4407
        %v4409 = vpop.f32.mrf.mxu0
        %4410 = vdwg.mxu0
        %4411 = vmatprep.subr.mxu0 0.0
        %4412 = vmatpush1.msra.mxu0 %v4280
        %4413 = vmatprep.subr.mxu0 0.0
        %4414 = vmatpush1.msra.mxu0 %v4279
        %4415 = vmatprep.subr.mxu0 0.0
        %4416 = vmatpush1.msra.mxu0 %v4278
        %4417 = vmatprep.subr.mxu0 0.0
        %4418 = vmatpush1.msra.mxu0 %v4277
        %4419 = vmatprep.subr.mxu0 0.0
        %4420 = vmatpush1.msra.mxu0 %v4276
        %4421 = vmatprep.subr.mxu0 0.0
        %4422 = vmatpush1.msra.mxu0 %v4275
        %4423 = vmatprep.subr.mxu0 0.0
        %4424 = vmatpush1.msra.mxu0 %v4274
        %4425 = vmatprep.subr.mxu0 0.0
        %4426 = vmatpush1.msra.mxu0 %v4273
        %4427 = vmatprep.subr.mxu0 0.0
        %4428 = vmatpush1.msra.mxu0 %v4272
        %4429 = vmatprep.subr.mxu0 0.0
        %4430 = vmatpush1.msra.mxu0 %v4271
        %4431 = vmatprep.subr.mxu0 0.0
        %4432 = vmatpush1.msra.mxu0 %v4270
        %4433 = vmatprep.subr.mxu0 0.0
        %4434 = vmatpush1.msra.mxu0 %v4269
        %4435 = vmatprep.subr.mxu0 0.0
        %4436 = vmatpush1.msra.mxu0 %v4268
        %4437 = vmatprep.subr.mxu0 0.0
        %4438 = vmatpush1.msra.mxu0 %v4267
        %4439 = vmatprep.subr.mxu0 0.0
        %4440 = vmatpush1.msra.mxu0 %v4266
        %4441 = vmatprep.subr.mxu0 0.0
        %4442 = vmatpush1.msra.mxu0 %v4265
        %4443 = vmatprep.subr.mxu0 0.0
        %4444 = vmatpush2.msra.mxu0 0.0
        %4445 = vmatprep.subr.mxu0 0.0
        %4446 = vmatpush2.msra.mxu0 0.0
        %4447 = vmatprep.subr.mxu0 0.0
        %4448 = vmatpush2.msra.mxu0 0.0
        %4449 = vmatprep.subr.mxu0 0.0
        %4450 = vmatpush2.msra.mxu0 0.0
        %4451 = vmatprep.subr.mxu0 0.0
        %4452 = vmatpush2.msra.mxu0 0.0
        %4453 = vmatprep.subr.mxu0 0.0
        %4454 = vmatpush2.msra.mxu0 0.0
        %4455 = vmatprep.subr.mxu0 0.0
        %4456 = vmatpush2.msra.mxu0 0.0
        %4457 = vmatprep.subr.mxu0 0.0
        %4458 = vmatpush2.msra.mxu0 0.0
        %4459 = vmatprep.subr.mxu0 0.0
        %4460 = vmatpush2.msra.mxu0 0.0
        %4461 = vmatprep.subr.mxu0 0.0
        %4462 = vmatpush2.msra.mxu0 0.0
        %4463 = vmatprep.subr.mxu0 0.0
        %4464 = vmatpush2.msra.mxu0 0.0
        %4465 = vmatprep.subr.mxu0 0.0
        %4466 = vmatpush2.msra.mxu0 0.0
        %4467 = vmatprep.subr.mxu0 0.0
        %4468 = vmatpush2.msra.mxu0 0.0
        %4469 = vmatprep.subr.mxu0 0.0
        %4470 = vmatpush2.msra.mxu0 0.0
        %4471 = vmatprep.subr.mxu0 0.0
        %4472 = vmatpush2.msra.mxu0 0.0
        %4473 = vmatprep.subr.mxu0 0.0
        %4474 = vmatpush2.msra.mxu0 0.0
        %4475 = vmatprep.mubr.f32.mxu0 0.0
        %4476 = vmatmul.mubr.f32.gmra.mxu0 %v4256
        %v4477 = vpop.f32.mrf.mxu0
        %v4478 = vadd.f32 %v4373, %v4477
        %v4479 = vpop.f32.mrf.mxu0
        %4480 = vmatprep.mubr.f32.mxu0 0.0
        %4481 = vmatmul.mubr.f32.gmra.mxu0 %v4257
        %v4482 = vpop.f32.mrf.mxu0
        %v4483 = vadd.f32 %v4378, %v4482
        %v4484 = vpop.f32.mrf.mxu0
        %4485 = vmatprep.mubr.f32.mxu0 0.0
        %4486 = vmatmul.mubr.f32.gmra.mxu0 %v4258
        %v4487 = vpop.f32.mrf.mxu0
        %v4488 = vadd.f32 %v4383, %v4487
        %v4489 = vpop.f32.mrf.mxu0
        %4490 = vmatprep.mubr.f32.mxu0 0.0
        %4491 = vmatmul.mubr.f32.gmra.mxu0 %v4259
        %v4492 = vpop.f32.mrf.mxu0
        %v4493 = vadd.f32 %v4388, %v4492
        %v4494 = vpop.f32.mrf.mxu0
        %4495 = vmatprep.mubr.f32.mxu0 0.0
        %4496 = vmatmul.mubr.f32.gmra.mxu0 %v4260
        %v4497 = vpop.f32.mrf.mxu0
        %v4498 = vadd.f32 %v4393, %v4497
        %v4499 = vpop.f32.mrf.mxu0
        %4500 = vmatprep.mubr.f32.mxu0 0.0
        %4501 = vmatmul.mubr.f32.gmra.mxu0 %v4261
        %v4502 = vpop.f32.mrf.mxu0
        %v4503 = vadd.f32 %v4398, %v4502
        %v4504 = vpop.f32.mrf.mxu0
        %4505 = vmatprep.mubr.f32.mxu0 0.0
        %4506 = vmatmul.mubr.f32.gmra.mxu0 %v4262
        %v4507 = vpop.f32.mrf.mxu0
        %v4508 = vadd.f32 %v4403, %v4507
        %v4509 = vpop.f32.mrf.mxu0
        %4510 = vmatprep.mubr.f32.mxu0 0.0
        %4511 = vmatmul.mubr.f32.gmra.mxu0 %v4263
        %v4512 = vpop.f32.mrf.mxu0
        %v4513 = vadd.f32 %v4408, %v4512
        %v4514 = vpop.f32.mrf.mxu0
        %4515 = vdwg.mxu0
        %v4516 = vld [vmem:[#allocation3 + $0x2] sm:$0xff]
        %v4517 = vld [vmem:[#allocation3 + $0x12] sm:$0xff]
        %v4518 = vld [vmem:[#allocation3 + $0x22] sm:$0xff]
        %v4519 = vld [vmem:[#allocation3 + $0x32] sm:$0xff]
        %v4520 = vld [vmem:[#allocation3 + $0x42] sm:$0xff]
        %v4521 = vld [vmem:[#allocation3 + $0x52] sm:$0xff]
        %v4522 = vld [vmem:[#allocation3 + $0x62] sm:$0xff]
        %v4523 = vld [vmem:[#allocation3 + $0x72] sm:$0xff]
        %s4524 = scalar_lea.vmem %s1, 3712
        %v4525 = vld [vmem:[%s4524] sm:$0xff]
        %v4526 = vld [vmem:[%s4524 + $0x8] sm:$0xff]
        %v4527 = vld [vmem:[%s4524 + $0x10] sm:$0xff]
        %v4528 = vld [vmem:[%s4524 + $0x18] sm:$0xff]
        %v4529 = vld [vmem:[%s4524 + $0x20] sm:$0xff]
        %v4530 = vld [vmem:[%s4524 + $0x28] sm:$0xff]
        %v4531 = vld [vmem:[%s4524 + $0x30] sm:$0xff]
        %v4532 = vld [vmem:[%s4524 + $0x38] sm:$0xff]
        %v4533 = vld [vmem:[%s4524 + $0x40] sm:$0xff]
        %v4534 = vld [vmem:[%s4524 + $0x48] sm:$0xff]
        %v4535 = vld [vmem:[%s4524 + $0x50] sm:$0xff]
        %v4536 = vld [vmem:[%s4524 + $0x58] sm:$0xff]
        %v4537 = vld [vmem:[%s4524 + $0x60] sm:$0xff]
        %v4538 = vld [vmem:[%s4524 + $0x68] sm:$0xff]
        %v4539 = vld [vmem:[%s4524 + $0x70] sm:$0xff]
        %v4540 = vld [vmem:[%s4524 + $0x78] sm:$0xff]
        %4541 = vmatprep.subr.mxu0 0.0
        %4542 = vmatpush1.msra.mxu0 %v4540
        %4543 = vmatprep.subr.mxu0 0.0
        %4544 = vmatpush1.msra.mxu0 %v4539
        %4545 = vmatprep.subr.mxu0 0.0
        %4546 = vmatpush1.msra.mxu0 %v4538
        %4547 = vmatprep.subr.mxu0 0.0
        %4548 = vmatpush1.msra.mxu0 %v4537
        %4549 = vmatprep.subr.mxu0 0.0
        %4550 = vmatpush1.msra.mxu0 %v4536
        %4551 = vmatprep.subr.mxu0 0.0
        %4552 = vmatpush1.msra.mxu0 %v4535
        %4553 = vmatprep.subr.mxu0 0.0
        %4554 = vmatpush1.msra.mxu0 %v4534
        %4555 = vmatprep.subr.mxu0 0.0
        %4556 = vmatpush1.msra.mxu0 %v4533
        %4557 = vmatprep.subr.mxu0 0.0
        %4558 = vmatpush1.msra.mxu0 %v4532
        %4559 = vmatprep.subr.mxu0 0.0
        %4560 = vmatpush1.msra.mxu0 %v4531
        %4561 = vmatprep.subr.mxu0 0.0
        %4562 = vmatpush1.msra.mxu0 %v4530
        %4563 = vmatprep.subr.mxu0 0.0
        %4564 = vmatpush1.msra.mxu0 %v4529
        %4565 = vmatprep.subr.mxu0 0.0
        %4566 = vmatpush1.msra.mxu0 %v4528
        %4567 = vmatprep.subr.mxu0 0.0
        %4568 = vmatpush1.msra.mxu0 %v4527
        %4569 = vmatprep.subr.mxu0 0.0
        %4570 = vmatpush1.msra.mxu0 %v4526
        %4571 = vmatprep.subr.mxu0 0.0
        %4572 = vmatpush1.msra.mxu0 %v4525
        %4573 = vmatprep.subr.mxu0 0.0
        %4574 = vmatpush2.msra.mxu0 0.0
        %4575 = vmatprep.subr.mxu0 0.0
        %4576 = vmatpush2.msra.mxu0 0.0
        %4577 = vmatprep.subr.mxu0 0.0
        %4578 = vmatpush2.msra.mxu0 0.0
        %4579 = vmatprep.subr.mxu0 0.0
        %4580 = vmatpush2.msra.mxu0 0.0
        %4581 = vmatprep.subr.mxu0 0.0
        %4582 = vmatpush2.msra.mxu0 0.0
        %4583 = vmatprep.subr.mxu0 0.0
        %4584 = vmatpush2.msra.mxu0 0.0
        %4585 = vmatprep.subr.mxu0 0.0
        %4586 = vmatpush2.msra.mxu0 0.0
        %4587 = vmatprep.subr.mxu0 0.0
        %4588 = vmatpush2.msra.mxu0 0.0
        %4589 = vmatprep.subr.mxu0 0.0
        %4590 = vmatpush2.msra.mxu0 0.0
        %4591 = vmatprep.subr.mxu0 0.0
        %4592 = vmatpush2.msra.mxu0 0.0
        %4593 = vmatprep.subr.mxu0 0.0
        %4594 = vmatpush2.msra.mxu0 0.0
        %4595 = vmatprep.subr.mxu0 0.0
        %4596 = vmatpush2.msra.mxu0 0.0
        %4597 = vmatprep.subr.mxu0 0.0
        %4598 = vmatpush2.msra.mxu0 0.0
        %4599 = vmatprep.subr.mxu0 0.0
        %4600 = vmatpush2.msra.mxu0 0.0
        %4601 = vmatprep.subr.mxu0 0.0
        %4602 = vmatpush2.msra.mxu0 0.0
        %4603 = vmatprep.subr.mxu0 0.0
        %4604 = vmatpush2.msra.mxu0 0.0
        %4605 = vmatprep.mubr.f32.mxu0 0.0
        %4606 = vmatmul.mubr.f32.gmra.mxu0 %v4516
        %v4607 = vpop.f32.mrf.mxu0
        %v4608 = vadd.f32 0.0, %v4607
        %v4609 = vpop.f32.mrf.mxu0
        %4610 = vmatprep.mubr.f32.mxu0 0.0
        %4611 = vmatmul.mubr.f32.gmra.mxu0 %v4517
        %v4612 = vpop.f32.mrf.mxu0
        %v4613 = vadd.f32 0.0, %v4612
        %v4614 = vpop.f32.mrf.mxu0
        %4615 = vmatprep.mubr.f32.mxu0 0.0
        %4616 = vmatmul.mubr.f32.gmra.mxu0 %v4518
        %v4617 = vpop.f32.mrf.mxu0
        %v4618 = vadd.f32 0.0, %v4617
        %v4619 = vpop.f32.mrf.mxu0
        %4620 = vmatprep.mubr.f32.mxu0 0.0
        %4621 = vmatmul.mubr.f32.gmra.mxu0 %v4519
        %v4622 = vpop.f32.mrf.mxu0
        %v4623 = vadd.f32 0.0, %v4622
        %v4624 = vpop.f32.mrf.mxu0
        %4625 = vmatprep.mubr.f32.mxu0 0.0
        %4626 = vmatmul.mubr.f32.gmra.mxu0 %v4520
        %v4627 = vpop.f32.mrf.mxu0
        %v4628 = vadd.f32 0.0, %v4627
        %v4629 = vpop.f32.mrf.mxu0
        %4630 = vmatprep.mubr.f32.mxu0 0.0
        %4631 = vmatmul.mubr.f32.gmra.mxu0 %v4521
        %v4632 = vpop.f32.mrf.mxu0
        %v4633 = vadd.f32 0.0, %v4632
        %v4634 = vpop.f32.mrf.mxu0
        %4635 = vmatprep.mubr.f32.mxu0 0.0
        %4636 = vmatmul.mubr.f32.gmra.mxu0 %v4522
        %v4637 = vpop.f32.mrf.mxu0
        %v4638 = vadd.f32 0.0, %v4637
        %v4639 = vpop.f32.mrf.mxu0
        %4640 = vmatprep.mubr.f32.mxu0 0.0
        %4641 = vmatmul.mubr.f32.gmra.mxu0 %v4523
        %v4642 = vpop.f32.mrf.mxu0
        %v4643 = vadd.f32 0.0, %v4642
        %v4644 = vpop.f32.mrf.mxu0
        %4645 = vdwg.mxu0
        %v4646 = vadd.f32 %v4478, %v4608
        %v4647 = vadd.f32 %v4483, %v4613
        %v4648 = vadd.f32 %v4488, %v4618
        %v4649 = vadd.f32 %v4493, %v4623
        %v4650 = vadd.f32 %v4498, %v4628
        %v4651 = vadd.f32 %v4503, %v4633
        %v4652 = vadd.f32 %v4508, %v4638
        %v4653 = vadd.f32 %v4513, %v4643
        %v4654 = vld [vmem:[%s385] sm:$0xff]
        %v4655 = vld [vmem:[%s385 + $0x10] sm:$0xff]
        %v4656 = vld [vmem:[%s385 + $0x20] sm:$0xff]
        %v4657 = vld [vmem:[%s385 + $0x30] sm:$0xff]
        %v4658 = vld [vmem:[%s385 + $0x40] sm:$0xff]
        %v4659 = vld [vmem:[%s385 + $0x50] sm:$0xff]
        %v4660 = vld [vmem:[%s385 + $0x60] sm:$0xff]
        %v4661 = vld [vmem:[%s385 + $0x70] sm:$0xff]
        %s4662 = scalar_lea.vmem %s1, 3840
        %v4663 = vld [vmem:[%s4662] sm:$0xff]
        %v4664 = vld [vmem:[%s4662 + $0x8] sm:$0xff]
        %v4665 = vld [vmem:[%s4662 + $0x10] sm:$0xff]
        %v4666 = vld [vmem:[%s4662 + $0x18] sm:$0xff]
        %v4667 = vld [vmem:[%s4662 + $0x20] sm:$0xff]
        %v4668 = vld [vmem:[%s4662 + $0x28] sm:$0xff]
        %v4669 = vld [vmem:[%s4662 + $0x30] sm:$0xff]
        %v4670 = vld [vmem:[%s4662 + $0x38] sm:$0xff]
        %v4671 = vld [vmem:[%s4662 + $0x40] sm:$0xff]
        %v4672 = vld [vmem:[%s4662 + $0x48] sm:$0xff]
        %v4673 = vld [vmem:[%s4662 + $0x50] sm:$0xff]
        %v4674 = vld [vmem:[%s4662 + $0x58] sm:$0xff]
        %v4675 = vld [vmem:[%s4662 + $0x60] sm:$0xff]
        %v4676 = vld [vmem:[%s4662 + $0x68] sm:$0xff]
        %v4677 = vld [vmem:[%s4662 + $0x70] sm:$0xff]
        %v4678 = vld [vmem:[%s4662 + $0x78] sm:$0xff]
        %4679 = vmatprep.subr.mxu0 0.0
        %4680 = vmatpush1.msra.mxu0 %v4678
        %4681 = vmatprep.subr.mxu0 0.0
        %4682 = vmatpush1.msra.mxu0 %v4677
        %4683 = vmatprep.subr.mxu0 0.0
        %4684 = vmatpush1.msra.mxu0 %v4676
        %4685 = vmatprep.subr.mxu0 0.0
        %4686 = vmatpush1.msra.mxu0 %v4675
        %4687 = vmatprep.subr.mxu0 0.0
        %4688 = vmatpush1.msra.mxu0 %v4674
        %4689 = vmatprep.subr.mxu0 0.0
        %4690 = vmatpush1.msra.mxu0 %v4673
        %4691 = vmatprep.subr.mxu0 0.0
        %4692 = vmatpush1.msra.mxu0 %v4672
        %4693 = vmatprep.subr.mxu0 0.0
        %4694 = vmatpush1.msra.mxu0 %v4671
        %4695 = vmatprep.subr.mxu0 0.0
        %4696 = vmatpush1.msra.mxu0 %v4670
        %4697 = vmatprep.subr.mxu0 0.0
        %4698 = vmatpush1.msra.mxu0 %v4669
        %4699 = vmatprep.subr.mxu0 0.0
        %4700 = vmatpush1.msra.mxu0 %v4668
        %4701 = vmatprep.subr.mxu0 0.0
        %4702 = vmatpush1.msra.mxu0 %v4667
        %4703 = vmatprep.subr.mxu0 0.0
        %4704 = vmatpush1.msra.mxu0 %v4666
        %4705 = vmatprep.subr.mxu0 0.0
        %4706 = vmatpush1.msra.mxu0 %v4665
        %4707 = vmatprep.subr.mxu0 0.0
        %4708 = vmatpush1.msra.mxu0 %v4664
        %4709 = vmatprep.subr.mxu0 0.0
        %4710 = vmatpush1.msra.mxu0 %v4663
        %4711 = vmatprep.subr.mxu0 0.0
        %4712 = vmatpush2.msra.mxu0 0.0
        %4713 = vmatprep.subr.mxu0 0.0
        %4714 = vmatpush2.msra.mxu0 0.0
        %4715 = vmatprep.subr.mxu0 0.0
        %4716 = vmatpush2.msra.mxu0 0.0
        %4717 = vmatprep.subr.mxu0 0.0
        %4718 = vmatpush2.msra.mxu0 0.0
        %4719 = vmatprep.subr.mxu0 0.0
        %4720 = vmatpush2.msra.mxu0 0.0
        %4721 = vmatprep.subr.mxu0 0.0
        %4722 = vmatpush2.msra.mxu0 0.0
        %4723 = vmatprep.subr.mxu0 0.0
        %4724 = vmatpush2.msra.mxu0 0.0
        %4725 = vmatprep.subr.mxu0 0.0
        %4726 = vmatpush2.msra.mxu0 0.0
        %4727 = vmatprep.subr.mxu0 0.0
        %4728 = vmatpush2.msra.mxu0 0.0
        %4729 = vmatprep.subr.mxu0 0.0
        %4730 = vmatpush2.msra.mxu0 0.0
        %4731 = vmatprep.subr.mxu0 0.0
        %4732 = vmatpush2.msra.mxu0 0.0
        %4733 = vmatprep.subr.mxu0 0.0
        %4734 = vmatpush2.msra.mxu0 0.0
        %4735 = vmatprep.subr.mxu0 0.0
        %4736 = vmatpush2.msra.mxu0 0.0
        %4737 = vmatprep.subr.mxu0 0.0
        %4738 = vmatpush2.msra.mxu0 0.0
        %4739 = vmatprep.subr.mxu0 0.0
        %4740 = vmatpush2.msra.mxu0 0.0
        %4741 = vmatprep.subr.mxu0 0.0
        %4742 = vmatpush2.msra.mxu0 0.0
        %4743 = vmatprep.mubr.f32.mxu0 0.0
        %4744 = vmatmul.mubr.f32.gmra.mxu0 %v4654
        %v4745 = vpop.f32.mrf.mxu0
        %v4746 = vadd.f32 0.0, %v4745
        %v4747 = vpop.f32.mrf.mxu0
        %4748 = vmatprep.mubr.f32.mxu0 0.0
        %4749 = vmatmul.mubr.f32.gmra.mxu0 %v4655
        %v4750 = vpop.f32.mrf.mxu0
        %v4751 = vadd.f32 0.0, %v4750
        %v4752 = vpop.f32.mrf.mxu0
        %4753 = vmatprep.mubr.f32.mxu0 0.0
        %4754 = vmatmul.mubr.f32.gmra.mxu0 %v4656
        %v4755 = vpop.f32.mrf.mxu0
        %v4756 = vadd.f32 0.0, %v4755
        %v4757 = vpop.f32.mrf.mxu0
        %4758 = vmatprep.mubr.f32.mxu0 0.0
        %4759 = vmatmul.mubr.f32.gmra.mxu0 %v4657
        %v4760 = vpop.f32.mrf.mxu0
        %v4761 = vadd.f32 0.0, %v4760
        %v4762 = vpop.f32.mrf.mxu0
        %4763 = vmatprep.mubr.f32.mxu0 0.0
        %4764 = vmatmul.mubr.f32.gmra.mxu0 %v4658
        %v4765 = vpop.f32.mrf.mxu0
        %v4766 = vadd.f32 0.0, %v4765
        %v4767 = vpop.f32.mrf.mxu0
        %4768 = vmatprep.mubr.f32.mxu0 0.0
        %4769 = vmatmul.mubr.f32.gmra.mxu0 %v4659
        %v4770 = vpop.f32.mrf.mxu0
        %v4771 = vadd.f32 0.0, %v4770
        %v4772 = vpop.f32.mrf.mxu0
        %4773 = vmatprep.mubr.f32.mxu0 0.0
        %4774 = vmatmul.mubr.f32.gmra.mxu0 %v4660
        %v4775 = vpop.f32.mrf.mxu0
        %v4776 = vadd.f32 0.0, %v4775
        %v4777 = vpop.f32.mrf.mxu0
        %4778 = vmatprep.mubr.f32.mxu0 0.0
        %4779 = vmatmul.mubr.f32.gmra.mxu0 %v4661
        %v4780 = vpop.f32.mrf.mxu0
        %v4781 = vadd.f32 0.0, %v4780
        %v4782 = vpop.f32.mrf.mxu0
        %4783 = vdwg.mxu0
        %v4784 = vadd.f32 %v4646, %v4746
        %v4785 = vadd.f32 %v4647, %v4751
        %v4786 = vadd.f32 %v4648, %v4756
        %v4787 = vadd.f32 %v4649, %v4761
        %v4788 = vadd.f32 %v4650, %v4766
        %v4789 = vadd.f32 %v4651, %v4771
        %v4790 = vadd.f32 %v4652, %v4776
        %v4791 = vadd.f32 %v4653, %v4781
        %v4792 = vld [vmem:[%s385 + $0x1] sm:$0xff]
        %v4793 = vld [vmem:[%s385 + $0x11] sm:$0xff]
        %v4794 = vld [vmem:[%s385 + $0x21] sm:$0xff]
        %v4795 = vld [vmem:[%s385 + $0x31] sm:$0xff]
        %v4796 = vld [vmem:[%s385 + $0x41] sm:$0xff]
        %v4797 = vld [vmem:[%s385 + $0x51] sm:$0xff]
        %v4798 = vld [vmem:[%s385 + $0x61] sm:$0xff]
        %v4799 = vld [vmem:[%s385 + $0x71] sm:$0xff]
        %s4800 = scalar_lea.vmem %s1, 3968
        %v4801 = vld [vmem:[%s4800] sm:$0xff]
        %v4802 = vld [vmem:[%s4800 + $0x8] sm:$0xff]
        %v4803 = vld [vmem:[%s4800 + $0x10] sm:$0xff]
        %v4804 = vld [vmem:[%s4800 + $0x18] sm:$0xff]
        %v4805 = vld [vmem:[%s4800 + $0x20] sm:$0xff]
        %v4806 = vld [vmem:[%s4800 + $0x28] sm:$0xff]
        %v4807 = vld [vmem:[%s4800 + $0x30] sm:$0xff]
        %v4808 = vld [vmem:[%s4800 + $0x38] sm:$0xff]
        %v4809 = vld [vmem:[%s4800 + $0x40] sm:$0xff]
        %v4810 = vld [vmem:[%s4800 + $0x48] sm:$0xff]
        %v4811 = vld [vmem:[%s4800 + $0x50] sm:$0xff]
        %v4812 = vld [vmem:[%s4800 + $0x58] sm:$0xff]
        %v4813 = vld [vmem:[%s4800 + $0x60] sm:$0xff]
        %v4814 = vld [vmem:[%s4800 + $0x68] sm:$0xff]
        %v4815 = vld [vmem:[%s4800 + $0x70] sm:$0xff]
        %v4816 = vld [vmem:[%s4800 + $0x78] sm:$0xff]
        %4817 = vmatprep.subr.mxu0 0.0
        %4818 = vmatpush1.msra.mxu0 %v4816
        %4819 = vmatprep.subr.mxu0 0.0
        %4820 = vmatpush1.msra.mxu0 %v4815
        %4821 = vmatprep.subr.mxu0 0.0
        %4822 = vmatpush1.msra.mxu0 %v4814
        %4823 = vmatprep.subr.mxu0 0.0
        %4824 = vmatpush1.msra.mxu0 %v4813
        %4825 = vmatprep.subr.mxu0 0.0
        %4826 = vmatpush1.msra.mxu0 %v4812
        %4827 = vmatprep.subr.mxu0 0.0
        %4828 = vmatpush1.msra.mxu0 %v4811
        %4829 = vmatprep.subr.mxu0 0.0
        %4830 = vmatpush1.msra.mxu0 %v4810
        %4831 = vmatprep.subr.mxu0 0.0
        %4832 = vmatpush1.msra.mxu0 %v4809
        %4833 = vmatprep.subr.mxu0 0.0
        %4834 = vmatpush1.msra.mxu0 %v4808
        %4835 = vmatprep.subr.mxu0 0.0
        %4836 = vmatpush1.msra.mxu0 %v4807
        %4837 = vmatprep.subr.mxu0 0.0
        %4838 = vmatpush1.msra.mxu0 %v4806
        %4839 = vmatprep.subr.mxu0 0.0
        %4840 = vmatpush1.msra.mxu0 %v4805
        %4841 = vmatprep.subr.mxu0 0.0
        %4842 = vmatpush1.msra.mxu0 %v4804
        %4843 = vmatprep.subr.mxu0 0.0
        %4844 = vmatpush1.msra.mxu0 %v4803
        %4845 = vmatprep.subr.mxu0 0.0
        %4846 = vmatpush1.msra.mxu0 %v4802
        %4847 = vmatprep.subr.mxu0 0.0
        %4848 = vmatpush1.msra.mxu0 %v4801
        %4849 = vmatprep.subr.mxu0 0.0
        %4850 = vmatpush2.msra.mxu0 0.0
        %4851 = vmatprep.subr.mxu0 0.0
        %4852 = vmatpush2.msra.mxu0 0.0
        %4853 = vmatprep.subr.mxu0 0.0
        %4854 = vmatpush2.msra.mxu0 0.0
        %4855 = vmatprep.subr.mxu0 0.0
        %4856 = vmatpush2.msra.mxu0 0.0
        %4857 = vmatprep.subr.mxu0 0.0
        %4858 = vmatpush2.msra.mxu0 0.0
        %4859 = vmatprep.subr.mxu0 0.0
        %4860 = vmatpush2.msra.mxu0 0.0
        %4861 = vmatprep.subr.mxu0 0.0
        %4862 = vmatpush2.msra.mxu0 0.0
        %4863 = vmatprep.subr.mxu0 0.0
        %4864 = vmatpush2.msra.mxu0 0.0
        %4865 = vmatprep.subr.mxu0 0.0
        %4866 = vmatpush2.msra.mxu0 0.0
        %4867 = vmatprep.subr.mxu0 0.0
        %4868 = vmatpush2.msra.mxu0 0.0
        %4869 = vmatprep.subr.mxu0 0.0
        %4870 = vmatpush2.msra.mxu0 0.0
        %4871 = vmatprep.subr.mxu0 0.0
        %4872 = vmatpush2.msra.mxu0 0.0
        %4873 = vmatprep.subr.mxu0 0.0
        %4874 = vmatpush2.msra.mxu0 0.0
        %4875 = vmatprep.subr.mxu0 0.0
        %4876 = vmatpush2.msra.mxu0 0.0
        %4877 = vmatprep.subr.mxu0 0.0
        %4878 = vmatpush2.msra.mxu0 0.0
        %4879 = vmatprep.subr.mxu0 0.0
        %4880 = vmatpush2.msra.mxu0 0.0
        %4881 = vmatprep.mubr.f32.mxu0 0.0
        %4882 = vmatmul.mubr.f32.gmra.mxu0 %v4792
        %v4883 = vpop.f32.mrf.mxu0
        %v4884 = vadd.f32 0.0, %v4883
        %v4885 = vpop.f32.mrf.mxu0
        %4886 = vmatprep.mubr.f32.mxu0 0.0
        %4887 = vmatmul.mubr.f32.gmra.mxu0 %v4793
        %v4888 = vpop.f32.mrf.mxu0
        %v4889 = vadd.f32 0.0, %v4888
        %v4890 = vpop.f32.mrf.mxu0
        %4891 = vmatprep.mubr.f32.mxu0 0.0
        %4892 = vmatmul.mubr.f32.gmra.mxu0 %v4794
        %v4893 = vpop.f32.mrf.mxu0
        %v4894 = vadd.f32 0.0, %v4893
        %v4895 = vpop.f32.mrf.mxu0
        %4896 = vmatprep.mubr.f32.mxu0 0.0
        %4897 = vmatmul.mubr.f32.gmra.mxu0 %v4795
        %v4898 = vpop.f32.mrf.mxu0
        %v4899 = vadd.f32 0.0, %v4898
        %v4900 = vpop.f32.mrf.mxu0
        %4901 = vmatprep.mubr.f32.mxu0 0.0
        %4902 = vmatmul.mubr.f32.gmra.mxu0 %v4796
        %v4903 = vpop.f32.mrf.mxu0
        %v4904 = vadd.f32 0.0, %v4903
        %v4905 = vpop.f32.mrf.mxu0
        %4906 = vmatprep.mubr.f32.mxu0 0.0
        %4907 = vmatmul.mubr.f32.gmra.mxu0 %v4797
        %v4908 = vpop.f32.mrf.mxu0
        %v4909 = vadd.f32 0.0, %v4908
        %v4910 = vpop.f32.mrf.mxu0
        %4911 = vmatprep.mubr.f32.mxu0 0.0
        %4912 = vmatmul.mubr.f32.gmra.mxu0 %v4798
        %v4913 = vpop.f32.mrf.mxu0
        %v4914 = vadd.f32 0.0, %v4913
        %v4915 = vpop.f32.mrf.mxu0
        %4916 = vmatprep.mubr.f32.mxu0 0.0
        %4917 = vmatmul.mubr.f32.gmra.mxu0 %v4799
        %v4918 = vpop.f32.mrf.mxu0
        %v4919 = vadd.f32 0.0, %v4918
        %v4920 = vpop.f32.mrf.mxu0
        %4921 = vdwg.mxu0
        %v4922 = vadd.f32 %v4784, %v4884
        %v4923 = vadd.f32 %v4785, %v4889
        %v4924 = vadd.f32 %v4786, %v4894
        %v4925 = vadd.f32 %v4787, %v4899
        %v4926 = vadd.f32 %v4788, %v4904
        %v4927 = vadd.f32 %v4789, %v4909
        %v4928 = vadd.f32 %v4790, %v4914
        %v4929 = vadd.f32 %v4791, %v4919
        %v4930 = vld [vmem:[%s385 + $0x2] sm:$0xff]
        %v4931 = vld [vmem:[%s385 + $0x12] sm:$0xff]
        %v4932 = vld [vmem:[%s385 + $0x22] sm:$0xff]
        %v4933 = vld [vmem:[%s385 + $0x32] sm:$0xff]
        %v4934 = vld [vmem:[%s385 + $0x42] sm:$0xff]
        %v4935 = vld [vmem:[%s385 + $0x52] sm:$0xff]
        %v4936 = vld [vmem:[%s385 + $0x62] sm:$0xff]
        %v4937 = vld [vmem:[%s385 + $0x72] sm:$0xff]
        %s4938 = scalar_lea.vmem %s1, 4096
        %v4939 = vld [vmem:[%s4938] sm:$0xff]
        %v4940 = vld [vmem:[%s4938 + $0x8] sm:$0xff]
        %v4941 = vld [vmem:[%s4938 + $0x10] sm:$0xff]
        %v4942 = vld [vmem:[%s4938 + $0x18] sm:$0xff]
        %v4943 = vld [vmem:[%s4938 + $0x20] sm:$0xff]
        %v4944 = vld [vmem:[%s4938 + $0x28] sm:$0xff]
        %v4945 = vld [vmem:[%s4938 + $0x30] sm:$0xff]
        %v4946 = vld [vmem:[%s4938 + $0x38] sm:$0xff]
        %v4947 = vld [vmem:[%s4938 + $0x40] sm:$0xff]
        %v4948 = vld [vmem:[%s4938 + $0x48] sm:$0xff]
        %v4949 = vld [vmem:[%s4938 + $0x50] sm:$0xff]
        %v4950 = vld [vmem:[%s4938 + $0x58] sm:$0xff]
        %v4951 = vld [vmem:[%s4938 + $0x60] sm:$0xff]
        %v4952 = vld [vmem:[%s4938 + $0x68] sm:$0xff]
        %v4953 = vld [vmem:[%s4938 + $0x70] sm:$0xff]
        %v4954 = vld [vmem:[%s4938 + $0x78] sm:$0xff]
        %4955 = vmatprep.subr.mxu0 0.0
        %4956 = vmatpush1.msra.mxu0 %v4954
        %4957 = vmatprep.subr.mxu0 0.0
        %4958 = vmatpush1.msra.mxu0 %v4953
        %4959 = vmatprep.subr.mxu0 0.0
        %4960 = vmatpush1.msra.mxu0 %v4952
        %4961 = vmatprep.subr.mxu0 0.0
        %4962 = vmatpush1.msra.mxu0 %v4951
        %4963 = vmatprep.subr.mxu0 0.0
        %4964 = vmatpush1.msra.mxu0 %v4950
        %4965 = vmatprep.subr.mxu0 0.0
        %4966 = vmatpush1.msra.mxu0 %v4949
        %4967 = vmatprep.subr.mxu0 0.0
        %4968 = vmatpush1.msra.mxu0 %v4948
        %4969 = vmatprep.subr.mxu0 0.0
        %4970 = vmatpush1.msra.mxu0 %v4947
        %4971 = vmatprep.subr.mxu0 0.0
        %4972 = vmatpush1.msra.mxu0 %v4946
        %4973 = vmatprep.subr.mxu0 0.0
        %4974 = vmatpush1.msra.mxu0 %v4945
        %4975 = vmatprep.subr.mxu0 0.0
        %4976 = vmatpush1.msra.mxu0 %v4944
        %4977 = vmatprep.subr.mxu0 0.0
        %4978 = vmatpush1.msra.mxu0 %v4943
        %4979 = vmatprep.subr.mxu0 0.0
        %4980 = vmatpush1.msra.mxu0 %v4942
        %4981 = vmatprep.subr.mxu0 0.0
        %4982 = vmatpush1.msra.mxu0 %v4941
        %4983 = vmatprep.subr.mxu0 0.0
        %4984 = vmatpush1.msra.mxu0 %v4940
        %4985 = vmatprep.subr.mxu0 0.0
        %4986 = vmatpush1.msra.mxu0 %v4939
        %4987 = vmatprep.subr.mxu0 0.0
        %4988 = vmatpush2.msra.mxu0 0.0
        %4989 = vmatprep.subr.mxu0 0.0
        %4990 = vmatpush2.msra.mxu0 0.0
        %4991 = vmatprep.subr.mxu0 0.0
        %4992 = vmatpush2.msra.mxu0 0.0
        %4993 = vmatprep.subr.mxu0 0.0
        %4994 = vmatpush2.msra.mxu0 0.0
        %4995 = vmatprep.subr.mxu0 0.0
        %4996 = vmatpush2.msra.mxu0 0.0
        %4997 = vmatprep.subr.mxu0 0.0
        %4998 = vmatpush2.msra.mxu0 0.0
        %4999 = vmatprep.subr.mxu0 0.0
        %5000 = vmatpush2.msra.mxu0 0.0
        %5001 = vmatprep.subr.mxu0 0.0
        %5002 = vmatpush2.msra.mxu0 0.0
        %5003 = vmatprep.subr.mxu0 0.0
        %5004 = vmatpush2.msra.mxu0 0.0
        %5005 = vmatprep.subr.mxu0 0.0
        %5006 = vmatpush2.msra.mxu0 0.0
        %5007 = vmatprep.subr.mxu0 0.0
        %5008 = vmatpush2.msra.mxu0 0.0
        %5009 = vmatprep.subr.mxu0 0.0
        %5010 = vmatpush2.msra.mxu0 0.0
        %5011 = vmatprep.subr.mxu0 0.0
        %5012 = vmatpush2.msra.mxu0 0.0
        %5013 = vmatprep.subr.mxu0 0.0
        %5014 = vmatpush2.msra.mxu0 0.0
        %5015 = vmatprep.subr.mxu0 0.0
        %5016 = vmatpush2.msra.mxu0 0.0
        %5017 = vmatprep.subr.mxu0 0.0
        %5018 = vmatpush2.msra.mxu0 0.0
        %5019 = vmatprep.mubr.f32.mxu0 0.0
        %5020 = vmatmul.mubr.f32.gmra.mxu0 %v4930
        %v5021 = vpop.f32.mrf.mxu0
        %v5022 = vadd.f32 0.0, %v5021
        %v5023 = vpop.f32.mrf.mxu0
        %5024 = vmatprep.mubr.f32.mxu0 0.0
        %5025 = vmatmul.mubr.f32.gmra.mxu0 %v4931
        %v5026 = vpop.f32.mrf.mxu0
        %v5027 = vadd.f32 0.0, %v5026
        %v5028 = vpop.f32.mrf.mxu0
        %5029 = vmatprep.mubr.f32.mxu0 0.0
        %5030 = vmatmul.mubr.f32.gmra.mxu0 %v4932
        %v5031 = vpop.f32.mrf.mxu0
        %v5032 = vadd.f32 0.0, %v5031
        %v5033 = vpop.f32.mrf.mxu0
        %5034 = vmatprep.mubr.f32.mxu0 0.0
        %5035 = vmatmul.mubr.f32.gmra.mxu0 %v4933
        %v5036 = vpop.f32.mrf.mxu0
        %v5037 = vadd.f32 0.0, %v5036
        %v5038 = vpop.f32.mrf.mxu0
        %5039 = vmatprep.mubr.f32.mxu0 0.0
        %5040 = vmatmul.mubr.f32.gmra.mxu0 %v4934
        %v5041 = vpop.f32.mrf.mxu0
        %v5042 = vadd.f32 0.0, %v5041
        %v5043 = vpop.f32.mrf.mxu0
        %5044 = vmatprep.mubr.f32.mxu0 0.0
        %5045 = vmatmul.mubr.f32.gmra.mxu0 %v4935
        %v5046 = vpop.f32.mrf.mxu0
        %v5047 = vadd.f32 0.0, %v5046
        %v5048 = vpop.f32.mrf.mxu0
        %5049 = vmatprep.mubr.f32.mxu0 0.0
        %5050 = vmatmul.mubr.f32.gmra.mxu0 %v4936
        %v5051 = vpop.f32.mrf.mxu0
        %v5052 = vadd.f32 0.0, %v5051
        %v5053 = vpop.f32.mrf.mxu0
        %5054 = vmatprep.mubr.f32.mxu0 0.0
        %5055 = vmatmul.mubr.f32.gmra.mxu0 %v4937
        %v5056 = vpop.f32.mrf.mxu0
        %v5057 = vadd.f32 0.0, %v5056
        %v5058 = vpop.f32.mrf.mxu0
        %5059 = vdwg.mxu0
        %v5060 = vadd.f32 %v4922, %v5022
        %v5061 = vadd.f32 %v4923, %v5027
        %v5062 = vadd.f32 %v4924, %v5032
        %v5063 = vadd.f32 %v4925, %v5037
        %v5064 = vadd.f32 %v4926, %v5042
        %v5065 = vadd.f32 %v4927, %v5047
        %v5066 = vadd.f32 %v4928, %v5052
        %v5067 = vadd.f32 %v4929, %v5057
        %v5068 = vld [vmem:[%s2517] sm:$0xff]
        %v5069 = vld [vmem:[%s2517 + $0x10] sm:$0xff]
        %v5070 = vld [vmem:[%s2517 + $0x20] sm:$0xff]
        %v5071 = vld [vmem:[%s2517 + $0x30] sm:$0xff]
        %v5072 = vld [vmem:[%s2517 + $0x40] sm:$0xff]
        %v5073 = vld [vmem:[%s2517 + $0x50] sm:$0xff]
        %v5074 = vld [vmem:[%s2517 + $0x60] sm:$0xff]
        %v5075 = vld [vmem:[%s2517 + $0x70] sm:$0xff]
        %s5076 = scalar_lea.vmem %s1, 4224
        %v5077 = vld [vmem:[%s5076] sm:$0xff]
        %v5078 = vld [vmem:[%s5076 + $0x8] sm:$0xff]
        %v5079 = vld [vmem:[%s5076 + $0x10] sm:$0xff]
        %v5080 = vld [vmem:[%s5076 + $0x18] sm:$0xff]
        %v5081 = vld [vmem:[%s5076 + $0x20] sm:$0xff]
        %v5082 = vld [vmem:[%s5076 + $0x28] sm:$0xff]
        %v5083 = vld [vmem:[%s5076 + $0x30] sm:$0xff]
        %v5084 = vld [vmem:[%s5076 + $0x38] sm:$0xff]
        %v5085 = vld [vmem:[%s5076 + $0x40] sm:$0xff]
        %v5086 = vld [vmem:[%s5076 + $0x48] sm:$0xff]
        %v5087 = vld [vmem:[%s5076 + $0x50] sm:$0xff]
        %v5088 = vld [vmem:[%s5076 + $0x58] sm:$0xff]
        %v5089 = vld [vmem:[%s5076 + $0x60] sm:$0xff]
        %v5090 = vld [vmem:[%s5076 + $0x68] sm:$0xff]
        %v5091 = vld [vmem:[%s5076 + $0x70] sm:$0xff]
        %v5092 = vld [vmem:[%s5076 + $0x78] sm:$0xff]
        %5093 = vmatprep.subr.mxu0 0.0
        %5094 = vmatpush1.msra.mxu0 %v5092
        %5095 = vmatprep.subr.mxu0 0.0
        %5096 = vmatpush1.msra.mxu0 %v5091
        %5097 = vmatprep.subr.mxu0 0.0
        %5098 = vmatpush1.msra.mxu0 %v5090
        %5099 = vmatprep.subr.mxu0 0.0
        %5100 = vmatpush1.msra.mxu0 %v5089
        %5101 = vmatprep.subr.mxu0 0.0
        %5102 = vmatpush1.msra.mxu0 %v5088
        %5103 = vmatprep.subr.mxu0 0.0
        %5104 = vmatpush1.msra.mxu0 %v5087
        %5105 = vmatprep.subr.mxu0 0.0
        %5106 = vmatpush1.msra.mxu0 %v5086
        %5107 = vmatprep.subr.mxu0 0.0
        %5108 = vmatpush1.msra.mxu0 %v5085
        %5109 = vmatprep.subr.mxu0 0.0
        %5110 = vmatpush1.msra.mxu0 %v5084
        %5111 = vmatprep.subr.mxu0 0.0
        %5112 = vmatpush1.msra.mxu0 %v5083
        %5113 = vmatprep.subr.mxu0 0.0
        %5114 = vmatpush1.msra.mxu0 %v5082
        %5115 = vmatprep.subr.mxu0 0.0
        %5116 = vmatpush1.msra.mxu0 %v5081
        %5117 = vmatprep.subr.mxu0 0.0
        %5118 = vmatpush1.msra.mxu0 %v5080
        %5119 = vmatprep.subr.mxu0 0.0
        %5120 = vmatpush1.msra.mxu0 %v5079
        %5121 = vmatprep.subr.mxu0 0.0
        %5122 = vmatpush1.msra.mxu0 %v5078
        %5123 = vmatprep.subr.mxu0 0.0
        %5124 = vmatpush1.msra.mxu0 %v5077
        %5125 = vmatprep.subr.mxu0 0.0
        %5126 = vmatpush2.msra.mxu0 0.0
        %5127 = vmatprep.subr.mxu0 0.0
        %5128 = vmatpush2.msra.mxu0 0.0
        %5129 = vmatprep.subr.mxu0 0.0
        %5130 = vmatpush2.msra.mxu0 0.0
        %5131 = vmatprep.subr.mxu0 0.0
        %5132 = vmatpush2.msra.mxu0 0.0
        %5133 = vmatprep.subr.mxu0 0.0
        %5134 = vmatpush2.msra.mxu0 0.0
        %5135 = vmatprep.subr.mxu0 0.0
        %5136 = vmatpush2.msra.mxu0 0.0
        %5137 = vmatprep.subr.mxu0 0.0
        %5138 = vmatpush2.msra.mxu0 0.0
        %5139 = vmatprep.subr.mxu0 0.0
        %5140 = vmatpush2.msra.mxu0 0.0
        %5141 = vmatprep.subr.mxu0 0.0
        %5142 = vmatpush2.msra.mxu0 0.0
        %5143 = vmatprep.subr.mxu0 0.0
        %5144 = vmatpush2.msra.mxu0 0.0
        %5145 = vmatprep.subr.mxu0 0.0
        %5146 = vmatpush2.msra.mxu0 0.0
        %5147 = vmatprep.subr.mxu0 0.0
        %5148 = vmatpush2.msra.mxu0 0.0
        %5149 = vmatprep.subr.mxu0 0.0
        %5150 = vmatpush2.msra.mxu0 0.0
        %5151 = vmatprep.subr.mxu0 0.0
        %5152 = vmatpush2.msra.mxu0 0.0
        %5153 = vmatprep.subr.mxu0 0.0
        %5154 = vmatpush2.msra.mxu0 0.0
        %5155 = vmatprep.subr.mxu0 0.0
        %5156 = vmatpush2.msra.mxu0 0.0
        %5157 = vmatprep.mubr.f32.mxu0 0.0
        %5158 = vmatmul.mubr.f32.gmra.mxu0 %v5068
        %v5159 = vpop.f32.mrf.mxu0
        %v5160 = vadd.f32 0.0, %v5159
        %v5161 = vpop.f32.mrf.mxu0
        %5162 = vmatprep.mubr.f32.mxu0 0.0
        %5163 = vmatmul.mubr.f32.gmra.mxu0 %v5069
        %v5164 = vpop.f32.mrf.mxu0
        %v5165 = vadd.f32 0.0, %v5164
        %v5166 = vpop.f32.mrf.mxu0
        %5167 = vmatprep.mubr.f32.mxu0 0.0
        %5168 = vmatmul.mubr.f32.gmra.mxu0 %v5070
        %v5169 = vpop.f32.mrf.mxu0
        %v5170 = vadd.f32 0.0, %v5169
        %v5171 = vpop.f32.mrf.mxu0
        %5172 = vmatprep.mubr.f32.mxu0 0.0
        %5173 = vmatmul.mubr.f32.gmra.mxu0 %v5071
        %v5174 = vpop.f32.mrf.mxu0
        %v5175 = vadd.f32 0.0, %v5174
        %v5176 = vpop.f32.mrf.mxu0
        %5177 = vmatprep.mubr.f32.mxu0 0.0
        %5178 = vmatmul.mubr.f32.gmra.mxu0 %v5072
        %v5179 = vpop.f32.mrf.mxu0
        %v5180 = vadd.f32 0.0, %v5179
        %v5181 = vpop.f32.mrf.mxu0
        %5182 = vmatprep.mubr.f32.mxu0 0.0
        %5183 = vmatmul.mubr.f32.gmra.mxu0 %v5073
        %v5184 = vpop.f32.mrf.mxu0
        %v5185 = vadd.f32 0.0, %v5184
        %v5186 = vpop.f32.mrf.mxu0
        %5187 = vmatprep.mubr.f32.mxu0 0.0
        %5188 = vmatmul.mubr.f32.gmra.mxu0 %v5074
        %v5189 = vpop.f32.mrf.mxu0
        %v5190 = vadd.f32 0.0, %v5189
        %v5191 = vpop.f32.mrf.mxu0
        %5192 = vmatprep.mubr.f32.mxu0 0.0
        %5193 = vmatmul.mubr.f32.gmra.mxu0 %v5075
        %v5194 = vpop.f32.mrf.mxu0
        %v5195 = vadd.f32 0.0, %v5194
        %v5196 = vpop.f32.mrf.mxu0
        %5197 = vdwg.mxu0
        %v5198 = vadd.f32 %v5060, %v5160
        %v5199 = vadd.f32 %v5061, %v5165
        %v5200 = vadd.f32 %v5062, %v5170
        %v5201 = vadd.f32 %v5063, %v5175
        %v5202 = vadd.f32 %v5064, %v5180
        %v5203 = vadd.f32 %v5065, %v5185
        %v5204 = vadd.f32 %v5066, %v5190
        %v5205 = vadd.f32 %v5067, %v5195
        %v5206 = vld [vmem:[%s2517 + $0x1] sm:$0xff]
        %v5207 = vld [vmem:[%s2517 + $0x11] sm:$0xff]
        %v5208 = vld [vmem:[%s2517 + $0x21] sm:$0xff]
        %v5209 = vld [vmem:[%s2517 + $0x31] sm:$0xff]
        %v5210 = vld [vmem:[%s2517 + $0x41] sm:$0xff]
        %v5211 = vld [vmem:[%s2517 + $0x51] sm:$0xff]
        %v5212 = vld [vmem:[%s2517 + $0x61] sm:$0xff]
        %v5213 = vld [vmem:[%s2517 + $0x71] sm:$0xff]
        %s5214 = scalar_lea.vmem %s1, 4352
        %v5215 = vld [vmem:[%s5214] sm:$0xff]
        %v5216 = vld [vmem:[%s5214 + $0x8] sm:$0xff]
        %v5217 = vld [vmem:[%s5214 + $0x10] sm:$0xff]
        %v5218 = vld [vmem:[%s5214 + $0x18] sm:$0xff]
        %v5219 = vld [vmem:[%s5214 + $0x20] sm:$0xff]
        %v5220 = vld [vmem:[%s5214 + $0x28] sm:$0xff]
        %v5221 = vld [vmem:[%s5214 + $0x30] sm:$0xff]
        %v5222 = vld [vmem:[%s5214 + $0x38] sm:$0xff]
        %v5223 = vld [vmem:[%s5214 + $0x40] sm:$0xff]
        %v5224 = vld [vmem:[%s5214 + $0x48] sm:$0xff]
        %v5225 = vld [vmem:[%s5214 + $0x50] sm:$0xff]
        %v5226 = vld [vmem:[%s5214 + $0x58] sm:$0xff]
        %v5227 = vld [vmem:[%s5214 + $0x60] sm:$0xff]
        %v5228 = vld [vmem:[%s5214 + $0x68] sm:$0xff]
        %v5229 = vld [vmem:[%s5214 + $0x70] sm:$0xff]
        %v5230 = vld [vmem:[%s5214 + $0x78] sm:$0xff]
        %5231 = vmatprep.subr.mxu0 0.0
        %5232 = vmatpush1.msra.mxu0 %v5230
        %5233 = vmatprep.subr.mxu0 0.0
        %5234 = vmatpush1.msra.mxu0 %v5229
        %5235 = vmatprep.subr.mxu0 0.0
        %5236 = vmatpush1.msra.mxu0 %v5228
        %5237 = vmatprep.subr.mxu0 0.0
        %5238 = vmatpush1.msra.mxu0 %v5227
        %5239 = vmatprep.subr.mxu0 0.0
        %5240 = vmatpush1.msra.mxu0 %v5226
        %5241 = vmatprep.subr.mxu0 0.0
        %5242 = vmatpush1.msra.mxu0 %v5225
        %5243 = vmatprep.subr.mxu0 0.0
        %5244 = vmatpush1.msra.mxu0 %v5224
        %5245 = vmatprep.subr.mxu0 0.0
        %5246 = vmatpush1.msra.mxu0 %v5223
        %5247 = vmatprep.subr.mxu0 0.0
        %5248 = vmatpush1.msra.mxu0 %v5222
        %5249 = vmatprep.subr.mxu0 0.0
        %5250 = vmatpush1.msra.mxu0 %v5221
        %5251 = vmatprep.subr.mxu0 0.0
        %5252 = vmatpush1.msra.mxu0 %v5220
        %5253 = vmatprep.subr.mxu0 0.0
        %5254 = vmatpush1.msra.mxu0 %v5219
        %5255 = vmatprep.subr.mxu0 0.0
        %5256 = vmatpush1.msra.mxu0 %v5218
        %5257 = vmatprep.subr.mxu0 0.0
        %5258 = vmatpush1.msra.mxu0 %v5217
        %5259 = vmatprep.subr.mxu0 0.0
        %5260 = vmatpush1.msra.mxu0 %v5216
        %5261 = vmatprep.subr.mxu0 0.0
        %5262 = vmatpush1.msra.mxu0 %v5215
        %5263 = vmatprep.subr.mxu0 0.0
        %5264 = vmatpush2.msra.mxu0 0.0
        %5265 = vmatprep.subr.mxu0 0.0
        %5266 = vmatpush2.msra.mxu0 0.0
        %5267 = vmatprep.subr.mxu0 0.0
        %5268 = vmatpush2.msra.mxu0 0.0
        %5269 = vmatprep.subr.mxu0 0.0
        %5270 = vmatpush2.msra.mxu0 0.0
        %5271 = vmatprep.subr.mxu0 0.0
        %5272 = vmatpush2.msra.mxu0 0.0
        %5273 = vmatprep.subr.mxu0 0.0
        %5274 = vmatpush2.msra.mxu0 0.0
        %5275 = vmatprep.subr.mxu0 0.0
        %5276 = vmatpush2.msra.mxu0 0.0
        %5277 = vmatprep.subr.mxu0 0.0
        %5278 = vmatpush2.msra.mxu0 0.0
        %5279 = vmatprep.subr.mxu0 0.0
        %5280 = vmatpush2.msra.mxu0 0.0
        %5281 = vmatprep.subr.mxu0 0.0
        %5282 = vmatpush2.msra.mxu0 0.0
        %5283 = vmatprep.subr.mxu0 0.0
        %5284 = vmatpush2.msra.mxu0 0.0
        %5285 = vmatprep.subr.mxu0 0.0
        %5286 = vmatpush2.msra.mxu0 0.0
        %5287 = vmatprep.subr.mxu0 0.0
        %5288 = vmatpush2.msra.mxu0 0.0
        %5289 = vmatprep.subr.mxu0 0.0
        %5290 = vmatpush2.msra.mxu0 0.0
        %5291 = vmatprep.subr.mxu0 0.0
        %5292 = vmatpush2.msra.mxu0 0.0
        %5293 = vmatprep.subr.mxu0 0.0
        %5294 = vmatpush2.msra.mxu0 0.0
        %5295 = vmatprep.mubr.f32.mxu0 0.0
        %5296 = vmatmul.mubr.f32.gmra.mxu0 %v5206
        %v5297 = vpop.f32.mrf.mxu0
        %v5298 = vadd.f32 0.0, %v5297
        %v5299 = vpop.f32.mrf.mxu0
        %5300 = vmatprep.mubr.f32.mxu0 0.0
        %5301 = vmatmul.mubr.f32.gmra.mxu0 %v5207
        %v5302 = vpop.f32.mrf.mxu0
        %v5303 = vadd.f32 0.0, %v5302
        %v5304 = vpop.f32.mrf.mxu0
        %5305 = vmatprep.mubr.f32.mxu0 0.0
        %5306 = vmatmul.mubr.f32.gmra.mxu0 %v5208
        %v5307 = vpop.f32.mrf.mxu0
        %v5308 = vadd.f32 0.0, %v5307
        %v5309 = vpop.f32.mrf.mxu0
        %5310 = vmatprep.mubr.f32.mxu0 0.0
        %5311 = vmatmul.mubr.f32.gmra.mxu0 %v5209
        %v5312 = vpop.f32.mrf.mxu0
        %v5313 = vadd.f32 0.0, %v5312
        %v5314 = vpop.f32.mrf.mxu0
        %5315 = vmatprep.mubr.f32.mxu0 0.0
        %5316 = vmatmul.mubr.f32.gmra.mxu0 %v5210
        %v5317 = vpop.f32.mrf.mxu0
        %v5318 = vadd.f32 0.0, %v5317
        %v5319 = vpop.f32.mrf.mxu0
        %5320 = vmatprep.mubr.f32.mxu0 0.0
        %5321 = vmatmul.mubr.f32.gmra.mxu0 %v5211
        %v5322 = vpop.f32.mrf.mxu0
        %v5323 = vadd.f32 0.0, %v5322
        %v5324 = vpop.f32.mrf.mxu0
        %5325 = vmatprep.mubr.f32.mxu0 0.0
        %5326 = vmatmul.mubr.f32.gmra.mxu0 %v5212
        %v5327 = vpop.f32.mrf.mxu0
        %v5328 = vadd.f32 0.0, %v5327
        %v5329 = vpop.f32.mrf.mxu0
        %5330 = vmatprep.mubr.f32.mxu0 0.0
        %5331 = vmatmul.mubr.f32.gmra.mxu0 %v5213
        %v5332 = vpop.f32.mrf.mxu0
        %v5333 = vadd.f32 0.0, %v5332
        %v5334 = vpop.f32.mrf.mxu0
        %5335 = vdwg.mxu0
        %v5336 = vadd.f32 %v5198, %v5298
        %v5337 = vadd.f32 %v5199, %v5303
        %v5338 = vadd.f32 %v5200, %v5308
        %v5339 = vadd.f32 %v5201, %v5313
        %v5340 = vadd.f32 %v5202, %v5318
        %v5341 = vadd.f32 %v5203, %v5323
        %v5342 = vadd.f32 %v5204, %v5328
        %v5343 = vadd.f32 %v5205, %v5333
        %v5344 = vld [vmem:[%s2517 + $0x2] sm:$0xff]
        %v5345 = vld [vmem:[%s2517 + $0x12] sm:$0xff]
        %v5346 = vld [vmem:[%s2517 + $0x22] sm:$0xff]
        %v5347 = vld [vmem:[%s2517 + $0x32] sm:$0xff]
        %v5348 = vld [vmem:[%s2517 + $0x42] sm:$0xff]
        %v5349 = vld [vmem:[%s2517 + $0x52] sm:$0xff]
        %v5350 = vld [vmem:[%s2517 + $0x62] sm:$0xff]
        %v5351 = vld [vmem:[%s2517 + $0x72] sm:$0xff]
        %s5352 = scalar_lea.vmem %s1, 4480
        %v5353 = vld [vmem:[%s5352] sm:$0xff]
        %v5354 = vld [vmem:[%s5352 + $0x8] sm:$0xff]
        %v5355 = vld [vmem:[%s5352 + $0x10] sm:$0xff]
        %v5356 = vld [vmem:[%s5352 + $0x18] sm:$0xff]
        %v5357 = vld [vmem:[%s5352 + $0x20] sm:$0xff]
        %v5358 = vld [vmem:[%s5352 + $0x28] sm:$0xff]
        %v5359 = vld [vmem:[%s5352 + $0x30] sm:$0xff]
        %v5360 = vld [vmem:[%s5352 + $0x38] sm:$0xff]
        %v5361 = vld [vmem:[%s5352 + $0x40] sm:$0xff]
        %v5362 = vld [vmem:[%s5352 + $0x48] sm:$0xff]
        %v5363 = vld [vmem:[%s5352 + $0x50] sm:$0xff]
        %v5364 = vld [vmem:[%s5352 + $0x58] sm:$0xff]
        %v5365 = vld [vmem:[%s5352 + $0x60] sm:$0xff]
        %v5366 = vld [vmem:[%s5352 + $0x68] sm:$0xff]
        %v5367 = vld [vmem:[%s5352 + $0x70] sm:$0xff]
        %v5368 = vld [vmem:[%s5352 + $0x78] sm:$0xff]
        %5369 = vmatprep.subr.mxu0 0.0
        %5370 = vmatpush1.msra.mxu0 %v5368
        %5371 = vmatprep.subr.mxu0 0.0
        %5372 = vmatpush1.msra.mxu0 %v5367
        %5373 = vmatprep.subr.mxu0 0.0
        %5374 = vmatpush1.msra.mxu0 %v5366
        %5375 = vmatprep.subr.mxu0 0.0
        %5376 = vmatpush1.msra.mxu0 %v5365
        %5377 = vmatprep.subr.mxu0 0.0
        %5378 = vmatpush1.msra.mxu0 %v5364
        %5379 = vmatprep.subr.mxu0 0.0
        %5380 = vmatpush1.msra.mxu0 %v5363
        %5381 = vmatprep.subr.mxu0 0.0
        %5382 = vmatpush1.msra.mxu0 %v5362
        %5383 = vmatprep.subr.mxu0 0.0
        %5384 = vmatpush1.msra.mxu0 %v5361
        %5385 = vmatprep.subr.mxu0 0.0
        %5386 = vmatpush1.msra.mxu0 %v5360
        %5387 = vmatprep.subr.mxu0 0.0
        %5388 = vmatpush1.msra.mxu0 %v5359
        %5389 = vmatprep.subr.mxu0 0.0
        %5390 = vmatpush1.msra.mxu0 %v5358
        %5391 = vmatprep.subr.mxu0 0.0
        %5392 = vmatpush1.msra.mxu0 %v5357
        %5393 = vmatprep.subr.mxu0 0.0
        %5394 = vmatpush1.msra.mxu0 %v5356
        %5395 = vmatprep.subr.mxu0 0.0
        %5396 = vmatpush1.msra.mxu0 %v5355
        %5397 = vmatprep.subr.mxu0 0.0
        %5398 = vmatpush1.msra.mxu0 %v5354
        %5399 = vmatprep.subr.mxu0 0.0
        %5400 = vmatpush1.msra.mxu0 %v5353
        %5401 = vmatprep.subr.mxu0 0.0
        %5402 = vmatpush2.msra.mxu0 0.0
        %5403 = vmatprep.subr.mxu0 0.0
        %5404 = vmatpush2.msra.mxu0 0.0
        %5405 = vmatprep.subr.mxu0 0.0
        %5406 = vmatpush2.msra.mxu0 0.0
        %5407 = vmatprep.subr.mxu0 0.0
        %5408 = vmatpush2.msra.mxu0 0.0
        %5409 = vmatprep.subr.mxu0 0.0
        %5410 = vmatpush2.msra.mxu0 0.0
        %5411 = vmatprep.subr.mxu0 0.0
        %5412 = vmatpush2.msra.mxu0 0.0
        %5413 = vmatprep.subr.mxu0 0.0
        %5414 = vmatpush2.msra.mxu0 0.0
        %5415 = vmatprep.subr.mxu0 0.0
        %5416 = vmatpush2.msra.mxu0 0.0
        %5417 = vmatprep.subr.mxu0 0.0
        %5418 = vmatpush2.msra.mxu0 0.0
        %5419 = vmatprep.subr.mxu0 0.0
        %5420 = vmatpush2.msra.mxu0 0.0
        %5421 = vmatprep.subr.mxu0 0.0
        %5422 = vmatpush2.msra.mxu0 0.0
        %5423 = vmatprep.subr.mxu0 0.0
        %5424 = vmatpush2.msra.mxu0 0.0
        %5425 = vmatprep.subr.mxu0 0.0
        %5426 = vmatpush2.msra.mxu0 0.0
        %5427 = vmatprep.subr.mxu0 0.0
        %5428 = vmatpush2.msra.mxu0 0.0
        %5429 = vmatprep.subr.mxu0 0.0
        %5430 = vmatpush2.msra.mxu0 0.0
        %5431 = vmatprep.subr.mxu0 0.0
        %5432 = vmatpush2.msra.mxu0 0.0
        %5433 = vmatprep.mubr.f32.mxu0 0.0
        %5434 = vmatmul.mubr.f32.gmra.mxu0 %v5344
        %v5435 = vpop.f32.mrf.mxu0
        %v5436 = vadd.f32 0.0, %v5435
        %v5437 = vpop.f32.mrf.mxu0
        %5438 = vmatprep.mubr.f32.mxu0 0.0
        %5439 = vmatmul.mubr.f32.gmra.mxu0 %v5345
        %v5440 = vpop.f32.mrf.mxu0
        %v5441 = vadd.f32 0.0, %v5440
        %v5442 = vpop.f32.mrf.mxu0
        %5443 = vmatprep.mubr.f32.mxu0 0.0
        %5444 = vmatmul.mubr.f32.gmra.mxu0 %v5346
        %v5445 = vpop.f32.mrf.mxu0
        %v5446 = vadd.f32 0.0, %v5445
        %v5447 = vpop.f32.mrf.mxu0
        %5448 = vmatprep.mubr.f32.mxu0 0.0
        %5449 = vmatmul.mubr.f32.gmra.mxu0 %v5347
        %v5450 = vpop.f32.mrf.mxu0
        %v5451 = vadd.f32 0.0, %v5450
        %v5452 = vpop.f32.mrf.mxu0
        %5453 = vmatprep.mubr.f32.mxu0 0.0
        %5454 = vmatmul.mubr.f32.gmra.mxu0 %v5348
        %v5455 = vpop.f32.mrf.mxu0
        %v5456 = vadd.f32 0.0, %v5455
        %v5457 = vpop.f32.mrf.mxu0
        %5458 = vmatprep.mubr.f32.mxu0 0.0
        %5459 = vmatmul.mubr.f32.gmra.mxu0 %v5349
        %v5460 = vpop.f32.mrf.mxu0
        %v5461 = vadd.f32 0.0, %v5460
        %v5462 = vpop.f32.mrf.mxu0
        %5463 = vmatprep.mubr.f32.mxu0 0.0
        %5464 = vmatmul.mubr.f32.gmra.mxu0 %v5350
        %v5465 = vpop.f32.mrf.mxu0
        %v5466 = vadd.f32 0.0, %v5465
        %v5467 = vpop.f32.mrf.mxu0
        %5468 = vmatprep.mubr.f32.mxu0 0.0
        %5469 = vmatmul.mubr.f32.gmra.mxu0 %v5351
        %v5470 = vpop.f32.mrf.mxu0
        %v5471 = vadd.f32 0.0, %v5470
        %v5472 = vpop.f32.mrf.mxu0
        %5473 = vdwg.mxu0
        %v5474 = vadd.f32 %v5336, %v5436
        %v5475 = vadd.f32 %v5337, %v5441
        %v5476 = vadd.f32 %v5338, %v5446
        %v5477 = vadd.f32 %v5339, %v5451
        %v5478 = vadd.f32 %v5340, %v5456
        %v5479 = vadd.f32 %v5341, %v5461
        %v5480 = vadd.f32 %v5342, %v5466
        %v5481 = vadd.f32 %v5343, %v5471
        %v5482 = vld [vmem:[%s9 + $0x3] sm:$0x1]
        %v5483 = vlaneseq
        %v5484 = vshrl.u32 %v5483, 7
        %v5485 = vsub.s32 0, %v5484
        %v5486 = vrot.slane %v5482, %v5485
        %v5487 = vadd.f32 %v5474, %v5486
        %v5488 = vadd.f32 %v5475, %v5486
        %v5489 = vadd.f32 %v5476, %v5486
        %v5490 = vadd.f32 %v5477, %v5486
        %v5491 = vadd.f32 %v5478, %v5486
        %v5492 = vadd.f32 %v5479, %v5486
        %v5493 = vadd.f32 %v5480, %v5486
        %v5494 = vadd.f32 %v5481, %v5486
        %v5495 = vmul.f32 %v5487, 0.5
        %v5496 = vmul.f32 %v5488, 0.5
        %v5497 = vmul.f32 %v5489, 0.5
        %v5498 = vmul.f32 %v5490, 0.5
        %v5499 = vmul.f32 %v5491, 0.5
        %v5500 = vmul.f32 %v5492, 0.5
        %v5501 = vmul.f32 %v5493, 0.5
        %v5502 = vmul.f32 %v5494, 0.5
        %v5503 = vmul.f32 %v5487, 0.70710677
        %v5504 = vmul.f32 %v5488, 0.70710677
        %v5505 = vmul.f32 %v5489, 0.70710677
        %v5506 = vmul.f32 %v5490, 0.70710677
        %v5507 = vmul.f32 %v5491, 0.70710677
        %v5508 = vmul.f32 %v5492, 0.70710677
        %v5509 = vmul.f32 %v5493, 0.70710677
        %v5510 = vmul.f32 %v5494, 0.70710677
        %v5511 = verf.f32.pop %v5503
        %v5512 = verf.f32.pop %v5504
        %v5513 = verf.f32.pop %v5505
        %v5514 = verf.f32.pop %v5506
        %v5515 = verf.f32.pop %v5507
        %v5516 = verf.f32.pop %v5508
        %v5517 = verf.f32.pop %v5509
        %v5518 = verf.f32.pop %v5510
        %v5519 = vadd.f32 %v5511, 1.0
        %v5520 = vadd.f32 %v5512, 1.0
        %v5521 = vadd.f32 %v5513, 1.0
        %v5522 = vadd.f32 %v5514, 1.0
        %v5523 = vadd.f32 %v5515, 1.0
        %v5524 = vadd.f32 %v5516, 1.0
        %v5525 = vadd.f32 %v5517, 1.0
        %v5526 = vadd.f32 %v5518, 1.0
        %v5527 = vmul.f32 %v5495, %v5519
        %v5528 = vmul.f32 %v5496, %v5520
        %v5529 = vmul.f32 %v5497, %v5521
        %v5530 = vmul.f32 %v5498, %v5522
        %v5531 = vmul.f32 %v5499, %v5523
        %v5532 = vmul.f32 %v5500, %v5524
        %v5533 = vmul.f32 %v5501, %v5525
        %v5534 = vmul.f32 %v5502, %v5526
        %5535 = vst [vmem:[%s363 + $0x1] sm:$0xff] %v5527
        %5536 = vst [vmem:[%s363 + $0x11] sm:$0xff] %v5528
        %5537 = vst [vmem:[%s363 + $0x21] sm:$0xff] %v5529
        %5538 = vst [vmem:[%s363 + $0x31] sm:$0xff] %v5530
        %5539 = vst [vmem:[%s363 + $0x41] sm:$0xff] %v5531
        %5540 = vst [vmem:[%s363 + $0x51] sm:$0xff] %v5532
        %5541 = vst [vmem:[%s363 + $0x61] sm:$0xff] %v5533
        %5542 = vst [vmem:[%s363 + $0x71] sm:$0xff] %v5534
        %v5543 = vld [vmem:[#allocation2] sm:$0xff]
        %v5544 = vld [vmem:[#allocation2 + $0x10] sm:$0xff]
        %v5545 = vld [vmem:[#allocation2 + $0x20] sm:$0xff]
        %v5546 = vld [vmem:[#allocation2 + $0x30] sm:$0xff]
        %v5547 = vld [vmem:[#allocation2 + $0x40] sm:$0xff]
        %v5548 = vld [vmem:[#allocation2 + $0x50] sm:$0xff]
        %v5549 = vld [vmem:[#allocation2 + $0x60] sm:$0xff]
        %v5550 = vld [vmem:[#allocation2 + $0x70] sm:$0xff]
        %s5551 = scalar_lea.vmem %s1, 4608
        %v5552 = vld [vmem:[%s5551] sm:$0xff]
        %v5553 = vld [vmem:[%s5551 + $0x8] sm:$0xff]
        %v5554 = vld [vmem:[%s5551 + $0x10] sm:$0xff]
        %v5555 = vld [vmem:[%s5551 + $0x18] sm:$0xff]
        %v5556 = vld [vmem:[%s5551 + $0x20] sm:$0xff]
        %v5557 = vld [vmem:[%s5551 + $0x28] sm:$0xff]
        %v5558 = vld [vmem:[%s5551 + $0x30] sm:$0xff]
        %v5559 = vld [vmem:[%s5551 + $0x38] sm:$0xff]
        %v5560 = vld [vmem:[%s5551 + $0x40] sm:$0xff]
        %v5561 = vld [vmem:[%s5551 + $0x48] sm:$0xff]
        %v5562 = vld [vmem:[%s5551 + $0x50] sm:$0xff]
        %v5563 = vld [vmem:[%s5551 + $0x58] sm:$0xff]
        %v5564 = vld [vmem:[%s5551 + $0x60] sm:$0xff]
        %v5565 = vld [vmem:[%s5551 + $0x68] sm:$0xff]
        %v5566 = vld [vmem:[%s5551 + $0x70] sm:$0xff]
        %v5567 = vld [vmem:[%s5551 + $0x78] sm:$0xff]
        %v5568 = vld [vmem:[#allocation2 + $0x1] sm:$0xff]
        %v5569 = vld [vmem:[#allocation2 + $0x11] sm:$0xff]
        %v5570 = vld [vmem:[#allocation2 + $0x21] sm:$0xff]
        %v5571 = vld [vmem:[#allocation2 + $0x31] sm:$0xff]
        %v5572 = vld [vmem:[#allocation2 + $0x41] sm:$0xff]
        %v5573 = vld [vmem:[#allocation2 + $0x51] sm:$0xff]
        %v5574 = vld [vmem:[#allocation2 + $0x61] sm:$0xff]
        %v5575 = vld [vmem:[#allocation2 + $0x71] sm:$0xff]
        %s5576 = scalar_lea.vmem %s1, 4736
        %v5577 = vld [vmem:[%s5576] sm:$0xff]
        %v5578 = vld [vmem:[%s5576 + $0x8] sm:$0xff]
        %v5579 = vld [vmem:[%s5576 + $0x10] sm:$0xff]
        %v5580 = vld [vmem:[%s5576 + $0x18] sm:$0xff]
        %v5581 = vld [vmem:[%s5576 + $0x20] sm:$0xff]
        %v5582 = vld [vmem:[%s5576 + $0x28] sm:$0xff]
        %v5583 = vld [vmem:[%s5576 + $0x30] sm:$0xff]
        %v5584 = vld [vmem:[%s5576 + $0x38] sm:$0xff]
        %v5585 = vld [vmem:[%s5576 + $0x40] sm:$0xff]
        %v5586 = vld [vmem:[%s5576 + $0x48] sm:$0xff]
        %v5587 = vld [vmem:[%s5576 + $0x50] sm:$0xff]
        %v5588 = vld [vmem:[%s5576 + $0x58] sm:$0xff]
        %v5589 = vld [vmem:[%s5576 + $0x60] sm:$0xff]
        %v5590 = vld [vmem:[%s5576 + $0x68] sm:$0xff]
        %v5591 = vld [vmem:[%s5576 + $0x70] sm:$0xff]
        %v5592 = vld [vmem:[%s5576 + $0x78] sm:$0xff]
        %5593 = vmatprep.subr.mxu0 0.0
        %5594 = vmatpush1.msra.mxu0 %v5592
        %5595 = vmatprep.subr.mxu0 0.0
        %5596 = vmatpush1.msra.mxu0 %v5591
        %5597 = vmatprep.subr.mxu0 0.0
        %5598 = vmatpush1.msra.mxu0 %v5590
        %5599 = vmatprep.subr.mxu0 0.0
        %5600 = vmatpush1.msra.mxu0 %v5589
        %5601 = vmatprep.subr.mxu0 0.0
        %5602 = vmatpush1.msra.mxu0 %v5588
        %5603 = vmatprep.subr.mxu0 0.0
        %5604 = vmatpush1.msra.mxu0 %v5587
        %5605 = vmatprep.subr.mxu0 0.0
        %5606 = vmatpush1.msra.mxu0 %v5586
        %5607 = vmatprep.subr.mxu0 0.0
        %5608 = vmatpush1.msra.mxu0 %v5585
        %5609 = vmatprep.subr.mxu0 0.0
        %5610 = vmatpush1.msra.mxu0 %v5584
        %5611 = vmatprep.subr.mxu0 0.0
        %5612 = vmatpush1.msra.mxu0 %v5583
        %5613 = vmatprep.subr.mxu0 0.0
        %5614 = vmatpush1.msra.mxu0 %v5582
        %5615 = vmatprep.subr.mxu0 0.0
        %5616 = vmatpush1.msra.mxu0 %v5581
        %5617 = vmatprep.subr.mxu0 0.0
        %5618 = vmatpush1.msra.mxu0 %v5580
        %5619 = vmatprep.subr.mxu0 0.0
        %5620 = vmatpush1.msra.mxu0 %v5579
        %5621 = vmatprep.subr.mxu0 0.0
        %5622 = vmatpush1.msra.mxu0 %v5578
        %5623 = vmatprep.subr.mxu0 0.0
        %5624 = vmatpush1.msra.mxu0 %v5577
        %5625 = vmatprep.subr.mxu0 0.0
        %5626 = vmatpush2.msra.mxu0 0.0
        %5627 = vmatprep.subr.mxu0 0.0
        %5628 = vmatpush2.msra.mxu0 0.0
        %5629 = vmatprep.subr.mxu0 0.0
        %5630 = vmatpush2.msra.mxu0 0.0
        %5631 = vmatprep.subr.mxu0 0.0
        %5632 = vmatpush2.msra.mxu0 0.0
        %5633 = vmatprep.subr.mxu0 0.0
        %5634 = vmatpush2.msra.mxu0 0.0
        %5635 = vmatprep.subr.mxu0 0.0
        %5636 = vmatpush2.msra.mxu0 0.0
        %5637 = vmatprep.subr.mxu0 0.0
        %5638 = vmatpush2.msra.mxu0 0.0
        %5639 = vmatprep.subr.mxu0 0.0
        %5640 = vmatpush2.msra.mxu0 0.0
        %5641 = vmatprep.subr.mxu0 0.0
        %5642 = vmatpush2.msra.mxu0 0.0
        %5643 = vmatprep.subr.mxu0 0.0
        %5644 = vmatpush2.msra.mxu0 0.0
        %5645 = vmatprep.subr.mxu0 0.0
        %5646 = vmatpush2.msra.mxu0 0.0
        %5647 = vmatprep.subr.mxu0 0.0
        %5648 = vmatpush2.msra.mxu0 0.0
        %5649 = vmatprep.subr.mxu0 0.0
        %5650 = vmatpush2.msra.mxu0 0.0
        %5651 = vmatprep.subr.mxu0 0.0
        %5652 = vmatpush2.msra.mxu0 0.0
        %5653 = vmatprep.subr.mxu0 0.0
        %5654 = vmatpush2.msra.mxu0 0.0
        %5655 = vmatprep.subr.mxu0 0.0
        %5656 = vmatpush2.msra.mxu0 0.0
        %5657 = vmatprep.mubr.f32.mxu0 0.0
        %5658 = vmatmul.mubr.f32.gmra.mxu0 %v5568
        %v5659 = vpop.f32.mrf.mxu0
        %v5660 = vadd.f32 0.0, %v5659
        %v5661 = vpop.f32.mrf.mxu0
        %5662 = vmatprep.mubr.f32.mxu0 0.0
        %5663 = vmatmul.mubr.f32.gmra.mxu0 %v5569
        %v5664 = vpop.f32.mrf.mxu0
        %v5665 = vadd.f32 0.0, %v5664
        %v5666 = vpop.f32.mrf.mxu0
        %5667 = vmatprep.mubr.f32.mxu0 0.0
        %5668 = vmatmul.mubr.f32.gmra.mxu0 %v5570
        %v5669 = vpop.f32.mrf.mxu0
        %v5670 = vadd.f32 0.0, %v5669
        %v5671 = vpop.f32.mrf.mxu0
        %5672 = vmatprep.mubr.f32.mxu0 0.0
        %5673 = vmatmul.mubr.f32.gmra.mxu0 %v5571
        %v5674 = vpop.f32.mrf.mxu0
        %v5675 = vadd.f32 0.0, %v5674
        %v5676 = vpop.f32.mrf.mxu0
        %5677 = vmatprep.mubr.f32.mxu0 0.0
        %5678 = vmatmul.mubr.f32.gmra.mxu0 %v5572
        %v5679 = vpop.f32.mrf.mxu0
        %v5680 = vadd.f32 0.0, %v5679
        %v5681 = vpop.f32.mrf.mxu0
        %5682 = vmatprep.mubr.f32.mxu0 0.0
        %5683 = vmatmul.mubr.f32.gmra.mxu0 %v5573
        %v5684 = vpop.f32.mrf.mxu0
        %v5685 = vadd.f32 0.0, %v5684
        %v5686 = vpop.f32.mrf.mxu0
        %5687 = vmatprep.mubr.f32.mxu0 0.0
        %5688 = vmatmul.mubr.f32.gmra.mxu0 %v5574
        %v5689 = vpop.f32.mrf.mxu0
        %v5690 = vadd.f32 0.0, %v5689
        %v5691 = vpop.f32.mrf.mxu0
        %5692 = vmatprep.mubr.f32.mxu0 0.0
        %5693 = vmatmul.mubr.f32.gmra.mxu0 %v5575
        %v5694 = vpop.f32.mrf.mxu0
        %v5695 = vadd.f32 0.0, %v5694
        %v5696 = vpop.f32.mrf.mxu0
        %5697 = vdwg.mxu0
        %5698 = vmatprep.subr.mxu0 0.0
        %5699 = vmatpush1.msra.mxu0 %v5567
        %5700 = vmatprep.subr.mxu0 0.0
        %5701 = vmatpush1.msra.mxu0 %v5566
        %5702 = vmatprep.subr.mxu0 0.0
        %5703 = vmatpush1.msra.mxu0 %v5565
        %5704 = vmatprep.subr.mxu0 0.0
        %5705 = vmatpush1.msra.mxu0 %v5564
        %5706 = vmatprep.subr.mxu0 0.0
        %5707 = vmatpush1.msra.mxu0 %v5563
        %5708 = vmatprep.subr.mxu0 0.0
        %5709 = vmatpush1.msra.mxu0 %v5562
        %5710 = vmatprep.subr.mxu0 0.0
        %5711 = vmatpush1.msra.mxu0 %v5561
        %5712 = vmatprep.subr.mxu0 0.0
        %5713 = vmatpush1.msra.mxu0 %v5560
        %5714 = vmatprep.subr.mxu0 0.0
        %5715 = vmatpush1.msra.mxu0 %v5559
        %5716 = vmatprep.subr.mxu0 0.0
        %5717 = vmatpush1.msra.mxu0 %v5558
        %5718 = vmatprep.subr.mxu0 0.0
        %5719 = vmatpush1.msra.mxu0 %v5557
        %5720 = vmatprep.subr.mxu0 0.0
        %5721 = vmatpush1.msra.mxu0 %v5556
        %5722 = vmatprep.subr.mxu0 0.0
        %5723 = vmatpush1.msra.mxu0 %v5555
        %5724 = vmatprep.subr.mxu0 0.0
        %5725 = vmatpush1.msra.mxu0 %v5554
        %5726 = vmatprep.subr.mxu0 0.0
        %5727 = vmatpush1.msra.mxu0 %v5553
        %5728 = vmatprep.subr.mxu0 0.0
        %5729 = vmatpush1.msra.mxu0 %v5552
        %5730 = vmatprep.subr.mxu0 0.0
        %5731 = vmatpush2.msra.mxu0 0.0
        %5732 = vmatprep.subr.mxu0 0.0
        %5733 = vmatpush2.msra.mxu0 0.0
        %5734 = vmatprep.subr.mxu0 0.0
        %5735 = vmatpush2.msra.mxu0 0.0
        %5736 = vmatprep.subr.mxu0 0.0
        %5737 = vmatpush2.msra.mxu0 0.0
        %5738 = vmatprep.subr.mxu0 0.0
        %5739 = vmatpush2.msra.mxu0 0.0
        %5740 = vmatprep.subr.mxu0 0.0
        %5741 = vmatpush2.msra.mxu0 0.0
        %5742 = vmatprep.subr.mxu0 0.0
        %5743 = vmatpush2.msra.mxu0 0.0
        %5744 = vmatprep.subr.mxu0 0.0
        %5745 = vmatpush2.msra.mxu0 0.0
        %5746 = vmatprep.subr.mxu0 0.0
        %5747 = vmatpush2.msra.mxu0 0.0
        %5748 = vmatprep.subr.mxu0 0.0
        %5749 = vmatpush2.msra.mxu0 0.0
        %5750 = vmatprep.subr.mxu0 0.0
        %5751 = vmatpush2.msra.mxu0 0.0
        %5752 = vmatprep.subr.mxu0 0.0
        %5753 = vmatpush2.msra.mxu0 0.0
        %5754 = vmatprep.subr.mxu0 0.0
        %5755 = vmatpush2.msra.mxu0 0.0
        %5756 = vmatprep.subr.mxu0 0.0
        %5757 = vmatpush2.msra.mxu0 0.0
        %5758 = vmatprep.subr.mxu0 0.0
        %5759 = vmatpush2.msra.mxu0 0.0
        %5760 = vmatprep.subr.mxu0 0.0
        %5761 = vmatpush2.msra.mxu0 0.0
        %5762 = vmatprep.mubr.f32.mxu0 0.0
        %5763 = vmatmul.mubr.f32.gmra.mxu0 %v5543
        %v5764 = vpop.f32.mrf.mxu0
        %v5765 = vadd.f32 %v5660, %v5764
        %v5766 = vpop.f32.mrf.mxu0
        %5767 = vmatprep.mubr.f32.mxu0 0.0
        %5768 = vmatmul.mubr.f32.gmra.mxu0 %v5544
        %v5769 = vpop.f32.mrf.mxu0
        %v5770 = vadd.f32 %v5665, %v5769
        %v5771 = vpop.f32.mrf.mxu0
        %5772 = vmatprep.mubr.f32.mxu0 0.0
        %5773 = vmatmul.mubr.f32.gmra.mxu0 %v5545
        %v5774 = vpop.f32.mrf.mxu0
        %v5775 = vadd.f32 %v5670, %v5774
        %v5776 = vpop.f32.mrf.mxu0
        %5777 = vmatprep.mubr.f32.mxu0 0.0
        %5778 = vmatmul.mubr.f32.gmra.mxu0 %v5546
        %v5779 = vpop.f32.mrf.mxu0
        %v5780 = vadd.f32 %v5675, %v5779
        %v5781 = vpop.f32.mrf.mxu0
        %5782 = vmatprep.mubr.f32.mxu0 0.0
        %5783 = vmatmul.mubr.f32.gmra.mxu0 %v5547
        %v5784 = vpop.f32.mrf.mxu0
        %v5785 = vadd.f32 %v5680, %v5784
        %v5786 = vpop.f32.mrf.mxu0
        %5787 = vmatprep.mubr.f32.mxu0 0.0
        %5788 = vmatmul.mubr.f32.gmra.mxu0 %v5548
        %v5789 = vpop.f32.mrf.mxu0
        %v5790 = vadd.f32 %v5685, %v5789
        %v5791 = vpop.f32.mrf.mxu0
        %5792 = vmatprep.mubr.f32.mxu0 0.0
        %5793 = vmatmul.mubr.f32.gmra.mxu0 %v5549
        %v5794 = vpop.f32.mrf.mxu0
        %v5795 = vadd.f32 %v5690, %v5794
        %v5796 = vpop.f32.mrf.mxu0
        %5797 = vmatprep.mubr.f32.mxu0 0.0
        %5798 = vmatmul.mubr.f32.gmra.mxu0 %v5550
        %v5799 = vpop.f32.mrf.mxu0
        %v5800 = vadd.f32 %v5695, %v5799
        %v5801 = vpop.f32.mrf.mxu0
        %5802 = vdwg.mxu0
        %v5803 = vld [vmem:[#allocation2 + $0x2] sm:$0xff]
        %v5804 = vld [vmem:[#allocation2 + $0x12] sm:$0xff]
        %v5805 = vld [vmem:[#allocation2 + $0x22] sm:$0xff]
        %v5806 = vld [vmem:[#allocation2 + $0x32] sm:$0xff]
        %v5807 = vld [vmem:[#allocation2 + $0x42] sm:$0xff]
        %v5808 = vld [vmem:[#allocation2 + $0x52] sm:$0xff]
        %v5809 = vld [vmem:[#allocation2 + $0x62] sm:$0xff]
        %v5810 = vld [vmem:[#allocation2 + $0x72] sm:$0xff]
        %s5811 = scalar_lea.vmem %s1, 4864
        %v5812 = vld [vmem:[%s5811] sm:$0xff]
        %v5813 = vld [vmem:[%s5811 + $0x8] sm:$0xff]
        %v5814 = vld [vmem:[%s5811 + $0x10] sm:$0xff]
        %v5815 = vld [vmem:[%s5811 + $0x18] sm:$0xff]
        %v5816 = vld [vmem:[%s5811 + $0x20] sm:$0xff]
        %v5817 = vld [vmem:[%s5811 + $0x28] sm:$0xff]
        %v5818 = vld [vmem:[%s5811 + $0x30] sm:$0xff]
        %v5819 = vld [vmem:[%s5811 + $0x38] sm:$0xff]
        %v5820 = vld [vmem:[%s5811 + $0x40] sm:$0xff]
        %v5821 = vld [vmem:[%s5811 + $0x48] sm:$0xff]
        %v5822 = vld [vmem:[%s5811 + $0x50] sm:$0xff]
        %v5823 = vld [vmem:[%s5811 + $0x58] sm:$0xff]
        %v5824 = vld [vmem:[%s5811 + $0x60] sm:$0xff]
        %v5825 = vld [vmem:[%s5811 + $0x68] sm:$0xff]
        %v5826 = vld [vmem:[%s5811 + $0x70] sm:$0xff]
        %v5827 = vld [vmem:[%s5811 + $0x78] sm:$0xff]
        %5828 = vmatprep.subr.mxu0 0.0
        %5829 = vmatpush1.msra.mxu0 %v5827
        %5830 = vmatprep.subr.mxu0 0.0
        %5831 = vmatpush1.msra.mxu0 %v5826
        %5832 = vmatprep.subr.mxu0 0.0
        %5833 = vmatpush1.msra.mxu0 %v5825
        %5834 = vmatprep.subr.mxu0 0.0
        %5835 = vmatpush1.msra.mxu0 %v5824
        %5836 = vmatprep.subr.mxu0 0.0
        %5837 = vmatpush1.msra.mxu0 %v5823
        %5838 = vmatprep.subr.mxu0 0.0
        %5839 = vmatpush1.msra.mxu0 %v5822
        %5840 = vmatprep.subr.mxu0 0.0
        %5841 = vmatpush1.msra.mxu0 %v5821
        %5842 = vmatprep.subr.mxu0 0.0
        %5843 = vmatpush1.msra.mxu0 %v5820
        %5844 = vmatprep.subr.mxu0 0.0
        %5845 = vmatpush1.msra.mxu0 %v5819
        %5846 = vmatprep.subr.mxu0 0.0
        %5847 = vmatpush1.msra.mxu0 %v5818
        %5848 = vmatprep.subr.mxu0 0.0
        %5849 = vmatpush1.msra.mxu0 %v5817
        %5850 = vmatprep.subr.mxu0 0.0
        %5851 = vmatpush1.msra.mxu0 %v5816
        %5852 = vmatprep.subr.mxu0 0.0
        %5853 = vmatpush1.msra.mxu0 %v5815
        %5854 = vmatprep.subr.mxu0 0.0
        %5855 = vmatpush1.msra.mxu0 %v5814
        %5856 = vmatprep.subr.mxu0 0.0
        %5857 = vmatpush1.msra.mxu0 %v5813
        %5858 = vmatprep.subr.mxu0 0.0
        %5859 = vmatpush1.msra.mxu0 %v5812
        %5860 = vmatprep.subr.mxu0 0.0
        %5861 = vmatpush2.msra.mxu0 0.0
        %5862 = vmatprep.subr.mxu0 0.0
        %5863 = vmatpush2.msra.mxu0 0.0
        %5864 = vmatprep.subr.mxu0 0.0
        %5865 = vmatpush2.msra.mxu0 0.0
        %5866 = vmatprep.subr.mxu0 0.0
        %5867 = vmatpush2.msra.mxu0 0.0
        %5868 = vmatprep.subr.mxu0 0.0
        %5869 = vmatpush2.msra.mxu0 0.0
        %5870 = vmatprep.subr.mxu0 0.0
        %5871 = vmatpush2.msra.mxu0 0.0
        %5872 = vmatprep.subr.mxu0 0.0
        %5873 = vmatpush2.msra.mxu0 0.0
        %5874 = vmatprep.subr.mxu0 0.0
        %5875 = vmatpush2.msra.mxu0 0.0
        %5876 = vmatprep.subr.mxu0 0.0
        %5877 = vmatpush2.msra.mxu0 0.0
        %5878 = vmatprep.subr.mxu0 0.0
        %5879 = vmatpush2.msra.mxu0 0.0
        %5880 = vmatprep.subr.mxu0 0.0
        %5881 = vmatpush2.msra.mxu0 0.0
        %5882 = vmatprep.subr.mxu0 0.0
        %5883 = vmatpush2.msra.mxu0 0.0
        %5884 = vmatprep.subr.mxu0 0.0
        %5885 = vmatpush2.msra.mxu0 0.0
        %5886 = vmatprep.subr.mxu0 0.0
        %5887 = vmatpush2.msra.mxu0 0.0
        %5888 = vmatprep.subr.mxu0 0.0
        %5889 = vmatpush2.msra.mxu0 0.0
        %5890 = vmatprep.subr.mxu0 0.0
        %5891 = vmatpush2.msra.mxu0 0.0
        %5892 = vmatprep.mubr.f32.mxu0 0.0
        %5893 = vmatmul.mubr.f32.gmra.mxu0 %v5803
        %v5894 = vpop.f32.mrf.mxu0
        %v5895 = vadd.f32 0.0, %v5894
        %v5896 = vpop.f32.mrf.mxu0
        %5897 = vmatprep.mubr.f32.mxu0 0.0
        %5898 = vmatmul.mubr.f32.gmra.mxu0 %v5804
        %v5899 = vpop.f32.mrf.mxu0
        %v5900 = vadd.f32 0.0, %v5899
        %v5901 = vpop.f32.mrf.mxu0
        %5902 = vmatprep.mubr.f32.mxu0 0.0
        %5903 = vmatmul.mubr.f32.gmra.mxu0 %v5805
        %v5904 = vpop.f32.mrf.mxu0
        %v5905 = vadd.f32 0.0, %v5904
        %v5906 = vpop.f32.mrf.mxu0
        %5907 = vmatprep.mubr.f32.mxu0 0.0
        %5908 = vmatmul.mubr.f32.gmra.mxu0 %v5806
        %v5909 = vpop.f32.mrf.mxu0
        %v5910 = vadd.f32 0.0, %v5909
        %v5911 = vpop.f32.mrf.mxu0
        %5912 = vmatprep.mubr.f32.mxu0 0.0
        %5913 = vmatmul.mubr.f32.gmra.mxu0 %v5807
        %v5914 = vpop.f32.mrf.mxu0
        %v5915 = vadd.f32 0.0, %v5914
        %v5916 = vpop.f32.mrf.mxu0
        %5917 = vmatprep.mubr.f32.mxu0 0.0
        %5918 = vmatmul.mubr.f32.gmra.mxu0 %v5808
        %v5919 = vpop.f32.mrf.mxu0
        %v5920 = vadd.f32 0.0, %v5919
        %v5921 = vpop.f32.mrf.mxu0
        %5922 = vmatprep.mubr.f32.mxu0 0.0
        %5923 = vmatmul.mubr.f32.gmra.mxu0 %v5809
        %v5924 = vpop.f32.mrf.mxu0
        %v5925 = vadd.f32 0.0, %v5924
        %v5926 = vpop.f32.mrf.mxu0
        %5927 = vmatprep.mubr.f32.mxu0 0.0
        %5928 = vmatmul.mubr.f32.gmra.mxu0 %v5810
        %v5929 = vpop.f32.mrf.mxu0
        %v5930 = vadd.f32 0.0, %v5929
        %v5931 = vpop.f32.mrf.mxu0
        %5932 = vdwg.mxu0
        %v5933 = vadd.f32 %v5765, %v5895
        %v5934 = vadd.f32 %v5770, %v5900
        %v5935 = vadd.f32 %v5775, %v5905
        %v5936 = vadd.f32 %v5780, %v5910
        %v5937 = vadd.f32 %v5785, %v5915
        %v5938 = vadd.f32 %v5790, %v5920
        %v5939 = vadd.f32 %v5795, %v5925
        %v5940 = vadd.f32 %v5800, %v5930
        %v5941 = vld [vmem:[%s363] sm:$0xff]
        %v5942 = vld [vmem:[%s363 + $0x10] sm:$0xff]
        %v5943 = vld [vmem:[%s363 + $0x20] sm:$0xff]
        %v5944 = vld [vmem:[%s363 + $0x30] sm:$0xff]
        %v5945 = vld [vmem:[%s363 + $0x40] sm:$0xff]
        %v5946 = vld [vmem:[%s363 + $0x50] sm:$0xff]
        %v5947 = vld [vmem:[%s363 + $0x60] sm:$0xff]
        %v5948 = vld [vmem:[%s363 + $0x70] sm:$0xff]
        %s5949 = scalar_lea.vmem %s1, 4992
        %v5950 = vld [vmem:[%s5949] sm:$0xff]
        %v5951 = vld [vmem:[%s5949 + $0x8] sm:$0xff]
        %v5952 = vld [vmem:[%s5949 + $0x10] sm:$0xff]
        %v5953 = vld [vmem:[%s5949 + $0x18] sm:$0xff]
        %v5954 = vld [vmem:[%s5949 + $0x20] sm:$0xff]
        %v5955 = vld [vmem:[%s5949 + $0x28] sm:$0xff]
        %v5956 = vld [vmem:[%s5949 + $0x30] sm:$0xff]
        %v5957 = vld [vmem:[%s5949 + $0x38] sm:$0xff]
        %v5958 = vld [vmem:[%s5949 + $0x40] sm:$0xff]
        %v5959 = vld [vmem:[%s5949 + $0x48] sm:$0xff]
        %v5960 = vld [vmem:[%s5949 + $0x50] sm:$0xff]
        %v5961 = vld [vmem:[%s5949 + $0x58] sm:$0xff]
        %v5962 = vld [vmem:[%s5949 + $0x60] sm:$0xff]
        %v5963 = vld [vmem:[%s5949 + $0x68] sm:$0xff]
        %v5964 = vld [vmem:[%s5949 + $0x70] sm:$0xff]
        %v5965 = vld [vmem:[%s5949 + $0x78] sm:$0xff]
        %5966 = vmatprep.subr.mxu0 0.0
        %5967 = vmatpush1.msra.mxu0 %v5965
        %5968 = vmatprep.subr.mxu0 0.0
        %5969 = vmatpush1.msra.mxu0 %v5964
        %5970 = vmatprep.subr.mxu0 0.0
        %5971 = vmatpush1.msra.mxu0 %v5963
        %5972 = vmatprep.subr.mxu0 0.0
        %5973 = vmatpush1.msra.mxu0 %v5962
        %5974 = vmatprep.subr.mxu0 0.0
        %5975 = vmatpush1.msra.mxu0 %v5961
        %5976 = vmatprep.subr.mxu0 0.0
        %5977 = vmatpush1.msra.mxu0 %v5960
        %5978 = vmatprep.subr.mxu0 0.0
        %5979 = vmatpush1.msra.mxu0 %v5959
        %5980 = vmatprep.subr.mxu0 0.0
        %5981 = vmatpush1.msra.mxu0 %v5958
        %5982 = vmatprep.subr.mxu0 0.0
        %5983 = vmatpush1.msra.mxu0 %v5957
        %5984 = vmatprep.subr.mxu0 0.0
        %5985 = vmatpush1.msra.mxu0 %v5956
        %5986 = vmatprep.subr.mxu0 0.0
        %5987 = vmatpush1.msra.mxu0 %v5955
        %5988 = vmatprep.subr.mxu0 0.0
        %5989 = vmatpush1.msra.mxu0 %v5954
        %5990 = vmatprep.subr.mxu0 0.0
        %5991 = vmatpush1.msra.mxu0 %v5953
        %5992 = vmatprep.subr.mxu0 0.0
        %5993 = vmatpush1.msra.mxu0 %v5952
        %5994 = vmatprep.subr.mxu0 0.0
        %5995 = vmatpush1.msra.mxu0 %v5951
        %5996 = vmatprep.subr.mxu0 0.0
        %5997 = vmatpush1.msra.mxu0 %v5950
        %5998 = vmatprep.subr.mxu0 0.0
        %5999 = vmatpush2.msra.mxu0 0.0
        %6000 = vmatprep.subr.mxu0 0.0
        %6001 = vmatpush2.msra.mxu0 0.0
        %6002 = vmatprep.subr.mxu0 0.0
        %6003 = vmatpush2.msra.mxu0 0.0
        %6004 = vmatprep.subr.mxu0 0.0
        %6005 = vmatpush2.msra.mxu0 0.0
        %6006 = vmatprep.subr.mxu0 0.0
        %6007 = vmatpush2.msra.mxu0 0.0
        %6008 = vmatprep.subr.mxu0 0.0
        %6009 = vmatpush2.msra.mxu0 0.0
        %6010 = vmatprep.subr.mxu0 0.0
        %6011 = vmatpush2.msra.mxu0 0.0
        %6012 = vmatprep.subr.mxu0 0.0
        %6013 = vmatpush2.msra.mxu0 0.0
        %6014 = vmatprep.subr.mxu0 0.0
        %6015 = vmatpush2.msra.mxu0 0.0
        %6016 = vmatprep.subr.mxu0 0.0
        %6017 = vmatpush2.msra.mxu0 0.0
        %6018 = vmatprep.subr.mxu0 0.0
        %6019 = vmatpush2.msra.mxu0 0.0
        %6020 = vmatprep.subr.mxu0 0.0
        %6021 = vmatpush2.msra.mxu0 0.0
        %6022 = vmatprep.subr.mxu0 0.0
        %6023 = vmatpush2.msra.mxu0 0.0
        %6024 = vmatprep.subr.mxu0 0.0
        %6025 = vmatpush2.msra.mxu0 0.0
        %6026 = vmatprep.subr.mxu0 0.0
        %6027 = vmatpush2.msra.mxu0 0.0
        %6028 = vmatprep.subr.mxu0 0.0
        %6029 = vmatpush2.msra.mxu0 0.0
        %6030 = vmatprep.mubr.f32.mxu0 0.0
        %6031 = vmatmul.mubr.f32.gmra.mxu0 %v5941
        %v6032 = vpop.f32.mrf.mxu0
        %v6033 = vadd.f32 0.0, %v6032
        %v6034 = vpop.f32.mrf.mxu0
        %6035 = vmatprep.mubr.f32.mxu0 0.0
        %6036 = vmatmul.mubr.f32.gmra.mxu0 %v5942
        %v6037 = vpop.f32.mrf.mxu0
        %v6038 = vadd.f32 0.0, %v6037
        %v6039 = vpop.f32.mrf.mxu0
        %6040 = vmatprep.mubr.f32.mxu0 0.0
        %6041 = vmatmul.mubr.f32.gmra.mxu0 %v5943
        %v6042 = vpop.f32.mrf.mxu0
        %v6043 = vadd.f32 0.0, %v6042
        %v6044 = vpop.f32.mrf.mxu0
        %6045 = vmatprep.mubr.f32.mxu0 0.0
        %6046 = vmatmul.mubr.f32.gmra.mxu0 %v5944
        %v6047 = vpop.f32.mrf.mxu0
        %v6048 = vadd.f32 0.0, %v6047
        %v6049 = vpop.f32.mrf.mxu0
        %6050 = vmatprep.mubr.f32.mxu0 0.0
        %6051 = vmatmul.mubr.f32.gmra.mxu0 %v5945
        %v6052 = vpop.f32.mrf.mxu0
        %v6053 = vadd.f32 0.0, %v6052
        %v6054 = vpop.f32.mrf.mxu0
        %6055 = vmatprep.mubr.f32.mxu0 0.0
        %6056 = vmatmul.mubr.f32.gmra.mxu0 %v5946
        %v6057 = vpop.f32.mrf.mxu0
        %v6058 = vadd.f32 0.0, %v6057
        %v6059 = vpop.f32.mrf.mxu0
        %6060 = vmatprep.mubr.f32.mxu0 0.0
        %6061 = vmatmul.mubr.f32.gmra.mxu0 %v5947
        %v6062 = vpop.f32.mrf.mxu0
        %v6063 = vadd.f32 0.0, %v6062
        %v6064 = vpop.f32.mrf.mxu0
        %6065 = vmatprep.mubr.f32.mxu0 0.0
        %6066 = vmatmul.mubr.f32.gmra.mxu0 %v5948
        %v6067 = vpop.f32.mrf.mxu0
        %v6068 = vadd.f32 0.0, %v6067
        %v6069 = vpop.f32.mrf.mxu0
        %6070 = vdwg.mxu0
        %v6071 = vadd.f32 %v5933, %v6033
        %v6072 = vadd.f32 %v5934, %v6038
        %v6073 = vadd.f32 %v5935, %v6043
        %v6074 = vadd.f32 %v5936, %v6048
        %v6075 = vadd.f32 %v5937, %v6053
        %v6076 = vadd.f32 %v5938, %v6058
        %v6077 = vadd.f32 %v5939, %v6063
        %v6078 = vadd.f32 %v5940, %v6068
        %v6079 = vld [vmem:[%s363 + $0x1] sm:$0xff]
        %v6080 = vld [vmem:[%s363 + $0x11] sm:$0xff]
        %v6081 = vld [vmem:[%s363 + $0x21] sm:$0xff]
        %v6082 = vld [vmem:[%s363 + $0x31] sm:$0xff]
        %v6083 = vld [vmem:[%s363 + $0x41] sm:$0xff]
        %v6084 = vld [vmem:[%s363 + $0x51] sm:$0xff]
        %v6085 = vld [vmem:[%s363 + $0x61] sm:$0xff]
        %v6086 = vld [vmem:[%s363 + $0x71] sm:$0xff]
        %s6087 = scalar_lea.vmem %s1, 5120
        %v6088 = vld [vmem:[%s6087] sm:$0xff]
        %v6089 = vld [vmem:[%s6087 + $0x8] sm:$0xff]
        %v6090 = vld [vmem:[%s6087 + $0x10] sm:$0xff]
        %v6091 = vld [vmem:[%s6087 + $0x18] sm:$0xff]
        %v6092 = vld [vmem:[%s6087 + $0x20] sm:$0xff]
        %v6093 = vld [vmem:[%s6087 + $0x28] sm:$0xff]
        %v6094 = vld [vmem:[%s6087 + $0x30] sm:$0xff]
        %v6095 = vld [vmem:[%s6087 + $0x38] sm:$0xff]
        %v6096 = vld [vmem:[%s6087 + $0x40] sm:$0xff]
        %v6097 = vld [vmem:[%s6087 + $0x48] sm:$0xff]
        %v6098 = vld [vmem:[%s6087 + $0x50] sm:$0xff]
        %v6099 = vld [vmem:[%s6087 + $0x58] sm:$0xff]
        %v6100 = vld [vmem:[%s6087 + $0x60] sm:$0xff]
        %v6101 = vld [vmem:[%s6087 + $0x68] sm:$0xff]
        %v6102 = vld [vmem:[%s6087 + $0x70] sm:$0xff]
        %v6103 = vld [vmem:[%s6087 + $0x78] sm:$0xff]
        %6104 = vmatprep.subr.mxu0 0.0
        %6105 = vmatpush1.msra.mxu0 %v6103
        %6106 = vmatprep.subr.mxu0 0.0
        %6107 = vmatpush1.msra.mxu0 %v6102
        %6108 = vmatprep.subr.mxu0 0.0
        %6109 = vmatpush1.msra.mxu0 %v6101
        %6110 = vmatprep.subr.mxu0 0.0
        %6111 = vmatpush1.msra.mxu0 %v6100
        %6112 = vmatprep.subr.mxu0 0.0
        %6113 = vmatpush1.msra.mxu0 %v6099
        %6114 = vmatprep.subr.mxu0 0.0
        %6115 = vmatpush1.msra.mxu0 %v6098
        %6116 = vmatprep.subr.mxu0 0.0
        %6117 = vmatpush1.msra.mxu0 %v6097
        %6118 = vmatprep.subr.mxu0 0.0
        %6119 = vmatpush1.msra.mxu0 %v6096
        %6120 = vmatprep.subr.mxu0 0.0
        %6121 = vmatpush1.msra.mxu0 %v6095
        %6122 = vmatprep.subr.mxu0 0.0
        %6123 = vmatpush1.msra.mxu0 %v6094
        %6124 = vmatprep.subr.mxu0 0.0
        %6125 = vmatpush1.msra.mxu0 %v6093
        %6126 = vmatprep.subr.mxu0 0.0
        %6127 = vmatpush1.msra.mxu0 %v6092
        %6128 = vmatprep.subr.mxu0 0.0
        %6129 = vmatpush1.msra.mxu0 %v6091
        %6130 = vmatprep.subr.mxu0 0.0
        %6131 = vmatpush1.msra.mxu0 %v6090
        %6132 = vmatprep.subr.mxu0 0.0
        %6133 = vmatpush1.msra.mxu0 %v6089
        %6134 = vmatprep.subr.mxu0 0.0
        %6135 = vmatpush1.msra.mxu0 %v6088
        %6136 = vmatprep.subr.mxu0 0.0
        %6137 = vmatpush2.msra.mxu0 0.0
        %6138 = vmatprep.subr.mxu0 0.0
        %6139 = vmatpush2.msra.mxu0 0.0
        %6140 = vmatprep.subr.mxu0 0.0
        %6141 = vmatpush2.msra.mxu0 0.0
        %6142 = vmatprep.subr.mxu0 0.0
        %6143 = vmatpush2.msra.mxu0 0.0
        %6144 = vmatprep.subr.mxu0 0.0
        %6145 = vmatpush2.msra.mxu0 0.0
        %6146 = vmatprep.subr.mxu0 0.0
        %6147 = vmatpush2.msra.mxu0 0.0
        %6148 = vmatprep.subr.mxu0 0.0
        %6149 = vmatpush2.msra.mxu0 0.0
        %6150 = vmatprep.subr.mxu0 0.0
        %6151 = vmatpush2.msra.mxu0 0.0
        %6152 = vmatprep.subr.mxu0 0.0
        %6153 = vmatpush2.msra.mxu0 0.0
        %6154 = vmatprep.subr.mxu0 0.0
        %6155 = vmatpush2.msra.mxu0 0.0
        %6156 = vmatprep.subr.mxu0 0.0
        %6157 = vmatpush2.msra.mxu0 0.0
        %6158 = vmatprep.subr.mxu0 0.0
        %6159 = vmatpush2.msra.mxu0 0.0
        %6160 = vmatprep.subr.mxu0 0.0
        %6161 = vmatpush2.msra.mxu0 0.0
        %6162 = vmatprep.subr.mxu0 0.0
        %6163 = vmatpush2.msra.mxu0 0.0
        %6164 = vmatprep.subr.mxu0 0.0
        %6165 = vmatpush2.msra.mxu0 0.0
        %6166 = vmatprep.subr.mxu0 0.0
        %6167 = vmatpush2.msra.mxu0 0.0
        %6168 = vmatprep.mubr.f32.mxu0 0.0
        %6169 = vmatmul.mubr.f32.gmra.mxu0 %v6079
        %v6170 = vpop.f32.mrf.mxu0
        %v6171 = vadd.f32 0.0, %v6170
        %v6172 = vpop.f32.mrf.mxu0
        %6173 = vmatprep.mubr.f32.mxu0 0.0
        %6174 = vmatmul.mubr.f32.gmra.mxu0 %v6080
        %v6175 = vpop.f32.mrf.mxu0
        %v6176 = vadd.f32 0.0, %v6175
        %v6177 = vpop.f32.mrf.mxu0
        %6178 = vmatprep.mubr.f32.mxu0 0.0
        %6179 = vmatmul.mubr.f32.gmra.mxu0 %v6081
        %v6180 = vpop.f32.mrf.mxu0
        %v6181 = vadd.f32 0.0, %v6180
        %v6182 = vpop.f32.mrf.mxu0
        %6183 = vmatprep.mubr.f32.mxu0 0.0
        %6184 = vmatmul.mubr.f32.gmra.mxu0 %v6082
        %v6185 = vpop.f32.mrf.mxu0
        %v6186 = vadd.f32 0.0, %v6185
        %v6187 = vpop.f32.mrf.mxu0
        %6188 = vmatprep.mubr.f32.mxu0 0.0
        %6189 = vmatmul.mubr.f32.gmra.mxu0 %v6083
        %v6190 = vpop.f32.mrf.mxu0
        %v6191 = vadd.f32 0.0, %v6190
        %v6192 = vpop.f32.mrf.mxu0
        %6193 = vmatprep.mubr.f32.mxu0 0.0
        %6194 = vmatmul.mubr.f32.gmra.mxu0 %v6084
        %v6195 = vpop.f32.mrf.mxu0
        %v6196 = vadd.f32 0.0, %v6195
        %v6197 = vpop.f32.mrf.mxu0
        %6198 = vmatprep.mubr.f32.mxu0 0.0
        %6199 = vmatmul.mubr.f32.gmra.mxu0 %v6085
        %v6200 = vpop.f32.mrf.mxu0
        %v6201 = vadd.f32 0.0, %v6200
        %v6202 = vpop.f32.mrf.mxu0
        %6203 = vmatprep.mubr.f32.mxu0 0.0
        %6204 = vmatmul.mubr.f32.gmra.mxu0 %v6086
        %v6205 = vpop.f32.mrf.mxu0
        %v6206 = vadd.f32 0.0, %v6205
        %v6207 = vpop.f32.mrf.mxu0
        %6208 = vdwg.mxu0
        %v6209 = vadd.f32 %v6071, %v6171
        %v6210 = vadd.f32 %v6072, %v6176
        %v6211 = vadd.f32 %v6073, %v6181
        %v6212 = vadd.f32 %v6074, %v6186
        %v6213 = vadd.f32 %v6075, %v6191
        %v6214 = vadd.f32 %v6076, %v6196
        %v6215 = vadd.f32 %v6077, %v6201
        %v6216 = vadd.f32 %v6078, %v6206
        %v6217 = vld [vmem:[%s363 + $0x2] sm:$0xff]
        %v6218 = vld [vmem:[%s363 + $0x12] sm:$0xff]
        %v6219 = vld [vmem:[%s363 + $0x22] sm:$0xff]
        %v6220 = vld [vmem:[%s363 + $0x32] sm:$0xff]
        %v6221 = vld [vmem:[%s363 + $0x42] sm:$0xff]
        %v6222 = vld [vmem:[%s363 + $0x52] sm:$0xff]
        %v6223 = vld [vmem:[%s363 + $0x62] sm:$0xff]
        %v6224 = vld [vmem:[%s363 + $0x72] sm:$0xff]
        %s6225 = scalar_lea.vmem %s1, 5248
        %v6226 = vld [vmem:[%s6225] sm:$0xff]
        %v6227 = vld [vmem:[%s6225 + $0x8] sm:$0xff]
        %v6228 = vld [vmem:[%s6225 + $0x10] sm:$0xff]
        %v6229 = vld [vmem:[%s6225 + $0x18] sm:$0xff]
        %v6230 = vld [vmem:[%s6225 + $0x20] sm:$0xff]
        %v6231 = vld [vmem:[%s6225 + $0x28] sm:$0xff]
        %v6232 = vld [vmem:[%s6225 + $0x30] sm:$0xff]
        %v6233 = vld [vmem:[%s6225 + $0x38] sm:$0xff]
        %v6234 = vld [vmem:[%s6225 + $0x40] sm:$0xff]
        %v6235 = vld [vmem:[%s6225 + $0x48] sm:$0xff]
        %v6236 = vld [vmem:[%s6225 + $0x50] sm:$0xff]
        %v6237 = vld [vmem:[%s6225 + $0x58] sm:$0xff]
        %v6238 = vld [vmem:[%s6225 + $0x60] sm:$0xff]
        %v6239 = vld [vmem:[%s6225 + $0x68] sm:$0xff]
        %v6240 = vld [vmem:[%s6225 + $0x70] sm:$0xff]
        %v6241 = vld [vmem:[%s6225 + $0x78] sm:$0xff]
        %6242 = vmatprep.subr.mxu0 0.0
        %6243 = vmatpush1.msra.mxu0 %v6241
        %6244 = vmatprep.subr.mxu0 0.0
        %6245 = vmatpush1.msra.mxu0 %v6240
        %6246 = vmatprep.subr.mxu0 0.0
        %6247 = vmatpush1.msra.mxu0 %v6239
        %6248 = vmatprep.subr.mxu0 0.0
        %6249 = vmatpush1.msra.mxu0 %v6238
        %6250 = vmatprep.subr.mxu0 0.0
        %6251 = vmatpush1.msra.mxu0 %v6237
        %6252 = vmatprep.subr.mxu0 0.0
        %6253 = vmatpush1.msra.mxu0 %v6236
        %6254 = vmatprep.subr.mxu0 0.0
        %6255 = vmatpush1.msra.mxu0 %v6235
        %6256 = vmatprep.subr.mxu0 0.0
        %6257 = vmatpush1.msra.mxu0 %v6234
        %6258 = vmatprep.subr.mxu0 0.0
        %6259 = vmatpush1.msra.mxu0 %v6233
        %6260 = vmatprep.subr.mxu0 0.0
        %6261 = vmatpush1.msra.mxu0 %v6232
        %6262 = vmatprep.subr.mxu0 0.0
        %6263 = vmatpush1.msra.mxu0 %v6231
        %6264 = vmatprep.subr.mxu0 0.0
        %6265 = vmatpush1.msra.mxu0 %v6230
        %6266 = vmatprep.subr.mxu0 0.0
        %6267 = vmatpush1.msra.mxu0 %v6229
        %6268 = vmatprep.subr.mxu0 0.0
        %6269 = vmatpush1.msra.mxu0 %v6228
        %6270 = vmatprep.subr.mxu0 0.0
        %6271 = vmatpush1.msra.mxu0 %v6227
        %6272 = vmatprep.subr.mxu0 0.0
        %6273 = vmatpush1.msra.mxu0 %v6226
        %6274 = vmatprep.subr.mxu0 0.0
        %6275 = vmatpush2.msra.mxu0 0.0
        %6276 = vmatprep.subr.mxu0 0.0
        %6277 = vmatpush2.msra.mxu0 0.0
        %6278 = vmatprep.subr.mxu0 0.0
        %6279 = vmatpush2.msra.mxu0 0.0
        %6280 = vmatprep.subr.mxu0 0.0
        %6281 = vmatpush2.msra.mxu0 0.0
        %6282 = vmatprep.subr.mxu0 0.0
        %6283 = vmatpush2.msra.mxu0 0.0
        %6284 = vmatprep.subr.mxu0 0.0
        %6285 = vmatpush2.msra.mxu0 0.0
        %6286 = vmatprep.subr.mxu0 0.0
        %6287 = vmatpush2.msra.mxu0 0.0
        %6288 = vmatprep.subr.mxu0 0.0
        %6289 = vmatpush2.msra.mxu0 0.0
        %6290 = vmatprep.subr.mxu0 0.0
        %6291 = vmatpush2.msra.mxu0 0.0
        %6292 = vmatprep.subr.mxu0 0.0
        %6293 = vmatpush2.msra.mxu0 0.0
        %6294 = vmatprep.subr.mxu0 0.0
        %6295 = vmatpush2.msra.mxu0 0.0
        %6296 = vmatprep.subr.mxu0 0.0
        %6297 = vmatpush2.msra.mxu0 0.0
        %6298 = vmatprep.subr.mxu0 0.0
        %6299 = vmatpush2.msra.mxu0 0.0
        %6300 = vmatprep.subr.mxu0 0.0
        %6301 = vmatpush2.msra.mxu0 0.0
        %6302 = vmatprep.subr.mxu0 0.0
        %6303 = vmatpush2.msra.mxu0 0.0
        %6304 = vmatprep.subr.mxu0 0.0
        %6305 = vmatpush2.msra.mxu0 0.0
        %6306 = vmatprep.mubr.f32.mxu0 0.0
        %6307 = vmatmul.mubr.f32.gmra.mxu0 %v6217
        %v6308 = vpop.f32.mrf.mxu0
        %v6309 = vadd.f32 0.0, %v6308
        %v6310 = vpop.f32.mrf.mxu0
        %6311 = vmatprep.mubr.f32.mxu0 0.0
        %6312 = vmatmul.mubr.f32.gmra.mxu0 %v6218
        %v6313 = vpop.f32.mrf.mxu0
        %v6314 = vadd.f32 0.0, %v6313
        %v6315 = vpop.f32.mrf.mxu0
        %6316 = vmatprep.mubr.f32.mxu0 0.0
        %6317 = vmatmul.mubr.f32.gmra.mxu0 %v6219
        %v6318 = vpop.f32.mrf.mxu0
        %v6319 = vadd.f32 0.0, %v6318
        %v6320 = vpop.f32.mrf.mxu0
        %6321 = vmatprep.mubr.f32.mxu0 0.0
        %6322 = vmatmul.mubr.f32.gmra.mxu0 %v6220
        %v6323 = vpop.f32.mrf.mxu0
        %v6324 = vadd.f32 0.0, %v6323
        %v6325 = vpop.f32.mrf.mxu0
        %6326 = vmatprep.mubr.f32.mxu0 0.0
        %6327 = vmatmul.mubr.f32.gmra.mxu0 %v6221
        %v6328 = vpop.f32.mrf.mxu0
        %v6329 = vadd.f32 0.0, %v6328
        %v6330 = vpop.f32.mrf.mxu0
        %6331 = vmatprep.mubr.f32.mxu0 0.0
        %6332 = vmatmul.mubr.f32.gmra.mxu0 %v6222
        %v6333 = vpop.f32.mrf.mxu0
        %v6334 = vadd.f32 0.0, %v6333
        %v6335 = vpop.f32.mrf.mxu0
        %6336 = vmatprep.mubr.f32.mxu0 0.0
        %6337 = vmatmul.mubr.f32.gmra.mxu0 %v6223
        %v6338 = vpop.f32.mrf.mxu0
        %v6339 = vadd.f32 0.0, %v6338
        %v6340 = vpop.f32.mrf.mxu0
        %6341 = vmatprep.mubr.f32.mxu0 0.0
        %6342 = vmatmul.mubr.f32.gmra.mxu0 %v6224
        %v6343 = vpop.f32.mrf.mxu0
        %v6344 = vadd.f32 0.0, %v6343
        %v6345 = vpop.f32.mrf.mxu0
        %6346 = vdwg.mxu0
        %v6347 = vadd.f32 %v6209, %v6309
        %v6348 = vadd.f32 %v6210, %v6314
        %v6349 = vadd.f32 %v6211, %v6319
        %v6350 = vadd.f32 %v6212, %v6324
        %v6351 = vadd.f32 %v6213, %v6329
        %v6352 = vadd.f32 %v6214, %v6334
        %v6353 = vadd.f32 %v6215, %v6339
        %v6354 = vadd.f32 %v6216, %v6344
        %v6355 = vld [vmem:[%s1229] sm:$0xff]
        %v6356 = vld [vmem:[%s1229 + $0x10] sm:$0xff]
        %v6357 = vld [vmem:[%s1229 + $0x20] sm:$0xff]
        %v6358 = vld [vmem:[%s1229 + $0x30] sm:$0xff]
        %v6359 = vld [vmem:[%s1229 + $0x40] sm:$0xff]
        %v6360 = vld [vmem:[%s1229 + $0x50] sm:$0xff]
        %v6361 = vld [vmem:[%s1229 + $0x60] sm:$0xff]
        %v6362 = vld [vmem:[%s1229 + $0x70] sm:$0xff]
        %s6363 = scalar_lea.vmem %s1, 5376
        %v6364 = vld [vmem:[%s6363] sm:$0xff]
        %v6365 = vld [vmem:[%s6363 + $0x8] sm:$0xff]
        %v6366 = vld [vmem:[%s6363 + $0x10] sm:$0xff]
        %v6367 = vld [vmem:[%s6363 + $0x18] sm:$0xff]
        %v6368 = vld [vmem:[%s6363 + $0x20] sm:$0xff]
        %v6369 = vld [vmem:[%s6363 + $0x28] sm:$0xff]
        %v6370 = vld [vmem:[%s6363 + $0x30] sm:$0xff]
        %v6371 = vld [vmem:[%s6363 + $0x38] sm:$0xff]
        %v6372 = vld [vmem:[%s6363 + $0x40] sm:$0xff]
        %v6373 = vld [vmem:[%s6363 + $0x48] sm:$0xff]
        %v6374 = vld [vmem:[%s6363 + $0x50] sm:$0xff]
        %v6375 = vld [vmem:[%s6363 + $0x58] sm:$0xff]
        %v6376 = vld [vmem:[%s6363 + $0x60] sm:$0xff]
        %v6377 = vld [vmem:[%s6363 + $0x68] sm:$0xff]
        %v6378 = vld [vmem:[%s6363 + $0x70] sm:$0xff]
        %v6379 = vld [vmem:[%s6363 + $0x78] sm:$0xff]
        %6380 = vmatprep.subr.mxu0 0.0
        %6381 = vmatpush1.msra.mxu0 %v6379
        %6382 = vmatprep.subr.mxu0 0.0
        %6383 = vmatpush1.msra.mxu0 %v6378
        %6384 = vmatprep.subr.mxu0 0.0
        %6385 = vmatpush1.msra.mxu0 %v6377
        %6386 = vmatprep.subr.mxu0 0.0
        %6387 = vmatpush1.msra.mxu0 %v6376
        %6388 = vmatprep.subr.mxu0 0.0
        %6389 = vmatpush1.msra.mxu0 %v6375
        %6390 = vmatprep.subr.mxu0 0.0
        %6391 = vmatpush1.msra.mxu0 %v6374
        %6392 = vmatprep.subr.mxu0 0.0
        %6393 = vmatpush1.msra.mxu0 %v6373
        %6394 = vmatprep.subr.mxu0 0.0
        %6395 = vmatpush1.msra.mxu0 %v6372
        %6396 = vmatprep.subr.mxu0 0.0
        %6397 = vmatpush1.msra.mxu0 %v6371
        %6398 = vmatprep.subr.mxu0 0.0
        %6399 = vmatpush1.msra.mxu0 %v6370
        %6400 = vmatprep.subr.mxu0 0.0
        %6401 = vmatpush1.msra.mxu0 %v6369
        %6402 = vmatprep.subr.mxu0 0.0
        %6403 = vmatpush1.msra.mxu0 %v6368
        %6404 = vmatprep.subr.mxu0 0.0
        %6405 = vmatpush1.msra.mxu0 %v6367
        %6406 = vmatprep.subr.mxu0 0.0
        %6407 = vmatpush1.msra.mxu0 %v6366
        %6408 = vmatprep.subr.mxu0 0.0
        %6409 = vmatpush1.msra.mxu0 %v6365
        %6410 = vmatprep.subr.mxu0 0.0
        %6411 = vmatpush1.msra.mxu0 %v6364
        %6412 = vmatprep.subr.mxu0 0.0
        %6413 = vmatpush2.msra.mxu0 0.0
        %6414 = vmatprep.subr.mxu0 0.0
        %6415 = vmatpush2.msra.mxu0 0.0
        %6416 = vmatprep.subr.mxu0 0.0
        %6417 = vmatpush2.msra.mxu0 0.0
        %6418 = vmatprep.subr.mxu0 0.0
        %6419 = vmatpush2.msra.mxu0 0.0
        %6420 = vmatprep.subr.mxu0 0.0
        %6421 = vmatpush2.msra.mxu0 0.0
        %6422 = vmatprep.subr.mxu0 0.0
        %6423 = vmatpush2.msra.mxu0 0.0
        %6424 = vmatprep.subr.mxu0 0.0
        %6425 = vmatpush2.msra.mxu0 0.0
        %6426 = vmatprep.subr.mxu0 0.0
        %6427 = vmatpush2.msra.mxu0 0.0
        %6428 = vmatprep.subr.mxu0 0.0
        %6429 = vmatpush2.msra.mxu0 0.0
        %6430 = vmatprep.subr.mxu0 0.0
        %6431 = vmatpush2.msra.mxu0 0.0
        %6432 = vmatprep.subr.mxu0 0.0
        %6433 = vmatpush2.msra.mxu0 0.0
        %6434 = vmatprep.subr.mxu0 0.0
        %6435 = vmatpush2.msra.mxu0 0.0
        %6436 = vmatprep.subr.mxu0 0.0
        %6437 = vmatpush2.msra.mxu0 0.0
        %6438 = vmatprep.subr.mxu0 0.0
        %6439 = vmatpush2.msra.mxu0 0.0
        %6440 = vmatprep.subr.mxu0 0.0
        %6441 = vmatpush2.msra.mxu0 0.0
        %6442 = vmatprep.subr.mxu0 0.0
        %6443 = vmatpush2.msra.mxu0 0.0
        %6444 = vmatprep.mubr.f32.mxu0 0.0
        %6445 = vmatmul.mubr.f32.gmra.mxu0 %v6355
        %v6446 = vpop.f32.mrf.mxu0
        %v6447 = vadd.f32 0.0, %v6446
        %v6448 = vpop.f32.mrf.mxu0
        %6449 = vmatprep.mubr.f32.mxu0 0.0
        %6450 = vmatmul.mubr.f32.gmra.mxu0 %v6356
        %v6451 = vpop.f32.mrf.mxu0
        %v6452 = vadd.f32 0.0, %v6451
        %v6453 = vpop.f32.mrf.mxu0
        %6454 = vmatprep.mubr.f32.mxu0 0.0
        %6455 = vmatmul.mubr.f32.gmra.mxu0 %v6357
        %v6456 = vpop.f32.mrf.mxu0
        %v6457 = vadd.f32 0.0, %v6456
        %v6458 = vpop.f32.mrf.mxu0
        %6459 = vmatprep.mubr.f32.mxu0 0.0
        %6460 = vmatmul.mubr.f32.gmra.mxu0 %v6358
        %v6461 = vpop.f32.mrf.mxu0
        %v6462 = vadd.f32 0.0, %v6461
        %v6463 = vpop.f32.mrf.mxu0
        %6464 = vmatprep.mubr.f32.mxu0 0.0
        %6465 = vmatmul.mubr.f32.gmra.mxu0 %v6359
        %v6466 = vpop.f32.mrf.mxu0
        %v6467 = vadd.f32 0.0, %v6466
        %v6468 = vpop.f32.mrf.mxu0
        %6469 = vmatprep.mubr.f32.mxu0 0.0
        %6470 = vmatmul.mubr.f32.gmra.mxu0 %v6360
        %v6471 = vpop.f32.mrf.mxu0
        %v6472 = vadd.f32 0.0, %v6471
        %v6473 = vpop.f32.mrf.mxu0
        %6474 = vmatprep.mubr.f32.mxu0 0.0
        %6475 = vmatmul.mubr.f32.gmra.mxu0 %v6361
        %v6476 = vpop.f32.mrf.mxu0
        %v6477 = vadd.f32 0.0, %v6476
        %v6478 = vpop.f32.mrf.mxu0
        %6479 = vmatprep.mubr.f32.mxu0 0.0
        %6480 = vmatmul.mubr.f32.gmra.mxu0 %v6362
        %v6481 = vpop.f32.mrf.mxu0
        %v6482 = vadd.f32 0.0, %v6481
        %v6483 = vpop.f32.mrf.mxu0
        %6484 = vdwg.mxu0
        %v6485 = vadd.f32 %v6347, %v6447
        %v6486 = vadd.f32 %v6348, %v6452
        %v6487 = vadd.f32 %v6349, %v6457
        %v6488 = vadd.f32 %v6350, %v6462
        %v6489 = vadd.f32 %v6351, %v6467
        %v6490 = vadd.f32 %v6352, %v6472
        %v6491 = vadd.f32 %v6353, %v6477
        %v6492 = vadd.f32 %v6354, %v6482
        %v6493 = vld [vmem:[%s1229 + $0x1] sm:$0xff]
        %v6494 = vld [vmem:[%s1229 + $0x11] sm:$0xff]
        %v6495 = vld [vmem:[%s1229 + $0x21] sm:$0xff]
        %v6496 = vld [vmem:[%s1229 + $0x31] sm:$0xff]
        %v6497 = vld [vmem:[%s1229 + $0x41] sm:$0xff]
        %v6498 = vld [vmem:[%s1229 + $0x51] sm:$0xff]
        %v6499 = vld [vmem:[%s1229 + $0x61] sm:$0xff]
        %v6500 = vld [vmem:[%s1229 + $0x71] sm:$0xff]
        %s6501 = scalar_lea.vmem %s1, 5504
        %v6502 = vld [vmem:[%s6501] sm:$0xff]
        %v6503 = vld [vmem:[%s6501 + $0x8] sm:$0xff]
        %v6504 = vld [vmem:[%s6501 + $0x10] sm:$0xff]
        %v6505 = vld [vmem:[%s6501 + $0x18] sm:$0xff]
        %v6506 = vld [vmem:[%s6501 + $0x20] sm:$0xff]
        %v6507 = vld [vmem:[%s6501 + $0x28] sm:$0xff]
        %v6508 = vld [vmem:[%s6501 + $0x30] sm:$0xff]
        %v6509 = vld [vmem:[%s6501 + $0x38] sm:$0xff]
        %v6510 = vld [vmem:[%s6501 + $0x40] sm:$0xff]
        %v6511 = vld [vmem:[%s6501 + $0x48] sm:$0xff]
        %v6512 = vld [vmem:[%s6501 + $0x50] sm:$0xff]
        %v6513 = vld [vmem:[%s6501 + $0x58] sm:$0xff]
        %v6514 = vld [vmem:[%s6501 + $0x60] sm:$0xff]
        %v6515 = vld [vmem:[%s6501 + $0x68] sm:$0xff]
        %v6516 = vld [vmem:[%s6501 + $0x70] sm:$0xff]
        %v6517 = vld [vmem:[%s6501 + $0x78] sm:$0xff]
        %6518 = vmatprep.subr.mxu0 0.0
        %6519 = vmatpush1.msra.mxu0 %v6517
        %6520 = vmatprep.subr.mxu0 0.0
        %6521 = vmatpush1.msra.mxu0 %v6516
        %6522 = vmatprep.subr.mxu0 0.0
        %6523 = vmatpush1.msra.mxu0 %v6515
        %6524 = vmatprep.subr.mxu0 0.0
        %6525 = vmatpush1.msra.mxu0 %v6514
        %6526 = vmatprep.subr.mxu0 0.0
        %6527 = vmatpush1.msra.mxu0 %v6513
        %6528 = vmatprep.subr.mxu0 0.0
        %6529 = vmatpush1.msra.mxu0 %v6512
        %6530 = vmatprep.subr.mxu0 0.0
        %6531 = vmatpush1.msra.mxu0 %v6511
        %6532 = vmatprep.subr.mxu0 0.0
        %6533 = vmatpush1.msra.mxu0 %v6510
        %6534 = vmatprep.subr.mxu0 0.0
        %6535 = vmatpush1.msra.mxu0 %v6509
        %6536 = vmatprep.subr.mxu0 0.0
        %6537 = vmatpush1.msra.mxu0 %v6508
        %6538 = vmatprep.subr.mxu0 0.0
        %6539 = vmatpush1.msra.mxu0 %v6507
        %6540 = vmatprep.subr.mxu0 0.0
        %6541 = vmatpush1.msra.mxu0 %v6506
        %6542 = vmatprep.subr.mxu0 0.0
        %6543 = vmatpush1.msra.mxu0 %v6505
        %6544 = vmatprep.subr.mxu0 0.0
        %6545 = vmatpush1.msra.mxu0 %v6504
        %6546 = vmatprep.subr.mxu0 0.0
        %6547 = vmatpush1.msra.mxu0 %v6503
        %6548 = vmatprep.subr.mxu0 0.0
        %6549 = vmatpush1.msra.mxu0 %v6502
        %6550 = vmatprep.subr.mxu0 0.0
        %6551 = vmatpush2.msra.mxu0 0.0
        %6552 = vmatprep.subr.mxu0 0.0
        %6553 = vmatpush2.msra.mxu0 0.0
        %6554 = vmatprep.subr.mxu0 0.0
        %6555 = vmatpush2.msra.mxu0 0.0
        %6556 = vmatprep.subr.mxu0 0.0
        %6557 = vmatpush2.msra.mxu0 0.0
        %6558 = vmatprep.subr.mxu0 0.0
        %6559 = vmatpush2.msra.mxu0 0.0
        %6560 = vmatprep.subr.mxu0 0.0
        %6561 = vmatpush2.msra.mxu0 0.0
        %6562 = vmatprep.subr.mxu0 0.0
        %6563 = vmatpush2.msra.mxu0 0.0
        %6564 = vmatprep.subr.mxu0 0.0
        %6565 = vmatpush2.msra.mxu0 0.0
        %6566 = vmatprep.subr.mxu0 0.0
        %6567 = vmatpush2.msra.mxu0 0.0
        %6568 = vmatprep.subr.mxu0 0.0
        %6569 = vmatpush2.msra.mxu0 0.0
        %6570 = vmatprep.subr.mxu0 0.0
        %6571 = vmatpush2.msra.mxu0 0.0
        %6572 = vmatprep.subr.mxu0 0.0
        %6573 = vmatpush2.msra.mxu0 0.0
        %6574 = vmatprep.subr.mxu0 0.0
        %6575 = vmatpush2.msra.mxu0 0.0
        %6576 = vmatprep.subr.mxu0 0.0
        %6577 = vmatpush2.msra.mxu0 0.0
        %6578 = vmatprep.subr.mxu0 0.0
        %6579 = vmatpush2.msra.mxu0 0.0
        %6580 = vmatprep.subr.mxu0 0.0
        %6581 = vmatpush2.msra.mxu0 0.0
        %6582 = vmatprep.mubr.f32.mxu0 0.0
        %6583 = vmatmul.mubr.f32.gmra.mxu0 %v6493
        %v6584 = vpop.f32.mrf.mxu0
        %v6585 = vadd.f32 0.0, %v6584
        %v6586 = vpop.f32.mrf.mxu0
        %6587 = vmatprep.mubr.f32.mxu0 0.0
        %6588 = vmatmul.mubr.f32.gmra.mxu0 %v6494
        %v6589 = vpop.f32.mrf.mxu0
        %v6590 = vadd.f32 0.0, %v6589
        %v6591 = vpop.f32.mrf.mxu0
        %6592 = vmatprep.mubr.f32.mxu0 0.0
        %6593 = vmatmul.mubr.f32.gmra.mxu0 %v6495
        %v6594 = vpop.f32.mrf.mxu0
        %v6595 = vadd.f32 0.0, %v6594
        %v6596 = vpop.f32.mrf.mxu0
        %6597 = vmatprep.mubr.f32.mxu0 0.0
        %6598 = vmatmul.mubr.f32.gmra.mxu0 %v6496
        %v6599 = vpop.f32.mrf.mxu0
        %v6600 = vadd.f32 0.0, %v6599
        %v6601 = vpop.f32.mrf.mxu0
        %6602 = vmatprep.mubr.f32.mxu0 0.0
        %6603 = vmatmul.mubr.f32.gmra.mxu0 %v6497
        %v6604 = vpop.f32.mrf.mxu0
        %v6605 = vadd.f32 0.0, %v6604
        %v6606 = vpop.f32.mrf.mxu0
        %6607 = vmatprep.mubr.f32.mxu0 0.0
        %6608 = vmatmul.mubr.f32.gmra.mxu0 %v6498
        %v6609 = vpop.f32.mrf.mxu0
        %v6610 = vadd.f32 0.0, %v6609
        %v6611 = vpop.f32.mrf.mxu0
        %6612 = vmatprep.mubr.f32.mxu0 0.0
        %6613 = vmatmul.mubr.f32.gmra.mxu0 %v6499
        %v6614 = vpop.f32.mrf.mxu0
        %v6615 = vadd.f32 0.0, %v6614
        %v6616 = vpop.f32.mrf.mxu0
        %6617 = vmatprep.mubr.f32.mxu0 0.0
        %6618 = vmatmul.mubr.f32.gmra.mxu0 %v6500
        %v6619 = vpop.f32.mrf.mxu0
        %v6620 = vadd.f32 0.0, %v6619
        %v6621 = vpop.f32.mrf.mxu0
        %6622 = vdwg.mxu0
        %v6623 = vadd.f32 %v6485, %v6585
        %v6624 = vadd.f32 %v6486, %v6590
        %v6625 = vadd.f32 %v6487, %v6595
        %v6626 = vadd.f32 %v6488, %v6600
        %v6627 = vadd.f32 %v6489, %v6605
        %v6628 = vadd.f32 %v6490, %v6610
        %v6629 = vadd.f32 %v6491, %v6615
        %v6630 = vadd.f32 %v6492, %v6620
        %v6631 = vld [vmem:[%s1229 + $0x2] sm:$0xff]
        %v6632 = vld [vmem:[%s1229 + $0x12] sm:$0xff]
        %v6633 = vld [vmem:[%s1229 + $0x22] sm:$0xff]
        %v6634 = vld [vmem:[%s1229 + $0x32] sm:$0xff]
        %v6635 = vld [vmem:[%s1229 + $0x42] sm:$0xff]
        %v6636 = vld [vmem:[%s1229 + $0x52] sm:$0xff]
        %v6637 = vld [vmem:[%s1229 + $0x62] sm:$0xff]
        %v6638 = vld [vmem:[%s1229 + $0x72] sm:$0xff]
        %s6639 = scalar_lea.vmem %s1, 5632
        %v6640 = vld [vmem:[%s6639] sm:$0xff]
        %v6641 = vld [vmem:[%s6639 + $0x8] sm:$0xff]
        %v6642 = vld [vmem:[%s6639 + $0x10] sm:$0xff]
        %v6643 = vld [vmem:[%s6639 + $0x18] sm:$0xff]
        %v6644 = vld [vmem:[%s6639 + $0x20] sm:$0xff]
        %v6645 = vld [vmem:[%s6639 + $0x28] sm:$0xff]
        %v6646 = vld [vmem:[%s6639 + $0x30] sm:$0xff]
        %v6647 = vld [vmem:[%s6639 + $0x38] sm:$0xff]
        %v6648 = vld [vmem:[%s6639 + $0x40] sm:$0xff]
        %v6649 = vld [vmem:[%s6639 + $0x48] sm:$0xff]
        %v6650 = vld [vmem:[%s6639 + $0x50] sm:$0xff]
        %v6651 = vld [vmem:[%s6639 + $0x58] sm:$0xff]
        %v6652 = vld [vmem:[%s6639 + $0x60] sm:$0xff]
        %v6653 = vld [vmem:[%s6639 + $0x68] sm:$0xff]
        %v6654 = vld [vmem:[%s6639 + $0x70] sm:$0xff]
        %v6655 = vld [vmem:[%s6639 + $0x78] sm:$0xff]
        %6656 = vmatprep.subr.mxu0 0.0
        %6657 = vmatpush1.msra.mxu0 %v6655
        %6658 = vmatprep.subr.mxu0 0.0
        %6659 = vmatpush1.msra.mxu0 %v6654
        %6660 = vmatprep.subr.mxu0 0.0
        %6661 = vmatpush1.msra.mxu0 %v6653
        %6662 = vmatprep.subr.mxu0 0.0
        %6663 = vmatpush1.msra.mxu0 %v6652
        %6664 = vmatprep.subr.mxu0 0.0
        %6665 = vmatpush1.msra.mxu0 %v6651
        %6666 = vmatprep.subr.mxu0 0.0
        %6667 = vmatpush1.msra.mxu0 %v6650
        %6668 = vmatprep.subr.mxu0 0.0
        %6669 = vmatpush1.msra.mxu0 %v6649
        %6670 = vmatprep.subr.mxu0 0.0
        %6671 = vmatpush1.msra.mxu0 %v6648
        %6672 = vmatprep.subr.mxu0 0.0
        %6673 = vmatpush1.msra.mxu0 %v6647
        %6674 = vmatprep.subr.mxu0 0.0
        %6675 = vmatpush1.msra.mxu0 %v6646
        %6676 = vmatprep.subr.mxu0 0.0
        %6677 = vmatpush1.msra.mxu0 %v6645
        %6678 = vmatprep.subr.mxu0 0.0
        %6679 = vmatpush1.msra.mxu0 %v6644
        %6680 = vmatprep.subr.mxu0 0.0
        %6681 = vmatpush1.msra.mxu0 %v6643
        %6682 = vmatprep.subr.mxu0 0.0
        %6683 = vmatpush1.msra.mxu0 %v6642
        %6684 = vmatprep.subr.mxu0 0.0
        %6685 = vmatpush1.msra.mxu0 %v6641
        %6686 = vmatprep.subr.mxu0 0.0
        %6687 = vmatpush1.msra.mxu0 %v6640
        %6688 = vmatprep.subr.mxu0 0.0
        %6689 = vmatpush2.msra.mxu0 0.0
        %6690 = vmatprep.subr.mxu0 0.0
        %6691 = vmatpush2.msra.mxu0 0.0
        %6692 = vmatprep.subr.mxu0 0.0
        %6693 = vmatpush2.msra.mxu0 0.0
        %6694 = vmatprep.subr.mxu0 0.0
        %6695 = vmatpush2.msra.mxu0 0.0
        %6696 = vmatprep.subr.mxu0 0.0
        %6697 = vmatpush2.msra.mxu0 0.0
        %6698 = vmatprep.subr.mxu0 0.0
        %6699 = vmatpush2.msra.mxu0 0.0
        %6700 = vmatprep.subr.mxu0 0.0
        %6701 = vmatpush2.msra.mxu0 0.0
        %6702 = vmatprep.subr.mxu0 0.0
        %6703 = vmatpush2.msra.mxu0 0.0
        %6704 = vmatprep.subr.mxu0 0.0
        %6705 = vmatpush2.msra.mxu0 0.0
        %6706 = vmatprep.subr.mxu0 0.0
        %6707 = vmatpush2.msra.mxu0 0.0
        %6708 = vmatprep.subr.mxu0 0.0
        %6709 = vmatpush2.msra.mxu0 0.0
        %6710 = vmatprep.subr.mxu0 0.0
        %6711 = vmatpush2.msra.mxu0 0.0
        %6712 = vmatprep.subr.mxu0 0.0
        %6713 = vmatpush2.msra.mxu0 0.0
        %6714 = vmatprep.subr.mxu0 0.0
        %6715 = vmatpush2.msra.mxu0 0.0
        %6716 = vmatprep.subr.mxu0 0.0
        %6717 = vmatpush2.msra.mxu0 0.0
        %6718 = vmatprep.subr.mxu0 0.0
        %6719 = vmatpush2.msra.mxu0 0.0
        %6720 = vmatprep.mubr.f32.mxu0 0.0
        %6721 = vmatmul.mubr.f32.gmra.mxu0 %v6631
        %v6722 = vpop.f32.mrf.mxu0
        %v6723 = vadd.f32 0.0, %v6722
        %v6724 = vpop.f32.mrf.mxu0
        %6725 = vmatprep.mubr.f32.mxu0 0.0
        %6726 = vmatmul.mubr.f32.gmra.mxu0 %v6632
        %v6727 = vpop.f32.mrf.mxu0
        %v6728 = vadd.f32 0.0, %v6727
        %v6729 = vpop.f32.mrf.mxu0
        %6730 = vmatprep.mubr.f32.mxu0 0.0
        %6731 = vmatmul.mubr.f32.gmra.mxu0 %v6633
        %v6732 = vpop.f32.mrf.mxu0
        %v6733 = vadd.f32 0.0, %v6732
        %v6734 = vpop.f32.mrf.mxu0
        %6735 = vmatprep.mubr.f32.mxu0 0.0
        %6736 = vmatmul.mubr.f32.gmra.mxu0 %v6634
        %v6737 = vpop.f32.mrf.mxu0
        %v6738 = vadd.f32 0.0, %v6737
        %v6739 = vpop.f32.mrf.mxu0
        %6740 = vmatprep.mubr.f32.mxu0 0.0
        %6741 = vmatmul.mubr.f32.gmra.mxu0 %v6635
        %v6742 = vpop.f32.mrf.mxu0
        %v6743 = vadd.f32 0.0, %v6742
        %v6744 = vpop.f32.mrf.mxu0
        %6745 = vmatprep.mubr.f32.mxu0 0.0
        %6746 = vmatmul.mubr.f32.gmra.mxu0 %v6636
        %v6747 = vpop.f32.mrf.mxu0
        %v6748 = vadd.f32 0.0, %v6747
        %v6749 = vpop.f32.mrf.mxu0
        %6750 = vmatprep.mubr.f32.mxu0 0.0
        %6751 = vmatmul.mubr.f32.gmra.mxu0 %v6637
        %v6752 = vpop.f32.mrf.mxu0
        %v6753 = vadd.f32 0.0, %v6752
        %v6754 = vpop.f32.mrf.mxu0
        %6755 = vmatprep.mubr.f32.mxu0 0.0
        %6756 = vmatmul.mubr.f32.gmra.mxu0 %v6638
        %v6757 = vpop.f32.mrf.mxu0
        %v6758 = vadd.f32 0.0, %v6757
        %v6759 = vpop.f32.mrf.mxu0
        %6760 = vdwg.mxu0
        %v6761 = vadd.f32 %v6623, %v6723
        %v6762 = vadd.f32 %v6624, %v6728
        %v6763 = vadd.f32 %v6625, %v6733
        %v6764 = vadd.f32 %v6626, %v6738
        %v6765 = vadd.f32 %v6627, %v6743
        %v6766 = vadd.f32 %v6628, %v6748
        %v6767 = vadd.f32 %v6629, %v6753
        %v6768 = vadd.f32 %v6630, %v6758
        %v6769 = vld [vmem:[%s9 + $0x4] sm:$0x1]
        %v6770 = vlaneseq
        %v6771 = vshrl.u32 %v6770, 7
        %v6772 = vsub.s32 0, %v6771
        %v6773 = vrot.slane %v6769, %v6772
        %v6774 = vadd.f32 %v6761, %v6773
        %v6775 = vadd.f32 %v6762, %v6773
        %v6776 = vadd.f32 %v6763, %v6773
        %v6777 = vadd.f32 %v6764, %v6773
        %v6778 = vadd.f32 %v6765, %v6773
        %v6779 = vadd.f32 %v6766, %v6773
        %v6780 = vadd.f32 %v6767, %v6773
        %v6781 = vadd.f32 %v6768, %v6773
        %v6782 = vld [vmem:[%s385 + $0x1] sm:$0xff]
        %v6783 = vld [vmem:[%s385 + $0x11] sm:$0xff]
        %v6784 = vld [vmem:[%s385 + $0x21] sm:$0xff]
        %v6785 = vld [vmem:[%s385 + $0x31] sm:$0xff]
        %v6786 = vld [vmem:[%s385 + $0x41] sm:$0xff]
        %v6787 = vld [vmem:[%s385 + $0x51] sm:$0xff]
        %v6788 = vld [vmem:[%s385 + $0x61] sm:$0xff]
        %v6789 = vld [vmem:[%s385 + $0x71] sm:$0xff]
        %v6790 = vadd.f32 %v6774, %v6782
        %v6791 = vadd.f32 %v6775, %v6783
        %v6792 = vadd.f32 %v6776, %v6784
        %v6793 = vadd.f32 %v6777, %v6785
        %v6794 = vadd.f32 %v6778, %v6786
        %v6795 = vadd.f32 %v6779, %v6787
        %v6796 = vadd.f32 %v6780, %v6788
        %v6797 = vadd.f32 %v6781, %v6789
        %6798 = vst [vmem:[%s385 + $0x1] sm:$0xff] %v6790
        %6799 = vst [vmem:[%s385 + $0x11] sm:$0xff] %v6791
        %6800 = vst [vmem:[%s385 + $0x21] sm:$0xff] %v6792
        %6801 = vst [vmem:[%s385 + $0x31] sm:$0xff] %v6793
        %6802 = vst [vmem:[%s385 + $0x41] sm:$0xff] %v6794
        %6803 = vst [vmem:[%s385 + $0x51] sm:$0xff] %v6795
        %6804 = vst [vmem:[%s385 + $0x61] sm:$0xff] %v6796
        %6805 = vst [vmem:[%s385 + $0x71] sm:$0xff] %v6797
        %v6806 = vld [vmem:[#allocation3] sm:$0xff]
        %v6807 = vld [vmem:[#allocation3 + $0x10] sm:$0xff]
        %v6808 = vld [vmem:[#allocation3 + $0x20] sm:$0xff]
        %v6809 = vld [vmem:[#allocation3 + $0x30] sm:$0xff]
        %v6810 = vld [vmem:[#allocation3 + $0x40] sm:$0xff]
        %v6811 = vld [vmem:[#allocation3 + $0x50] sm:$0xff]
        %v6812 = vld [vmem:[#allocation3 + $0x60] sm:$0xff]
        %v6813 = vld [vmem:[#allocation3 + $0x70] sm:$0xff]
        %s6814 = scalar_lea.vmem %s1, 5760
        %v6815 = vld [vmem:[%s6814] sm:$0xff]
        %v6816 = vld [vmem:[%s6814 + $0x8] sm:$0xff]
        %v6817 = vld [vmem:[%s6814 + $0x10] sm:$0xff]
        %v6818 = vld [vmem:[%s6814 + $0x18] sm:$0xff]
        %v6819 = vld [vmem:[%s6814 + $0x20] sm:$0xff]
        %v6820 = vld [vmem:[%s6814 + $0x28] sm:$0xff]
        %v6821 = vld [vmem:[%s6814 + $0x30] sm:$0xff]
        %v6822 = vld [vmem:[%s6814 + $0x38] sm:$0xff]
        %v6823 = vld [vmem:[%s6814 + $0x40] sm:$0xff]
        %v6824 = vld [vmem:[%s6814 + $0x48] sm:$0xff]
        %v6825 = vld [vmem:[%s6814 + $0x50] sm:$0xff]
        %v6826 = vld [vmem:[%s6814 + $0x58] sm:$0xff]
        %v6827 = vld [vmem:[%s6814 + $0x60] sm:$0xff]
        %v6828 = vld [vmem:[%s6814 + $0x68] sm:$0xff]
        %v6829 = vld [vmem:[%s6814 + $0x70] sm:$0xff]
        %v6830 = vld [vmem:[%s6814 + $0x78] sm:$0xff]
        %v6831 = vld [vmem:[#allocation3 + $0x1] sm:$0xff]
        %v6832 = vld [vmem:[#allocation3 + $0x11] sm:$0xff]
        %v6833 = vld [vmem:[#allocation3 + $0x21] sm:$0xff]
        %v6834 = vld [vmem:[#allocation3 + $0x31] sm:$0xff]
        %v6835 = vld [vmem:[#allocation3 + $0x41] sm:$0xff]
        %v6836 = vld [vmem:[#allocation3 + $0x51] sm:$0xff]
        %v6837 = vld [vmem:[#allocation3 + $0x61] sm:$0xff]
        %v6838 = vld [vmem:[#allocation3 + $0x71] sm:$0xff]
        %s6839 = scalar_lea.vmem %s1, 5888
        %v6840 = vld [vmem:[%s6839] sm:$0xff]
        %v6841 = vld [vmem:[%s6839 + $0x8] sm:$0xff]
        %v6842 = vld [vmem:[%s6839 + $0x10] sm:$0xff]
        %v6843 = vld [vmem:[%s6839 + $0x18] sm:$0xff]
        %v6844 = vld [vmem:[%s6839 + $0x20] sm:$0xff]
        %v6845 = vld [vmem:[%s6839 + $0x28] sm:$0xff]
        %v6846 = vld [vmem:[%s6839 + $0x30] sm:$0xff]
        %v6847 = vld [vmem:[%s6839 + $0x38] sm:$0xff]
        %v6848 = vld [vmem:[%s6839 + $0x40] sm:$0xff]
        %v6849 = vld [vmem:[%s6839 + $0x48] sm:$0xff]
        %v6850 = vld [vmem:[%s6839 + $0x50] sm:$0xff]
        %v6851 = vld [vmem:[%s6839 + $0x58] sm:$0xff]
        %v6852 = vld [vmem:[%s6839 + $0x60] sm:$0xff]
        %v6853 = vld [vmem:[%s6839 + $0x68] sm:$0xff]
        %v6854 = vld [vmem:[%s6839 + $0x70] sm:$0xff]
        %v6855 = vld [vmem:[%s6839 + $0x78] sm:$0xff]
        %6856 = vmatprep.subr.mxu0 0.0
        %6857 = vmatpush1.msra.mxu0 %v6855
        %6858 = vmatprep.subr.mxu0 0.0
        %6859 = vmatpush1.msra.mxu0 %v6854
        %6860 = vmatprep.subr.mxu0 0.0
        %6861 = vmatpush1.msra.mxu0 %v6853
        %6862 = vmatprep.subr.mxu0 0.0
        %6863 = vmatpush1.msra.mxu0 %v6852
        %6864 = vmatprep.subr.mxu0 0.0
        %6865 = vmatpush1.msra.mxu0 %v6851
        %6866 = vmatprep.subr.mxu0 0.0
        %6867 = vmatpush1.msra.mxu0 %v6850
        %6868 = vmatprep.subr.mxu0 0.0
        %6869 = vmatpush1.msra.mxu0 %v6849
        %6870 = vmatprep.subr.mxu0 0.0
        %6871 = vmatpush1.msra.mxu0 %v6848
        %6872 = vmatprep.subr.mxu0 0.0
        %6873 = vmatpush1.msra.mxu0 %v6847
        %6874 = vmatprep.subr.mxu0 0.0
        %6875 = vmatpush1.msra.mxu0 %v6846
        %6876 = vmatprep.subr.mxu0 0.0
        %6877 = vmatpush1.msra.mxu0 %v6845
        %6878 = vmatprep.subr.mxu0 0.0
        %6879 = vmatpush1.msra.mxu0 %v6844
        %6880 = vmatprep.subr.mxu0 0.0
        %6881 = vmatpush1.msra.mxu0 %v6843
        %6882 = vmatprep.subr.mxu0 0.0
        %6883 = vmatpush1.msra.mxu0 %v6842
        %6884 = vmatprep.subr.mxu0 0.0
        %6885 = vmatpush1.msra.mxu0 %v6841
        %6886 = vmatprep.subr.mxu0 0.0
        %6887 = vmatpush1.msra.mxu0 %v6840
        %6888 = vmatprep.subr.mxu0 0.0
        %6889 = vmatpush2.msra.mxu0 0.0
        %6890 = vmatprep.subr.mxu0 0.0
        %6891 = vmatpush2.msra.mxu0 0.0
        %6892 = vmatprep.subr.mxu0 0.0
        %6893 = vmatpush2.msra.mxu0 0.0
        %6894 = vmatprep.subr.mxu0 0.0
        %6895 = vmatpush2.msra.mxu0 0.0
        %6896 = vmatprep.subr.mxu0 0.0
        %6897 = vmatpush2.msra.mxu0 0.0
        %6898 = vmatprep.subr.mxu0 0.0
        %6899 = vmatpush2.msra.mxu0 0.0
        %6900 = vmatprep.subr.mxu0 0.0
        %6901 = vmatpush2.msra.mxu0 0.0
        %6902 = vmatprep.subr.mxu0 0.0
        %6903 = vmatpush2.msra.mxu0 0.0
        %6904 = vmatprep.subr.mxu0 0.0
        %6905 = vmatpush2.msra.mxu0 0.0
        %6906 = vmatprep.subr.mxu0 0.0
        %6907 = vmatpush2.msra.mxu0 0.0
        %6908 = vmatprep.subr.mxu0 0.0
        %6909 = vmatpush2.msra.mxu0 0.0
        %6910 = vmatprep.subr.mxu0 0.0
        %6911 = vmatpush2.msra.mxu0 0.0
        %6912 = vmatprep.subr.mxu0 0.0
        %6913 = vmatpush2.msra.mxu0 0.0
        %6914 = vmatprep.subr.mxu0 0.0
        %6915 = vmatpush2.msra.mxu0 0.0
        %6916 = vmatprep.subr.mxu0 0.0
        %6917 = vmatpush2.msra.mxu0 0.0
        %6918 = vmatprep.subr.mxu0 0.0
        %6919 = vmatpush2.msra.mxu0 0.0
        %6920 = vmatprep.mubr.f32.mxu0 0.0
        %6921 = vmatmul.mubr.f32.gmra.mxu0 %v6831
        %v6922 = vpop.f32.mrf.mxu0
        %v6923 = vadd.f32 0.0, %v6922
        %v6924 = vpop.f32.mrf.mxu0
        %6925 = vmatprep.mubr.f32.mxu0 0.0
        %6926 = vmatmul.mubr.f32.gmra.mxu0 %v6832
        %v6927 = vpop.f32.mrf.mxu0
        %v6928 = vadd.f32 0.0, %v6927
        %v6929 = vpop.f32.mrf.mxu0
        %6930 = vmatprep.mubr.f32.mxu0 0.0
        %6931 = vmatmul.mubr.f32.gmra.mxu0 %v6833
        %v6932 = vpop.f32.mrf.mxu0
        %v6933 = vadd.f32 0.0, %v6932
        %v6934 = vpop.f32.mrf.mxu0
        %6935 = vmatprep.mubr.f32.mxu0 0.0
        %6936 = vmatmul.mubr.f32.gmra.mxu0 %v6834
        %v6937 = vpop.f32.mrf.mxu0
        %v6938 = vadd.f32 0.0, %v6937
        %v6939 = vpop.f32.mrf.mxu0
        %6940 = vmatprep.mubr.f32.mxu0 0.0
        %6941 = vmatmul.mubr.f32.gmra.mxu0 %v6835
        %v6942 = vpop.f32.mrf.mxu0
        %v6943 = vadd.f32 0.0, %v6942
        %v6944 = vpop.f32.mrf.mxu0
        %6945 = vmatprep.mubr.f32.mxu0 0.0
        %6946 = vmatmul.mubr.f32.gmra.mxu0 %v6836
        %v6947 = vpop.f32.mrf.mxu0
        %v6948 = vadd.f32 0.0, %v6947
        %v6949 = vpop.f32.mrf.mxu0
        %6950 = vmatprep.mubr.f32.mxu0 0.0
        %6951 = vmatmul.mubr.f32.gmra.mxu0 %v6837
        %v6952 = vpop.f32.mrf.mxu0
        %v6953 = vadd.f32 0.0, %v6952
        %v6954 = vpop.f32.mrf.mxu0
        %6955 = vmatprep.mubr.f32.mxu0 0.0
        %6956 = vmatmul.mubr.f32.gmra.mxu0 %v6838
        %v6957 = vpop.f32.mrf.mxu0
        %v6958 = vadd.f32 0.0, %v6957
        %v6959 = vpop.f32.mrf.mxu0
        %6960 = vdwg.mxu0
        %6961 = vmatprep.subr.mxu0 0.0
        %6962 = vmatpush1.msra.mxu0 %v6830
        %6963 = vmatprep.subr.mxu0 0.0
        %6964 = vmatpush1.msra.mxu0 %v6829
        %6965 = vmatprep.subr.mxu0 0.0
        %6966 = vmatpush1.msra.mxu0 %v6828
        %6967 = vmatprep.subr.mxu0 0.0
        %6968 = vmatpush1.msra.mxu0 %v6827
        %6969 = vmatprep.subr.mxu0 0.0
        %6970 = vmatpush1.msra.mxu0 %v6826
        %6971 = vmatprep.subr.mxu0 0.0
        %6972 = vmatpush1.msra.mxu0 %v6825
        %6973 = vmatprep.subr.mxu0 0.0
        %6974 = vmatpush1.msra.mxu0 %v6824
        %6975 = vmatprep.subr.mxu0 0.0
        %6976 = vmatpush1.msra.mxu0 %v6823
        %6977 = vmatprep.subr.mxu0 0.0
        %6978 = vmatpush1.msra.mxu0 %v6822
        %6979 = vmatprep.subr.mxu0 0.0
        %6980 = vmatpush1.msra.mxu0 %v6821
        %6981 = vmatprep.subr.mxu0 0.0
        %6982 = vmatpush1.msra.mxu0 %v6820
        %6983 = vmatprep.subr.mxu0 0.0
        %6984 = vmatpush1.msra.mxu0 %v6819
        %6985 = vmatprep.subr.mxu0 0.0
        %6986 = vmatpush1.msra.mxu0 %v6818
        %6987 = vmatprep.subr.mxu0 0.0
        %6988 = vmatpush1.msra.mxu0 %v6817
        %6989 = vmatprep.subr.mxu0 0.0
        %6990 = vmatpush1.msra.mxu0 %v6816
        %6991 = vmatprep.subr.mxu0 0.0
        %6992 = vmatpush1.msra.mxu0 %v6815
        %6993 = vmatprep.subr.mxu0 0.0
        %6994 = vmatpush2.msra.mxu0 0.0
        %6995 = vmatprep.subr.mxu0 0.0
        %6996 = vmatpush2.msra.mxu0 0.0
        %6997 = vmatprep.subr.mxu0 0.0
        %6998 = vmatpush2.msra.mxu0 0.0
        %6999 = vmatprep.subr.mxu0 0.0
        %7000 = vmatpush2.msra.mxu0 0.0
        %7001 = vmatprep.subr.mxu0 0.0
        %7002 = vmatpush2.msra.mxu0 0.0
        %7003 = vmatprep.subr.mxu0 0.0
        %7004 = vmatpush2.msra.mxu0 0.0
        %7005 = vmatprep.subr.mxu0 0.0
        %7006 = vmatpush2.msra.mxu0 0.0
        %7007 = vmatprep.subr.mxu0 0.0
        %7008 = vmatpush2.msra.mxu0 0.0
        %7009 = vmatprep.subr.mxu0 0.0
        %7010 = vmatpush2.msra.mxu0 0.0
        %7011 = vmatprep.subr.mxu0 0.0
        %7012 = vmatpush2.msra.mxu0 0.0
        %7013 = vmatprep.subr.mxu0 0.0
        %7014 = vmatpush2.msra.mxu0 0.0
        %7015 = vmatprep.subr.mxu0 0.0
        %7016 = vmatpush2.msra.mxu0 0.0
        %7017 = vmatprep.subr.mxu0 0.0
        %7018 = vmatpush2.msra.mxu0 0.0
        %7019 = vmatprep.subr.mxu0 0.0
        %7020 = vmatpush2.msra.mxu0 0.0
        %7021 = vmatprep.subr.mxu0 0.0
        %7022 = vmatpush2.msra.mxu0 0.0
        %7023 = vmatprep.subr.mxu0 0.0
        %7024 = vmatpush2.msra.mxu0 0.0
        %7025 = vmatprep.mubr.f32.mxu0 0.0
        %7026 = vmatmul.mubr.f32.gmra.mxu0 %v6806
        %v7027 = vpop.f32.mrf.mxu0
        %v7028 = vadd.f32 %v6923, %v7027
        %v7029 = vpop.f32.mrf.mxu0
        %7030 = vmatprep.mubr.f32.mxu0 0.0
        %7031 = vmatmul.mubr.f32.gmra.mxu0 %v6807
        %v7032 = vpop.f32.mrf.mxu0
        %v7033 = vadd.f32 %v6928, %v7032
        %v7034 = vpop.f32.mrf.mxu0
        %7035 = vmatprep.mubr.f32.mxu0 0.0
        %7036 = vmatmul.mubr.f32.gmra.mxu0 %v6808
        %v7037 = vpop.f32.mrf.mxu0
        %v7038 = vadd.f32 %v6933, %v7037
        %v7039 = vpop.f32.mrf.mxu0
        %7040 = vmatprep.mubr.f32.mxu0 0.0
        %7041 = vmatmul.mubr.f32.gmra.mxu0 %v6809
        %v7042 = vpop.f32.mrf.mxu0
        %v7043 = vadd.f32 %v6938, %v7042
        %v7044 = vpop.f32.mrf.mxu0
        %7045 = vmatprep.mubr.f32.mxu0 0.0
        %7046 = vmatmul.mubr.f32.gmra.mxu0 %v6810
        %v7047 = vpop.f32.mrf.mxu0
        %v7048 = vadd.f32 %v6943, %v7047
        %v7049 = vpop.f32.mrf.mxu0
        %7050 = vmatprep.mubr.f32.mxu0 0.0
        %7051 = vmatmul.mubr.f32.gmra.mxu0 %v6811
        %v7052 = vpop.f32.mrf.mxu0
        %v7053 = vadd.f32 %v6948, %v7052
        %v7054 = vpop.f32.mrf.mxu0
        %7055 = vmatprep.mubr.f32.mxu0 0.0
        %7056 = vmatmul.mubr.f32.gmra.mxu0 %v6812
        %v7057 = vpop.f32.mrf.mxu0
        %v7058 = vadd.f32 %v6953, %v7057
        %v7059 = vpop.f32.mrf.mxu0
        %7060 = vmatprep.mubr.f32.mxu0 0.0
        %7061 = vmatmul.mubr.f32.gmra.mxu0 %v6813
        %v7062 = vpop.f32.mrf.mxu0
        %v7063 = vadd.f32 %v6958, %v7062
        %v7064 = vpop.f32.mrf.mxu0
        %7065 = vdwg.mxu0
        %v7066 = vld [vmem:[#allocation3 + $0x2] sm:$0xff]
        %v7067 = vld [vmem:[#allocation3 + $0x12] sm:$0xff]
        %v7068 = vld [vmem:[#allocation3 + $0x22] sm:$0xff]
        %v7069 = vld [vmem:[#allocation3 + $0x32] sm:$0xff]
        %v7070 = vld [vmem:[#allocation3 + $0x42] sm:$0xff]
        %v7071 = vld [vmem:[#allocation3 + $0x52] sm:$0xff]
        %v7072 = vld [vmem:[#allocation3 + $0x62] sm:$0xff]
        %v7073 = vld [vmem:[#allocation3 + $0x72] sm:$0xff]
        %s7074 = scalar_lea.vmem %s1, 6016
        %v7075 = vld [vmem:[%s7074] sm:$0xff]
        %v7076 = vld [vmem:[%s7074 + $0x8] sm:$0xff]
        %v7077 = vld [vmem:[%s7074 + $0x10] sm:$0xff]
        %v7078 = vld [vmem:[%s7074 + $0x18] sm:$0xff]
        %v7079 = vld [vmem:[%s7074 + $0x20] sm:$0xff]
        %v7080 = vld [vmem:[%s7074 + $0x28] sm:$0xff]
        %v7081 = vld [vmem:[%s7074 + $0x30] sm:$0xff]
        %v7082 = vld [vmem:[%s7074 + $0x38] sm:$0xff]
        %v7083 = vld [vmem:[%s7074 + $0x40] sm:$0xff]
        %v7084 = vld [vmem:[%s7074 + $0x48] sm:$0xff]
        %v7085 = vld [vmem:[%s7074 + $0x50] sm:$0xff]
        %v7086 = vld [vmem:[%s7074 + $0x58] sm:$0xff]
        %v7087 = vld [vmem:[%s7074 + $0x60] sm:$0xff]
        %v7088 = vld [vmem:[%s7074 + $0x68] sm:$0xff]
        %v7089 = vld [vmem:[%s7074 + $0x70] sm:$0xff]
        %v7090 = vld [vmem:[%s7074 + $0x78] sm:$0xff]
        %7091 = vmatprep.subr.mxu0 0.0
        %7092 = vmatpush1.msra.mxu0 %v7090
        %7093 = vmatprep.subr.mxu0 0.0
        %7094 = vmatpush1.msra.mxu0 %v7089
        %7095 = vmatprep.subr.mxu0 0.0
        %7096 = vmatpush1.msra.mxu0 %v7088
        %7097 = vmatprep.subr.mxu0 0.0
        %7098 = vmatpush1.msra.mxu0 %v7087
        %7099 = vmatprep.subr.mxu0 0.0
        %7100 = vmatpush1.msra.mxu0 %v7086
        %7101 = vmatprep.subr.mxu0 0.0
        %7102 = vmatpush1.msra.mxu0 %v7085
        %7103 = vmatprep.subr.mxu0 0.0
        %7104 = vmatpush1.msra.mxu0 %v7084
        %7105 = vmatprep.subr.mxu0 0.0
        %7106 = vmatpush1.msra.mxu0 %v7083
        %7107 = vmatprep.subr.mxu0 0.0
        %7108 = vmatpush1.msra.mxu0 %v7082
        %7109 = vmatprep.subr.mxu0 0.0
        %7110 = vmatpush1.msra.mxu0 %v7081
        %7111 = vmatprep.subr.mxu0 0.0
        %7112 = vmatpush1.msra.mxu0 %v7080
        %7113 = vmatprep.subr.mxu0 0.0
        %7114 = vmatpush1.msra.mxu0 %v7079
        %7115 = vmatprep.subr.mxu0 0.0
        %7116 = vmatpush1.msra.mxu0 %v7078
        %7117 = vmatprep.subr.mxu0 0.0
        %7118 = vmatpush1.msra.mxu0 %v7077
        %7119 = vmatprep.subr.mxu0 0.0
        %7120 = vmatpush1.msra.mxu0 %v7076
        %7121 = vmatprep.subr.mxu0 0.0
        %7122 = vmatpush1.msra.mxu0 %v7075
        %7123 = vmatprep.subr.mxu0 0.0
        %7124 = vmatpush2.msra.mxu0 0.0
        %7125 = vmatprep.subr.mxu0 0.0
        %7126 = vmatpush2.msra.mxu0 0.0
        %7127 = vmatprep.subr.mxu0 0.0
        %7128 = vmatpush2.msra.mxu0 0.0
        %7129 = vmatprep.subr.mxu0 0.0
        %7130 = vmatpush2.msra.mxu0 0.0
        %7131 = vmatprep.subr.mxu0 0.0
        %7132 = vmatpush2.msra.mxu0 0.0
        %7133 = vmatprep.subr.mxu0 0.0
        %7134 = vmatpush2.msra.mxu0 0.0
        %7135 = vmatprep.subr.mxu0 0.0
        %7136 = vmatpush2.msra.mxu0 0.0
        %7137 = vmatprep.subr.mxu0 0.0
        %7138 = vmatpush2.msra.mxu0 0.0
        %7139 = vmatprep.subr.mxu0 0.0
        %7140 = vmatpush2.msra.mxu0 0.0
        %7141 = vmatprep.subr.mxu0 0.0
        %7142 = vmatpush2.msra.mxu0 0.0
        %7143 = vmatprep.subr.mxu0 0.0
        %7144 = vmatpush2.msra.mxu0 0.0
        %7145 = vmatprep.subr.mxu0 0.0
        %7146 = vmatpush2.msra.mxu0 0.0
        %7147 = vmatprep.subr.mxu0 0.0
        %7148 = vmatpush2.msra.mxu0 0.0
        %7149 = vmatprep.subr.mxu0 0.0
        %7150 = vmatpush2.msra.mxu0 0.0
        %7151 = vmatprep.subr.mxu0 0.0
        %7152 = vmatpush2.msra.mxu0 0.0
        %7153 = vmatprep.subr.mxu0 0.0
        %7154 = vmatpush2.msra.mxu0 0.0
        %7155 = vmatprep.mubr.f32.mxu0 0.0
        %7156 = vmatmul.mubr.f32.gmra.mxu0 %v7066
        %v7157 = vpop.f32.mrf.mxu0
        %v7158 = vadd.f32 0.0, %v7157
        %v7159 = vpop.f32.mrf.mxu0
        %7160 = vmatprep.mubr.f32.mxu0 0.0
        %7161 = vmatmul.mubr.f32.gmra.mxu0 %v7067
        %v7162 = vpop.f32.mrf.mxu0
        %v7163 = vadd.f32 0.0, %v7162
        %v7164 = vpop.f32.mrf.mxu0
        %7165 = vmatprep.mubr.f32.mxu0 0.0
        %7166 = vmatmul.mubr.f32.gmra.mxu0 %v7068
        %v7167 = vpop.f32.mrf.mxu0
        %v7168 = vadd.f32 0.0, %v7167
        %v7169 = vpop.f32.mrf.mxu0
        %7170 = vmatprep.mubr.f32.mxu0 0.0
        %7171 = vmatmul.mubr.f32.gmra.mxu0 %v7069
        %v7172 = vpop.f32.mrf.mxu0
        %v7173 = vadd.f32 0.0, %v7172
        %v7174 = vpop.f32.mrf.mxu0
        %7175 = vmatprep.mubr.f32.mxu0 0.0
        %7176 = vmatmul.mubr.f32.gmra.mxu0 %v7070
        %v7177 = vpop.f32.mrf.mxu0
        %v7178 = vadd.f32 0.0, %v7177
        %v7179 = vpop.f32.mrf.mxu0
        %7180 = vmatprep.mubr.f32.mxu0 0.0
        %7181 = vmatmul.mubr.f32.gmra.mxu0 %v7071
        %v7182 = vpop.f32.mrf.mxu0
        %v7183 = vadd.f32 0.0, %v7182
        %v7184 = vpop.f32.mrf.mxu0
        %7185 = vmatprep.mubr.f32.mxu0 0.0
        %7186 = vmatmul.mubr.f32.gmra.mxu0 %v7072
        %v7187 = vpop.f32.mrf.mxu0
        %v7188 = vadd.f32 0.0, %v7187
        %v7189 = vpop.f32.mrf.mxu0
        %7190 = vmatprep.mubr.f32.mxu0 0.0
        %7191 = vmatmul.mubr.f32.gmra.mxu0 %v7073
        %v7192 = vpop.f32.mrf.mxu0
        %v7193 = vadd.f32 0.0, %v7192
        %v7194 = vpop.f32.mrf.mxu0
        %7195 = vdwg.mxu0
        %v7196 = vadd.f32 %v7028, %v7158
        %v7197 = vadd.f32 %v7033, %v7163
        %v7198 = vadd.f32 %v7038, %v7168
        %v7199 = vadd.f32 %v7043, %v7173
        %v7200 = vadd.f32 %v7048, %v7178
        %v7201 = vadd.f32 %v7053, %v7183
        %v7202 = vadd.f32 %v7058, %v7188
        %v7203 = vadd.f32 %v7063, %v7193
        %v7204 = vld [vmem:[%s385] sm:$0xff]
        %v7205 = vld [vmem:[%s385 + $0x10] sm:$0xff]
        %v7206 = vld [vmem:[%s385 + $0x20] sm:$0xff]
        %v7207 = vld [vmem:[%s385 + $0x30] sm:$0xff]
        %v7208 = vld [vmem:[%s385 + $0x40] sm:$0xff]
        %v7209 = vld [vmem:[%s385 + $0x50] sm:$0xff]
        %v7210 = vld [vmem:[%s385 + $0x60] sm:$0xff]
        %v7211 = vld [vmem:[%s385 + $0x70] sm:$0xff]
        %s7212 = scalar_lea.vmem %s1, 6144
        %v7213 = vld [vmem:[%s7212] sm:$0xff]
        %v7214 = vld [vmem:[%s7212 + $0x8] sm:$0xff]
        %v7215 = vld [vmem:[%s7212 + $0x10] sm:$0xff]
        %v7216 = vld [vmem:[%s7212 + $0x18] sm:$0xff]
        %v7217 = vld [vmem:[%s7212 + $0x20] sm:$0xff]
        %v7218 = vld [vmem:[%s7212 + $0x28] sm:$0xff]
        %v7219 = vld [vmem:[%s7212 + $0x30] sm:$0xff]
        %v7220 = vld [vmem:[%s7212 + $0x38] sm:$0xff]
        %v7221 = vld [vmem:[%s7212 + $0x40] sm:$0xff]
        %v7222 = vld [vmem:[%s7212 + $0x48] sm:$0xff]
        %v7223 = vld [vmem:[%s7212 + $0x50] sm:$0xff]
        %v7224 = vld [vmem:[%s7212 + $0x58] sm:$0xff]
        %v7225 = vld [vmem:[%s7212 + $0x60] sm:$0xff]
        %v7226 = vld [vmem:[%s7212 + $0x68] sm:$0xff]
        %v7227 = vld [vmem:[%s7212 + $0x70] sm:$0xff]
        %v7228 = vld [vmem:[%s7212 + $0x78] sm:$0xff]
        %7229 = vmatprep.subr.mxu0 0.0
        %7230 = vmatpush1.msra.mxu0 %v7228
        %7231 = vmatprep.subr.mxu0 0.0
        %7232 = vmatpush1.msra.mxu0 %v7227
        %7233 = vmatprep.subr.mxu0 0.0
        %7234 = vmatpush1.msra.mxu0 %v7226
        %7235 = vmatprep.subr.mxu0 0.0
        %7236 = vmatpush1.msra.mxu0 %v7225
        %7237 = vmatprep.subr.mxu0 0.0
        %7238 = vmatpush1.msra.mxu0 %v7224
        %7239 = vmatprep.subr.mxu0 0.0
        %7240 = vmatpush1.msra.mxu0 %v7223
        %7241 = vmatprep.subr.mxu0 0.0
        %7242 = vmatpush1.msra.mxu0 %v7222
        %7243 = vmatprep.subr.mxu0 0.0
        %7244 = vmatpush1.msra.mxu0 %v7221
        %7245 = vmatprep.subr.mxu0 0.0
        %7246 = vmatpush1.msra.mxu0 %v7220
        %7247 = vmatprep.subr.mxu0 0.0
        %7248 = vmatpush1.msra.mxu0 %v7219
        %7249 = vmatprep.subr.mxu0 0.0
        %7250 = vmatpush1.msra.mxu0 %v7218
        %7251 = vmatprep.subr.mxu0 0.0
        %7252 = vmatpush1.msra.mxu0 %v7217
        %7253 = vmatprep.subr.mxu0 0.0
        %7254 = vmatpush1.msra.mxu0 %v7216
        %7255 = vmatprep.subr.mxu0 0.0
        %7256 = vmatpush1.msra.mxu0 %v7215
        %7257 = vmatprep.subr.mxu0 0.0
        %7258 = vmatpush1.msra.mxu0 %v7214
        %7259 = vmatprep.subr.mxu0 0.0
        %7260 = vmatpush1.msra.mxu0 %v7213
        %7261 = vmatprep.subr.mxu0 0.0
        %7262 = vmatpush2.msra.mxu0 0.0
        %7263 = vmatprep.subr.mxu0 0.0
        %7264 = vmatpush2.msra.mxu0 0.0
        %7265 = vmatprep.subr.mxu0 0.0
        %7266 = vmatpush2.msra.mxu0 0.0
        %7267 = vmatprep.subr.mxu0 0.0
        %7268 = vmatpush2.msra.mxu0 0.0
        %7269 = vmatprep.subr.mxu0 0.0
        %7270 = vmatpush2.msra.mxu0 0.0
        %7271 = vmatprep.subr.mxu0 0.0
        %7272 = vmatpush2.msra.mxu0 0.0
        %7273 = vmatprep.subr.mxu0 0.0
        %7274 = vmatpush2.msra.mxu0 0.0
        %7275 = vmatprep.subr.mxu0 0.0
        %7276 = vmatpush2.msra.mxu0 0.0
        %7277 = vmatprep.subr.mxu0 0.0
        %7278 = vmatpush2.msra.mxu0 0.0
        %7279 = vmatprep.subr.mxu0 0.0
        %7280 = vmatpush2.msra.mxu0 0.0
        %7281 = vmatprep.subr.mxu0 0.0
        %7282 = vmatpush2.msra.mxu0 0.0
        %7283 = vmatprep.subr.mxu0 0.0
        %7284 = vmatpush2.msra.mxu0 0.0
        %7285 = vmatprep.subr.mxu0 0.0
        %7286 = vmatpush2.msra.mxu0 0.0
        %7287 = vmatprep.subr.mxu0 0.0
        %7288 = vmatpush2.msra.mxu0 0.0
        %7289 = vmatprep.subr.mxu0 0.0
        %7290 = vmatpush2.msra.mxu0 0.0
        %7291 = vmatprep.subr.mxu0 0.0
        %7292 = vmatpush2.msra.mxu0 0.0
        %7293 = vmatprep.mubr.f32.mxu0 0.0
        %7294 = vmatmul.mubr.f32.gmra.mxu0 %v7204
        %v7295 = vpop.f32.mrf.mxu0
        %v7296 = vadd.f32 0.0, %v7295
        %v7297 = vpop.f32.mrf.mxu0
        %7298 = vmatprep.mubr.f32.mxu0 0.0
        %7299 = vmatmul.mubr.f32.gmra.mxu0 %v7205
        %v7300 = vpop.f32.mrf.mxu0
        %v7301 = vadd.f32 0.0, %v7300
        %v7302 = vpop.f32.mrf.mxu0
        %7303 = vmatprep.mubr.f32.mxu0 0.0
        %7304 = vmatmul.mubr.f32.gmra.mxu0 %v7206
        %v7305 = vpop.f32.mrf.mxu0
        %v7306 = vadd.f32 0.0, %v7305
        %v7307 = vpop.f32.mrf.mxu0
        %7308 = vmatprep.mubr.f32.mxu0 0.0
        %7309 = vmatmul.mubr.f32.gmra.mxu0 %v7207
        %v7310 = vpop.f32.mrf.mxu0
        %v7311 = vadd.f32 0.0, %v7310
        %v7312 = vpop.f32.mrf.mxu0
        %7313 = vmatprep.mubr.f32.mxu0 0.0
        %7314 = vmatmul.mubr.f32.gmra.mxu0 %v7208
        %v7315 = vpop.f32.mrf.mxu0
        %v7316 = vadd.f32 0.0, %v7315
        %v7317 = vpop.f32.mrf.mxu0
        %7318 = vmatprep.mubr.f32.mxu0 0.0
        %7319 = vmatmul.mubr.f32.gmra.mxu0 %v7209
        %v7320 = vpop.f32.mrf.mxu0
        %v7321 = vadd.f32 0.0, %v7320
        %v7322 = vpop.f32.mrf.mxu0
        %7323 = vmatprep.mubr.f32.mxu0 0.0
        %7324 = vmatmul.mubr.f32.gmra.mxu0 %v7210
        %v7325 = vpop.f32.mrf.mxu0
        %v7326 = vadd.f32 0.0, %v7325
        %v7327 = vpop.f32.mrf.mxu0
        %7328 = vmatprep.mubr.f32.mxu0 0.0
        %7329 = vmatmul.mubr.f32.gmra.mxu0 %v7211
        %v7330 = vpop.f32.mrf.mxu0
        %v7331 = vadd.f32 0.0, %v7330
        %v7332 = vpop.f32.mrf.mxu0
        %7333 = vdwg.mxu0
        %v7334 = vadd.f32 %v7196, %v7296
        %v7335 = vadd.f32 %v7197, %v7301
        %v7336 = vadd.f32 %v7198, %v7306
        %v7337 = vadd.f32 %v7199, %v7311
        %v7338 = vadd.f32 %v7200, %v7316
        %v7339 = vadd.f32 %v7201, %v7321
        %v7340 = vadd.f32 %v7202, %v7326
        %v7341 = vadd.f32 %v7203, %v7331
        %v7342 = vld [vmem:[%s385 + $0x1] sm:$0xff]
        %v7343 = vld [vmem:[%s385 + $0x11] sm:$0xff]
        %v7344 = vld [vmem:[%s385 + $0x21] sm:$0xff]
        %v7345 = vld [vmem:[%s385 + $0x31] sm:$0xff]
        %v7346 = vld [vmem:[%s385 + $0x41] sm:$0xff]
        %v7347 = vld [vmem:[%s385 + $0x51] sm:$0xff]
        %v7348 = vld [vmem:[%s385 + $0x61] sm:$0xff]
        %v7349 = vld [vmem:[%s385 + $0x71] sm:$0xff]
        %s7350 = scalar_lea.vmem %s1, 6272
        %v7351 = vld [vmem:[%s7350] sm:$0xff]
        %v7352 = vld [vmem:[%s7350 + $0x8] sm:$0xff]
        %v7353 = vld [vmem:[%s7350 + $0x10] sm:$0xff]
        %v7354 = vld [vmem:[%s7350 + $0x18] sm:$0xff]
        %v7355 = vld [vmem:[%s7350 + $0x20] sm:$0xff]
        %v7356 = vld [vmem:[%s7350 + $0x28] sm:$0xff]
        %v7357 = vld [vmem:[%s7350 + $0x30] sm:$0xff]
        %v7358 = vld [vmem:[%s7350 + $0x38] sm:$0xff]
        %v7359 = vld [vmem:[%s7350 + $0x40] sm:$0xff]
        %v7360 = vld [vmem:[%s7350 + $0x48] sm:$0xff]
        %v7361 = vld [vmem:[%s7350 + $0x50] sm:$0xff]
        %v7362 = vld [vmem:[%s7350 + $0x58] sm:$0xff]
        %v7363 = vld [vmem:[%s7350 + $0x60] sm:$0xff]
        %v7364 = vld [vmem:[%s7350 + $0x68] sm:$0xff]
        %v7365 = vld [vmem:[%s7350 + $0x70] sm:$0xff]
        %v7366 = vld [vmem:[%s7350 + $0x78] sm:$0xff]
        %7367 = vmatprep.subr.mxu0 0.0
        %7368 = vmatpush1.msra.mxu0 %v7366
        %7369 = vmatprep.subr.mxu0 0.0
        %7370 = vmatpush1.msra.mxu0 %v7365
        %7371 = vmatprep.subr.mxu0 0.0
        %7372 = vmatpush1.msra.mxu0 %v7364
        %7373 = vmatprep.subr.mxu0 0.0
        %7374 = vmatpush1.msra.mxu0 %v7363
        %7375 = vmatprep.subr.mxu0 0.0
        %7376 = vmatpush1.msra.mxu0 %v7362
        %7377 = vmatprep.subr.mxu0 0.0
        %7378 = vmatpush1.msra.mxu0 %v7361
        %7379 = vmatprep.subr.mxu0 0.0
        %7380 = vmatpush1.msra.mxu0 %v7360
        %7381 = vmatprep.subr.mxu0 0.0
        %7382 = vmatpush1.msra.mxu0 %v7359
        %7383 = vmatprep.subr.mxu0 0.0
        %7384 = vmatpush1.msra.mxu0 %v7358
        %7385 = vmatprep.subr.mxu0 0.0
        %7386 = vmatpush1.msra.mxu0 %v7357
        %7387 = vmatprep.subr.mxu0 0.0
        %7388 = vmatpush1.msra.mxu0 %v7356
        %7389 = vmatprep.subr.mxu0 0.0
        %7390 = vmatpush1.msra.mxu0 %v7355
        %7391 = vmatprep.subr.mxu0 0.0
        %7392 = vmatpush1.msra.mxu0 %v7354
        %7393 = vmatprep.subr.mxu0 0.0
        %7394 = vmatpush1.msra.mxu0 %v7353
        %7395 = vmatprep.subr.mxu0 0.0
        %7396 = vmatpush1.msra.mxu0 %v7352
        %7397 = vmatprep.subr.mxu0 0.0
        %7398 = vmatpush1.msra.mxu0 %v7351
        %7399 = vmatprep.subr.mxu0 0.0
        %7400 = vmatpush2.msra.mxu0 0.0
        %7401 = vmatprep.subr.mxu0 0.0
        %7402 = vmatpush2.msra.mxu0 0.0
        %7403 = vmatprep.subr.mxu0 0.0
        %7404 = vmatpush2.msra.mxu0 0.0
        %7405 = vmatprep.subr.mxu0 0.0
        %7406 = vmatpush2.msra.mxu0 0.0
        %7407 = vmatprep.subr.mxu0 0.0
        %7408 = vmatpush2.msra.mxu0 0.0
        %7409 = vmatprep.subr.mxu0 0.0
        %7410 = vmatpush2.msra.mxu0 0.0
        %7411 = vmatprep.subr.mxu0 0.0
        %7412 = vmatpush2.msra.mxu0 0.0
        %7413 = vmatprep.subr.mxu0 0.0
        %7414 = vmatpush2.msra.mxu0 0.0
        %7415 = vmatprep.subr.mxu0 0.0
        %7416 = vmatpush2.msra.mxu0 0.0
        %7417 = vmatprep.subr.mxu0 0.0
        %7418 = vmatpush2.msra.mxu0 0.0
        %7419 = vmatprep.subr.mxu0 0.0
        %7420 = vmatpush2.msra.mxu0 0.0
        %7421 = vmatprep.subr.mxu0 0.0
        %7422 = vmatpush2.msra.mxu0 0.0
        %7423 = vmatprep.subr.mxu0 0.0
        %7424 = vmatpush2.msra.mxu0 0.0
        %7425 = vmatprep.subr.mxu0 0.0
        %7426 = vmatpush2.msra.mxu0 0.0
        %7427 = vmatprep.subr.mxu0 0.0
        %7428 = vmatpush2.msra.mxu0 0.0
        %7429 = vmatprep.subr.mxu0 0.0
        %7430 = vmatpush2.msra.mxu0 0.0
        %7431 = vmatprep.mubr.f32.mxu0 0.0
        %7432 = vmatmul.mubr.f32.gmra.mxu0 %v7342
        %v7433 = vpop.f32.mrf.mxu0
        %v7434 = vadd.f32 0.0, %v7433
        %v7435 = vpop.f32.mrf.mxu0
        %7436 = vmatprep.mubr.f32.mxu0 0.0
        %7437 = vmatmul.mubr.f32.gmra.mxu0 %v7343
        %v7438 = vpop.f32.mrf.mxu0
        %v7439 = vadd.f32 0.0, %v7438
        %v7440 = vpop.f32.mrf.mxu0
        %7441 = vmatprep.mubr.f32.mxu0 0.0
        %7442 = vmatmul.mubr.f32.gmra.mxu0 %v7344
        %v7443 = vpop.f32.mrf.mxu0
        %v7444 = vadd.f32 0.0, %v7443
        %v7445 = vpop.f32.mrf.mxu0
        %7446 = vmatprep.mubr.f32.mxu0 0.0
        %7447 = vmatmul.mubr.f32.gmra.mxu0 %v7345
        %v7448 = vpop.f32.mrf.mxu0
        %v7449 = vadd.f32 0.0, %v7448
        %v7450 = vpop.f32.mrf.mxu0
        %7451 = vmatprep.mubr.f32.mxu0 0.0
        %7452 = vmatmul.mubr.f32.gmra.mxu0 %v7346
        %v7453 = vpop.f32.mrf.mxu0
        %v7454 = vadd.f32 0.0, %v7453
        %v7455 = vpop.f32.mrf.mxu0
        %7456 = vmatprep.mubr.f32.mxu0 0.0
        %7457 = vmatmul.mubr.f32.gmra.mxu0 %v7347
        %v7458 = vpop.f32.mrf.mxu0
        %v7459 = vadd.f32 0.0, %v7458
        %v7460 = vpop.f32.mrf.mxu0
        %7461 = vmatprep.mubr.f32.mxu0 0.0
        %7462 = vmatmul.mubr.f32.gmra.mxu0 %v7348
        %v7463 = vpop.f32.mrf.mxu0
        %v7464 = vadd.f32 0.0, %v7463
        %v7465 = vpop.f32.mrf.mxu0
        %7466 = vmatprep.mubr.f32.mxu0 0.0
        %7467 = vmatmul.mubr.f32.gmra.mxu0 %v7349
        %v7468 = vpop.f32.mrf.mxu0
        %v7469 = vadd.f32 0.0, %v7468
        %v7470 = vpop.f32.mrf.mxu0
        %7471 = vdwg.mxu0
        %v7472 = vadd.f32 %v7334, %v7434
        %v7473 = vadd.f32 %v7335, %v7439
        %v7474 = vadd.f32 %v7336, %v7444
        %v7475 = vadd.f32 %v7337, %v7449
        %v7476 = vadd.f32 %v7338, %v7454
        %v7477 = vadd.f32 %v7339, %v7459
        %v7478 = vadd.f32 %v7340, %v7464
        %v7479 = vadd.f32 %v7341, %v7469
        %v7480 = vld [vmem:[%s385 + $0x2] sm:$0xff]
        %v7481 = vld [vmem:[%s385 + $0x12] sm:$0xff]
        %v7482 = vld [vmem:[%s385 + $0x22] sm:$0xff]
        %v7483 = vld [vmem:[%s385 + $0x32] sm:$0xff]
        %v7484 = vld [vmem:[%s385 + $0x42] sm:$0xff]
        %v7485 = vld [vmem:[%s385 + $0x52] sm:$0xff]
        %v7486 = vld [vmem:[%s385 + $0x62] sm:$0xff]
        %v7487 = vld [vmem:[%s385 + $0x72] sm:$0xff]
        %s7488 = scalar_lea.vmem %s1, 6400
        %v7489 = vld [vmem:[%s7488] sm:$0xff]
        %v7490 = vld [vmem:[%s7488 + $0x8] sm:$0xff]
        %v7491 = vld [vmem:[%s7488 + $0x10] sm:$0xff]
        %v7492 = vld [vmem:[%s7488 + $0x18] sm:$0xff]
        %v7493 = vld [vmem:[%s7488 + $0x20] sm:$0xff]
        %v7494 = vld [vmem:[%s7488 + $0x28] sm:$0xff]
        %v7495 = vld [vmem:[%s7488 + $0x30] sm:$0xff]
        %v7496 = vld [vmem:[%s7488 + $0x38] sm:$0xff]
        %v7497 = vld [vmem:[%s7488 + $0x40] sm:$0xff]
        %v7498 = vld [vmem:[%s7488 + $0x48] sm:$0xff]
        %v7499 = vld [vmem:[%s7488 + $0x50] sm:$0xff]
        %v7500 = vld [vmem:[%s7488 + $0x58] sm:$0xff]
        %v7501 = vld [vmem:[%s7488 + $0x60] sm:$0xff]
        %v7502 = vld [vmem:[%s7488 + $0x68] sm:$0xff]
        %v7503 = vld [vmem:[%s7488 + $0x70] sm:$0xff]
        %v7504 = vld [vmem:[%s7488 + $0x78] sm:$0xff]
        %7505 = vmatprep.subr.mxu0 0.0
        %7506 = vmatpush1.msra.mxu0 %v7504
        %7507 = vmatprep.subr.mxu0 0.0
        %7508 = vmatpush1.msra.mxu0 %v7503
        %7509 = vmatprep.subr.mxu0 0.0
        %7510 = vmatpush1.msra.mxu0 %v7502
        %7511 = vmatprep.subr.mxu0 0.0
        %7512 = vmatpush1.msra.mxu0 %v7501
        %7513 = vmatprep.subr.mxu0 0.0
        %7514 = vmatpush1.msra.mxu0 %v7500
        %7515 = vmatprep.subr.mxu0 0.0
        %7516 = vmatpush1.msra.mxu0 %v7499
        %7517 = vmatprep.subr.mxu0 0.0
        %7518 = vmatpush1.msra.mxu0 %v7498
        %7519 = vmatprep.subr.mxu0 0.0
        %7520 = vmatpush1.msra.mxu0 %v7497
        %7521 = vmatprep.subr.mxu0 0.0
        %7522 = vmatpush1.msra.mxu0 %v7496
        %7523 = vmatprep.subr.mxu0 0.0
        %7524 = vmatpush1.msra.mxu0 %v7495
        %7525 = vmatprep.subr.mxu0 0.0
        %7526 = vmatpush1.msra.mxu0 %v7494
        %7527 = vmatprep.subr.mxu0 0.0
        %7528 = vmatpush1.msra.mxu0 %v7493
        %7529 = vmatprep.subr.mxu0 0.0
        %7530 = vmatpush1.msra.mxu0 %v7492
        %7531 = vmatprep.subr.mxu0 0.0
        %7532 = vmatpush1.msra.mxu0 %v7491
        %7533 = vmatprep.subr.mxu0 0.0
        %7534 = vmatpush1.msra.mxu0 %v7490
        %7535 = vmatprep.subr.mxu0 0.0
        %7536 = vmatpush1.msra.mxu0 %v7489
        %7537 = vmatprep.subr.mxu0 0.0
        %7538 = vmatpush2.msra.mxu0 0.0
        %7539 = vmatprep.subr.mxu0 0.0
        %7540 = vmatpush2.msra.mxu0 0.0
        %7541 = vmatprep.subr.mxu0 0.0
        %7542 = vmatpush2.msra.mxu0 0.0
        %7543 = vmatprep.subr.mxu0 0.0
        %7544 = vmatpush2.msra.mxu0 0.0
        %7545 = vmatprep.subr.mxu0 0.0
        %7546 = vmatpush2.msra.mxu0 0.0
        %7547 = vmatprep.subr.mxu0 0.0
        %7548 = vmatpush2.msra.mxu0 0.0
        %7549 = vmatprep.subr.mxu0 0.0
        %7550 = vmatpush2.msra.mxu0 0.0
        %7551 = vmatprep.subr.mxu0 0.0
        %7552 = vmatpush2.msra.mxu0 0.0
        %7553 = vmatprep.subr.mxu0 0.0
        %7554 = vmatpush2.msra.mxu0 0.0
        %7555 = vmatprep.subr.mxu0 0.0
        %7556 = vmatpush2.msra.mxu0 0.0
        %7557 = vmatprep.subr.mxu0 0.0
        %7558 = vmatpush2.msra.mxu0 0.0
        %7559 = vmatprep.subr.mxu0 0.0
        %7560 = vmatpush2.msra.mxu0 0.0
        %7561 = vmatprep.subr.mxu0 0.0
        %7562 = vmatpush2.msra.mxu0 0.0
        %7563 = vmatprep.subr.mxu0 0.0
        %7564 = vmatpush2.msra.mxu0 0.0
        %7565 = vmatprep.subr.mxu0 0.0
        %7566 = vmatpush2.msra.mxu0 0.0
        %7567 = vmatprep.subr.mxu0 0.0
        %7568 = vmatpush2.msra.mxu0 0.0
        %7569 = vmatprep.mubr.f32.mxu0 0.0
        %7570 = vmatmul.mubr.f32.gmra.mxu0 %v7480
        %v7571 = vpop.f32.mrf.mxu0
        %v7572 = vadd.f32 0.0, %v7571
        %v7573 = vpop.f32.mrf.mxu0
        %7574 = vmatprep.mubr.f32.mxu0 0.0
        %7575 = vmatmul.mubr.f32.gmra.mxu0 %v7481
        %v7576 = vpop.f32.mrf.mxu0
        %v7577 = vadd.f32 0.0, %v7576
        %v7578 = vpop.f32.mrf.mxu0
        %7579 = vmatprep.mubr.f32.mxu0 0.0
        %7580 = vmatmul.mubr.f32.gmra.mxu0 %v7482
        %v7581 = vpop.f32.mrf.mxu0
        %v7582 = vadd.f32 0.0, %v7581
        %v7583 = vpop.f32.mrf.mxu0
        %7584 = vmatprep.mubr.f32.mxu0 0.0
        %7585 = vmatmul.mubr.f32.gmra.mxu0 %v7483
        %v7586 = vpop.f32.mrf.mxu0
        %v7587 = vadd.f32 0.0, %v7586
        %v7588 = vpop.f32.mrf.mxu0
        %7589 = vmatprep.mubr.f32.mxu0 0.0
        %7590 = vmatmul.mubr.f32.gmra.mxu0 %v7484
        %v7591 = vpop.f32.mrf.mxu0
        %v7592 = vadd.f32 0.0, %v7591
        %v7593 = vpop.f32.mrf.mxu0
        %7594 = vmatprep.mubr.f32.mxu0 0.0
        %7595 = vmatmul.mubr.f32.gmra.mxu0 %v7485
        %v7596 = vpop.f32.mrf.mxu0
        %v7597 = vadd.f32 0.0, %v7596
        %v7598 = vpop.f32.mrf.mxu0
        %7599 = vmatprep.mubr.f32.mxu0 0.0
        %7600 = vmatmul.mubr.f32.gmra.mxu0 %v7486
        %v7601 = vpop.f32.mrf.mxu0
        %v7602 = vadd.f32 0.0, %v7601
        %v7603 = vpop.f32.mrf.mxu0
        %7604 = vmatprep.mubr.f32.mxu0 0.0
        %7605 = vmatmul.mubr.f32.gmra.mxu0 %v7487
        %v7606 = vpop.f32.mrf.mxu0
        %v7607 = vadd.f32 0.0, %v7606
        %v7608 = vpop.f32.mrf.mxu0
        %7609 = vdwg.mxu0
        %v7610 = vadd.f32 %v7472, %v7572
        %v7611 = vadd.f32 %v7473, %v7577
        %v7612 = vadd.f32 %v7474, %v7582
        %v7613 = vadd.f32 %v7475, %v7587
        %v7614 = vadd.f32 %v7476, %v7592
        %v7615 = vadd.f32 %v7477, %v7597
        %v7616 = vadd.f32 %v7478, %v7602
        %v7617 = vadd.f32 %v7479, %v7607
        %v7618 = vld [vmem:[%s2517] sm:$0xff]
        %v7619 = vld [vmem:[%s2517 + $0x10] sm:$0xff]
        %v7620 = vld [vmem:[%s2517 + $0x20] sm:$0xff]
        %v7621 = vld [vmem:[%s2517 + $0x30] sm:$0xff]
        %v7622 = vld [vmem:[%s2517 + $0x40] sm:$0xff]
        %v7623 = vld [vmem:[%s2517 + $0x50] sm:$0xff]
        %v7624 = vld [vmem:[%s2517 + $0x60] sm:$0xff]
        %v7625 = vld [vmem:[%s2517 + $0x70] sm:$0xff]
        %s7626 = scalar_lea.vmem %s1, 6528
        %v7627 = vld [vmem:[%s7626] sm:$0xff]
        %v7628 = vld [vmem:[%s7626 + $0x8] sm:$0xff]
        %v7629 = vld [vmem:[%s7626 + $0x10] sm:$0xff]
        %v7630 = vld [vmem:[%s7626 + $0x18] sm:$0xff]
        %v7631 = vld [vmem:[%s7626 + $0x20] sm:$0xff]
        %v7632 = vld [vmem:[%s7626 + $0x28] sm:$0xff]
        %v7633 = vld [vmem:[%s7626 + $0x30] sm:$0xff]
        %v7634 = vld [vmem:[%s7626 + $0x38] sm:$0xff]
        %v7635 = vld [vmem:[%s7626 + $0x40] sm:$0xff]
        %v7636 = vld [vmem:[%s7626 + $0x48] sm:$0xff]
        %v7637 = vld [vmem:[%s7626 + $0x50] sm:$0xff]
        %v7638 = vld [vmem:[%s7626 + $0x58] sm:$0xff]
        %v7639 = vld [vmem:[%s7626 + $0x60] sm:$0xff]
        %v7640 = vld [vmem:[%s7626 + $0x68] sm:$0xff]
        %v7641 = vld [vmem:[%s7626 + $0x70] sm:$0xff]
        %v7642 = vld [vmem:[%s7626 + $0x78] sm:$0xff]
        %7643 = vmatprep.subr.mxu0 0.0
        %7644 = vmatpush1.msra.mxu0 %v7642
        %7645 = vmatprep.subr.mxu0 0.0
        %7646 = vmatpush1.msra.mxu0 %v7641
        %7647 = vmatprep.subr.mxu0 0.0
        %7648 = vmatpush1.msra.mxu0 %v7640
        %7649 = vmatprep.subr.mxu0 0.0
        %7650 = vmatpush1.msra.mxu0 %v7639
        %7651 = vmatprep.subr.mxu0 0.0
        %7652 = vmatpush1.msra.mxu0 %v7638
        %7653 = vmatprep.subr.mxu0 0.0
        %7654 = vmatpush1.msra.mxu0 %v7637
        %7655 = vmatprep.subr.mxu0 0.0
        %7656 = vmatpush1.msra.mxu0 %v7636
        %7657 = vmatprep.subr.mxu0 0.0
        %7658 = vmatpush1.msra.mxu0 %v7635
        %7659 = vmatprep.subr.mxu0 0.0
        %7660 = vmatpush1.msra.mxu0 %v7634
        %7661 = vmatprep.subr.mxu0 0.0
        %7662 = vmatpush1.msra.mxu0 %v7633
        %7663 = vmatprep.subr.mxu0 0.0
        %7664 = vmatpush1.msra.mxu0 %v7632
        %7665 = vmatprep.subr.mxu0 0.0
        %7666 = vmatpush1.msra.mxu0 %v7631
        %7667 = vmatprep.subr.mxu0 0.0
        %7668 = vmatpush1.msra.mxu0 %v7630
        %7669 = vmatprep.subr.mxu0 0.0
        %7670 = vmatpush1.msra.mxu0 %v7629
        %7671 = vmatprep.subr.mxu0 0.0
        %7672 = vmatpush1.msra.mxu0 %v7628
        %7673 = vmatprep.subr.mxu0 0.0
        %7674 = vmatpush1.msra.mxu0 %v7627
        %7675 = vmatprep.subr.mxu0 0.0
        %7676 = vmatpush2.msra.mxu0 0.0
        %7677 = vmatprep.subr.mxu0 0.0
        %7678 = vmatpush2.msra.mxu0 0.0
        %7679 = vmatprep.subr.mxu0 0.0
        %7680 = vmatpush2.msra.mxu0 0.0
        %7681 = vmatprep.subr.mxu0 0.0
        %7682 = vmatpush2.msra.mxu0 0.0
        %7683 = vmatprep.subr.mxu0 0.0
        %7684 = vmatpush2.msra.mxu0 0.0
        %7685 = vmatprep.subr.mxu0 0.0
        %7686 = vmatpush2.msra.mxu0 0.0
        %7687 = vmatprep.subr.mxu0 0.0
        %7688 = vmatpush2.msra.mxu0 0.0
        %7689 = vmatprep.subr.mxu0 0.0
        %7690 = vmatpush2.msra.mxu0 0.0
        %7691 = vmatprep.subr.mxu0 0.0
        %7692 = vmatpush2.msra.mxu0 0.0
        %7693 = vmatprep.subr.mxu0 0.0
        %7694 = vmatpush2.msra.mxu0 0.0
        %7695 = vmatprep.subr.mxu0 0.0
        %7696 = vmatpush2.msra.mxu0 0.0
        %7697 = vmatprep.subr.mxu0 0.0
        %7698 = vmatpush2.msra.mxu0 0.0
        %7699 = vmatprep.subr.mxu0 0.0
        %7700 = vmatpush2.msra.mxu0 0.0
        %7701 = vmatprep.subr.mxu0 0.0
        %7702 = vmatpush2.msra.mxu0 0.0
        %7703 = vmatprep.subr.mxu0 0.0
        %7704 = vmatpush2.msra.mxu0 0.0
        %7705 = vmatprep.subr.mxu0 0.0
        %7706 = vmatpush2.msra.mxu0 0.0
        %7707 = vmatprep.mubr.f32.mxu0 0.0
        %7708 = vmatmul.mubr.f32.gmra.mxu0 %v7618
        %v7709 = vpop.f32.mrf.mxu0
        %v7710 = vadd.f32 0.0, %v7709
        %v7711 = vpop.f32.mrf.mxu0
        %7712 = vmatprep.mubr.f32.mxu0 0.0
        %7713 = vmatmul.mubr.f32.gmra.mxu0 %v7619
        %v7714 = vpop.f32.mrf.mxu0
        %v7715 = vadd.f32 0.0, %v7714
        %v7716 = vpop.f32.mrf.mxu0
        %7717 = vmatprep.mubr.f32.mxu0 0.0
        %7718 = vmatmul.mubr.f32.gmra.mxu0 %v7620
        %v7719 = vpop.f32.mrf.mxu0
        %v7720 = vadd.f32 0.0, %v7719
        %v7721 = vpop.f32.mrf.mxu0
        %7722 = vmatprep.mubr.f32.mxu0 0.0
        %7723 = vmatmul.mubr.f32.gmra.mxu0 %v7621
        %v7724 = vpop.f32.mrf.mxu0
        %v7725 = vadd.f32 0.0, %v7724
        %v7726 = vpop.f32.mrf.mxu0
        %7727 = vmatprep.mubr.f32.mxu0 0.0
        %7728 = vmatmul.mubr.f32.gmra.mxu0 %v7622
        %v7729 = vpop.f32.mrf.mxu0
        %v7730 = vadd.f32 0.0, %v7729
        %v7731 = vpop.f32.mrf.mxu0
        %7732 = vmatprep.mubr.f32.mxu0 0.0
        %7733 = vmatmul.mubr.f32.gmra.mxu0 %v7623
        %v7734 = vpop.f32.mrf.mxu0
        %v7735 = vadd.f32 0.0, %v7734
        %v7736 = vpop.f32.mrf.mxu0
        %7737 = vmatprep.mubr.f32.mxu0 0.0
        %7738 = vmatmul.mubr.f32.gmra.mxu0 %v7624
        %v7739 = vpop.f32.mrf.mxu0
        %v7740 = vadd.f32 0.0, %v7739
        %v7741 = vpop.f32.mrf.mxu0
        %7742 = vmatprep.mubr.f32.mxu0 0.0
        %7743 = vmatmul.mubr.f32.gmra.mxu0 %v7625
        %v7744 = vpop.f32.mrf.mxu0
        %v7745 = vadd.f32 0.0, %v7744
        %v7746 = vpop.f32.mrf.mxu0
        %7747 = vdwg.mxu0
        %v7748 = vadd.f32 %v7610, %v7710
        %v7749 = vadd.f32 %v7611, %v7715
        %v7750 = vadd.f32 %v7612, %v7720
        %v7751 = vadd.f32 %v7613, %v7725
        %v7752 = vadd.f32 %v7614, %v7730
        %v7753 = vadd.f32 %v7615, %v7735
        %v7754 = vadd.f32 %v7616, %v7740
        %v7755 = vadd.f32 %v7617, %v7745
        %v7756 = vld [vmem:[%s2517 + $0x1] sm:$0xff]
        %v7757 = vld [vmem:[%s2517 + $0x11] sm:$0xff]
        %v7758 = vld [vmem:[%s2517 + $0x21] sm:$0xff]
        %v7759 = vld [vmem:[%s2517 + $0x31] sm:$0xff]
        %v7760 = vld [vmem:[%s2517 + $0x41] sm:$0xff]
        %v7761 = vld [vmem:[%s2517 + $0x51] sm:$0xff]
        %v7762 = vld [vmem:[%s2517 + $0x61] sm:$0xff]
        %v7763 = vld [vmem:[%s2517 + $0x71] sm:$0xff]
        %s7764 = scalar_lea.vmem %s1, 6656
        %v7765 = vld [vmem:[%s7764] sm:$0xff]
        %v7766 = vld [vmem:[%s7764 + $0x8] sm:$0xff]
        %v7767 = vld [vmem:[%s7764 + $0x10] sm:$0xff]
        %v7768 = vld [vmem:[%s7764 + $0x18] sm:$0xff]
        %v7769 = vld [vmem:[%s7764 + $0x20] sm:$0xff]
        %v7770 = vld [vmem:[%s7764 + $0x28] sm:$0xff]
        %v7771 = vld [vmem:[%s7764 + $0x30] sm:$0xff]
        %v7772 = vld [vmem:[%s7764 + $0x38] sm:$0xff]
        %v7773 = vld [vmem:[%s7764 + $0x40] sm:$0xff]
        %v7774 = vld [vmem:[%s7764 + $0x48] sm:$0xff]
        %v7775 = vld [vmem:[%s7764 + $0x50] sm:$0xff]
        %v7776 = vld [vmem:[%s7764 + $0x58] sm:$0xff]
        %v7777 = vld [vmem:[%s7764 + $0x60] sm:$0xff]
        %v7778 = vld [vmem:[%s7764 + $0x68] sm:$0xff]
        %v7779 = vld [vmem:[%s7764 + $0x70] sm:$0xff]
        %v7780 = vld [vmem:[%s7764 + $0x78] sm:$0xff]
        %7781 = vmatprep.subr.mxu0 0.0
        %7782 = vmatpush1.msra.mxu0 %v7780
        %7783 = vmatprep.subr.mxu0 0.0
        %7784 = vmatpush1.msra.mxu0 %v7779
        %7785 = vmatprep.subr.mxu0 0.0
        %7786 = vmatpush1.msra.mxu0 %v7778
        %7787 = vmatprep.subr.mxu0 0.0
        %7788 = vmatpush1.msra.mxu0 %v7777
        %7789 = vmatprep.subr.mxu0 0.0
        %7790 = vmatpush1.msra.mxu0 %v7776
        %7791 = vmatprep.subr.mxu0 0.0
        %7792 = vmatpush1.msra.mxu0 %v7775
        %7793 = vmatprep.subr.mxu0 0.0
        %7794 = vmatpush1.msra.mxu0 %v7774
        %7795 = vmatprep.subr.mxu0 0.0
        %7796 = vmatpush1.msra.mxu0 %v7773
        %7797 = vmatprep.subr.mxu0 0.0
        %7798 = vmatpush1.msra.mxu0 %v7772
        %7799 = vmatprep.subr.mxu0 0.0
        %7800 = vmatpush1.msra.mxu0 %v7771
        %7801 = vmatprep.subr.mxu0 0.0
        %7802 = vmatpush1.msra.mxu0 %v7770
        %7803 = vmatprep.subr.mxu0 0.0
        %7804 = vmatpush1.msra.mxu0 %v7769
        %7805 = vmatprep.subr.mxu0 0.0
        %7806 = vmatpush1.msra.mxu0 %v7768
        %7807 = vmatprep.subr.mxu0 0.0
        %7808 = vmatpush1.msra.mxu0 %v7767
        %7809 = vmatprep.subr.mxu0 0.0
        %7810 = vmatpush1.msra.mxu0 %v7766
        %7811 = vmatprep.subr.mxu0 0.0
        %7812 = vmatpush1.msra.mxu0 %v7765
        %7813 = vmatprep.subr.mxu0 0.0
        %7814 = vmatpush2.msra.mxu0 0.0
        %7815 = vmatprep.subr.mxu0 0.0
        %7816 = vmatpush2.msra.mxu0 0.0
        %7817 = vmatprep.subr.mxu0 0.0
        %7818 = vmatpush2.msra.mxu0 0.0
        %7819 = vmatprep.subr.mxu0 0.0
        %7820 = vmatpush2.msra.mxu0 0.0
        %7821 = vmatprep.subr.mxu0 0.0
        %7822 = vmatpush2.msra.mxu0 0.0
        %7823 = vmatprep.subr.mxu0 0.0
        %7824 = vmatpush2.msra.mxu0 0.0
        %7825 = vmatprep.subr.mxu0 0.0
        %7826 = vmatpush2.msra.mxu0 0.0
        %7827 = vmatprep.subr.mxu0 0.0
        %7828 = vmatpush2.msra.mxu0 0.0
        %7829 = vmatprep.subr.mxu0 0.0
        %7830 = vmatpush2.msra.mxu0 0.0
        %7831 = vmatprep.subr.mxu0 0.0
        %7832 = vmatpush2.msra.mxu0 0.0
        %7833 = vmatprep.subr.mxu0 0.0
        %7834 = vmatpush2.msra.mxu0 0.0
        %7835 = vmatprep.subr.mxu0 0.0
        %7836 = vmatpush2.msra.mxu0 0.0
        %7837 = vmatprep.subr.mxu0 0.0
        %7838 = vmatpush2.msra.mxu0 0.0
        %7839 = vmatprep.subr.mxu0 0.0
        %7840 = vmatpush2.msra.mxu0 0.0
        %7841 = vmatprep.subr.mxu0 0.0
        %7842 = vmatpush2.msra.mxu0 0.0
        %7843 = vmatprep.subr.mxu0 0.0
        %7844 = vmatpush2.msra.mxu0 0.0
        %7845 = vmatprep.mubr.f32.mxu0 0.0
        %7846 = vmatmul.mubr.f32.gmra.mxu0 %v7756
        %v7847 = vpop.f32.mrf.mxu0
        %v7848 = vadd.f32 0.0, %v7847
        %v7849 = vpop.f32.mrf.mxu0
        %7850 = vmatprep.mubr.f32.mxu0 0.0
        %7851 = vmatmul.mubr.f32.gmra.mxu0 %v7757
        %v7852 = vpop.f32.mrf.mxu0
        %v7853 = vadd.f32 0.0, %v7852
        %v7854 = vpop.f32.mrf.mxu0
        %7855 = vmatprep.mubr.f32.mxu0 0.0
        %7856 = vmatmul.mubr.f32.gmra.mxu0 %v7758
        %v7857 = vpop.f32.mrf.mxu0
        %v7858 = vadd.f32 0.0, %v7857
        %v7859 = vpop.f32.mrf.mxu0
        %7860 = vmatprep.mubr.f32.mxu0 0.0
        %7861 = vmatmul.mubr.f32.gmra.mxu0 %v7759
        %v7862 = vpop.f32.mrf.mxu0
        %v7863 = vadd.f32 0.0, %v7862
        %v7864 = vpop.f32.mrf.mxu0
        %7865 = vmatprep.mubr.f32.mxu0 0.0
        %7866 = vmatmul.mubr.f32.gmra.mxu0 %v7760
        %v7867 = vpop.f32.mrf.mxu0
        %v7868 = vadd.f32 0.0, %v7867
        %v7869 = vpop.f32.mrf.mxu0
        %7870 = vmatprep.mubr.f32.mxu0 0.0
        %7871 = vmatmul.mubr.f32.gmra.mxu0 %v7761
        %v7872 = vpop.f32.mrf.mxu0
        %v7873 = vadd.f32 0.0, %v7872
        %v7874 = vpop.f32.mrf.mxu0
        %7875 = vmatprep.mubr.f32.mxu0 0.0
        %7876 = vmatmul.mubr.f32.gmra.mxu0 %v7762
        %v7877 = vpop.f32.mrf.mxu0
        %v7878 = vadd.f32 0.0, %v7877
        %v7879 = vpop.f32.mrf.mxu0
        %7880 = vmatprep.mubr.f32.mxu0 0.0
        %7881 = vmatmul.mubr.f32.gmra.mxu0 %v7763
        %v7882 = vpop.f32.mrf.mxu0
        %v7883 = vadd.f32 0.0, %v7882
        %v7884 = vpop.f32.mrf.mxu0
        %7885 = vdwg.mxu0
        %v7886 = vadd.f32 %v7748, %v7848
        %v7887 = vadd.f32 %v7749, %v7853
        %v7888 = vadd.f32 %v7750, %v7858
        %v7889 = vadd.f32 %v7751, %v7863
        %v7890 = vadd.f32 %v7752, %v7868
        %v7891 = vadd.f32 %v7753, %v7873
        %v7892 = vadd.f32 %v7754, %v7878
        %v7893 = vadd.f32 %v7755, %v7883
        %v7894 = vld [vmem:[%s2517 + $0x2] sm:$0xff]
        %v7895 = vld [vmem:[%s2517 + $0x12] sm:$0xff]
        %v7896 = vld [vmem:[%s2517 + $0x22] sm:$0xff]
        %v7897 = vld [vmem:[%s2517 + $0x32] sm:$0xff]
        %v7898 = vld [vmem:[%s2517 + $0x42] sm:$0xff]
        %v7899 = vld [vmem:[%s2517 + $0x52] sm:$0xff]
        %v7900 = vld [vmem:[%s2517 + $0x62] sm:$0xff]
        %v7901 = vld [vmem:[%s2517 + $0x72] sm:$0xff]
        %s7902 = scalar_lea.vmem %s1, 6784
        %v7903 = vld [vmem:[%s7902] sm:$0xff]
        %v7904 = vld [vmem:[%s7902 + $0x8] sm:$0xff]
        %v7905 = vld [vmem:[%s7902 + $0x10] sm:$0xff]
        %v7906 = vld [vmem:[%s7902 + $0x18] sm:$0xff]
        %v7907 = vld [vmem:[%s7902 + $0x20] sm:$0xff]
        %v7908 = vld [vmem:[%s7902 + $0x28] sm:$0xff]
        %v7909 = vld [vmem:[%s7902 + $0x30] sm:$0xff]
        %v7910 = vld [vmem:[%s7902 + $0x38] sm:$0xff]
        %v7911 = vld [vmem:[%s7902 + $0x40] sm:$0xff]
        %v7912 = vld [vmem:[%s7902 + $0x48] sm:$0xff]
        %v7913 = vld [vmem:[%s7902 + $0x50] sm:$0xff]
        %v7914 = vld [vmem:[%s7902 + $0x58] sm:$0xff]
        %v7915 = vld [vmem:[%s7902 + $0x60] sm:$0xff]
        %v7916 = vld [vmem:[%s7902 + $0x68] sm:$0xff]
        %v7917 = vld [vmem:[%s7902 + $0x70] sm:$0xff]
        %v7918 = vld [vmem:[%s7902 + $0x78] sm:$0xff]
        %7919 = vmatprep.subr.mxu0 0.0
        %7920 = vmatpush1.msra.mxu0 %v7918
        %7921 = vmatprep.subr.mxu0 0.0
        %7922 = vmatpush1.msra.mxu0 %v7917
        %7923 = vmatprep.subr.mxu0 0.0
        %7924 = vmatpush1.msra.mxu0 %v7916
        %7925 = vmatprep.subr.mxu0 0.0
        %7926 = vmatpush1.msra.mxu0 %v7915
        %7927 = vmatprep.subr.mxu0 0.0
        %7928 = vmatpush1.msra.mxu0 %v7914
        %7929 = vmatprep.subr.mxu0 0.0
        %7930 = vmatpush1.msra.mxu0 %v7913
        %7931 = vmatprep.subr.mxu0 0.0
        %7932 = vmatpush1.msra.mxu0 %v7912
        %7933 = vmatprep.subr.mxu0 0.0
        %7934 = vmatpush1.msra.mxu0 %v7911
        %7935 = vmatprep.subr.mxu0 0.0
        %7936 = vmatpush1.msra.mxu0 %v7910
        %7937 = vmatprep.subr.mxu0 0.0
        %7938 = vmatpush1.msra.mxu0 %v7909
        %7939 = vmatprep.subr.mxu0 0.0
        %7940 = vmatpush1.msra.mxu0 %v7908
        %7941 = vmatprep.subr.mxu0 0.0
        %7942 = vmatpush1.msra.mxu0 %v7907
        %7943 = vmatprep.subr.mxu0 0.0
        %7944 = vmatpush1.msra.mxu0 %v7906
        %7945 = vmatprep.subr.mxu0 0.0
        %7946 = vmatpush1.msra.mxu0 %v7905
        %7947 = vmatprep.subr.mxu0 0.0
        %7948 = vmatpush1.msra.mxu0 %v7904
        %7949 = vmatprep.subr.mxu0 0.0
        %7950 = vmatpush1.msra.mxu0 %v7903
        %7951 = vmatprep.subr.mxu0 0.0
        %7952 = vmatpush2.msra.mxu0 0.0
        %7953 = vmatprep.subr.mxu0 0.0
        %7954 = vmatpush2.msra.mxu0 0.0
        %7955 = vmatprep.subr.mxu0 0.0
        %7956 = vmatpush2.msra.mxu0 0.0
        %7957 = vmatprep.subr.mxu0 0.0
        %7958 = vmatpush2.msra.mxu0 0.0
        %7959 = vmatprep.subr.mxu0 0.0
        %7960 = vmatpush2.msra.mxu0 0.0
        %7961 = vmatprep.subr.mxu0 0.0
        %7962 = vmatpush2.msra.mxu0 0.0
        %7963 = vmatprep.subr.mxu0 0.0
        %7964 = vmatpush2.msra.mxu0 0.0
        %7965 = vmatprep.subr.mxu0 0.0
        %7966 = vmatpush2.msra.mxu0 0.0
        %7967 = vmatprep.subr.mxu0 0.0
        %7968 = vmatpush2.msra.mxu0 0.0
        %7969 = vmatprep.subr.mxu0 0.0
        %7970 = vmatpush2.msra.mxu0 0.0
        %7971 = vmatprep.subr.mxu0 0.0
        %7972 = vmatpush2.msra.mxu0 0.0
        %7973 = vmatprep.subr.mxu0 0.0
        %7974 = vmatpush2.msra.mxu0 0.0
        %7975 = vmatprep.subr.mxu0 0.0
        %7976 = vmatpush2.msra.mxu0 0.0
        %7977 = vmatprep.subr.mxu0 0.0
        %7978 = vmatpush2.msra.mxu0 0.0
        %7979 = vmatprep.subr.mxu0 0.0
        %7980 = vmatpush2.msra.mxu0 0.0
        %7981 = vmatprep.subr.mxu0 0.0
        %7982 = vmatpush2.msra.mxu0 0.0
        %7983 = vmatprep.mubr.f32.mxu0 0.0
        %7984 = vmatmul.mubr.f32.gmra.mxu0 %v7894
        %v7985 = vpop.f32.mrf.mxu0
        %v7986 = vadd.f32 0.0, %v7985
        %v7987 = vpop.f32.mrf.mxu0
        %7988 = vmatprep.mubr.f32.mxu0 0.0
        %7989 = vmatmul.mubr.f32.gmra.mxu0 %v7895
        %v7990 = vpop.f32.mrf.mxu0
        %v7991 = vadd.f32 0.0, %v7990
        %v7992 = vpop.f32.mrf.mxu0
        %7993 = vmatprep.mubr.f32.mxu0 0.0
        %7994 = vmatmul.mubr.f32.gmra.mxu0 %v7896
        %v7995 = vpop.f32.mrf.mxu0
        %v7996 = vadd.f32 0.0, %v7995
        %v7997 = vpop.f32.mrf.mxu0
        %7998 = vmatprep.mubr.f32.mxu0 0.0
        %7999 = vmatmul.mubr.f32.gmra.mxu0 %v7897
        %v8000 = vpop.f32.mrf.mxu0
        %v8001 = vadd.f32 0.0, %v8000
        %v8002 = vpop.f32.mrf.mxu0
        %8003 = vmatprep.mubr.f32.mxu0 0.0
        %8004 = vmatmul.mubr.f32.gmra.mxu0 %v7898
        %v8005 = vpop.f32.mrf.mxu0
        %v8006 = vadd.f32 0.0, %v8005
        %v8007 = vpop.f32.mrf.mxu0
        %8008 = vmatprep.mubr.f32.mxu0 0.0
        %8009 = vmatmul.mubr.f32.gmra.mxu0 %v7899
        %v8010 = vpop.f32.mrf.mxu0
        %v8011 = vadd.f32 0.0, %v8010
        %v8012 = vpop.f32.mrf.mxu0
        %8013 = vmatprep.mubr.f32.mxu0 0.0
        %8014 = vmatmul.mubr.f32.gmra.mxu0 %v7900
        %v8015 = vpop.f32.mrf.mxu0
        %v8016 = vadd.f32 0.0, %v8015
        %v8017 = vpop.f32.mrf.mxu0
        %8018 = vmatprep.mubr.f32.mxu0 0.0
        %8019 = vmatmul.mubr.f32.gmra.mxu0 %v7901
        %v8020 = vpop.f32.mrf.mxu0
        %v8021 = vadd.f32 0.0, %v8020
        %v8022 = vpop.f32.mrf.mxu0
        %8023 = vdwg.mxu0
        %v8024 = vadd.f32 %v7886, %v7986
        %v8025 = vadd.f32 %v7887, %v7991
        %v8026 = vadd.f32 %v7888, %v7996
        %v8027 = vadd.f32 %v7889, %v8001
        %v8028 = vadd.f32 %v7890, %v8006
        %v8029 = vadd.f32 %v7891, %v8011
        %v8030 = vadd.f32 %v7892, %v8016
        %v8031 = vadd.f32 %v7893, %v8021
        %v8032 = vld [vmem:[%s9 + $0x5] sm:$0x1]
        %v8033 = vlaneseq
        %v8034 = vshrl.u32 %v8033, 7
        %v8035 = vsub.s32 0, %v8034
        %v8036 = vrot.slane %v8032, %v8035
        %v8037 = vadd.f32 %v8024, %v8036
        %v8038 = vadd.f32 %v8025, %v8036
        %v8039 = vadd.f32 %v8026, %v8036
        %v8040 = vadd.f32 %v8027, %v8036
        %v8041 = vadd.f32 %v8028, %v8036
        %v8042 = vadd.f32 %v8029, %v8036
        %v8043 = vadd.f32 %v8030, %v8036
        %v8044 = vadd.f32 %v8031, %v8036
        %v8045 = vld [vmem:[%s2] sm:$0xff]
        %v8046 = vld [vmem:[%s2 + $0x8] sm:$0xff]
        %vm8047 = vcmask 523264
        %v8049 = vsel %vm8047, %v8045, 0
        %v8052 = vsel %vm8047, %v8046, 0
        %8054 = vmatprep.subr.mxu0 0.0
        %8055 = vmatpush1.msra.mxu0 0.0
        %8056 = vmatprep.subr.mxu0 0.0
        %8057 = vmatpush1.msra.mxu0 0.0
        %8058 = vmatprep.subr.mxu0 0.0
        %8059 = vmatpush1.msra.mxu0 0.0
        %8060 = vmatprep.subr.mxu0 0.0
        %8061 = vmatpush1.msra.mxu0 0.0
        %8062 = vmatprep.subr.mxu0 0.0
        %8063 = vmatpush1.msra.mxu0 0.0
        %8064 = vmatprep.subr.mxu0 0.0
        %8065 = vmatpush1.msra.mxu0 0.0
        %8066 = vmatprep.subr.mxu0 0.0
        %8067 = vmatpush1.msra.mxu0 0.0
        %8068 = vmatprep.subr.mxu0 0.0
        %8069 = vmatpush1.msra.mxu0 0.0
        %8070 = vmatprep.subr.mxu0 0.0
        %8071 = vmatpush1.msra.mxu0 %v8044
        %8072 = vmatprep.subr.mxu0 0.0
        %8073 = vmatpush1.msra.mxu0 %v8043
        %8074 = vmatprep.subr.mxu0 0.0
        %8075 = vmatpush1.msra.mxu0 %v8042
        %8076 = vmatprep.subr.mxu0 0.0
        %8077 = vmatpush1.msra.mxu0 %v8041
        %8078 = vmatprep.subr.mxu0 0.0
        %8079 = vmatpush1.msra.mxu0 %v8040
        %8080 = vmatprep.subr.mxu0 0.0
        %8081 = vmatpush1.msra.mxu0 %v8039
        %8082 = vmatprep.subr.mxu0 0.0
        %8083 = vmatpush1.msra.mxu0 %v8038
        %8084 = vmatprep.subr.mxu0 0.0
        %8085 = vmatpush1.msra.mxu0 %v8037
        %8086 = vmatprep.subr.mxu0 0.0
        %8087 = vmatpush2.msra.mxu0 0.0
        %8088 = vmatprep.subr.mxu0 0.0
        %8089 = vmatpush2.msra.mxu0 0.0
        %8090 = vmatprep.subr.mxu0 0.0
        %8091 = vmatpush2.msra.mxu0 0.0
        %8092 = vmatprep.subr.mxu0 0.0
        %8093 = vmatpush2.msra.mxu0 0.0
        %8094 = vmatprep.subr.mxu0 0.0
        %8095 = vmatpush2.msra.mxu0 0.0
        %8096 = vmatprep.subr.mxu0 0.0
        %8097 = vmatpush2.msra.mxu0 0.0
        %8098 = vmatprep.subr.mxu0 0.0
        %8099 = vmatpush2.msra.mxu0 0.0
        %8100 = vmatprep.subr.mxu0 0.0
        %8101 = vmatpush2.msra.mxu0 0.0
        %8102 = vmatprep.subr.mxu0 0.0
        %8103 = vmatpush2.msra.mxu0 0.0
        %8104 = vmatprep.subr.mxu0 0.0
        %8105 = vmatpush2.msra.mxu0 0.0
        %8106 = vmatprep.subr.mxu0 0.0
        %8107 = vmatpush2.msra.mxu0 0.0
        %8108 = vmatprep.subr.mxu0 0.0
        %8109 = vmatpush2.msra.mxu0 0.0
        %8110 = vmatprep.subr.mxu0 0.0
        %8111 = vmatpush2.msra.mxu0 0.0
        %8112 = vmatprep.subr.mxu0 0.0
        %8113 = vmatpush2.msra.mxu0 0.0
        %8114 = vmatprep.subr.mxu0 0.0
        %8115 = vmatpush2.msra.mxu0 0.0
        %8116 = vmatprep.subr.mxu0 0.0
        %8117 = vmatpush2.msra.mxu0 0.0
        %8118 = vmatprep.mubr.f32.mxu0 0.0
        %8119 = vmatmul.mubr.f32.gmra.mxu0 %v8049
        %v8120 = vpop.f32.mrf.mxu0
        %v8121 = vadd.f32 0.0, %v8120
        %v8122 = vpop.f32.mrf.mxu0
        %8123 = vmatprep.mubr.f32.mxu0 0.0
        %8124 = vmatmul.mubr.f32.gmra.mxu0 %v8052
        %v8125 = vpop.f32.mrf.mxu0
        %v8126 = vadd.f32 0.0, %v8125
        %v8127 = vpop.f32.mrf.mxu0
        %8128 = vdwg.mxu0
        %v8129 = vld [vmem:[%s3] sm:$0xff]
        %v8130 = vld [vmem:[%s3 + $0x8] sm:$0xff]
        %v8131 = vadd.f32 %v8121, %v8129
        %v8132 = vadd.f32 %v8126, %v8130
        %v8133 = vld [vmem:[%s9 + $0x6] sm:$0x1]
        %v8134 = vld [vmem:[%s9 + $0x7] sm:$0x1]
        %v8135 = vld [vmem:[%s9 + $0x8] sm:$0x1]
        %v8136 = vld [vmem:[%s9 + $0x9] sm:$0x1]
        %v8137 = vld [vmem:[%s9 + $0xa] sm:$0x1]
        %v8138 = vld [vmem:[%s9 + $0xb] sm:$0x1]
        %v8139 = vld [vmem:[%s9 + $0xc] sm:$0x1]
        %v8140 = vld [vmem:[%s9 + $0xd] sm:$0x1]
        %v8141 = vld [vmem:[%s9 + $0xe] sm:$0x1]
        %vm8142 = vcmask 261120
        %v8143 = vsel %vm8142, %v8131, 0.0
        %8144 = vadd.xlane.f32.xlu0 %v8143
        %v8145 = vpop.xlane.xlu0 %8144
        %v8146 = vsel %vm8142, %v8132, 0.0
        %8147 = vadd.xlane.f32.xlu0 %v8146
        %v8148 = vpop.xlane.xlu0 %8147
        %v8149 = vrcp.pop 32.0
        %v8150 = vmul.f32 %v8145, %v8149
        %v8151 = vmul.f32 %v8148, %v8149
        %v8152 = vsub.f32 %v8131, %v8150
        %v8153 = vsub.f32 %v8132, %v8151
        %v8154 = vmul.f32 %v8152, %v8152
        %v8155 = vmul.f32 %v8153, %v8153
        %v8156 = vsel %vm8142, %v8154, 0.0
        %8157 = vadd.xlane.f32.xlu0 %v8156
        %v8158 = vpop.xlane.xlu0 %8157
        %v8159 = vsel %vm8142, %v8155, 0.0
        %8160 = vadd.xlane.f32.xlu0 %v8159
        %v8161 = vpop.xlane.xlu0 %8160
        %v8162 = vmul.f32 %v8158, %v8149
        %v8163 = vmul.f32 %v8161, %v8149
        %v8164 = vadd.f32 %v8162, 1e-05
        %v8165 = vadd.f32 %v8163, 1e-05
        %v8166 = vrsqrt.pop %v8164
        %v8167 = vrsqrt.pop %v8165
        %v8168 = vmul.f32 %v8152, %v8166
        %v8169 = vmul.f32 %v8153, %v8167
        %v8170 = vlaneseq
        %v8171 = vshrl.u32 %v8170, 7
        %v8172 = vsub.s32 0, %v8171
        %v8173 = vrot.slane %v8133, %v8172
        %v8174 = vmul.f32 %v8168, %v8173
        %v8175 = vmul.f32 %v8169, %v8173
        %v8176 = vlaneseq
        %v8177 = vshrl.u32 %v8176, 7
        %v8178 = vsub.s32 0, %v8177
        %v8179 = vrot.slane %v8134, %v8178
        %v8180 = vadd.f32 %v8174, %v8179
        %v8181 = vadd.f32 %v8175, %v8179
        %8182 = vxpose.xlu0.b32.start [1/16] %v8180, 128
        %8183 = vxpose.xlu0.b32.cont [2/16] %v8181, 128
        %8184 = vxpose.xlu0.b32.cont [3/16] 0.0, 128
        %8185 = vxpose.xlu0.b32.cont [4/16] 0.0, 128
        %8186 = vxpose.xlu0.b32.cont [5/16] 0.0, 128
        %8187 = vxpose.xlu0.b32.cont [6/16] 0.0, 128
        %8188 = vxpose.xlu0.b32.cont [7/16] 0.0, 128
        %8189 = vxpose.xlu0.b32.cont [8/16] 0.0, 128
        %8190 = vxpose.xlu0.b32.cont [9/16] 0.0, 128
        %8191 = vxpose.xlu0.b32.cont [10/16] 0.0, 128
        %8192 = vxpose.xlu0.b32.cont [11/16] 0.0, 128
        %8193 = vxpose.xlu0.b32.cont [12/16] 0.0, 128
        %8194 = vxpose.xlu0.b32.cont [13/16] 0.0, 128
        %8195 = vxpose.xlu0.b32.cont [14/16] 0.0, 128
        %8196 = vxpose.xlu0.b32.cont [15/16] 0.0, 128
        %8197 = vxpose.xlu0.b32.end [16/16] 0.0, 128
        %v8198 = vpop.trf.xlu0
        %v8199 = vpop.trf.xlu0
        %v8200 = vpop.trf.xlu0
        %v8201 = vpop.trf.xlu0
        %v8202 = vpop.trf.xlu0
        %v8203 = vpop.trf.xlu0
        %v8204 = vpop.trf.xlu0
        %v8205 = vpop.trf.xlu0
        %v8206 = vpop.trf.xlu0
        %v8207 = vpop.trf.xlu0
        %v8208 = vpop.trf.xlu0
        %v8209 = vpop.trf.xlu0
        %v8210 = vpop.trf.xlu0
        %v8211 = vpop.trf.xlu0
        %v8212 = vpop.trf.xlu0
        %v8213 = vpop.trf.xlu0
        %v8214 = vld [vmem:[%s4] sm:$0xff]
        %v8215 = vld [vmem:[%s4 + $0x8] sm:$0xff]
        %v8216 = vlaneseq
        %v8217 = vshrl.u32 %v8216, 7
        %v8218 = vsub.s32 0, %v8217
        %v8219 = vrot.slane %v8137, %v8218
        %vm8220 = vcmask 130048
        %v8222 = vsel %vm8220, %v8198, 0
        %v8225 = vsel %vm8220, %v8199, 0
        %v8228 = vsel %vm8220, %v8200, 0
        %v8231 = vsel %vm8220, %v8201, 0
        %8233 = vmatprep.subr.mxu0 0.0
        %8234 = vmatpush1.msra.mxu0 0.0
        %8235 = vmatprep.subr.mxu0 0.0
        %8236 = vmatpush1.msra.mxu0 0.0
        %8237 = vmatprep.subr.mxu0 0.0
        %8238 = vmatpush1.msra.mxu0 0.0
        %8239 = vmatprep.subr.mxu0 0.0
        %8240 = vmatpush1.msra.mxu0 0.0
        %8241 = vmatprep.subr.mxu0 0.0
        %8242 = vmatpush1.msra.mxu0 0.0
        %8243 = vmatprep.subr.mxu0 0.0
        %8244 = vmatpush1.msra.mxu0 0.0
        %8245 = vmatprep.subr.mxu0 0.0
        %8246 = vmatpush1.msra.mxu0 0.0
        %8247 = vmatprep.subr.mxu0 0.0
        %8248 = vmatpush1.msra.mxu0 0.0
        %8249 = vmatprep.subr.mxu0 0.0
        %8250 = vmatpush1.msra.mxu0 0.0
        %8251 = vmatprep.subr.mxu0 0.0
        %8252 = vmatpush1.msra.mxu0 0.0
        %8253 = vmatprep.subr.mxu0 0.0
        %8254 = vmatpush1.msra.mxu0 0.0
        %8255 = vmatprep.subr.mxu0 0.0
        %8256 = vmatpush1.msra.mxu0 0.0
        %8257 = vmatprep.subr.mxu0 0.0
        %8258 = vmatpush1.msra.mxu0 0.0
        %8259 = vmatprep.subr.mxu0 0.0
        %8260 = vmatpush1.msra.mxu0 0.0
        %8261 = vmatprep.subr.mxu0 0.0
        %8262 = vmatpush1.msra.mxu0 %v8215
        %8263 = vmatprep.subr.mxu0 0.0
        %8264 = vmatpush1.msra.mxu0 %v8214
        %8265 = vmatprep.subr.mxu0 0.0
        %8266 = vmatpush2.msra.mxu0 0.0
        %8267 = vmatprep.subr.mxu0 0.0
        %8268 = vmatpush2.msra.mxu0 0.0
        %8269 = vmatprep.subr.mxu0 0.0
        %8270 = vmatpush2.msra.mxu0 0.0
        %8271 = vmatprep.subr.mxu0 0.0
        %8272 = vmatpush2.msra.mxu0 0.0
        %8273 = vmatprep.subr.mxu0 0.0
        %8274 = vmatpush2.msra.mxu0 0.0
        %8275 = vmatprep.subr.mxu0 0.0
        %8276 = vmatpush2.msra.mxu0 0.0
        %8277 = vmatprep.subr.mxu0 0.0
        %8278 = vmatpush2.msra.mxu0 0.0
        %8279 = vmatprep.subr.mxu0 0.0
        %8280 = vmatpush2.msra.mxu0 0.0
        %8281 = vmatprep.subr.mxu0 0.0
        %8282 = vmatpush2.msra.mxu0 0.0
        %8283 = vmatprep.subr.mxu0 0.0
        %8284 = vmatpush2.msra.mxu0 0.0
        %8285 = vmatprep.subr.mxu0 0.0
        %8286 = vmatpush2.msra.mxu0 0.0
        %8287 = vmatprep.subr.mxu0 0.0
        %8288 = vmatpush2.msra.mxu0 0.0
        %8289 = vmatprep.subr.mxu0 0.0
        %8290 = vmatpush2.msra.mxu0 0.0
        %8291 = vmatprep.subr.mxu0 0.0
        %8292 = vmatpush2.msra.mxu0 0.0
        %8293 = vmatprep.subr.mxu0 0.0
        %8294 = vmatpush2.msra.mxu0 0.0
        %8295 = vmatprep.subr.mxu0 0.0
        %8296 = vmatpush2.msra.mxu0 0.0
        %8297 = vmatprep.mubr.f32.mxu0 0.0
        %8298 = vmatmul.mubr.f32.gmra.mxu0 %v8222
        %v8299 = vpop.f32.mrf.mxu0
        %v8300 = vadd.f32 %v8219, %v8299
        %v8301 = vpop.f32.mrf.mxu0
        %8302 = vmatprep.mubr.f32.mxu0 0.0
        %8303 = vmatmul.mubr.f32.gmra.mxu0 %v8225
        %v8304 = vpop.f32.mrf.mxu0
        %v8305 = vadd.f32 %v8219, %v8304
        %v8306 = vpop.f32.mrf.mxu0
        %8307 = vmatprep.mubr.f32.mxu0 0.0
        %8308 = vmatmul.mubr.f32.gmra.mxu0 %v8228
        %v8309 = vpop.f32.mrf.mxu0
        %v8310 = vadd.f32 %v8219, %v8309
        %v8311 = vpop.f32.mrf.mxu0
        %8312 = vmatprep.mubr.f32.mxu0 0.0
        %8313 = vmatmul.mubr.f32.gmra.mxu0 %v8231
        %v8314 = vpop.f32.mrf.mxu0
        %v8315 = vadd.f32 %v8219, %v8314
        %v8316 = vpop.f32.mrf.mxu0
        %8317 = vdwg.mxu0
        %v8318 = vmul.f32 %v8300, 0.5
        %v8319 = vmul.f32 %v8305, 0.5
        %v8320 = vmul.f32 %v8310, 0.5
        %v8321 = vmul.f32 %v8315, 0.5
        %v8322 = vmul.f32 %v8300, 0.70710677
        %v8323 = vmul.f32 %v8305, 0.70710677
        %v8324 = vmul.f32 %v8310, 0.70710677
        %v8325 = vmul.f32 %v8315, 0.70710677
        %v8326 = verf.f32.pop %v8322
        %v8327 = verf.f32.pop %v8323
        %v8328 = verf.f32.pop %v8324
        %v8329 = verf.f32.pop %v8325
        %v8330 = vadd.f32 %v8326, 1.0
        %v8331 = vadd.f32 %v8327, 1.0
        %v8332 = vadd.f32 %v8328, 1.0
        %v8333 = vadd.f32 %v8329, 1.0
        %v8334 = vmul.f32 %v8318, %v8330
        %v8335 = vmul.f32 %v8319, %v8331
        %v8336 = vmul.f32 %v8320, %v8332
        %v8337 = vmul.f32 %v8321, %v8333
        %v8338 = vld [vmem:[%s5] sm:$0xff]
        %v8339 = vlaneseq
        %v8340 = vshrl.u32 %v8339, 7
        %v8341 = vsub.s32 0, %v8340
        %v8342 = vrot.slane %v8138, %v8341
        %vm8343 = vcmask 64512
        %v8345 = vsel %vm8343, %v8334, 0
        %v8348 = vsel %vm8343, %v8335, 0
        %v8351 = vsel %vm8343, %v8336, 0
        %v8354 = vsel %vm8343, %v8337, 0
        %8356 = vmatprep.subr.mxu0 0.0
        %8357 = vmatpush1.msra.mxu0 0.0
        %8358 = vmatprep.subr.mxu0 0.0
        %8359 = vmatpush1.msra.mxu0 0.0
        %8360 = vmatprep.subr.mxu0 0.0
        %8361 = vmatpush1.msra.mxu0 0.0
        %8362 = vmatprep.subr.mxu0 0.0
        %8363 = vmatpush1.msra.mxu0 0.0
        %8364 = vmatprep.subr.mxu0 0.0
        %8365 = vmatpush1.msra.mxu0 0.0
        %8366 = vmatprep.subr.mxu0 0.0
        %8367 = vmatpush1.msra.mxu0 0.0
        %8368 = vmatprep.subr.mxu0 0.0
        %8369 = vmatpush1.msra.mxu0 0.0
        %8370 = vmatprep.subr.mxu0 0.0
        %8371 = vmatpush1.msra.mxu0 0.0
        %8372 = vmatprep.subr.mxu0 0.0
        %8373 = vmatpush1.msra.mxu0 0.0
        %8374 = vmatprep.subr.mxu0 0.0
        %8375 = vmatpush1.msra.mxu0 0.0
        %8376 = vmatprep.subr.mxu0 0.0
        %8377 = vmatpush1.msra.mxu0 0.0
        %8378 = vmatprep.subr.mxu0 0.0
        %8379 = vmatpush1.msra.mxu0 0.0
        %8380 = vmatprep.subr.mxu0 0.0
        %8381 = vmatpush1.msra.mxu0 0.0
        %8382 = vmatprep.subr.mxu0 0.0
        %8383 = vmatpush1.msra.mxu0 0.0
        %8384 = vmatprep.subr.mxu0 0.0
        %8385 = vmatpush1.msra.mxu0 0.0
        %8386 = vmatprep.subr.mxu0 0.0
        %8387 = vmatpush1.msra.mxu0 %v8338
        %8388 = vmatprep.subr.mxu0 0.0
        %8389 = vmatpush2.msra.mxu0 0.0
        %8390 = vmatprep.subr.mxu0 0.0
        %8391 = vmatpush2.msra.mxu0 0.0
        %8392 = vmatprep.subr.mxu0 0.0
        %8393 = vmatpush2.msra.mxu0 0.0
        %8394 = vmatprep.subr.mxu0 0.0
        %8395 = vmatpush2.msra.mxu0 0.0
        %8396 = vmatprep.subr.mxu0 0.0
        %8397 = vmatpush2.msra.mxu0 0.0
        %8398 = vmatprep.subr.mxu0 0.0
        %8399 = vmatpush2.msra.mxu0 0.0
        %8400 = vmatprep.subr.mxu0 0.0
        %8401 = vmatpush2.msra.mxu0 0.0
        %8402 = vmatprep.subr.mxu0 0.0
        %8403 = vmatpush2.msra.mxu0 0.0
        %8404 = vmatprep.subr.mxu0 0.0
        %8405 = vmatpush2.msra.mxu0 0.0
        %8406 = vmatprep.subr.mxu0 0.0
        %8407 = vmatpush2.msra.mxu0 0.0
        %8408 = vmatprep.subr.mxu0 0.0
        %8409 = vmatpush2.msra.mxu0 0.0
        %8410 = vmatprep.subr.mxu0 0.0
        %8411 = vmatpush2.msra.mxu0 0.0
        %8412 = vmatprep.subr.mxu0 0.0
        %8413 = vmatpush2.msra.mxu0 0.0
        %8414 = vmatprep.subr.mxu0 0.0
        %8415 = vmatpush2.msra.mxu0 0.0
        %8416 = vmatprep.subr.mxu0 0.0
        %8417 = vmatpush2.msra.mxu0 0.0
        %8418 = vmatprep.subr.mxu0 0.0
        %8419 = vmatpush2.msra.mxu0 0.0
        %8420 = vmatprep.mubr.f32.mxu0 0.0
        %8421 = vmatmul.mubr.f32.gmra.mxu0 %v8345
        %v8422 = vpop.f32.mrf.mxu0
        %v8423 = vadd.f32 %v8342, %v8422
        %v8424 = vpop.f32.mrf.mxu0
        %8425 = vmatprep.mubr.f32.mxu0 0.0
        %8426 = vmatmul.mubr.f32.gmra.mxu0 %v8348
        %v8427 = vpop.f32.mrf.mxu0
        %v8428 = vadd.f32 %v8342, %v8427
        %v8429 = vpop.f32.mrf.mxu0
        %8430 = vmatprep.mubr.f32.mxu0 0.0
        %8431 = vmatmul.mubr.f32.gmra.mxu0 %v8351
        %v8432 = vpop.f32.mrf.mxu0
        %v8433 = vadd.f32 %v8342, %v8432
        %v8434 = vpop.f32.mrf.mxu0
        %8435 = vmatprep.mubr.f32.mxu0 0.0
        %8436 = vmatmul.mubr.f32.gmra.mxu0 %v8354
        %v8437 = vpop.f32.mrf.mxu0
        %v8438 = vadd.f32 %v8342, %v8437
        %v8439 = vpop.f32.mrf.mxu0
        %8440 = vdwg.mxu0
        %8441 = vxpose.xlu0.b32.start [1/16] %v8423, 128
        %8442 = vxpose.xlu0.b32.cont [2/16] %v8428, 128
        %8443 = vxpose.xlu0.b32.cont [3/16] %v8433, 128
        %8444 = vxpose.xlu0.b32.cont [4/16] %v8438, 128
        %8445 = vxpose.xlu0.b32.cont [5/16] 0.0, 128
        %8446 = vxpose.xlu0.b32.cont [6/16] 0.0, 128
        %8447 = vxpose.xlu0.b32.cont [7/16] 0.0, 128
        %8448 = vxpose.xlu0.b32.cont [8/16] 0.0, 128
        %8449 = vxpose.xlu0.b32.cont [9/16] 0.0, 128
        %8450 = vxpose.xlu0.b32.cont [10/16] 0.0, 128
        %8451 = vxpose.xlu0.b32.cont [11/16] 0.0, 128
        %8452 = vxpose.xlu0.b32.cont [12/16] 0.0, 128
        %8453 = vxpose.xlu0.b32.cont [13/16] 0.0, 128
        %8454 = vxpose.xlu0.b32.cont [14/16] 0.0, 128
        %8455 = vxpose.xlu0.b32.cont [15/16] 0.0, 128
        %8456 = vxpose.xlu0.b32.end [16/16] 0.0, 128
        %v8457 = vpop.trf.xlu0
        %v8458 = vpop.trf.xlu0
        %v8459 = vpop.trf.xlu0
        %v8460 = vpop.trf.xlu0
        %v8461 = vpop.trf.xlu0
        %v8462 = vpop.trf.xlu0
        %v8463 = vpop.trf.xlu0
        %v8464 = vpop.trf.xlu0
        %v8465 = vpop.trf.xlu0
        %v8466 = vpop.trf.xlu0
        %v8467 = vpop.trf.xlu0
        %v8468 = vpop.trf.xlu0
        %v8469 = vpop.trf.xlu0
        %v8470 = vpop.trf.xlu0
        %v8471 = vpop.trf.xlu0
        %v8472 = vpop.trf.xlu0
        %v8473 = vadd.f32 %v8131, %v8457
        %v8474 = vadd.f32 %v8132, %v8458
        %v8475 = vsel %vm8142, %v8473, 0.0
        %8476 = vadd.xlane.f32.xlu0 %v8475
        %v8477 = vpop.xlane.xlu0 %8476
        %v8478 = vsel %vm8142, %v8474, 0.0
        %8479 = vadd.xlane.f32.xlu0 %v8478
        %v8480 = vpop.xlane.xlu0 %8479
        %v8481 = vmul.f32 %v8477, %v8149
        %v8482 = vmul.f32 %v8480, %v8149
        %v8483 = vsub.f32 %v8473, %v8481
        %v8484 = vsub.f32 %v8474, %v8482
        %v8485 = vmul.f32 %v8483, %v8483
        %v8486 = vmul.f32 %v8484, %v8484
        %v8487 = vsel %vm8142, %v8485, 0.0
        %8488 = vadd.xlane.f32.xlu0 %v8487
        %v8489 = vpop.xlane.xlu0 %8488
        %v8490 = vsel %vm8142, %v8486, 0.0
        %8491 = vadd.xlane.f32.xlu0 %v8490
        %v8492 = vpop.xlane.xlu0 %8491
        %v8493 = vmul.f32 %v8489, %v8149
        %v8494 = vmul.f32 %v8492, %v8149
        %v8495 = vadd.f32 %v8493, 1e-05
        %v8496 = vadd.f32 %v8494, 1e-05
        %v8497 = vrsqrt.pop %v8495
        %v8498 = vrsqrt.pop %v8496
        %v8499 = vmul.f32 %v8483, %v8497
        %v8500 = vmul.f32 %v8484, %v8498
        %v8501 = vlaneseq
        %v8502 = vshrl.u32 %v8501, 7
        %v8503 = vsub.s32 0, %v8502
        %v8504 = vrot.slane %v8135, %v8503
        %v8505 = vmul.f32 %v8499, %v8504
        %v8506 = vmul.f32 %v8500, %v8504
        %v8507 = vlaneseq
        %v8508 = vshrl.u32 %v8507, 7
        %v8509 = vsub.s32 0, %v8508
        %v8510 = vrot.slane %v8136, %v8509
        %v8511 = vadd.f32 %v8505, %v8510
        %v8512 = vadd.f32 %v8506, %v8510
        %v8513 = vld [vmem:[%s6] sm:$0xff]
        %v8514 = vld [vmem:[%s6 + $0x8] sm:$0xff]
        %v8515 = vld [vmem:[%s6 + $0x10] sm:$0xff]
        %v8516 = vld [vmem:[%s6 + $0x18] sm:$0xff]
        %v8517 = vlaneseq
        %v8518 = vshrl.u32 %v8517, 7
        %v8519 = vsub.s32 0, %v8518
        %v8520 = vrot.slane %v8139, %v8519
        %v8522 = vsel %vm8142, %v8511, 0
        %v8525 = vsel %vm8142, %v8512, 0
        %8527 = vmatprep.subr.mxu0 0.0
        %8528 = vmatpush1.msra.mxu0 0.0
        %8529 = vmatprep.subr.mxu0 0.0
        %8530 = vmatpush1.msra.mxu0 0.0
        %8531 = vmatprep.subr.mxu0 0.0
        %8532 = vmatpush1.msra.mxu0 0.0
        %8533 = vmatprep.subr.mxu0 0.0
        %8534 = vmatpush1.msra.mxu0 0.0
        %8535 = vmatprep.subr.mxu0 0.0
        %8536 = vmatpush1.msra.mxu0 0.0
        %8537 = vmatprep.subr.mxu0 0.0
        %8538 = vmatpush1.msra.mxu0 0.0
        %8539 = vmatprep.subr.mxu0 0.0
        %8540 = vmatpush1.msra.mxu0 0.0
        %8541 = vmatprep.subr.mxu0 0.0
        %8542 = vmatpush1.msra.mxu0 0.0
        %8543 = vmatprep.subr.mxu0 0.0
        %8544 = vmatpush1.msra.mxu0 0.0
        %8545 = vmatprep.subr.mxu0 0.0
        %8546 = vmatpush1.msra.mxu0 0.0
        %8547 = vmatprep.subr.mxu0 0.0
        %8548 = vmatpush1.msra.mxu0 0.0
        %8549 = vmatprep.subr.mxu0 0.0
        %8550 = vmatpush1.msra.mxu0 0.0
        %8551 = vmatprep.subr.mxu0 0.0
        %8552 = vmatpush1.msra.mxu0 %v8516
        %8553 = vmatprep.subr.mxu0 0.0
        %8554 = vmatpush1.msra.mxu0 %v8515
        %8555 = vmatprep.subr.mxu0 0.0
        %8556 = vmatpush1.msra.mxu0 %v8514
        %8557 = vmatprep.subr.mxu0 0.0
        %8558 = vmatpush1.msra.mxu0 %v8513
        %8559 = vmatprep.subr.mxu0 0.0
        %8560 = vmatpush2.msra.mxu0 0.0
        %8561 = vmatprep.subr.mxu0 0.0
        %8562 = vmatpush2.msra.mxu0 0.0
        %8563 = vmatprep.subr.mxu0 0.0
        %8564 = vmatpush2.msra.mxu0 0.0
        %8565 = vmatprep.subr.mxu0 0.0
        %8566 = vmatpush2.msra.mxu0 0.0
        %8567 = vmatprep.subr.mxu0 0.0
        %8568 = vmatpush2.msra.mxu0 0.0
        %8569 = vmatprep.subr.mxu0 0.0
        %8570 = vmatpush2.msra.mxu0 0.0
        %8571 = vmatprep.subr.mxu0 0.0
        %8572 = vmatpush2.msra.mxu0 0.0
        %8573 = vmatprep.subr.mxu0 0.0
        %8574 = vmatpush2.msra.mxu0 0.0
        %8575 = vmatprep.subr.mxu0 0.0
        %8576 = vmatpush2.msra.mxu0 0.0
        %8577 = vmatprep.subr.mxu0 0.0
        %8578 = vmatpush2.msra.mxu0 0.0
        %8579 = vmatprep.subr.mxu0 0.0
        %8580 = vmatpush2.msra.mxu0 0.0
        %8581 = vmatprep.subr.mxu0 0.0
        %8582 = vmatpush2.msra.mxu0 0.0
        %8583 = vmatprep.subr.mxu0 0.0
        %8584 = vmatpush2.msra.mxu0 0.0
        %8585 = vmatprep.subr.mxu0 0.0
        %8586 = vmatpush2.msra.mxu0 0.0
        %8587 = vmatprep.subr.mxu0 0.0
        %8588 = vmatpush2.msra.mxu0 0.0
        %8589 = vmatprep.subr.mxu0 0.0
        %8590 = vmatpush2.msra.mxu0 0.0
        %8591 = vmatprep.mubr.f32.mxu0 0.0
        %8592 = vmatmul.mubr.f32.gmra.mxu0 %v8522
        %v8593 = vpop.f32.mrf.mxu0
        %v8594 = vadd.f32 %v8520, %v8593
        %v8595 = vpop.f32.mrf.mxu0
        %8596 = vmatprep.mubr.f32.mxu0 0.0
        %8597 = vmatmul.mubr.f32.gmra.mxu0 %v8525
        %v8598 = vpop.f32.mrf.mxu0
        %v8599 = vadd.f32 %v8520, %v8598
        %v8600 = vpop.f32.mrf.mxu0
        %8601 = vdwg.mxu0
        %v8602 = vmul.f32 %v8594, 0.5
        %v8603 = vmul.f32 %v8599, 0.5
        %v8604 = vmul.f32 %v8594, 0.70710677
        %v8605 = vmul.f32 %v8599, 0.70710677
        %v8606 = verf.f32.pop %v8604
        %v8607 = verf.f32.pop %v8605
        %v8608 = vadd.f32 %v8606, 1.0
        %v8609 = vadd.f32 %v8607, 1.0
        %v8610 = vmul.f32 %v8602, %v8608
        %v8611 = vmul.f32 %v8603, %v8609
        %v8612 = vld [vmem:[%s7] sm:$0xff]
        %v8613 = vld [vmem:[%s7 + $0x8] sm:$0xff]
        %v8614 = vld [vmem:[%s7 + $0x10] sm:$0xff]
        %v8615 = vld [vmem:[%s7 + $0x18] sm:$0xff]
        %v8616 = vld [vmem:[%s7 + $0x20] sm:$0xff]
        %v8617 = vld [vmem:[%s7 + $0x28] sm:$0xff]
        %v8618 = vld [vmem:[%s7 + $0x30] sm:$0xff]
        %v8619 = vld [vmem:[%s7 + $0x38] sm:$0xff]
        %v8620 = vlaneseq
        %v8621 = vshrl.u32 %v8620, 7
        %v8622 = vsub.s32 0, %v8621
        %v8623 = vrot.slane %v8140, %v8622
        %v8625 = vsel %vm8047, %v8610, 0
        %v8628 = vsel %vm8047, %v8611, 0
        %8630 = vmatprep.subr.mxu0 0.0
        %8631 = vmatpush1.msra.mxu0 0.0
        %8632 = vmatprep.subr.mxu0 0.0
        %8633 = vmatpush1.msra.mxu0 0.0
        %8634 = vmatprep.subr.mxu0 0.0
        %8635 = vmatpush1.msra.mxu0 0.0
        %8636 = vmatprep.subr.mxu0 0.0
        %8637 = vmatpush1.msra.mxu0 0.0
        %8638 = vmatprep.subr.mxu0 0.0
        %8639 = vmatpush1.msra.mxu0 0.0
        %8640 = vmatprep.subr.mxu0 0.0
        %8641 = vmatpush1.msra.mxu0 0.0
        %8642 = vmatprep.subr.mxu0 0.0
        %8643 = vmatpush1.msra.mxu0 0.0
        %8644 = vmatprep.subr.mxu0 0.0
        %8645 = vmatpush1.msra.mxu0 0.0
        %8646 = vmatprep.subr.mxu0 0.0
        %8647 = vmatpush1.msra.mxu0 %v8619
        %8648 = vmatprep.subr.mxu0 0.0
        %8649 = vmatpush1.msra.mxu0 %v8618
        %8650 = vmatprep.subr.mxu0 0.0
        %8651 = vmatpush1.msra.mxu0 %v8617
        %8652 = vmatprep.subr.mxu0 0.0
        %8653 = vmatpush1.msra.mxu0 %v8616
        %8654 = vmatprep.subr.mxu0 0.0
        %8655 = vmatpush1.msra.mxu0 %v8615
        %8656 = vmatprep.subr.mxu0 0.0
        %8657 = vmatpush1.msra.mxu0 %v8614
        %8658 = vmatprep.subr.mxu0 0.0
        %8659 = vmatpush1.msra.mxu0 %v8613
        %8660 = vmatprep.subr.mxu0 0.0
        %8661 = vmatpush1.msra.mxu0 %v8612
        %8662 = vmatprep.subr.mxu0 0.0
        %8663 = vmatpush2.msra.mxu0 0.0
        %8664 = vmatprep.subr.mxu0 0.0
        %8665 = vmatpush2.msra.mxu0 0.0
        %8666 = vmatprep.subr.mxu0 0.0
        %8667 = vmatpush2.msra.mxu0 0.0
        %8668 = vmatprep.subr.mxu0 0.0
        %8669 = vmatpush2.msra.mxu0 0.0
        %8670 = vmatprep.subr.mxu0 0.0
        %8671 = vmatpush2.msra.mxu0 0.0
        %8672 = vmatprep.subr.mxu0 0.0
        %8673 = vmatpush2.msra.mxu0 0.0
        %8674 = vmatprep.subr.mxu0 0.0
        %8675 = vmatpush2.msra.mxu0 0.0
        %8676 = vmatprep.subr.mxu0 0.0
        %8677 = vmatpush2.msra.mxu0 0.0
        %8678 = vmatprep.subr.mxu0 0.0
        %8679 = vmatpush2.msra.mxu0 0.0
        %8680 = vmatprep.subr.mxu0 0.0
        %8681 = vmatpush2.msra.mxu0 0.0
        %8682 = vmatprep.subr.mxu0 0.0
        %8683 = vmatpush2.msra.mxu0 0.0
        %8684 = vmatprep.subr.mxu0 0.0
        %8685 = vmatpush2.msra.mxu0 0.0
        %8686 = vmatprep.subr.mxu0 0.0
        %8687 = vmatpush2.msra.mxu0 0.0
        %8688 = vmatprep.subr.mxu0 0.0
        %8689 = vmatpush2.msra.mxu0 0.0
        %8690 = vmatprep.subr.mxu0 0.0
        %8691 = vmatpush2.msra.mxu0 0.0
        %8692 = vmatprep.subr.mxu0 0.0
        %8693 = vmatpush2.msra.mxu0 0.0
        %8694 = vmatprep.mubr.f32.mxu0 0.0
        %8695 = vmatmul.mubr.f32.gmra.mxu0 %v8625
        %v8696 = vpop.f32.mrf.mxu0
        %v8697 = vadd.f32 %v8623, %v8696
        %v8698 = vpop.f32.mrf.mxu0
        %8699 = vmatprep.mubr.f32.mxu0 0.0
        %8700 = vmatmul.mubr.f32.gmra.mxu0 %v8628
        %v8701 = vpop.f32.mrf.mxu0
        %v8702 = vadd.f32 %v8623, %v8701
        %v8703 = vpop.f32.mrf.mxu0
        %8704 = vdwg.mxu0
        %v8705 = vadd.f32 %v8473, %v8697
        %v8706 = vadd.f32 %v8474, %v8702
        %v8707 = vld [vmem:[%s8] sm:$0xff]
        %v8708 = vld [vmem:[%s8 + $0x8] sm:$0xff]
        %v8709 = vld [vmem:[%s8 + $0x10] sm:$0xff]
        %v8710 = vld [vmem:[%s8 + $0x18] sm:$0xff]
        %v8711 = vlaneseq
        %v8712 = vshrl.u32 %v8711, 7
        %v8713 = vsub.s32 0, %v8712
        %v8714 = vrot.slane %v8141, %v8713
        %v8716 = vsel %vm8142, %v8705, 0
        %v8719 = vsel %vm8142, %v8706, 0
        %8721 = vmatprep.subr.mxu0 0.0
        %8722 = vmatpush1.msra.mxu0 0.0
        %8723 = vmatprep.subr.mxu0 0.0
        %8724 = vmatpush1.msra.mxu0 0.0
        %8725 = vmatprep.subr.mxu0 0.0
        %8726 = vmatpush1.msra.mxu0 0.0
        %8727 = vmatprep.subr.mxu0 0.0
        %8728 = vmatpush1.msra.mxu0 0.0
        %8729 = vmatprep.subr.mxu0 0.0
        %8730 = vmatpush1.msra.mxu0 0.0
        %8731 = vmatprep.subr.mxu0 0.0
        %8732 = vmatpush1.msra.mxu0 0.0
        %8733 = vmatprep.subr.mxu0 0.0
        %8734 = vmatpush1.msra.mxu0 0.0
        %8735 = vmatprep.subr.mxu0 0.0
        %8736 = vmatpush1.msra.mxu0 0.0
        %8737 = vmatprep.subr.mxu0 0.0
        %8738 = vmatpush1.msra.mxu0 0.0
        %8739 = vmatprep.subr.mxu0 0.0
        %8740 = vmatpush1.msra.mxu0 0.0
        %8741 = vmatprep.subr.mxu0 0.0
        %8742 = vmatpush1.msra.mxu0 0.0
        %8743 = vmatprep.subr.mxu0 0.0
        %8744 = vmatpush1.msra.mxu0 0.0
        %8745 = vmatprep.subr.mxu0 0.0
        %8746 = vmatpush1.msra.mxu0 %v8710
        %8747 = vmatprep.subr.mxu0 0.0
        %8748 = vmatpush1.msra.mxu0 %v8709
        %8749 = vmatprep.subr.mxu0 0.0
        %8750 = vmatpush1.msra.mxu0 %v8708
        %8751 = vmatprep.subr.mxu0 0.0
        %8752 = vmatpush1.msra.mxu0 %v8707
        %8753 = vmatprep.subr.mxu0 0.0
        %8754 = vmatpush2.msra.mxu0 0.0
        %8755 = vmatprep.subr.mxu0 0.0
        %8756 = vmatpush2.msra.mxu0 0.0
        %8757 = vmatprep.subr.mxu0 0.0
        %8758 = vmatpush2.msra.mxu0 0.0
        %8759 = vmatprep.subr.mxu0 0.0
        %8760 = vmatpush2.msra.mxu0 0.0
        %8761 = vmatprep.subr.mxu0 0.0
        %8762 = vmatpush2.msra.mxu0 0.0
        %8763 = vmatprep.subr.mxu0 0.0
        %8764 = vmatpush2.msra.mxu0 0.0
        %8765 = vmatprep.subr.mxu0 0.0
        %8766 = vmatpush2.msra.mxu0 0.0
        %8767 = vmatprep.subr.mxu0 0.0
        %8768 = vmatpush2.msra.mxu0 0.0
        %8769 = vmatprep.subr.mxu0 0.0
        %8770 = vmatpush2.msra.mxu0 0.0
        %8771 = vmatprep.subr.mxu0 0.0
        %8772 = vmatpush2.msra.mxu0 0.0
        %8773 = vmatprep.subr.mxu0 0.0
        %8774 = vmatpush2.msra.mxu0 0.0
        %8775 = vmatprep.subr.mxu0 0.0
        %8776 = vmatpush2.msra.mxu0 0.0
        %8777 = vmatprep.subr.mxu0 0.0
        %8778 = vmatpush2.msra.mxu0 0.0
        %8779 = vmatprep.subr.mxu0 0.0
        %8780 = vmatpush2.msra.mxu0 0.0
        %8781 = vmatprep.subr.mxu0 0.0
        %8782 = vmatpush2.msra.mxu0 0.0
        %8783 = vmatprep.subr.mxu0 0.0
        %8784 = vmatpush2.msra.mxu0 0.0
        %8785 = vmatprep.mubr.f32.mxu0 0.0
        %8786 = vmatmul.mubr.f32.gmra.mxu0 %v8716
        %v8787 = vpop.f32.mrf.mxu0
        %v8788 = vadd.f32 %v8714, %v8787
        %v8789 = vpop.f32.mrf.mxu0
        %8790 = vmatprep.mubr.f32.mxu0 0.0
        %8791 = vmatmul.mubr.f32.gmra.mxu0 %v8719
        %v8792 = vpop.f32.mrf.mxu0
        %v8793 = vadd.f32 %v8714, %v8792
        %v8794 = vpop.f32.mrf.mxu0
        %8795 = vdwg.mxu0
        %v8796 = vmul.f32 %v8788, 0.5
        %v8797 = vmul.f32 %v8793, 0.5
        %v8798 = vmul.f32 %v8788, 0.70710677
        %v8799 = vmul.f32 %v8793, 0.70710677
        %v8800 = verf.f32.pop %v8798
        %v8801 = verf.f32.pop %v8799
        %v8802 = vadd.f32 %v8800, 1.0
        %v8803 = vadd.f32 %v8801, 1.0
        %v8804 = vmul.f32 %v8796, %v8802
        %v8805 = vmul.f32 %v8797, %v8803
        %8806 = vst.msk [vmem:[%s352] sm:$0xff] %vm8047, %v8804
        %8807 = vst.msk [vmem:[%s352 + $0x8] sm:$0xff] %vm8047, %v8805
        %s8808 = sand.u32 %s247, 1
        %s8809 = scalar_lea.sflag [#allocation5], %s8808
        %s8810 = sand.u32 %s247, 1
        %s8811 = smul.addr %s8810, 16
        %s8812 = scalar_lea.vmem [#allocation4], %s8811
        // Predicated region
        $region61: #{latent_encoder_gelu_forward.1} parent=59 // pred_check
          %p8813 = pneg %p257
        $region62: #{latent_encoder_gelu_forward.1} parent=59 // pred_check_branch
          %8815 = sbr.rel (%p8813) target = $region64
        $region63: #{latent_encoder_gelu_forward.1} parent=59 // pred_region
          %s8817 = ssub.s32 256, 256
          %8818 = vsyncadd %s8809, %s8817
          %s8819 = smul.addr %s24, 2
          %s8820 = smul.addr %s8819, 128
          %s8821 = scalar_lea.hbm %s10, %s8820
          %s8822 = sshll.u32 %s8812, 4
          %s8823 = int_to_ptr.vmem [resolvable:$true] %s8822
          %8828 = dma.vmem_to_hbm [thread:$0]  %s8823, 256, %s8821, %s8809, 128, 128, 8
        $region64: #{latent_encoder_gelu_forward.1} parent=59 // pred_fallthru
          _
      $region60: #{latent_encoder_gelu_forward.1} parent=5 // pred_fallthru
        _
      %p8829 = scmp.le.s32.totalorder 2, %s19
      // Predicated region
      $region65: #{latent_encoder_gelu_forward.1} parent=5 // pred_check
        %p8830 = pneg %p8829
      $region66: #{latent_encoder_gelu_forward.1} parent=5 // pred_check_branch
        %8832 = sbr.rel (%p8830) target = $region68
      $region67: #{latent_encoder_gelu_forward.1} parent=5 // pred_region
        %s8833 = ssub.s32 %s19, 2
        // Predicated region
        $region69: #{latent_encoder_gelu_forward.1} parent=67 // pred_check
          %p8834 = pneg %p263
        $region70: #{latent_encoder_gelu_forward.1} parent=67 // pred_check_branch
          %8836 = sbr.rel (%p8834) target = $region72
        $region71: #{latent_encoder_gelu_forward.1} parent=67 // pred_region
          %s8837 = sand.u32 %s248, 1
          %s8838 = scalar_lea.sflag [#allocation5], %s8837
          %s8839 = sand.u32 %s248, 1
          %s8840 = smul.addr %s8839, 16
          %s8841 = scalar_lea.vmem [#allocation4], %s8840
          %8842 = dma.done %s8838, 256
        $region72: #{latent_encoder_gelu_forward.1} parent=67 // pred_fallthru
          _
      $region68: #{latent_encoder_gelu_forward.1} parent=5 // pred_fallthru
        _
    $region6: #{latent_encoder_gelu_forward.1} parent=1 // loop_footer
      %s23 = sadd.s32 1, %s19
    $region7: #{latent_encoder_gelu_forward.1} parent=1 // loop_footer_branch
      %18 = sbr.rel target = $region3
    $region8: #{latent_encoder_gelu_forward.1} parent=1 // loop_exit
      _
    %8843 = vsyncpa [#allocation5], 1
    %s8844 = scalar_lea.sflag [#allocation5], 1
    %8845 = vsyncpa %s8844, 1

</llo_original>
